<compile_context>
chip_gen: v7x
topology: tpu7x:2x2x1
jax: 0.10.0
libtpu: 0.0.40
codegen_flags: <defaults>
</compile_context>

<pallas_src>
import functools

import jax
import jax.numpy as jnp
from jax import lax
from jax.experimental import pallas as pl
from jax.experimental.pallas import tpu as pltpu

D_MODEL = 128          # channel count coming out of sfeb (must match BiGS d_model)
N_LAYERS = 4
BN_EPS = 1e-5
LN_EPS = 1e-5

SINC_OUT = 16
SINC_K = 251
CONV1_K = 15
CONV1_S = 8
CONV2_K = 6
CONV2_S = 2
KC = SINC_K + CONV1_K - 1        # 265: composed sinc*conv1 kernel length
KC_PAD = 272                     # padded to a multiple of 8
N_GROUPS = KC_PAD // 8           # 34 shifted-matmul groups for the composed conv


def _gelu(x):
    return jax.nn.gelu(x, approximate=True)


# ----------------------------- the fused Pallas kernel ---------------------------


def _fused_forward_kernel(x8_ref, wc_ref, aff1_ref, w2_ref, aff2_ref, sel_ref,
                          wp_ref, wg_ref, wo_ref, vec_ref, o_ref,
                          *, L1, L1v, L2, n_layers):
    f32 = jnp.float32
    bf16 = jnp.bfloat16

    # ---- composed sinc+conv1 (1 -> 64, K=265 (pad 272), stride 8) + BN1 + ReLU -----
    # x is pre-reshaped to (L1+33, 8); output row i needs rows i..i+33, so the conv is
    # 34 accumulated shifted matmuls (L1,8)@(8,64) on contiguous slices (no im2col).
    X8 = x8_ref[0]                                          # (L1+33, 8) f32
    h1 = jnp.zeros((L1, 64), f32)
    for k in range(N_GROUPS):
        piece = X8[k:k + L1, :].astype(bf16)                # (L1, 8)
        h1 = h1 + jnp.dot(piece, wc_ref[k], preferred_element_type=f32)
    h1 = jnp.maximum(h1 * aff1_ref[0:1, :] + aff1_ref[1:2, :], 0.0)   # (L1, 64)

    # ---- conv2 (64 -> 128, K=6, stride 2) + BN2 + ReLU ------------------------------
    # Compute the stride-1 result with 6 accumulated (L1v,64)@(64,128) matmuls, then
    # take every 2nd row with a tiny selection matmul (exact, avoids strided slicing).
    r = jnp.zeros((L1v, 128), f32)
    for k in range(CONV2_K):
        r = r + jnp.dot(h1[k:k + L1v, :].astype(bf16), w2_ref[k],
                        preferred_element_type=f32)
    u = jnp.dot(sel_ref[...], r, preferred_element_type=f32)          # (L2, 128)
    u = jnp.maximum(u * aff2_ref[0:1, :] + aff2_ref[1:2, :], 0.0)

    # ---- 4 x [BiGS (bidirectional diagonal SSM) + residual + post-LayerNorm] --------
    t_idx = lax.broadcasted_iota(jnp.int32, (L2, D_MODEL), 0)
    n_scan = max(1, (L2 - 1).bit_length())                  # ceil(log2(L2))
    for l in range(n_layers):
        V = vec_ref[l]                                      # (16, 128) f32
        bp = jnp.concatenate([V[0:1], V[1:2], V[2:3]], axis=1)        # (1, 384)
        a_f, c_f, d_f = V[3:4], V[4:5], V[5:6]
        a_b, c_b, d_b = V[6:7], V[7:8], V[8:9]
        bg, bo = V[9:10], V[10:11]
        ln_g, ln_b = V[11:12], V[12:13]

        # stacked input projections: [Wv | Wf | Wb] in one (128, 384) matmul
        proj = jnp.dot(u.astype(bf16), wp_ref[l], preferred_element_type=f32) + bp
        proj = _gelu(proj)
        val = proj[:, 0:128]
        fin = proj[:, 128:256]
        bwd = proj[:, 256:384]

        # forward diagonal SSM  h_t = a*h_{t-1} + x_t  via log2(L) doubling scan
        h = fin
        ap = a_f
        for s in range(n_scan):
            sh = 1 << s
            shifted = jnp.where(t_idx >= sh, pltpu.roll(h, sh, axis=0), 0.0)
            h = h + ap * shifted
            ap = ap * ap
        f_out = c_f * h + d_f * fin

        # backward diagonal SSM  h_t = a*h_{t+1} + x_t
        h = bwd
        ap = a_b
        for s in range(n_scan):
            sh = 1 << s
            shifted = jnp.where(t_idx < L2 - sh,
                                pltpu.roll(h, (L2 - sh) % L2, axis=0), 0.0)
            h = h + ap * shifted
            ap = ap * ap
        b_out = c_b * h + d_b * bwd

        # stacked gate matmul: [f_out | b_out] @ [Wuf ; Wub]  (K=256, N=128)
        fb = jnp.concatenate([f_out, b_out], axis=1).astype(bf16)     # (L2, 256)
        gate = jnp.dot(fb, wg_ref[l], preferred_element_type=f32) + bg
        z = jnp.dot((val * gate).astype(bf16), wo_ref[l],
                    preferred_element_type=f32) + bo

        # dropout = identity (eval); residual then post-LayerNorm over d_model
        resid = z + u
        mean = jnp.mean(resid, axis=-1, keepdims=True)
        cen = resid - mean
        var = jnp.mean(cen * cen, axis=-1, keepdims=True)
        u = cen * lax.rsqrt(var + LN_EPS) * ln_g + ln_b

    # write (d_model, L_out) directly — no XLA transpose afterwards
    o_ref[0] = u.T


# ----------------------------- glue: params ---------------------------------------


def sinc_filters(out_channels=SINC_OUT, kernel_size=SINC_K, sample_rate=30225.0,
                 min_low_hz=50.0, min_band_hz=50.0):
    """Deterministic SincConv_fast filters at their mel-spaced initialization."""
    def to_mel(hz):
        return 2595.0 * jnp.log10(1.0 + hz / 700.0)

    def to_hz(mel):
        return 700.0 * (jnp.power(10.0, mel / 2595.0) - 1.0)

    low_hz0 = 30.0
    high_hz0 = sample_rate / 2 - (min_low_hz + min_band_hz)
    mel = jnp.linspace(to_mel(low_hz0), to_mel(high_hz0), out_channels + 1)
    hz = to_hz(mel)
    low_hz_ = hz[:-1][:, None]
    band_hz_ = jnp.diff(hz)[:, None]

    half = kernel_size // 2
    n_lin = jnp.linspace(0.0, (kernel_size / 2) - 1, half)
    window_ = 0.54 - 0.46 * jnp.cos(2.0 * jnp.pi * n_lin / kernel_size)
    n = (kernel_size - 1) / 2.0
    n_ = 2.0 * jnp.pi * jnp.arange(-n, 0.0) / sample_rate            # (half,)

    low = min_low_hz + jnp.abs(low_hz_)
    high = jnp.clip(low + min_band_hz + jnp.abs(band_hz_), min_low_hz, sample_rate / 2)
    band = (high - low)[:, 0]

    f_t_low = low * n_[None, :]
    f_t_high = high * n_[None, :]
    bp_left = ((jnp.sin(f_t_high) - jnp.sin(f_t_low)) / (n_[None, :] / 2.0)) * window_[None, :]
    bp_center = 2.0 * band[:, None]
    bp_right = jnp.flip(bp_left, axis=1)
    bp = jnp.concatenate([bp_left, bp_center, bp_right], axis=1)      # (16, 251)
    bp = bp / (2.0 * band[:, None])
    return bp.astype(jnp.float32)


def init_bn(key, c):
    """Deterministic eval-mode BatchNorm, folded to (scale, shift)."""
    k1, k2, k3, k4 = jax.random.split(key, 4)
    gamma = 1.0 + 0.1 * jax.random.normal(k1, (c,))
    beta = 0.1 * jax.random.normal(k2, (c,))
    rmean = 0.1 * jax.random.normal(k3, (c,))
    rvar = 1.0 + 0.1 * jax.random.uniform(k4, (c,))
    scale = gamma / jnp.sqrt(rvar + BN_EPS)
    shift = beta - rmean * scale
    return scale.astype(jnp.float32), shift.astype(jnp.float32)


def init_params(key):
    keys = jax.random.split(key, 16)
    p = {}
    p["sinc_filters"] = sinc_filters()                                 # (16, 251)
    fan = 16 * 15
    p["conv1_w"] = (jax.random.normal(keys[0], (64, 16, 15)) * jnp.sqrt(2.0 / fan)).astype(jnp.float32)
    p["bn1"] = init_bn(keys[1], 64)
    fan = 64 * 6
    p["conv2_w"] = (jax.random.normal(keys[2], (128, 64, 6)) * jnp.sqrt(2.0 / fan)).astype(jnp.float32)
    p["bn2"] = init_bn(keys[3], 128)

    layers = []
    D = D_MODEL
    for li in range(N_LAYERS):
        lk = jax.random.split(keys[4 + li], 12)
        Ws = jnp.stack([jax.random.normal(lk[i], (D, D)) / jnp.sqrt(D) for i in range(6)])
        a_f = jax.nn.sigmoid(jax.random.normal(lk[6], (D,)))
        a_b = jax.nn.sigmoid(jax.random.normal(lk[7], (D,)))
        c_f = 1.0 + 0.1 * jax.random.normal(lk[8], (D,))
        c_b = 1.0 + 0.1 * jax.random.normal(lk[9], (D,))
        d_f = 0.1 * jax.random.normal(lk[10], (D,))
        d_b = 0.1 * jax.random.normal(lk[11], (D,))
        zeros = jnp.zeros((D,))
        vecs = jnp.stack([
            zeros, zeros, zeros,          # bv, bf, bb
            a_f, c_f, d_f,                # forward SSM
            a_b, c_b, d_b,                # backward SSM
            zeros, zeros, zeros,          # buf, bub, bo
            jnp.ones((D,)), zeros,        # LayerNorm gamma / beta (PyTorch defaults)
        ])
        layers.append((Ws.astype(jnp.float32), vecs.astype(jnp.float32)))
    p["layers"] = layers
    return p


def build_fused_params(params):
    """Compose sinc into conv1 and pack everything into stacked kernel operands."""
    sinc = params["sinc_filters"]                         # (16, 251)
    conv1_w = params["conv1_w"]                           # (64, 16, 15)
    # composed kernel: Wc[o, m] = sum_{c,k} conv1_w[o,c,k] * sinc[c, m-k]
    wc = jnp.zeros((64, KC), jnp.float32)
    for k in range(CONV1_K):
        wc = wc.at[:, k:k + SINC_K].add(conv1_w[:, :, k] @ sinc)
    wc = jnp.pad(wc, ((0, 0), (0, KC_PAD - KC)))          # (64, 272), zero tail
    wc = wc.reshape(64, N_GROUPS, 8).transpose(1, 2, 0)   # (34, 8, 64): [group, lane, out]

    w2 = params["conv2_w"].transpose(2, 1, 0)             # (6, 64, 128): [tap, cin, cout]

    aff1 = jnp.stack(params["bn1"])                       # (2, 64): scale / shift
    aff2 = jnp.stack(params["bn2"])                       # (2, 128)

    wp, wg, wo, vecs = [], [], [], []
    for Ws, V in params["layers"]:
        Wv, Wf, Wb, Wuf, Wub, Wo_ = (Ws[i] for i in range(6))
        wp.append(jnp.concatenate([Wv, Wf, Wb], axis=1))  # (128, 384)
        wg.append(jnp.concatenate([Wuf, Wub], axis=0))    # (256, 128)
        wo.append(Wo_)                                    # (128, 128)
        z = jnp.zeros((D_MODEL,), jnp.float32)
        vecs.append(jnp.stack([
            V[0], V[1], V[2],             # bv, bf, bb
            V[3], V[4], V[5],             # a_f, c_f, d_f
            V[6], V[7], V[8],             # a_b, c_b, d_b
            V[9] + V[10], V[11],          # bg = buf + bub ; bo
            V[12], V[13],                 # ln gamma / beta
            z, z, z,                      # pad to 16 rows
        ]))
    return {
        "wc": wc.astype(jnp.bfloat16),
        "w2": w2.astype(jnp.bfloat16),
        "aff1": aff1.astype(jnp.float32),
        "aff2": aff2.astype(jnp.float32),
        "wp": jnp.stack(wp).astype(jnp.bfloat16),
        "wg": jnp.stack(wg).astype(jnp.bfloat16),
        "wo": jnp.stack(wo).astype(jnp.bfloat16),
        "vecs": jnp.stack(vecs).astype(jnp.float32),
    }


# ----------------------------- forward (pt=False, prenorm=False) ------------------


def forward(fused, x):
    """x: (B, L, d_input=1) -> (B, d_model=128, L_out), matching the PyTorch module."""
    B, L, d_in = x.shape
    assert d_in == 1
    L1 = (L - KC) // CONV1_S + 1          # composed-conv output length
    L1v = L1 - (CONV2_K - 1)              # stride-1 conv2 length
    L2 = (L1 - CONV2_K) // CONV2_S + 1    # sfeb output length (BiGS sequence length)
    Rpad = L1 + N_GROUPS - 1              # rows of the (R, 8)-reshaped input
    Lpad = 8 * Rpad                       # >= L; the zero tail only meets zero weights

    xf = jnp.pad(x.reshape(B, L), ((0, 0), (0, Lpad - L)))
    x8 = xf.reshape(B, Rpad, 8)
    sel = jax.nn.one_hot(2 * jnp.arange(L2), L1v, dtype=jnp.float32)   # (L2, L1v)

    kernel = functools.partial(_fused_forward_kernel,
                               L1=L1, L1v=L1v, L2=L2, n_layers=N_LAYERS)
    return pl.pallas_call(
        kernel,
        out_shape=jax.ShapeDtypeStruct((B, D_MODEL, L2), jnp.float32),
        grid=(B,),
        in_specs=[
            pl.BlockSpec((1, Rpad, 8), lambda b: (b, 0, 0)),
            pl.BlockSpec((N_GROUPS, 8, 64), lambda b: (0, 0, 0)),
            pl.BlockSpec((2, 64), lambda b: (0, 0)),
            pl.BlockSpec((CONV2_K, 64, 128), lambda b: (0, 0, 0)),
            pl.BlockSpec((2, 128), lambda b: (0, 0)),
            pl.BlockSpec((L2, L1v), lambda b: (0, 0)),
            pl.BlockSpec((N_LAYERS, 128, 384), lambda b: (0, 0, 0)),
            pl.BlockSpec((N_LAYERS, 256, 128), lambda b: (0, 0, 0)),
            pl.BlockSpec((N_LAYERS, 128, 128), lambda b: (0, 0, 0)),
            pl.BlockSpec((N_LAYERS, 16, 128), lambda b: (0, 0, 0)),
        ],
        out_specs=pl.BlockSpec((1, D_MODEL, L2), lambda b: (b, 0, 0)),
        compiler_params=pltpu.CompilerParams(dimension_semantics=("parallel",)),
    )(x8, fused["wc"], fused["aff1"], fused["w2"], fused["aff2"], sel,
      fused["wp"], fused["wg"], fused["wo"], fused["vecs"])


if __name__ == "__main__":
    key = jax.random.PRNGKey(0)
    pkey, xkey = jax.random.split(key)
    params = init_params(pkey)
    fused = build_fused_params(params)

    # small but consistent shapes: B=2, L=417, d_input=1
    #   composed conv: (417-265)//8+1=20 ; conv2: (20-6)//2+1=8
    B, L, d_input = 2, 417, 1
    x = jax.random.normal(xkey, (B, L, d_input), jnp.float32)

    fwd = jax.jit(forward)
    out = fwd(fused, x)
    out = jax.block_until_ready(out)
    assert out.shape == (B, D_MODEL, 8), out.shape
    assert bool(jnp.all(jnp.isfinite(out)))
    print("KERNEL_OK")
</pallas_src>

<mosaic_0001>
module attributes {stable_mosaic.version = 11 : i64} {
  func.func @_fused_forward_kernel(%arg0: i32, %arg1: memref<1x53x8xf32, #tpu.memory_space<vmem>>, %arg2: memref<34x8x64xbf16, #tpu.memory_space<vmem>>, %arg3: memref<2x64xf32, #tpu.memory_space<vmem>>, %arg4: memref<6x64x128xbf16, #tpu.memory_space<vmem>>, %arg5: memref<2x128xf32, #tpu.memory_space<vmem>>, %arg6: memref<8x15xf32, #tpu.memory_space<vmem>>, %arg7: memref<4x128x384xbf16, #tpu.memory_space<vmem>>, %arg8: memref<4x256x128xbf16, #tpu.memory_space<vmem>>, %arg9: memref<4x128x128xbf16, #tpu.memory_space<vmem>>, %arg10: memref<4x16x128xf32, #tpu.memory_space<vmem>>, %arg11: memref<1x128x8xf32, #tpu.memory_space<vmem>>) attributes {dimension_semantics = [#tpu.dimension_semantics<parallel>], iteration_bounds = array<i64: 2>, scalar_prefetch = 0 : i64, scratch_operands = 0 : i64, tpu.core_type = #tpu.core_type<tc>, window_params = [{transform_indices = @transform_0, window_bounds = array<i64: 1, 53, 8>}, {pipeline_mode = #tpu.pipeline_mode<synchronous>, transform_indices = @transform_1, window_bounds = array<i64: 34, 8, 64>}, {pipeline_mode = #tpu.pipeline_mode<synchronous>, transform_indices = @transform_2, window_bounds = array<i64: 2, 64>}, {pipeline_mode = #tpu.pipeline_mode<synchronous>, transform_indices = @transform_3, window_bounds = array<i64: 6, 64, 128>}, {pipeline_mode = #tpu.pipeline_mode<synchronous>, transform_indices = @transform_4, window_bounds = array<i64: 2, 128>}, {pipeline_mode = #tpu.pipeline_mode<synchronous>, transform_indices = @transform_5, window_bounds = array<i64: 8, 15>}, {pipeline_mode = #tpu.pipeline_mode<synchronous>, transform_indices = @transform_6, window_bounds = array<i64: 4, 128, 384>}, {pipeline_mode = #tpu.pipeline_mode<synchronous>, transform_indices = @transform_7, window_bounds = array<i64: 4, 256, 128>}, {pipeline_mode = #tpu.pipeline_mode<synchronous>, transform_indices = @transform_8, window_bounds = array<i64: 4, 128, 128>}, {pipeline_mode = #tpu.pipeline_mode<synchronous>, transform_indices = @transform_9, window_bounds = array<i64: 4, 16, 128>}, {transform_indices = @transform_10, window_bounds = array<i64: 1, 128, 8>}]} {
    %c0 = arith.constant 0 : index
    %c0_0 = arith.constant 0 : index
    %c0_1 = arith.constant 0 : index
    %0 = vector.load %arg1[%c0, %c0_0, %c0_1] : memref<1x53x8xf32, #tpu.memory_space<vmem>>, vector<1x53x8xf32>
    %1 = vector.shape_cast %0 : vector<1x53x8xf32> to vector<53x8xf32>
    %cst = arith.constant 0.000000e+00 : f32
    %2 = vector.broadcast %cst : f32 to vector<20x64xf32>
    %3 = vector.extract_strided_slice %1 {offsets = [0, 0], sizes = [20, 8], strides = [1, 1]} : vector<53x8xf32> to vector<20x8xf32>
    %4 = arith.truncf %3 : vector<20x8xf32> to vector<20x8xbf16>
    %c0_2 = arith.constant 0 : index
    %c0_3 = arith.constant 0 : index
    %c0_4 = arith.constant 0 : index
    %5 = vector.load %arg2[%c0_2, %c0_3, %c0_4] : memref<34x8x64xbf16, #tpu.memory_space<vmem>>, vector<1x8x64xbf16>
    %6 = vector.shape_cast %5 : vector<1x8x64xbf16> to vector<8x64xbf16>
    %cst_5 = arith.constant dense<0.000000e+00> : vector<20x64xf32>
    %7 = tpu.matmul %4, %6, %cst_5 {dimension_numbers = #tpu.dot_dimension_numbers<[1], [0], [0], [1], [0, 0, 1, 1], [], []>} : vector<20x8xbf16>, vector<8x64xbf16>, vector<20x64xf32> -> vector<20x64xf32>
    %8 = arith.addf %2, %7 : vector<20x64xf32>
    %9 = vector.extract_strided_slice %1 {offsets = [1, 0], sizes = [20, 8], strides = [1, 1]} : vector<53x8xf32> to vector<20x8xf32>
    %10 = arith.truncf %9 : vector<20x8xf32> to vector<20x8xbf16>
    %c1 = arith.constant 1 : index
    %c0_6 = arith.constant 0 : index
    %c0_7 = arith.constant 0 : index
    %11 = vector.load %arg2[%c1, %c0_6, %c0_7] : memref<34x8x64xbf16, #tpu.memory_space<vmem>>, vector<1x8x64xbf16>
    %12 = vector.shape_cast %11 : vector<1x8x64xbf16> to vector<8x64xbf16>
    %cst_8 = arith.constant dense<0.000000e+00> : vector<20x64xf32>
    %13 = tpu.matmul %10, %12, %cst_8 {dimension_numbers = #tpu.dot_dimension_numbers<[1], [0], [0], [1], [0, 0, 1, 1], [], []>} : vector<20x8xbf16>, vector<8x64xbf16>, vector<20x64xf32> -> vector<20x64xf32>
    %14 = arith.addf %8, %13 : vector<20x64xf32>
    %15 = vector.extract_strided_slice %1 {offsets = [2, 0], sizes = [20, 8], strides = [1, 1]} : vector<53x8xf32> to vector<20x8xf32>
    %16 = arith.truncf %15 : vector<20x8xf32> to vector<20x8xbf16>
    %c2 = arith.constant 2 : index
    %c0_9 = arith.constant 0 : index
    %c0_10 = arith.constant 0 : index
    %17 = vector.load %arg2[%c2, %c0_9, %c0_10] : memref<34x8x64xbf16, #tpu.memory_space<vmem>>, vector<1x8x64xbf16>
    %18 = vector.shape_cast %17 : vector<1x8x64xbf16> to vector<8x64xbf16>
    %cst_11 = arith.constant dense<0.000000e+00> : vector<20x64xf32>
    %19 = tpu.matmul %16, %18, %cst_11 {dimension_numbers = #tpu.dot_dimension_numbers<[1], [0], [0], [1], [0, 0, 1, 1], [], []>} : vector<20x8xbf16>, vector<8x64xbf16>, vector<20x64xf32> -> vector<20x64xf32>
    %20 = arith.addf %14, %19 : vector<20x64xf32>
    %21 = vector.extract_strided_slice %1 {offsets = [3, 0], sizes = [20, 8], strides = [1, 1]} : vector<53x8xf32> to vector<20x8xf32>
    %22 = arith.truncf %21 : vector<20x8xf32> to vector<20x8xbf16>
    %c3 = arith.constant 3 : index
    %c0_12 = arith.constant 0 : index
    %c0_13 = arith.constant 0 : index
    %23 = vector.load %arg2[%c3, %c0_12, %c0_13] : memref<34x8x64xbf16, #tpu.memory_space<vmem>>, vector<1x8x64xbf16>
    %24 = vector.shape_cast %23 : vector<1x8x64xbf16> to vector<8x64xbf16>
    %cst_14 = arith.constant dense<0.000000e+00> : vector<20x64xf32>
    %25 = tpu.matmul %22, %24, %cst_14 {dimension_numbers = #tpu.dot_dimension_numbers<[1], [0], [0], [1], [0, 0, 1, 1], [], []>} : vector<20x8xbf16>, vector<8x64xbf16>, vector<20x64xf32> -> vector<20x64xf32>
    %26 = arith.addf %20, %25 : vector<20x64xf32>
    %27 = vector.extract_strided_slice %1 {offsets = [4, 0], sizes = [20, 8], strides = [1, 1]} : vector<53x8xf32> to vector<20x8xf32>
    %28 = arith.truncf %27 : vector<20x8xf32> to vector<20x8xbf16>
    %c4 = arith.constant 4 : index
    %c0_15 = arith.constant 0 : index
    %c0_16 = arith.constant 0 : index
    %29 = vector.load %arg2[%c4, %c0_15, %c0_16] : memref<34x8x64xbf16, #tpu.memory_space<vmem>>, vector<1x8x64xbf16>
    %30 = vector.shape_cast %29 : vector<1x8x64xbf16> to vector<8x64xbf16>
    %cst_17 = arith.constant dense<0.000000e+00> : vector<20x64xf32>
    %31 = tpu.matmul %28, %30, %cst_17 {dimension_numbers = #tpu.dot_dimension_numbers<[1], [0], [0], [1], [0, 0, 1, 1], [], []>} : vector<20x8xbf16>, vector<8x64xbf16>, vector<20x64xf32> -> vector<20x64xf32>
    %32 = arith.addf %26, %31 : vector<20x64xf32>
    %33 = vector.extract_strided_slice %1 {offsets = [5, 0], sizes = [20, 8], strides = [1, 1]} : vector<53x8xf32> to vector<20x8xf32>
    %34 = arith.truncf %33 : vector<20x8xf32> to vector<20x8xbf16>
    %c5 = arith.constant 5 : index
    %c0_18 = arith.constant 0 : index
    %c0_19 = arith.constant 0 : index
    %35 = vector.load %arg2[%c5, %c0_18, %c0_19] : memref<34x8x64xbf16, #tpu.memory_space<vmem>>, vector<1x8x64xbf16>
    %36 = vector.shape_cast %35 : vector<1x8x64xbf16> to vector<8x64xbf16>
    %cst_20 = arith.constant dense<0.000000e+00> : vector<20x64xf32>
    %37 = tpu.matmul %34, %36, %cst_20 {dimension_numbers = #tpu.dot_dimension_numbers<[1], [0], [0], [1], [0, 0, 1, 1], [], []>} : vector<20x8xbf16>, vector<8x64xbf16>, vector<20x64xf32> -> vector<20x64xf32>
    %38 = arith.addf %32, %37 : vector<20x64xf32>
    %39 = vector.extract_strided_slice %1 {offsets = [6, 0], sizes = [20, 8], strides = [1, 1]} : vector<53x8xf32> to vector<20x8xf32>
    %40 = arith.truncf %39 : vector<20x8xf32> to vector<20x8xbf16>
    %c6 = arith.constant 6 : index
    %c0_21 = arith.constant 0 : index
    %c0_22 = arith.constant 0 : index
    %41 = vector.load %arg2[%c6, %c0_21, %c0_22] : memref<34x8x64xbf16, #tpu.memory_space<vmem>>, vector<1x8x64xbf16>
    %42 = vector.shape_cast %41 : vector<1x8x64xbf16> to vector<8x64xbf16>
    %cst_23 = arith.constant dense<0.000000e+00> : vector<20x64xf32>
    %43 = tpu.matmul %40, %42, %cst_23 {dimension_numbers = #tpu.dot_dimension_numbers<[1], [0], [0], [1], [0, 0, 1, 1], [], []>} : vector<20x8xbf16>, vector<8x64xbf16>, vector<20x64xf32> -> vector<20x64xf32>
    %44 = arith.addf %38, %43 : vector<20x64xf32>
    %45 = vector.extract_strided_slice %1 {offsets = [7, 0], sizes = [20, 8], strides = [1, 1]} : vector<53x8xf32> to vector<20x8xf32>
    %46 = arith.truncf %45 : vector<20x8xf32> to vector<20x8xbf16>
    %c7 = arith.constant 7 : index
    %c0_24 = arith.constant 0 : index
    %c0_25 = arith.constant 0 : index
    %47 = vector.load %arg2[%c7, %c0_24, %c0_25] : memref<34x8x64xbf16, #tpu.memory_space<vmem>>, vector<1x8x64xbf16>
    %48 = vector.shape_cast %47 : vector<1x8x64xbf16> to vector<8x64xbf16>
    %cst_26 = arith.constant dense<0.000000e+00> : vector<20x64xf32>
    %49 = tpu.matmul %46, %48, %cst_26 {dimension_numbers = #tpu.dot_dimension_numbers<[1], [0], [0], [1], [0, 0, 1, 1], [], []>} : vector<20x8xbf16>, vector<8x64xbf16>, vector<20x64xf32> -> vector<20x64xf32>
    %50 = arith.addf %44, %49 : vector<20x64xf32>
    %51 = vector.extract_strided_slice %1 {offsets = [8, 0], sizes = [20, 8], strides = [1, 1]} : vector<53x8xf32> to vector<20x8xf32>
    %52 = arith.truncf %51 : vector<20x8xf32> to vector<20x8xbf16>
    %c8 = arith.constant 8 : index
    %c0_27 = arith.constant 0 : index
    %c0_28 = arith.constant 0 : index
    %53 = vector.load %arg2[%c8, %c0_27, %c0_28] : memref<34x8x64xbf16, #tpu.memory_space<vmem>>, vector<1x8x64xbf16>
    %54 = vector.shape_cast %53 : vector<1x8x64xbf16> to vector<8x64xbf16>
    %cst_29 = arith.constant dense<0.000000e+00> : vector<20x64xf32>
    %55 = tpu.matmul %52, %54, %cst_29 {dimension_numbers = #tpu.dot_dimension_numbers<[1], [0], [0], [1], [0, 0, 1, 1], [], []>} : vector<20x8xbf16>, vector<8x64xbf16>, vector<20x64xf32> -> vector<20x64xf32>
    %56 = arith.addf %50, %55 : vector<20x64xf32>
    %57 = vector.extract_strided_slice %1 {offsets = [9, 0], sizes = [20, 8], strides = [1, 1]} : vector<53x8xf32> to vector<20x8xf32>
    %58 = arith.truncf %57 : vector<20x8xf32> to vector<20x8xbf16>
    %c9 = arith.constant 9 : index
    %c0_30 = arith.constant 0 : index
    %c0_31 = arith.constant 0 : index
    %59 = vector.load %arg2[%c9, %c0_30, %c0_31] : memref<34x8x64xbf16, #tpu.memory_space<vmem>>, vector<1x8x64xbf16>
    %60 = vector.shape_cast %59 : vector<1x8x64xbf16> to vector<8x64xbf16>
    %cst_32 = arith.constant dense<0.000000e+00> : vector<20x64xf32>
    %61 = tpu.matmul %58, %60, %cst_32 {dimension_numbers = #tpu.dot_dimension_numbers<[1], [0], [0], [1], [0, 0, 1, 1], [], []>} : vector<20x8xbf16>, vector<8x64xbf16>, vector<20x64xf32> -> vector<20x64xf32>
    %62 = arith.addf %56, %61 : vector<20x64xf32>
    %63 = vector.extract_strided_slice %1 {offsets = [10, 0], sizes = [20, 8], strides = [1, 1]} : vector<53x8xf32> to vector<20x8xf32>
    %64 = arith.truncf %63 : vector<20x8xf32> to vector<20x8xbf16>
    %c10 = arith.constant 10 : index
    %c0_33 = arith.constant 0 : index
    %c0_34 = arith.constant 0 : index
    %65 = vector.load %arg2[%c10, %c0_33, %c0_34] : memref<34x8x64xbf16, #tpu.memory_space<vmem>>, vector<1x8x64xbf16>
    %66 = vector.shape_cast %65 : vector<1x8x64xbf16> to vector<8x64xbf16>
    %cst_35 = arith.constant dense<0.000000e+00> : vector<20x64xf32>
    %67 = tpu.matmul %64, %66, %cst_35 {dimension_numbers = #tpu.dot_dimension_numbers<[1], [0], [0], [1], [0, 0, 1, 1], [], []>} : vector<20x8xbf16>, vector<8x64xbf16>, vector<20x64xf32> -> vector<20x64xf32>
    %68 = arith.addf %62, %67 : vector<20x64xf32>
    %69 = vector.extract_strided_slice %1 {offsets = [11, 0], sizes = [20, 8], strides = [1, 1]} : vector<53x8xf32> to vector<20x8xf32>
    %70 = arith.truncf %69 : vector<20x8xf32> to vector<20x8xbf16>
    %c11 = arith.constant 11 : index
    %c0_36 = arith.constant 0 : index
    %c0_37 = arith.constant 0 : index
    %71 = vector.load %arg2[%c11, %c0_36, %c0_37] : memref<34x8x64xbf16, #tpu.memory_space<vmem>>, vector<1x8x64xbf16>
    %72 = vector.shape_cast %71 : vector<1x8x64xbf16> to vector<8x64xbf16>
    %cst_38 = arith.constant dense<0.000000e+00> : vector<20x64xf32>
    %73 = tpu.matmul %70, %72, %cst_38 {dimension_numbers = #tpu.dot_dimension_numbers<[1], [0], [0], [1], [0, 0, 1, 1], [], []>} : vector<20x8xbf16>, vector<8x64xbf16>, vector<20x64xf32> -> vector<20x64xf32>
    %74 = arith.addf %68, %73 : vector<20x64xf32>
    %75 = vector.extract_strided_slice %1 {offsets = [12, 0], sizes = [20, 8], strides = [1, 1]} : vector<53x8xf32> to vector<20x8xf32>
    %76 = arith.truncf %75 : vector<20x8xf32> to vector<20x8xbf16>
    %c12 = arith.constant 12 : index
    %c0_39 = arith.constant 0 : index
    %c0_40 = arith.constant 0 : index
    %77 = vector.load %arg2[%c12, %c0_39, %c0_40] : memref<34x8x64xbf16, #tpu.memory_space<vmem>>, vector<1x8x64xbf16>
    %78 = vector.shape_cast %77 : vector<1x8x64xbf16> to vector<8x64xbf16>
    %cst_41 = arith.constant dense<0.000000e+00> : vector<20x64xf32>
    %79 = tpu.matmul %76, %78, %cst_41 {dimension_numbers = #tpu.dot_dimension_numbers<[1], [0], [0], [1], [0, 0, 1, 1], [], []>} : vector<20x8xbf16>, vector<8x64xbf16>, vector<20x64xf32> -> vector<20x64xf32>
    %80 = arith.addf %74, %79 : vector<20x64xf32>
    %81 = vector.extract_strided_slice %1 {offsets = [13, 0], sizes = [20, 8], strides = [1, 1]} : vector<53x8xf32> to vector<20x8xf32>
    %82 = arith.truncf %81 : vector<20x8xf32> to vector<20x8xbf16>
    %c13 = arith.constant 13 : index
    %c0_42 = arith.constant 0 : index
    %c0_43 = arith.constant 0 : index
    %83 = vector.load %arg2[%c13, %c0_42, %c0_43] : memref<34x8x64xbf16, #tpu.memory_space<vmem>>, vector<1x8x64xbf16>
    %84 = vector.shape_cast %83 : vector<1x8x64xbf16> to vector<8x64xbf16>
    %cst_44 = arith.constant dense<0.000000e+00> : vector<20x64xf32>
    %85 = tpu.matmul %82, %84, %cst_44 {dimension_numbers = #tpu.dot_dimension_numbers<[1], [0], [0], [1], [0, 0, 1, 1], [], []>} : vector<20x8xbf16>, vector<8x64xbf16>, vector<20x64xf32> -> vector<20x64xf32>
    %86 = arith.addf %80, %85 : vector<20x64xf32>
    %87 = vector.extract_strided_slice %1 {offsets = [14, 0], sizes = [20, 8], strides = [1, 1]} : vector<53x8xf32> to vector<20x8xf32>
    %88 = arith.truncf %87 : vector<20x8xf32> to vector<20x8xbf16>
    %c14 = arith.constant 14 : index
    %c0_45 = arith.constant 0 : index
    %c0_46 = arith.constant 0 : index
    %89 = vector.load %arg2[%c14, %c0_45, %c0_46] : memref<34x8x64xbf16, #tpu.memory_space<vmem>>, vector<1x8x64xbf16>
    %90 = vector.shape_cast %89 : vector<1x8x64xbf16> to vector<8x64xbf16>
    %cst_47 = arith.constant dense<0.000000e+00> : vector<20x64xf32>
    %91 = tpu.matmul %88, %90, %cst_47 {dimension_numbers = #tpu.dot_dimension_numbers<[1], [0], [0], [1], [0, 0, 1, 1], [], []>} : vector<20x8xbf16>, vector<8x64xbf16>, vector<20x64xf32> -> vector<20x64xf32>
    %92 = arith.addf %86, %91 : vector<20x64xf32>
    %93 = vector.extract_strided_slice %1 {offsets = [15, 0], sizes = [20, 8], strides = [1, 1]} : vector<53x8xf32> to vector<20x8xf32>
    %94 = arith.truncf %93 : vector<20x8xf32> to vector<20x8xbf16>
    %c15 = arith.constant 15 : index
    %c0_48 = arith.constant 0 : index
    %c0_49 = arith.constant 0 : index
    %95 = vector.load %arg2[%c15, %c0_48, %c0_49] : memref<34x8x64xbf16, #tpu.memory_space<vmem>>, vector<1x8x64xbf16>
    %96 = vector.shape_cast %95 : vector<1x8x64xbf16> to vector<8x64xbf16>
    %cst_50 = arith.constant dense<0.000000e+00> : vector<20x64xf32>
    %97 = tpu.matmul %94, %96, %cst_50 {dimension_numbers = #tpu.dot_dimension_numbers<[1], [0], [0], [1], [0, 0, 1, 1], [], []>} : vector<20x8xbf16>, vector<8x64xbf16>, vector<20x64xf32> -> vector<20x64xf32>
    %98 = arith.addf %92, %97 : vector<20x64xf32>
    %99 = vector.extract_strided_slice %1 {offsets = [16, 0], sizes = [20, 8], strides = [1, 1]} : vector<53x8xf32> to vector<20x8xf32>
    %100 = arith.truncf %99 : vector<20x8xf32> to vector<20x8xbf16>
    %c16 = arith.constant 16 : index
    %c0_51 = arith.constant 0 : index
    %c0_52 = arith.constant 0 : index
    %101 = vector.load %arg2[%c16, %c0_51, %c0_52] : memref<34x8x64xbf16, #tpu.memory_space<vmem>>, vector<1x8x64xbf16>
    %102 = vector.shape_cast %101 : vector<1x8x64xbf16> to vector<8x64xbf16>
    %cst_53 = arith.constant dense<0.000000e+00> : vector<20x64xf32>
    %103 = tpu.matmul %100, %102, %cst_53 {dimension_numbers = #tpu.dot_dimension_numbers<[1], [0], [0], [1], [0, 0, 1, 1], [], []>} : vector<20x8xbf16>, vector<8x64xbf16>, vector<20x64xf32> -> vector<20x64xf32>
    %104 = arith.addf %98, %103 : vector<20x64xf32>
    %105 = vector.extract_strided_slice %1 {offsets = [17, 0], sizes = [20, 8], strides = [1, 1]} : vector<53x8xf32> to vector<20x8xf32>
    %106 = arith.truncf %105 : vector<20x8xf32> to vector<20x8xbf16>
    %c17 = arith.constant 17 : index
    %c0_54 = arith.constant 0 : index
    %c0_55 = arith.constant 0 : index
    %107 = vector.load %arg2[%c17, %c0_54, %c0_55] : memref<34x8x64xbf16, #tpu.memory_space<vmem>>, vector<1x8x64xbf16>
    %108 = vector.shape_cast %107 : vector<1x8x64xbf16> to vector<8x64xbf16>
    %cst_56 = arith.constant dense<0.000000e+00> : vector<20x64xf32>
    %109 = tpu.matmul %106, %108, %cst_56 {dimension_numbers = #tpu.dot_dimension_numbers<[1], [0], [0], [1], [0, 0, 1, 1], [], []>} : vector<20x8xbf16>, vector<8x64xbf16>, vector<20x64xf32> -> vector<20x64xf32>
    %110 = arith.addf %104, %109 : vector<20x64xf32>
    %111 = vector.extract_strided_slice %1 {offsets = [18, 0], sizes = [20, 8], strides = [1, 1]} : vector<53x8xf32> to vector<20x8xf32>
    %112 = arith.truncf %111 : vector<20x8xf32> to vector<20x8xbf16>
    %c18 = arith.constant 18 : index
    %c0_57 = arith.constant 0 : index
    %c0_58 = arith.constant 0 : index
    %113 = vector.load %arg2[%c18, %c0_57, %c0_58] : memref<34x8x64xbf16, #tpu.memory_space<vmem>>, vector<1x8x64xbf16>
    %114 = vector.shape_cast %113 : vector<1x8x64xbf16> to vector<8x64xbf16>
    %cst_59 = arith.constant dense<0.000000e+00> : vector<20x64xf32>
    %115 = tpu.matmul %112, %114, %cst_59 {dimension_numbers = #tpu.dot_dimension_numbers<[1], [0], [0], [1], [0, 0, 1, 1], [], []>} : vector<20x8xbf16>, vector<8x64xbf16>, vector<20x64xf32> -> vector<20x64xf32>
    %116 = arith.addf %110, %115 : vector<20x64xf32>
    %117 = vector.extract_strided_slice %1 {offsets = [19, 0], sizes = [20, 8], strides = [1, 1]} : vector<53x8xf32> to vector<20x8xf32>
    %118 = arith.truncf %117 : vector<20x8xf32> to vector<20x8xbf16>
    %c19 = arith.constant 19 : index
    %c0_60 = arith.constant 0 : index
    %c0_61 = arith.constant 0 : index
    %119 = vector.load %arg2[%c19, %c0_60, %c0_61] : memref<34x8x64xbf16, #tpu.memory_space<vmem>>, vector<1x8x64xbf16>
    %120 = vector.shape_cast %119 : vector<1x8x64xbf16> to vector<8x64xbf16>
    %cst_62 = arith.constant dense<0.000000e+00> : vector<20x64xf32>
    %121 = tpu.matmul %118, %120, %cst_62 {dimension_numbers = #tpu.dot_dimension_numbers<[1], [0], [0], [1], [0, 0, 1, 1], [], []>} : vector<20x8xbf16>, vector<8x64xbf16>, vector<20x64xf32> -> vector<20x64xf32>
    %122 = arith.addf %116, %121 : vector<20x64xf32>
    %123 = vector.extract_strided_slice %1 {offsets = [20, 0], sizes = [20, 8], strides = [1, 1]} : vector<53x8xf32> to vector<20x8xf32>
    %124 = arith.truncf %123 : vector<20x8xf32> to vector<20x8xbf16>
    %c20 = arith.constant 20 : index
    %c0_63 = arith.constant 0 : index
    %c0_64 = arith.constant 0 : index
    %125 = vector.load %arg2[%c20, %c0_63, %c0_64] : memref<34x8x64xbf16, #tpu.memory_space<vmem>>, vector<1x8x64xbf16>
    %126 = vector.shape_cast %125 : vector<1x8x64xbf16> to vector<8x64xbf16>
    %cst_65 = arith.constant dense<0.000000e+00> : vector<20x64xf32>
    %127 = tpu.matmul %124, %126, %cst_65 {dimension_numbers = #tpu.dot_dimension_numbers<[1], [0], [0], [1], [0, 0, 1, 1], [], []>} : vector<20x8xbf16>, vector<8x64xbf16>, vector<20x64xf32> -> vector<20x64xf32>
    %128 = arith.addf %122, %127 : vector<20x64xf32>
    %129 = vector.extract_strided_slice %1 {offsets = [21, 0], sizes = [20, 8], strides = [1, 1]} : vector<53x8xf32> to vector<20x8xf32>
    %130 = arith.truncf %129 : vector<20x8xf32> to vector<20x8xbf16>
    %c21 = arith.constant 21 : index
    %c0_66 = arith.constant 0 : index
    %c0_67 = arith.constant 0 : index
    %131 = vector.load %arg2[%c21, %c0_66, %c0_67] : memref<34x8x64xbf16, #tpu.memory_space<vmem>>, vector<1x8x64xbf16>
    %132 = vector.shape_cast %131 : vector<1x8x64xbf16> to vector<8x64xbf16>
    %cst_68 = arith.constant dense<0.000000e+00> : vector<20x64xf32>
    %133 = tpu.matmul %130, %132, %cst_68 {dimension_numbers = #tpu.dot_dimension_numbers<[1], [0], [0], [1], [0, 0, 1, 1], [], []>} : vector<20x8xbf16>, vector<8x64xbf16>, vector<20x64xf32> -> vector<20x64xf32>
    %134 = arith.addf %128, %133 : vector<20x64xf32>
    %135 = vector.extract_strided_slice %1 {offsets = [22, 0], sizes = [20, 8], strides = [1, 1]} : vector<53x8xf32> to vector<20x8xf32>
    %136 = arith.truncf %135 : vector<20x8xf32> to vector<20x8xbf16>
    %c22 = arith.constant 22 : index
    %c0_69 = arith.constant 0 : index
    %c0_70 = arith.constant 0 : index
    %137 = vector.load %arg2[%c22, %c0_69, %c0_70] : memref<34x8x64xbf16, #tpu.memory_space<vmem>>, vector<1x8x64xbf16>
    %138 = vector.shape_cast %137 : vector<1x8x64xbf16> to vector<8x64xbf16>
    %cst_71 = arith.constant dense<0.000000e+00> : vector<20x64xf32>
    %139 = tpu.matmul %136, %138, %cst_71 {dimension_numbers = #tpu.dot_dimension_numbers<[1], [0], [0], [1], [0, 0, 1, 1], [], []>} : vector<20x8xbf16>, vector<8x64xbf16>, vector<20x64xf32> -> vector<20x64xf32>
    %140 = arith.addf %134, %139 : vector<20x64xf32>
    %141 = vector.extract_strided_slice %1 {offsets = [23, 0], sizes = [20, 8], strides = [1, 1]} : vector<53x8xf32> to vector<20x8xf32>
    %142 = arith.truncf %141 : vector<20x8xf32> to vector<20x8xbf16>
    %c23 = arith.constant 23 : index
    %c0_72 = arith.constant 0 : index
    %c0_73 = arith.constant 0 : index
    %143 = vector.load %arg2[%c23, %c0_72, %c0_73] : memref<34x8x64xbf16, #tpu.memory_space<vmem>>, vector<1x8x64xbf16>
    %144 = vector.shape_cast %143 : vector<1x8x64xbf16> to vector<8x64xbf16>
    %cst_74 = arith.constant dense<0.000000e+00> : vector<20x64xf32>
    %145 = tpu.matmul %142, %144, %cst_74 {dimension_numbers = #tpu.dot_dimension_numbers<[1], [0], [0], [1], [0, 0, 1, 1], [], []>} : vector<20x8xbf16>, vector<8x64xbf16>, vector<20x64xf32> -> vector<20x64xf32>
    %146 = arith.addf %140, %145 : vector<20x64xf32>
    %147 = vector.extract_strided_slice %1 {offsets = [24, 0], sizes = [20, 8], strides = [1, 1]} : vector<53x8xf32> to vector<20x8xf32>
    %148 = arith.truncf %147 : vector<20x8xf32> to vector<20x8xbf16>
    %c24 = arith.constant 24 : index
    %c0_75 = arith.constant 0 : index
    %c0_76 = arith.constant 0 : index
    %149 = vector.load %arg2[%c24, %c0_75, %c0_76] : memref<34x8x64xbf16, #tpu.memory_space<vmem>>, vector<1x8x64xbf16>
    %150 = vector.shape_cast %149 : vector<1x8x64xbf16> to vector<8x64xbf16>
    %cst_77 = arith.constant dense<0.000000e+00> : vector<20x64xf32>
    %151 = tpu.matmul %148, %150, %cst_77 {dimension_numbers = #tpu.dot_dimension_numbers<[1], [0], [0], [1], [0, 0, 1, 1], [], []>} : vector<20x8xbf16>, vector<8x64xbf16>, vector<20x64xf32> -> vector<20x64xf32>
    %152 = arith.addf %146, %151 : vector<20x64xf32>
    %153 = vector.extract_strided_slice %1 {offsets = [25, 0], sizes = [20, 8], strides = [1, 1]} : vector<53x8xf32> to vector<20x8xf32>
    %154 = arith.truncf %153 : vector<20x8xf32> to vector<20x8xbf16>
    %c25 = arith.constant 25 : index
    %c0_78 = arith.constant 0 : index
    %c0_79 = arith.constant 0 : index
    %155 = vector.load %arg2[%c25, %c0_78, %c0_79] : memref<34x8x64xbf16, #tpu.memory_space<vmem>>, vector<1x8x64xbf16>
    %156 = vector.shape_cast %155 : vector<1x8x64xbf16> to vector<8x64xbf16>
    %cst_80 = arith.constant dense<0.000000e+00> : vector<20x64xf32>
    %157 = tpu.matmul %154, %156, %cst_80 {dimension_numbers = #tpu.dot_dimension_numbers<[1], [0], [0], [1], [0, 0, 1, 1], [], []>} : vector<20x8xbf16>, vector<8x64xbf16>, vector<20x64xf32> -> vector<20x64xf32>
    %158 = arith.addf %152, %157 : vector<20x64xf32>
    %159 = vector.extract_strided_slice %1 {offsets = [26, 0], sizes = [20, 8], strides = [1, 1]} : vector<53x8xf32> to vector<20x8xf32>
    %160 = arith.truncf %159 : vector<20x8xf32> to vector<20x8xbf16>
    %c26 = arith.constant 26 : index
    %c0_81 = arith.constant 0 : index
    %c0_82 = arith.constant 0 : index
    %161 = vector.load %arg2[%c26, %c0_81, %c0_82] : memref<34x8x64xbf16, #tpu.memory_space<vmem>>, vector<1x8x64xbf16>
    %162 = vector.shape_cast %161 : vector<1x8x64xbf16> to vector<8x64xbf16>
    %cst_83 = arith.constant dense<0.000000e+00> : vector<20x64xf32>
    %163 = tpu.matmul %160, %162, %cst_83 {dimension_numbers = #tpu.dot_dimension_numbers<[1], [0], [0], [1], [0, 0, 1, 1], [], []>} : vector<20x8xbf16>, vector<8x64xbf16>, vector<20x64xf32> -> vector<20x64xf32>
    %164 = arith.addf %158, %163 : vector<20x64xf32>
    %165 = vector.extract_strided_slice %1 {offsets = [27, 0], sizes = [20, 8], strides = [1, 1]} : vector<53x8xf32> to vector<20x8xf32>
    %166 = arith.truncf %165 : vector<20x8xf32> to vector<20x8xbf16>
    %c27 = arith.constant 27 : index
    %c0_84 = arith.constant 0 : index
    %c0_85 = arith.constant 0 : index
    %167 = vector.load %arg2[%c27, %c0_84, %c0_85] : memref<34x8x64xbf16, #tpu.memory_space<vmem>>, vector<1x8x64xbf16>
    %168 = vector.shape_cast %167 : vector<1x8x64xbf16> to vector<8x64xbf16>
    %cst_86 = arith.constant dense<0.000000e+00> : vector<20x64xf32>
    %169 = tpu.matmul %166, %168, %cst_86 {dimension_numbers = #tpu.dot_dimension_numbers<[1], [0], [0], [1], [0, 0, 1, 1], [], []>} : vector<20x8xbf16>, vector<8x64xbf16>, vector<20x64xf32> -> vector<20x64xf32>
    %170 = arith.addf %164, %169 : vector<20x64xf32>
    %171 = vector.extract_strided_slice %1 {offsets = [28, 0], sizes = [20, 8], strides = [1, 1]} : vector<53x8xf32> to vector<20x8xf32>
    %172 = arith.truncf %171 : vector<20x8xf32> to vector<20x8xbf16>
    %c28 = arith.constant 28 : index
    %c0_87 = arith.constant 0 : index
    %c0_88 = arith.constant 0 : index
    %173 = vector.load %arg2[%c28, %c0_87, %c0_88] : memref<34x8x64xbf16, #tpu.memory_space<vmem>>, vector<1x8x64xbf16>
    %174 = vector.shape_cast %173 : vector<1x8x64xbf16> to vector<8x64xbf16>
    %cst_89 = arith.constant dense<0.000000e+00> : vector<20x64xf32>
    %175 = tpu.matmul %172, %174, %cst_89 {dimension_numbers = #tpu.dot_dimension_numbers<[1], [0], [0], [1], [0, 0, 1, 1], [], []>} : vector<20x8xbf16>, vector<8x64xbf16>, vector<20x64xf32> -> vector<20x64xf32>
    %176 = arith.addf %170, %175 : vector<20x64xf32>
    %177 = vector.extract_strided_slice %1 {offsets = [29, 0], sizes = [20, 8], strides = [1, 1]} : vector<53x8xf32> to vector<20x8xf32>
    %178 = arith.truncf %177 : vector<20x8xf32> to vector<20x8xbf16>
    %c29 = arith.constant 29 : index
    %c0_90 = arith.constant 0 : index
    %c0_91 = arith.constant 0 : index
    %179 = vector.load %arg2[%c29, %c0_90, %c0_91] : memref<34x8x64xbf16, #tpu.memory_space<vmem>>, vector<1x8x64xbf16>
    %180 = vector.shape_cast %179 : vector<1x8x64xbf16> to vector<8x64xbf16>
    %cst_92 = arith.constant dense<0.000000e+00> : vector<20x64xf32>
    %181 = tpu.matmul %178, %180, %cst_92 {dimension_numbers = #tpu.dot_dimension_numbers<[1], [0], [0], [1], [0, 0, 1, 1], [], []>} : vector<20x8xbf16>, vector<8x64xbf16>, vector<20x64xf32> -> vector<20x64xf32>
    %182 = arith.addf %176, %181 : vector<20x64xf32>
    %183 = vector.extract_strided_slice %1 {offsets = [30, 0], sizes = [20, 8], strides = [1, 1]} : vector<53x8xf32> to vector<20x8xf32>
    %184 = arith.truncf %183 : vector<20x8xf32> to vector<20x8xbf16>
    %c30 = arith.constant 30 : index
    %c0_93 = arith.constant 0 : index
    %c0_94 = arith.constant 0 : index
    %185 = vector.load %arg2[%c30, %c0_93, %c0_94] : memref<34x8x64xbf16, #tpu.memory_space<vmem>>, vector<1x8x64xbf16>
    %186 = vector.shape_cast %185 : vector<1x8x64xbf16> to vector<8x64xbf16>
    %cst_95 = arith.constant dense<0.000000e+00> : vector<20x64xf32>
    %187 = tpu.matmul %184, %186, %cst_95 {dimension_numbers = #tpu.dot_dimension_numbers<[1], [0], [0], [1], [0, 0, 1, 1], [], []>} : vector<20x8xbf16>, vector<8x64xbf16>, vector<20x64xf32> -> vector<20x64xf32>
    %188 = arith.addf %182, %187 : vector<20x64xf32>
    %189 = vector.extract_strided_slice %1 {offsets = [31, 0], sizes = [20, 8], strides = [1, 1]} : vector<53x8xf32> to vector<20x8xf32>
    %190 = arith.truncf %189 : vector<20x8xf32> to vector<20x8xbf16>
    %c31 = arith.constant 31 : index
    %c0_96 = arith.constant 0 : index
    %c0_97 = arith.constant 0 : index
    %191 = vector.load %arg2[%c31, %c0_96, %c0_97] : memref<34x8x64xbf16, #tpu.memory_space<vmem>>, vector<1x8x64xbf16>
    %192 = vector.shape_cast %191 : vector<1x8x64xbf16> to vector<8x64xbf16>
    %cst_98 = arith.constant dense<0.000000e+00> : vector<20x64xf32>
    %193 = tpu.matmul %190, %192, %cst_98 {dimension_numbers = #tpu.dot_dimension_numbers<[1], [0], [0], [1], [0, 0, 1, 1], [], []>} : vector<20x8xbf16>, vector<8x64xbf16>, vector<20x64xf32> -> vector<20x64xf32>
    %194 = arith.addf %188, %193 : vector<20x64xf32>
    %195 = vector.extract_strided_slice %1 {offsets = [32, 0], sizes = [20, 8], strides = [1, 1]} : vector<53x8xf32> to vector<20x8xf32>
    %196 = arith.truncf %195 : vector<20x8xf32> to vector<20x8xbf16>
    %c32 = arith.constant 32 : index
    %c0_99 = arith.constant 0 : index
    %c0_100 = arith.constant 0 : index
    %197 = vector.load %arg2[%c32, %c0_99, %c0_100] : memref<34x8x64xbf16, #tpu.memory_space<vmem>>, vector<1x8x64xbf16>
    %198 = vector.shape_cast %197 : vector<1x8x64xbf16> to vector<8x64xbf16>
    %cst_101 = arith.constant dense<0.000000e+00> : vector<20x64xf32>
    %199 = tpu.matmul %196, %198, %cst_101 {dimension_numbers = #tpu.dot_dimension_numbers<[1], [0], [0], [1], [0, 0, 1, 1], [], []>} : vector<20x8xbf16>, vector<8x64xbf16>, vector<20x64xf32> -> vector<20x64xf32>
    %200 = arith.addf %194, %199 : vector<20x64xf32>
    %201 = vector.extract_strided_slice %1 {offsets = [33, 0], sizes = [20, 8], strides = [1, 1]} : vector<53x8xf32> to vector<20x8xf32>
    %202 = arith.truncf %201 : vector<20x8xf32> to vector<20x8xbf16>
    %c33 = arith.constant 33 : index
    %c0_102 = arith.constant 0 : index
    %c0_103 = arith.constant 0 : index
    %203 = vector.load %arg2[%c33, %c0_102, %c0_103] : memref<34x8x64xbf16, #tpu.memory_space<vmem>>, vector<1x8x64xbf16>
    %204 = vector.shape_cast %203 : vector<1x8x64xbf16> to vector<8x64xbf16>
    %cst_104 = arith.constant dense<0.000000e+00> : vector<20x64xf32>
    %205 = tpu.matmul %202, %204, %cst_104 {dimension_numbers = #tpu.dot_dimension_numbers<[1], [0], [0], [1], [0, 0, 1, 1], [], []>} : vector<20x8xbf16>, vector<8x64xbf16>, vector<20x64xf32> -> vector<20x64xf32>
    %206 = arith.addf %200, %205 : vector<20x64xf32>
    %c0_105 = arith.constant 0 : index
    %c0_106 = arith.constant 0 : index
    %207 = vector.load %arg3[%c0_105, %c0_106] : memref<2x64xf32, #tpu.memory_space<vmem>>, vector<1x64xf32>
    %208 = vector.broadcast %207 : vector<1x64xf32> to vector<20x64xf32>
    %209 = arith.mulf %206, %208 : vector<20x64xf32>
    %c1_107 = arith.constant 1 : index
    %c0_108 = arith.constant 0 : index
    %210 = vector.load %arg3[%c1_107, %c0_108] : memref<2x64xf32, #tpu.memory_space<vmem>>, vector<1x64xf32>
    %211 = vector.broadcast %210 : vector<1x64xf32> to vector<20x64xf32>
    %212 = arith.addf %209, %211 : vector<20x64xf32>
    %cst_109 = arith.constant 0.000000e+00 : f32
    %213 = vector.broadcast %cst_109 : f32 to vector<20x64xf32>
    %214 = arith.maximumf %212, %213 : vector<20x64xf32>
    %cst_110 = arith.constant 0.000000e+00 : f32
    %215 = vector.broadcast %cst_110 : f32 to vector<15x128xf32>
    %216 = vector.extract_strided_slice %214 {offsets = [0, 0], sizes = [15, 64], strides = [1, 1]} : vector<20x64xf32> to vector<15x64xf32>
    %217 = arith.truncf %216 : vector<15x64xf32> to vector<15x64xbf16>
    %c0_111 = arith.constant 0 : index
    %c0_112 = arith.constant 0 : index
    %c0_113 = arith.constant 0 : index
    %218 = vector.load %arg4[%c0_111, %c0_112, %c0_113] : memref<6x64x128xbf16, #tpu.memory_space<vmem>>, vector<1x64x128xbf16>
    %219 = vector.shape_cast %218 : vector<1x64x128xbf16> to vector<64x128xbf16>
    %cst_114 = arith.constant dense<0.000000e+00> : vector<15x128xf32>
    %220 = tpu.matmul %217, %219, %cst_114 {dimension_numbers = #tpu.dot_dimension_numbers<[1], [0], [0], [1], [0, 0, 1, 1], [], []>} : vector<15x64xbf16>, vector<64x128xbf16>, vector<15x128xf32> -> vector<15x128xf32>
    %221 = arith.addf %215, %220 : vector<15x128xf32>
    %222 = vector.extract_strided_slice %214 {offsets = [1, 0], sizes = [15, 64], strides = [1, 1]} : vector<20x64xf32> to vector<15x64xf32>
    %223 = arith.truncf %222 : vector<15x64xf32> to vector<15x64xbf16>
    %c1_115 = arith.constant 1 : index
    %c0_116 = arith.constant 0 : index
    %c0_117 = arith.constant 0 : index
    %224 = vector.load %arg4[%c1_115, %c0_116, %c0_117] : memref<6x64x128xbf16, #tpu.memory_space<vmem>>, vector<1x64x128xbf16>
    %225 = vector.shape_cast %224 : vector<1x64x128xbf16> to vector<64x128xbf16>
    %cst_118 = arith.constant dense<0.000000e+00> : vector<15x128xf32>
    %226 = tpu.matmul %223, %225, %cst_118 {dimension_numbers = #tpu.dot_dimension_numbers<[1], [0], [0], [1], [0, 0, 1, 1], [], []>} : vector<15x64xbf16>, vector<64x128xbf16>, vector<15x128xf32> -> vector<15x128xf32>
    %227 = arith.addf %221, %226 : vector<15x128xf32>
    %228 = vector.extract_strided_slice %214 {offsets = [2, 0], sizes = [15, 64], strides = [1, 1]} : vector<20x64xf32> to vector<15x64xf32>
    %229 = arith.truncf %228 : vector<15x64xf32> to vector<15x64xbf16>
    %c2_119 = arith.constant 2 : index
    %c0_120 = arith.constant 0 : index
    %c0_121 = arith.constant 0 : index
    %230 = vector.load %arg4[%c2_119, %c0_120, %c0_121] : memref<6x64x128xbf16, #tpu.memory_space<vmem>>, vector<1x64x128xbf16>
    %231 = vector.shape_cast %230 : vector<1x64x128xbf16> to vector<64x128xbf16>
    %cst_122 = arith.constant dense<0.000000e+00> : vector<15x128xf32>
    %232 = tpu.matmul %229, %231, %cst_122 {dimension_numbers = #tpu.dot_dimension_numbers<[1], [0], [0], [1], [0, 0, 1, 1], [], []>} : vector<15x64xbf16>, vector<64x128xbf16>, vector<15x128xf32> -> vector<15x128xf32>
    %233 = arith.addf %227, %232 : vector<15x128xf32>
    %234 = vector.extract_strided_slice %214 {offsets = [3, 0], sizes = [15, 64], strides = [1, 1]} : vector<20x64xf32> to vector<15x64xf32>
    %235 = arith.truncf %234 : vector<15x64xf32> to vector<15x64xbf16>
    %c3_123 = arith.constant 3 : index
    %c0_124 = arith.constant 0 : index
    %c0_125 = arith.constant 0 : index
    %236 = vector.load %arg4[%c3_123, %c0_124, %c0_125] : memref<6x64x128xbf16, #tpu.memory_space<vmem>>, vector<1x64x128xbf16>
    %237 = vector.shape_cast %236 : vector<1x64x128xbf16> to vector<64x128xbf16>
    %cst_126 = arith.constant dense<0.000000e+00> : vector<15x128xf32>
    %238 = tpu.matmul %235, %237, %cst_126 {dimension_numbers = #tpu.dot_dimension_numbers<[1], [0], [0], [1], [0, 0, 1, 1], [], []>} : vector<15x64xbf16>, vector<64x128xbf16>, vector<15x128xf32> -> vector<15x128xf32>
    %239 = arith.addf %233, %238 : vector<15x128xf32>
    %240 = vector.extract_strided_slice %214 {offsets = [4, 0], sizes = [15, 64], strides = [1, 1]} : vector<20x64xf32> to vector<15x64xf32>
    %241 = arith.truncf %240 : vector<15x64xf32> to vector<15x64xbf16>
    %c4_127 = arith.constant 4 : index
    %c0_128 = arith.constant 0 : index
    %c0_129 = arith.constant 0 : index
    %242 = vector.load %arg4[%c4_127, %c0_128, %c0_129] : memref<6x64x128xbf16, #tpu.memory_space<vmem>>, vector<1x64x128xbf16>
    %243 = vector.shape_cast %242 : vector<1x64x128xbf16> to vector<64x128xbf16>
    %cst_130 = arith.constant dense<0.000000e+00> : vector<15x128xf32>
    %244 = tpu.matmul %241, %243, %cst_130 {dimension_numbers = #tpu.dot_dimension_numbers<[1], [0], [0], [1], [0, 0, 1, 1], [], []>} : vector<15x64xbf16>, vector<64x128xbf16>, vector<15x128xf32> -> vector<15x128xf32>
    %245 = arith.addf %239, %244 : vector<15x128xf32>
    %246 = vector.extract_strided_slice %214 {offsets = [5, 0], sizes = [15, 64], strides = [1, 1]} : vector<20x64xf32> to vector<15x64xf32>
    %247 = arith.truncf %246 : vector<15x64xf32> to vector<15x64xbf16>
    %c5_131 = arith.constant 5 : index
    %c0_132 = arith.constant 0 : index
    %c0_133 = arith.constant 0 : index
    %248 = vector.load %arg4[%c5_131, %c0_132, %c0_133] : memref<6x64x128xbf16, #tpu.memory_space<vmem>>, vector<1x64x128xbf16>
    %249 = vector.shape_cast %248 : vector<1x64x128xbf16> to vector<64x128xbf16>
    %cst_134 = arith.constant dense<0.000000e+00> : vector<15x128xf32>
    %250 = tpu.matmul %247, %249, %cst_134 {dimension_numbers = #tpu.dot_dimension_numbers<[1], [0], [0], [1], [0, 0, 1, 1], [], []>} : vector<15x64xbf16>, vector<64x128xbf16>, vector<15x128xf32> -> vector<15x128xf32>
    %251 = arith.addf %245, %250 : vector<15x128xf32>
    %c0_135 = arith.constant 0 : index
    %c0_136 = arith.constant 0 : index
    %252 = vector.load %arg6[%c0_135, %c0_136] : memref<8x15xf32, #tpu.memory_space<vmem>>, vector<8x15xf32>
    %cst_137 = arith.constant dense<0.000000e+00> : vector<8x128xf32>
    %253 = tpu.matmul %252, %251, %cst_137 {dimension_numbers = #tpu.dot_dimension_numbers<[1], [0], [0], [1], [0, 0, 1, 1], [], []>} : vector<8x15xf32>, vector<15x128xf32>, vector<8x128xf32> -> vector<8x128xf32>
    %c0_138 = arith.constant 0 : index
    %c0_139 = arith.constant 0 : index
    %254 = vector.load %arg5[%c0_138, %c0_139] : memref<2x128xf32, #tpu.memory_space<vmem>>, vector<1x128xf32>
    %255 = vector.broadcast %254 : vector<1x128xf32> to vector<8x128xf32>
    %256 = arith.mulf %253, %255 : vector<8x128xf32>
    %c1_140 = arith.constant 1 : index
    %c0_141 = arith.constant 0 : index
    %257 = vector.load %arg5[%c1_140, %c0_141] : memref<2x128xf32, #tpu.memory_space<vmem>>, vector<1x128xf32>
    %258 = vector.broadcast %257 : vector<1x128xf32> to vector<8x128xf32>
    %259 = arith.addf %256, %258 : vector<8x128xf32>
    %cst_142 = arith.constant 0.000000e+00 : f32
    %260 = vector.broadcast %cst_142 : f32 to vector<8x128xf32>
    %261 = arith.maximumf %259, %260 : vector<8x128xf32>
    %262 = tpu.iota {dimensions = array<i32: 0>} : vector<8x128xi32>
    %c0_143 = arith.constant 0 : index
    %c0_144 = arith.constant 0 : index
    %c0_145 = arith.constant 0 : index
    %263 = vector.load %arg10[%c0_143, %c0_144, %c0_145] : memref<4x16x128xf32, #tpu.memory_space<vmem>>, vector<1x16x128xf32>
    %264 = vector.shape_cast %263 : vector<1x16x128xf32> to vector<16x128xf32>
    %265 = vector.extract_strided_slice %264 {offsets = [0, 0], sizes = [1, 128], strides = [1, 1]} : vector<16x128xf32> to vector<1x128xf32>
    %266 = vector.extract_strided_slice %264 {offsets = [1, 0], sizes = [1, 128], strides = [1, 1]} : vector<16x128xf32> to vector<1x128xf32>
    %267 = vector.extract_strided_slice %264 {offsets = [2, 0], sizes = [1, 128], strides = [1, 1]} : vector<16x128xf32> to vector<1x128xf32>
    %268 = tpu.concatenate %265, %266, %267 in 1 : vector<1x128xf32>, vector<1x128xf32>, vector<1x128xf32> -> vector<1x384xf32>
    %269 = vector.extract_strided_slice %264 {offsets = [3, 0], sizes = [1, 128], strides = [1, 1]} : vector<16x128xf32> to vector<1x128xf32>
    %270 = vector.extract_strided_slice %264 {offsets = [4, 0], sizes = [1, 128], strides = [1, 1]} : vector<16x128xf32> to vector<1x128xf32>
    %271 = vector.extract_strided_slice %264 {offsets = [5, 0], sizes = [1, 128], strides = [1, 1]} : vector<16x128xf32> to vector<1x128xf32>
    %272 = vector.extract_strided_slice %264 {offsets = [6, 0], sizes = [1, 128], strides = [1, 1]} : vector<16x128xf32> to vector<1x128xf32>
    %273 = vector.extract_strided_slice %264 {offsets = [7, 0], sizes = [1, 128], strides = [1, 1]} : vector<16x128xf32> to vector<1x128xf32>
    %274 = vector.extract_strided_slice %264 {offsets = [8, 0], sizes = [1, 128], strides = [1, 1]} : vector<16x128xf32> to vector<1x128xf32>
    %275 = vector.extract_strided_slice %264 {offsets = [9, 0], sizes = [1, 128], strides = [1, 1]} : vector<16x128xf32> to vector<1x128xf32>
    %276 = vector.extract_strided_slice %264 {offsets = [10, 0], sizes = [1, 128], strides = [1, 1]} : vector<16x128xf32> to vector<1x128xf32>
    %277 = vector.extract_strided_slice %264 {offsets = [11, 0], sizes = [1, 128], strides = [1, 1]} : vector<16x128xf32> to vector<1x128xf32>
    %278 = vector.extract_strided_slice %264 {offsets = [12, 0], sizes = [1, 128], strides = [1, 1]} : vector<16x128xf32> to vector<1x128xf32>
    %279 = arith.truncf %261 : vector<8x128xf32> to vector<8x128xbf16>
    %c0_146 = arith.constant 0 : index
    %c0_147 = arith.constant 0 : index
    %c0_148 = arith.constant 0 : index
    %280 = vector.load %arg7[%c0_146, %c0_147, %c0_148] : memref<4x128x384xbf16, #tpu.memory_space<vmem>>, vector<1x128x384xbf16>
    %281 = vector.shape_cast %280 : vector<1x128x384xbf16> to vector<128x384xbf16>
    %cst_149 = arith.constant dense<0.000000e+00> : vector<8x384xf32>
    %282 = tpu.matmul %279, %281, %cst_149 {dimension_numbers = #tpu.dot_dimension_numbers<[1], [0], [0], [1], [0, 0, 1, 1], [], []>} : vector<8x128xbf16>, vector<128x384xbf16>, vector<8x384xf32> -> vector<8x384xf32>
    %283 = vector.broadcast %268 : vector<1x384xf32> to vector<8x384xf32>
    %284 = arith.addf %282, %283 : vector<8x384xf32>
    %285 = arith.mulf %284, %284 : vector<8x384xf32>
    %286 = arith.mulf %284, %285 : vector<8x384xf32>
    %cst_150 = arith.constant 4.471500e-02 : f32
    %287 = vector.broadcast %cst_150 : f32 to vector<8x384xf32>
    %288 = arith.mulf %287, %286 : vector<8x384xf32>
    %289 = arith.addf %284, %288 : vector<8x384xf32>
    %cst_151 = arith.constant 0.797884583 : f32
    %290 = vector.broadcast %cst_151 : f32 to vector<8x384xf32>
    %291 = arith.mulf %290, %289 : vector<8x384xf32>
    %292 = math.tanh %291 : vector<8x384xf32>
    %cst_152 = arith.constant 1.000000e+00 : f32
    %293 = vector.broadcast %cst_152 : f32 to vector<8x384xf32>
    %294 = arith.addf %293, %292 : vector<8x384xf32>
    %cst_153 = arith.constant 5.000000e-01 : f32
    %295 = vector.broadcast %cst_153 : f32 to vector<8x384xf32>
    %296 = arith.mulf %295, %294 : vector<8x384xf32>
    %297 = arith.mulf %284, %296 : vector<8x384xf32>
    %298 = vector.extract_strided_slice %297 {offsets = [0, 0], sizes = [8, 128], strides = [1, 1]} : vector<8x384xf32> to vector<8x128xf32>
    %299 = vector.extract_strided_slice %297 {offsets = [0, 128], sizes = [8, 128], strides = [1, 1]} : vector<8x384xf32> to vector<8x128xf32>
    %300 = vector.extract_strided_slice %297 {offsets = [0, 256], sizes = [8, 128], strides = [1, 1]} : vector<8x384xf32> to vector<8x128xf32>
    %c1_i32 = arith.constant 1 : i32
    %301 = vector.broadcast %c1_i32 : i32 to vector<8x128xi32>
    %302 = arith.cmpi sge, %262, %301 : vector<8x128xi32>
    %c1_i32_154 = arith.constant 1 : i32
    %303 = tpu.dynamic_rotate %299 by %c1_i32_154 dim 0 : vector<8x128xf32>, i32 -> vector<8x128xf32>
    %cst_155 = arith.constant 0.000000e+00 : f32
    %304 = vector.broadcast %cst_155 : f32 to vector<8x128xf32>
    %305 = arith.select %302, %303, %304 : vector<8x128xi1>, vector<8x128xf32>
    %306 = vector.broadcast %269 : vector<1x128xf32> to vector<8x128xf32>
    %307 = arith.mulf %306, %305 : vector<8x128xf32>
    %308 = arith.addf %299, %307 : vector<8x128xf32>
    %309 = arith.mulf %269, %269 : vector<1x128xf32>
    %c2_i32 = arith.constant 2 : i32
    %310 = vector.broadcast %c2_i32 : i32 to vector<8x128xi32>
    %311 = arith.cmpi sge, %262, %310 : vector<8x128xi32>
    %c2_i32_156 = arith.constant 2 : i32
    %312 = tpu.dynamic_rotate %308 by %c2_i32_156 dim 0 : vector<8x128xf32>, i32 -> vector<8x128xf32>
    %cst_157 = arith.constant 0.000000e+00 : f32
    %313 = vector.broadcast %cst_157 : f32 to vector<8x128xf32>
    %314 = arith.select %311, %312, %313 : vector<8x128xi1>, vector<8x128xf32>
    %315 = vector.broadcast %309 : vector<1x128xf32> to vector<8x128xf32>
    %316 = arith.mulf %315, %314 : vector<8x128xf32>
    %317 = arith.addf %308, %316 : vector<8x128xf32>
    %318 = arith.mulf %309, %309 : vector<1x128xf32>
    %c4_i32 = arith.constant 4 : i32
    %319 = vector.broadcast %c4_i32 : i32 to vector<8x128xi32>
    %320 = arith.cmpi sge, %262, %319 : vector<8x128xi32>
    %c4_i32_158 = arith.constant 4 : i32
    %321 = tpu.dynamic_rotate %317 by %c4_i32_158 dim 0 : vector<8x128xf32>, i32 -> vector<8x128xf32>
    %cst_159 = arith.constant 0.000000e+00 : f32
    %322 = vector.broadcast %cst_159 : f32 to vector<8x128xf32>
    %323 = arith.select %320, %321, %322 : vector<8x128xi1>, vector<8x128xf32>
    %324 = vector.broadcast %318 : vector<1x128xf32> to vector<8x128xf32>
    %325 = arith.mulf %324, %323 : vector<8x128xf32>
    %326 = arith.addf %317, %325 : vector<8x128xf32>
    %327 = vector.broadcast %270 : vector<1x128xf32> to vector<8x128xf32>
    %328 = arith.mulf %327, %326 : vector<8x128xf32>
    %329 = vector.broadcast %271 : vector<1x128xf32> to vector<8x128xf32>
    %330 = arith.mulf %329, %299 : vector<8x128xf32>
    %331 = arith.addf %328, %330 : vector<8x128xf32>
    %c7_i32 = arith.constant 7 : i32
    %332 = vector.broadcast %c7_i32 : i32 to vector<8x128xi32>
    %333 = arith.cmpi slt, %262, %332 : vector<8x128xi32>
    %c7_i32_160 = arith.constant 7 : i32
    %334 = tpu.dynamic_rotate %300 by %c7_i32_160 dim 0 : vector<8x128xf32>, i32 -> vector<8x128xf32>
    %cst_161 = arith.constant 0.000000e+00 : f32
    %335 = vector.broadcast %cst_161 : f32 to vector<8x128xf32>
    %336 = arith.select %333, %334, %335 : vector<8x128xi1>, vector<8x128xf32>
    %337 = vector.broadcast %272 : vector<1x128xf32> to vector<8x128xf32>
    %338 = arith.mulf %337, %336 : vector<8x128xf32>
    %339 = arith.addf %300, %338 : vector<8x128xf32>
    %340 = arith.mulf %272, %272 : vector<1x128xf32>
    %c6_i32 = arith.constant 6 : i32
    %341 = vector.broadcast %c6_i32 : i32 to vector<8x128xi32>
    %342 = arith.cmpi slt, %262, %341 : vector<8x128xi32>
    %c6_i32_162 = arith.constant 6 : i32
    %343 = tpu.dynamic_rotate %339 by %c6_i32_162 dim 0 : vector<8x128xf32>, i32 -> vector<8x128xf32>
    %cst_163 = arith.constant 0.000000e+00 : f32
    %344 = vector.broadcast %cst_163 : f32 to vector<8x128xf32>
    %345 = arith.select %342, %343, %344 : vector<8x128xi1>, vector<8x128xf32>
    %346 = vector.broadcast %340 : vector<1x128xf32> to vector<8x128xf32>
    %347 = arith.mulf %346, %345 : vector<8x128xf32>
    %348 = arith.addf %339, %347 : vector<8x128xf32>
    %349 = arith.mulf %340, %340 : vector<1x128xf32>
    %c4_i32_164 = arith.constant 4 : i32
    %350 = vector.broadcast %c4_i32_164 : i32 to vector<8x128xi32>
    %351 = arith.cmpi slt, %262, %350 : vector<8x128xi32>
    %c4_i32_165 = arith.constant 4 : i32
    %352 = tpu.dynamic_rotate %348 by %c4_i32_165 dim 0 : vector<8x128xf32>, i32 -> vector<8x128xf32>
    %cst_166 = arith.constant 0.000000e+00 : f32
    %353 = vector.broadcast %cst_166 : f32 to vector<8x128xf32>
    %354 = arith.select %351, %352, %353 : vector<8x128xi1>, vector<8x128xf32>
    %355 = vector.broadcast %349 : vector<1x128xf32> to vector<8x128xf32>
    %356 = arith.mulf %355, %354 : vector<8x128xf32>
    %357 = arith.addf %348, %356 : vector<8x128xf32>
    %358 = vector.broadcast %273 : vector<1x128xf32> to vector<8x128xf32>
    %359 = arith.mulf %358, %357 : vector<8x128xf32>
    %360 = vector.broadcast %274 : vector<1x128xf32> to vector<8x128xf32>
    %361 = arith.mulf %360, %300 : vector<8x128xf32>
    %362 = arith.addf %359, %361 : vector<8x128xf32>
    %363 = tpu.concatenate %331, %362 in 1 : vector<8x128xf32>, vector<8x128xf32> -> vector<8x256xf32>
    %364 = arith.truncf %363 : vector<8x256xf32> to vector<8x256xbf16>
    %c0_167 = arith.constant 0 : index
    %c0_168 = arith.constant 0 : index
    %c0_169 = arith.constant 0 : index
    %365 = vector.load %arg8[%c0_167, %c0_168, %c0_169] : memref<4x256x128xbf16, #tpu.memory_space<vmem>>, vector<1x256x128xbf16>
    %366 = vector.shape_cast %365 : vector<1x256x128xbf16> to vector<256x128xbf16>
    %cst_170 = arith.constant dense<0.000000e+00> : vector<8x128xf32>
    %367 = tpu.matmul %364, %366, %cst_170 {dimension_numbers = #tpu.dot_dimension_numbers<[1], [0], [0], [1], [0, 0, 1, 1], [], []>} : vector<8x256xbf16>, vector<256x128xbf16>, vector<8x128xf32> -> vector<8x128xf32>
    %368 = vector.broadcast %275 : vector<1x128xf32> to vector<8x128xf32>
    %369 = arith.addf %367, %368 : vector<8x128xf32>
    %370 = arith.mulf %298, %369 : vector<8x128xf32>
    %371 = arith.truncf %370 : vector<8x128xf32> to vector<8x128xbf16>
    %c0_171 = arith.constant 0 : index
    %c0_172 = arith.constant 0 : index
    %c0_173 = arith.constant 0 : index
    %372 = vector.load %arg9[%c0_171, %c0_172, %c0_173] : memref<4x128x128xbf16, #tpu.memory_space<vmem>>, vector<1x128x128xbf16>
    %373 = vector.shape_cast %372 : vector<1x128x128xbf16> to vector<128x128xbf16>
    %cst_174 = arith.constant dense<0.000000e+00> : vector<8x128xf32>
    %374 = tpu.matmul %371, %373, %cst_174 {dimension_numbers = #tpu.dot_dimension_numbers<[1], [0], [0], [1], [0, 0, 1, 1], [], []>} : vector<8x128xbf16>, vector<128x128xbf16>, vector<8x128xf32> -> vector<8x128xf32>
    %375 = vector.broadcast %276 : vector<1x128xf32> to vector<8x128xf32>
    %376 = arith.addf %374, %375 : vector<8x128xf32>
    %377 = arith.addf %376, %261 : vector<8x128xf32>
    %cst_175 = arith.constant dense<0.000000e+00> : vector<8xf32>
    %378 = vector.multi_reduction <add>, %377, %cst_175 [1] : vector<8x128xf32> to vector<8xf32>
    %379 = vector.shape_cast %378 : vector<8xf32> to vector<8x1xf32>
    %cst_176 = arith.constant 1.280000e+02 : f32
    %380 = vector.broadcast %cst_176 : f32 to vector<8x1xf32>
    %381 = arith.divf %379, %380 : vector<8x1xf32>
    %382 = vector.broadcast %381 : vector<8x1xf32> to vector<8x128xf32>
    %383 = arith.subf %377, %382 : vector<8x128xf32>
    %384 = arith.mulf %383, %383 : vector<8x128xf32>
    %cst_177 = arith.constant dense<0.000000e+00> : vector<8xf32>
    %385 = vector.multi_reduction <add>, %384, %cst_177 [1] : vector<8x128xf32> to vector<8xf32>
    %386 = vector.shape_cast %385 : vector<8xf32> to vector<8x1xf32>
    %cst_178 = arith.constant 1.280000e+02 : f32
    %387 = vector.broadcast %cst_178 : f32 to vector<8x1xf32>
    %388 = arith.divf %386, %387 : vector<8x1xf32>
    %cst_179 = arith.constant 9.99999974E-6 : f32
    %389 = vector.broadcast %cst_179 : f32 to vector<8x1xf32>
    %390 = arith.addf %388, %389 : vector<8x1xf32>
    %391 = math.rsqrt %390 : vector<8x1xf32>
    %392 = vector.broadcast %391 : vector<8x1xf32> to vector<8x128xf32>
    %393 = arith.mulf %383, %392 : vector<8x128xf32>
    %394 = vector.broadcast %277 : vector<1x128xf32> to vector<8x128xf32>
    %395 = arith.mulf %393, %394 : vector<8x128xf32>
    %396 = vector.broadcast %278 : vector<1x128xf32> to vector<8x128xf32>
    %397 = arith.addf %395, %396 : vector<8x128xf32>
    %c1_180 = arith.constant 1 : index
    %c0_181 = arith.constant 0 : index
    %c0_182 = arith.constant 0 : index
    %398 = vector.load %arg10[%c1_180, %c0_181, %c0_182] : memref<4x16x128xf32, #tpu.memory_space<vmem>>, vector<1x16x128xf32>
    %399 = vector.shape_cast %398 : vector<1x16x128xf32> to vector<16x128xf32>
    %400 = vector.extract_strided_slice %399 {offsets = [0, 0], sizes = [1, 128], strides = [1, 1]} : vector<16x128xf32> to vector<1x128xf32>
    %401 = vector.extract_strided_slice %399 {offsets = [1, 0], sizes = [1, 128], strides = [1, 1]} : vector<16x128xf32> to vector<1x128xf32>
    %402 = vector.extract_strided_slice %399 {offsets = [2, 0], sizes = [1, 128], strides = [1, 1]} : vector<16x128xf32> to vector<1x128xf32>
    %403 = tpu.concatenate %400, %401, %402 in 1 : vector<1x128xf32>, vector<1x128xf32>, vector<1x128xf32> -> vector<1x384xf32>
    %404 = vector.extract_strided_slice %399 {offsets = [3, 0], sizes = [1, 128], strides = [1, 1]} : vector<16x128xf32> to vector<1x128xf32>
    %405 = vector.extract_strided_slice %399 {offsets = [4, 0], sizes = [1, 128], strides = [1, 1]} : vector<16x128xf32> to vector<1x128xf32>
    %406 = vector.extract_strided_slice %399 {offsets = [5, 0], sizes = [1, 128], strides = [1, 1]} : vector<16x128xf32> to vector<1x128xf32>
    %407 = vector.extract_strided_slice %399 {offsets = [6, 0], sizes = [1, 128], strides = [1, 1]} : vector<16x128xf32> to vector<1x128xf32>
    %408 = vector.extract_strided_slice %399 {offsets = [7, 0], sizes = [1, 128], strides = [1, 1]} : vector<16x128xf32> to vector<1x128xf32>
    %409 = vector.extract_strided_slice %399 {offsets = [8, 0], sizes = [1, 128], strides = [1, 1]} : vector<16x128xf32> to vector<1x128xf32>
    %410 = vector.extract_strided_slice %399 {offsets = [9, 0], sizes = [1, 128], strides = [1, 1]} : vector<16x128xf32> to vector<1x128xf32>
    %411 = vector.extract_strided_slice %399 {offsets = [10, 0], sizes = [1, 128], strides = [1, 1]} : vector<16x128xf32> to vector<1x128xf32>
    %412 = vector.extract_strided_slice %399 {offsets = [11, 0], sizes = [1, 128], strides = [1, 1]} : vector<16x128xf32> to vector<1x128xf32>
    %413 = vector.extract_strided_slice %399 {offsets = [12, 0], sizes = [1, 128], strides = [1, 1]} : vector<16x128xf32> to vector<1x128xf32>
    %414 = arith.truncf %397 : vector<8x128xf32> to vector<8x128xbf16>
    %c1_183 = arith.constant 1 : index
    %c0_184 = arith.constant 0 : index
    %c0_185 = arith.constant 0 : index
    %415 = vector.load %arg7[%c1_183, %c0_184, %c0_185] : memref<4x128x384xbf16, #tpu.memory_space<vmem>>, vector<1x128x384xbf16>
    %416 = vector.shape_cast %415 : vector<1x128x384xbf16> to vector<128x384xbf16>
    %cst_186 = arith.constant dense<0.000000e+00> : vector<8x384xf32>
    %417 = tpu.matmul %414, %416, %cst_186 {dimension_numbers = #tpu.dot_dimension_numbers<[1], [0], [0], [1], [0, 0, 1, 1], [], []>} : vector<8x128xbf16>, vector<128x384xbf16>, vector<8x384xf32> -> vector<8x384xf32>
    %418 = vector.broadcast %403 : vector<1x384xf32> to vector<8x384xf32>
    %419 = arith.addf %417, %418 : vector<8x384xf32>
    %420 = arith.mulf %419, %419 : vector<8x384xf32>
    %421 = arith.mulf %419, %420 : vector<8x384xf32>
    %cst_187 = arith.constant 4.471500e-02 : f32
    %422 = vector.broadcast %cst_187 : f32 to vector<8x384xf32>
    %423 = arith.mulf %422, %421 : vector<8x384xf32>
    %424 = arith.addf %419, %423 : vector<8x384xf32>
    %cst_188 = arith.constant 0.797884583 : f32
    %425 = vector.broadcast %cst_188 : f32 to vector<8x384xf32>
    %426 = arith.mulf %425, %424 : vector<8x384xf32>
    %427 = math.tanh %426 : vector<8x384xf32>
    %cst_189 = arith.constant 1.000000e+00 : f32
    %428 = vector.broadcast %cst_189 : f32 to vector<8x384xf32>
    %429 = arith.addf %428, %427 : vector<8x384xf32>
    %cst_190 = arith.constant 5.000000e-01 : f32
    %430 = vector.broadcast %cst_190 : f32 to vector<8x384xf32>
    %431 = arith.mulf %430, %429 : vector<8x384xf32>
    %432 = arith.mulf %419, %431 : vector<8x384xf32>
    %433 = vector.extract_strided_slice %432 {offsets = [0, 0], sizes = [8, 128], strides = [1, 1]} : vector<8x384xf32> to vector<8x128xf32>
    %434 = vector.extract_strided_slice %432 {offsets = [0, 128], sizes = [8, 128], strides = [1, 1]} : vector<8x384xf32> to vector<8x128xf32>
    %435 = vector.extract_strided_slice %432 {offsets = [0, 256], sizes = [8, 128], strides = [1, 1]} : vector<8x384xf32> to vector<8x128xf32>
    %c1_i32_191 = arith.constant 1 : i32
    %436 = vector.broadcast %c1_i32_191 : i32 to vector<8x128xi32>
    %437 = arith.cmpi sge, %262, %436 : vector<8x128xi32>
    %c1_i32_192 = arith.constant 1 : i32
    %438 = tpu.dynamic_rotate %434 by %c1_i32_192 dim 0 : vector<8x128xf32>, i32 -> vector<8x128xf32>
    %cst_193 = arith.constant 0.000000e+00 : f32
    %439 = vector.broadcast %cst_193 : f32 to vector<8x128xf32>
    %440 = arith.select %437, %438, %439 : vector<8x128xi1>, vector<8x128xf32>
    %441 = vector.broadcast %404 : vector<1x128xf32> to vector<8x128xf32>
    %442 = arith.mulf %441, %440 : vector<8x128xf32>
    %443 = arith.addf %434, %442 : vector<8x128xf32>
    %444 = arith.mulf %404, %404 : vector<1x128xf32>
    %c2_i32_194 = arith.constant 2 : i32
    %445 = vector.broadcast %c2_i32_194 : i32 to vector<8x128xi32>
    %446 = arith.cmpi sge, %262, %445 : vector<8x128xi32>
    %c2_i32_195 = arith.constant 2 : i32
    %447 = tpu.dynamic_rotate %443 by %c2_i32_195 dim 0 : vector<8x128xf32>, i32 -> vector<8x128xf32>
    %cst_196 = arith.constant 0.000000e+00 : f32
    %448 = vector.broadcast %cst_196 : f32 to vector<8x128xf32>
    %449 = arith.select %446, %447, %448 : vector<8x128xi1>, vector<8x128xf32>
    %450 = vector.broadcast %444 : vector<1x128xf32> to vector<8x128xf32>
    %451 = arith.mulf %450, %449 : vector<8x128xf32>
    %452 = arith.addf %443, %451 : vector<8x128xf32>
    %453 = arith.mulf %444, %444 : vector<1x128xf32>
    %c4_i32_197 = arith.constant 4 : i32
    %454 = vector.broadcast %c4_i32_197 : i32 to vector<8x128xi32>
    %455 = arith.cmpi sge, %262, %454 : vector<8x128xi32>
    %c4_i32_198 = arith.constant 4 : i32
    %456 = tpu.dynamic_rotate %452 by %c4_i32_198 dim 0 : vector<8x128xf32>, i32 -> vector<8x128xf32>
    %cst_199 = arith.constant 0.000000e+00 : f32
    %457 = vector.broadcast %cst_199 : f32 to vector<8x128xf32>
    %458 = arith.select %455, %456, %457 : vector<8x128xi1>, vector<8x128xf32>
    %459 = vector.broadcast %453 : vector<1x128xf32> to vector<8x128xf32>
    %460 = arith.mulf %459, %458 : vector<8x128xf32>
    %461 = arith.addf %452, %460 : vector<8x128xf32>
    %462 = vector.broadcast %405 : vector<1x128xf32> to vector<8x128xf32>
    %463 = arith.mulf %462, %461 : vector<8x128xf32>
    %464 = vector.broadcast %406 : vector<1x128xf32> to vector<8x128xf32>
    %465 = arith.mulf %464, %434 : vector<8x128xf32>
    %466 = arith.addf %463, %465 : vector<8x128xf32>
    %c7_i32_200 = arith.constant 7 : i32
    %467 = vector.broadcast %c7_i32_200 : i32 to vector<8x128xi32>
    %468 = arith.cmpi slt, %262, %467 : vector<8x128xi32>
    %c7_i32_201 = arith.constant 7 : i32
    %469 = tpu.dynamic_rotate %435 by %c7_i32_201 dim 0 : vector<8x128xf32>, i32 -> vector<8x128xf32>
    %cst_202 = arith.constant 0.000000e+00 : f32
    %470 = vector.broadcast %cst_202 : f32 to vector<8x128xf32>
    %471 = arith.select %468, %469, %470 : vector<8x128xi1>, vector<8x128xf32>
    %472 = vector.broadcast %407 : vector<1x128xf32> to vector<8x128xf32>
    %473 = arith.mulf %472, %471 : vector<8x128xf32>
    %474 = arith.addf %435, %473 : vector<8x128xf32>
    %475 = arith.mulf %407, %407 : vector<1x128xf32>
    %c6_i32_203 = arith.constant 6 : i32
    %476 = vector.broadcast %c6_i32_203 : i32 to vector<8x128xi32>
    %477 = arith.cmpi slt, %262, %476 : vector<8x128xi32>
    %c6_i32_204 = arith.constant 6 : i32
    %478 = tpu.dynamic_rotate %474 by %c6_i32_204 dim 0 : vector<8x128xf32>, i32 -> vector<8x128xf32>
    %cst_205 = arith.constant 0.000000e+00 : f32
    %479 = vector.broadcast %cst_205 : f32 to vector<8x128xf32>
    %480 = arith.select %477, %478, %479 : vector<8x128xi1>, vector<8x128xf32>
    %481 = vector.broadcast %475 : vector<1x128xf32> to vector<8x128xf32>
    %482 = arith.mulf %481, %480 : vector<8x128xf32>
    %483 = arith.addf %474, %482 : vector<8x128xf32>
    %484 = arith.mulf %475, %475 : vector<1x128xf32>
    %c4_i32_206 = arith.constant 4 : i32
    %485 = vector.broadcast %c4_i32_206 : i32 to vector<8x128xi32>
    %486 = arith.cmpi slt, %262, %485 : vector<8x128xi32>
    %c4_i32_207 = arith.constant 4 : i32
    %487 = tpu.dynamic_rotate %483 by %c4_i32_207 dim 0 : vector<8x128xf32>, i32 -> vector<8x128xf32>
    %cst_208 = arith.constant 0.000000e+00 : f32
    %488 = vector.broadcast %cst_208 : f32 to vector<8x128xf32>
    %489 = arith.select %486, %487, %488 : vector<8x128xi1>, vector<8x128xf32>
    %490 = vector.broadcast %484 : vector<1x128xf32> to vector<8x128xf32>
    %491 = arith.mulf %490, %489 : vector<8x128xf32>
    %492 = arith.addf %483, %491 : vector<8x128xf32>
    %493 = vector.broadcast %408 : vector<1x128xf32> to vector<8x128xf32>
    %494 = arith.mulf %493, %492 : vector<8x128xf32>
    %495 = vector.broadcast %409 : vector<1x128xf32> to vector<8x128xf32>
    %496 = arith.mulf %495, %435 : vector<8x128xf32>
    %497 = arith.addf %494, %496 : vector<8x128xf32>
    %498 = tpu.concatenate %466, %497 in 1 : vector<8x128xf32>, vector<8x128xf32> -> vector<8x256xf32>
    %499 = arith.truncf %498 : vector<8x256xf32> to vector<8x256xbf16>
    %c1_209 = arith.constant 1 : index
    %c0_210 = arith.constant 0 : index
    %c0_211 = arith.constant 0 : index
    %500 = vector.load %arg8[%c1_209, %c0_210, %c0_211] : memref<4x256x128xbf16, #tpu.memory_space<vmem>>, vector<1x256x128xbf16>
    %501 = vector.shape_cast %500 : vector<1x256x128xbf16> to vector<256x128xbf16>
    %cst_212 = arith.constant dense<0.000000e+00> : vector<8x128xf32>
    %502 = tpu.matmul %499, %501, %cst_212 {dimension_numbers = #tpu.dot_dimension_numbers<[1], [0], [0], [1], [0, 0, 1, 1], [], []>} : vector<8x256xbf16>, vector<256x128xbf16>, vector<8x128xf32> -> vector<8x128xf32>
    %503 = vector.broadcast %410 : vector<1x128xf32> to vector<8x128xf32>
    %504 = arith.addf %502, %503 : vector<8x128xf32>
    %505 = arith.mulf %433, %504 : vector<8x128xf32>
    %506 = arith.truncf %505 : vector<8x128xf32> to vector<8x128xbf16>
    %c1_213 = arith.constant 1 : index
    %c0_214 = arith.constant 0 : index
    %c0_215 = arith.constant 0 : index
    %507 = vector.load %arg9[%c1_213, %c0_214, %c0_215] : memref<4x128x128xbf16, #tpu.memory_space<vmem>>, vector<1x128x128xbf16>
    %508 = vector.shape_cast %507 : vector<1x128x128xbf16> to vector<128x128xbf16>
    %cst_216 = arith.constant dense<0.000000e+00> : vector<8x128xf32>
    %509 = tpu.matmul %506, %508, %cst_216 {dimension_numbers = #tpu.dot_dimension_numbers<[1], [0], [0], [1], [0, 0, 1, 1], [], []>} : vector<8x128xbf16>, vector<128x128xbf16>, vector<8x128xf32> -> vector<8x128xf32>
    %510 = vector.broadcast %411 : vector<1x128xf32> to vector<8x128xf32>
    %511 = arith.addf %509, %510 : vector<8x128xf32>
    %512 = arith.addf %511, %397 : vector<8x128xf32>
    %cst_217 = arith.constant dense<0.000000e+00> : vector<8xf32>
    %513 = vector.multi_reduction <add>, %512, %cst_217 [1] : vector<8x128xf32> to vector<8xf32>
    %514 = vector.shape_cast %513 : vector<8xf32> to vector<8x1xf32>
    %cst_218 = arith.constant 1.280000e+02 : f32
    %515 = vector.broadcast %cst_218 : f32 to vector<8x1xf32>
    %516 = arith.divf %514, %515 : vector<8x1xf32>
    %517 = vector.broadcast %516 : vector<8x1xf32> to vector<8x128xf32>
    %518 = arith.subf %512, %517 : vector<8x128xf32>
    %519 = arith.mulf %518, %518 : vector<8x128xf32>
    %cst_219 = arith.constant dense<0.000000e+00> : vector<8xf32>
    %520 = vector.multi_reduction <add>, %519, %cst_219 [1] : vector<8x128xf32> to vector<8xf32>
    %521 = vector.shape_cast %520 : vector<8xf32> to vector<8x1xf32>
    %cst_220 = arith.constant 1.280000e+02 : f32
    %522 = vector.broadcast %cst_220 : f32 to vector<8x1xf32>
    %523 = arith.divf %521, %522 : vector<8x1xf32>
    %cst_221 = arith.constant 9.99999974E-6 : f32
    %524 = vector.broadcast %cst_221 : f32 to vector<8x1xf32>
    %525 = arith.addf %523, %524 : vector<8x1xf32>
    %526 = math.rsqrt %525 : vector<8x1xf32>
    %527 = vector.broadcast %526 : vector<8x1xf32> to vector<8x128xf32>
    %528 = arith.mulf %518, %527 : vector<8x128xf32>
    %529 = vector.broadcast %412 : vector<1x128xf32> to vector<8x128xf32>
    %530 = arith.mulf %528, %529 : vector<8x128xf32>
    %531 = vector.broadcast %413 : vector<1x128xf32> to vector<8x128xf32>
    %532 = arith.addf %530, %531 : vector<8x128xf32>
    %c2_222 = arith.constant 2 : index
    %c0_223 = arith.constant 0 : index
    %c0_224 = arith.constant 0 : index
    %533 = vector.load %arg10[%c2_222, %c0_223, %c0_224] : memref<4x16x128xf32, #tpu.memory_space<vmem>>, vector<1x16x128xf32>
    %534 = vector.shape_cast %533 : vector<1x16x128xf32> to vector<16x128xf32>
    %535 = vector.extract_strided_slice %534 {offsets = [0, 0], sizes = [1, 128], strides = [1, 1]} : vector<16x128xf32> to vector<1x128xf32>
    %536 = vector.extract_strided_slice %534 {offsets = [1, 0], sizes = [1, 128], strides = [1, 1]} : vector<16x128xf32> to vector<1x128xf32>
    %537 = vector.extract_strided_slice %534 {offsets = [2, 0], sizes = [1, 128], strides = [1, 1]} : vector<16x128xf32> to vector<1x128xf32>
    %538 = tpu.concatenate %535, %536, %537 in 1 : vector<1x128xf32>, vector<1x128xf32>, vector<1x128xf32> -> vector<1x384xf32>
    %539 = vector.extract_strided_slice %534 {offsets = [3, 0], sizes = [1, 128], strides = [1, 1]} : vector<16x128xf32> to vector<1x128xf32>
    %540 = vector.extract_strided_slice %534 {offsets = [4, 0], sizes = [1, 128], strides = [1, 1]} : vector<16x128xf32> to vector<1x128xf32>
    %541 = vector.extract_strided_slice %534 {offsets = [5, 0], sizes = [1, 128], strides = [1, 1]} : vector<16x128xf32> to vector<1x128xf32>
    %542 = vector.extract_strided_slice %534 {offsets = [6, 0], sizes = [1, 128], strides = [1, 1]} : vector<16x128xf32> to vector<1x128xf32>
    %543 = vector.extract_strided_slice %534 {offsets = [7, 0], sizes = [1, 128], strides = [1, 1]} : vector<16x128xf32> to vector<1x128xf32>
    %544 = vector.extract_strided_slice %534 {offsets = [8, 0], sizes = [1, 128], strides = [1, 1]} : vector<16x128xf32> to vector<1x128xf32>
    %545 = vector.extract_strided_slice %534 {offsets = [9, 0], sizes = [1, 128], strides = [1, 1]} : vector<16x128xf32> to vector<1x128xf32>
    %546 = vector.extract_strided_slice %534 {offsets = [10, 0], sizes = [1, 128], strides = [1, 1]} : vector<16x128xf32> to vector<1x128xf32>
    %547 = vector.extract_strided_slice %534 {offsets = [11, 0], sizes = [1, 128], strides = [1, 1]} : vector<16x128xf32> to vector<1x128xf32>
    %548 = vector.extract_strided_slice %534 {offsets = [12, 0], sizes = [1, 128], strides = [1, 1]} : vector<16x128xf32> to vector<1x128xf32>
    %549 = arith.truncf %532 : vector<8x128xf32> to vector<8x128xbf16>
    %c2_225 = arith.constant 2 : index
    %c0_226 = arith.constant 0 : index
    %c0_227 = arith.constant 0 : index
    %550 = vector.load %arg7[%c2_225, %c0_226, %c0_227] : memref<4x128x384xbf16, #tpu.memory_space<vmem>>, vector<1x128x384xbf16>
    %551 = vector.shape_cast %550 : vector<1x128x384xbf16> to vector<128x384xbf16>
    %cst_228 = arith.constant dense<0.000000e+00> : vector<8x384xf32>
    %552 = tpu.matmul %549, %551, %cst_228 {dimension_numbers = #tpu.dot_dimension_numbers<[1], [0], [0], [1], [0, 0, 1, 1], [], []>} : vector<8x128xbf16>, vector<128x384xbf16>, vector<8x384xf32> -> vector<8x384xf32>
    %553 = vector.broadcast %538 : vector<1x384xf32> to vector<8x384xf32>
    %554 = arith.addf %552, %553 : vector<8x384xf32>
    %555 = arith.mulf %554, %554 : vector<8x384xf32>
    %556 = arith.mulf %554, %555 : vector<8x384xf32>
    %cst_229 = arith.constant 4.471500e-02 : f32
    %557 = vector.broadcast %cst_229 : f32 to vector<8x384xf32>
    %558 = arith.mulf %557, %556 : vector<8x384xf32>
    %559 = arith.addf %554, %558 : vector<8x384xf32>
    %cst_230 = arith.constant 0.797884583 : f32
    %560 = vector.broadcast %cst_230 : f32 to vector<8x384xf32>
    %561 = arith.mulf %560, %559 : vector<8x384xf32>
    %562 = math.tanh %561 : vector<8x384xf32>
    %cst_231 = arith.constant 1.000000e+00 : f32
    %563 = vector.broadcast %cst_231 : f32 to vector<8x384xf32>
    %564 = arith.addf %563, %562 : vector<8x384xf32>
    %cst_232 = arith.constant 5.000000e-01 : f32
    %565 = vector.broadcast %cst_232 : f32 to vector<8x384xf32>
    %566 = arith.mulf %565, %564 : vector<8x384xf32>
    %567 = arith.mulf %554, %566 : vector<8x384xf32>
    %568 = vector.extract_strided_slice %567 {offsets = [0, 0], sizes = [8, 128], strides = [1, 1]} : vector<8x384xf32> to vector<8x128xf32>
    %569 = vector.extract_strided_slice %567 {offsets = [0, 128], sizes = [8, 128], strides = [1, 1]} : vector<8x384xf32> to vector<8x128xf32>
    %570 = vector.extract_strided_slice %567 {offsets = [0, 256], sizes = [8, 128], strides = [1, 1]} : vector<8x384xf32> to vector<8x128xf32>
    %c1_i32_233 = arith.constant 1 : i32
    %571 = vector.broadcast %c1_i32_233 : i32 to vector<8x128xi32>
    %572 = arith.cmpi sge, %262, %571 : vector<8x128xi32>
    %c1_i32_234 = arith.constant 1 : i32
    %573 = tpu.dynamic_rotate %569 by %c1_i32_234 dim 0 : vector<8x128xf32>, i32 -> vector<8x128xf32>
    %cst_235 = arith.constant 0.000000e+00 : f32
    %574 = vector.broadcast %cst_235 : f32 to vector<8x128xf32>
    %575 = arith.select %572, %573, %574 : vector<8x128xi1>, vector<8x128xf32>
    %576 = vector.broadcast %539 : vector<1x128xf32> to vector<8x128xf32>
    %577 = arith.mulf %576, %575 : vector<8x128xf32>
    %578 = arith.addf %569, %577 : vector<8x128xf32>
    %579 = arith.mulf %539, %539 : vector<1x128xf32>
    %c2_i32_236 = arith.constant 2 : i32
    %580 = vector.broadcast %c2_i32_236 : i32 to vector<8x128xi32>
    %581 = arith.cmpi sge, %262, %580 : vector<8x128xi32>
    %c2_i32_237 = arith.constant 2 : i32
    %582 = tpu.dynamic_rotate %578 by %c2_i32_237 dim 0 : vector<8x128xf32>, i32 -> vector<8x128xf32>
    %cst_238 = arith.constant 0.000000e+00 : f32
    %583 = vector.broadcast %cst_238 : f32 to vector<8x128xf32>
    %584 = arith.select %581, %582, %583 : vector<8x128xi1>, vector<8x128xf32>
    %585 = vector.broadcast %579 : vector<1x128xf32> to vector<8x128xf32>
    %586 = arith.mulf %585, %584 : vector<8x128xf32>
    %587 = arith.addf %578, %586 : vector<8x128xf32>
    %588 = arith.mulf %579, %579 : vector<1x128xf32>
    %c4_i32_239 = arith.constant 4 : i32
    %589 = vector.broadcast %c4_i32_239 : i32 to vector<8x128xi32>
    %590 = arith.cmpi sge, %262, %589 : vector<8x128xi32>
    %c4_i32_240 = arith.constant 4 : i32
    %591 = tpu.dynamic_rotate %587 by %c4_i32_240 dim 0 : vector<8x128xf32>, i32 -> vector<8x128xf32>
    %cst_241 = arith.constant 0.000000e+00 : f32
    %592 = vector.broadcast %cst_241 : f32 to vector<8x128xf32>
    %593 = arith.select %590, %591, %592 : vector<8x128xi1>, vector<8x128xf32>
    %594 = vector.broadcast %588 : vector<1x128xf32> to vector<8x128xf32>
    %595 = arith.mulf %594, %593 : vector<8x128xf32>
    %596 = arith.addf %587, %595 : vector<8x128xf32>
    %597 = vector.broadcast %540 : vector<1x128xf32> to vector<8x128xf32>
    %598 = arith.mulf %597, %596 : vector<8x128xf32>
    %599 = vector.broadcast %541 : vector<1x128xf32> to vector<8x128xf32>
    %600 = arith.mulf %599, %569 : vector<8x128xf32>
    %601 = arith.addf %598, %600 : vector<8x128xf32>
    %c7_i32_242 = arith.constant 7 : i32
    %602 = vector.broadcast %c7_i32_242 : i32 to vector<8x128xi32>
    %603 = arith.cmpi slt, %262, %602 : vector<8x128xi32>
    %c7_i32_243 = arith.constant 7 : i32
    %604 = tpu.dynamic_rotate %570 by %c7_i32_243 dim 0 : vector<8x128xf32>, i32 -> vector<8x128xf32>
    %cst_244 = arith.constant 0.000000e+00 : f32
    %605 = vector.broadcast %cst_244 : f32 to vector<8x128xf32>
    %606 = arith.select %603, %604, %605 : vector<8x128xi1>, vector<8x128xf32>
    %607 = vector.broadcast %542 : vector<1x128xf32> to vector<8x128xf32>
    %608 = arith.mulf %607, %606 : vector<8x128xf32>
    %609 = arith.addf %570, %608 : vector<8x128xf32>
    %610 = arith.mulf %542, %542 : vector<1x128xf32>
    %c6_i32_245 = arith.constant 6 : i32
    %611 = vector.broadcast %c6_i32_245 : i32 to vector<8x128xi32>
    %612 = arith.cmpi slt, %262, %611 : vector<8x128xi32>
    %c6_i32_246 = arith.constant 6 : i32
    %613 = tpu.dynamic_rotate %609 by %c6_i32_246 dim 0 : vector<8x128xf32>, i32 -> vector<8x128xf32>
    %cst_247 = arith.constant 0.000000e+00 : f32
    %614 = vector.broadcast %cst_247 : f32 to vector<8x128xf32>
    %615 = arith.select %612, %613, %614 : vector<8x128xi1>, vector<8x128xf32>
    %616 = vector.broadcast %610 : vector<1x128xf32> to vector<8x128xf32>
    %617 = arith.mulf %616, %615 : vector<8x128xf32>
    %618 = arith.addf %609, %617 : vector<8x128xf32>
    %619 = arith.mulf %610, %610 : vector<1x128xf32>
    %c4_i32_248 = arith.constant 4 : i32
    %620 = vector.broadcast %c4_i32_248 : i32 to vector<8x128xi32>
    %621 = arith.cmpi slt, %262, %620 : vector<8x128xi32>
    %c4_i32_249 = arith.constant 4 : i32
    %622 = tpu.dynamic_rotate %618 by %c4_i32_249 dim 0 : vector<8x128xf32>, i32 -> vector<8x128xf32>
    %cst_250 = arith.constant 0.000000e+00 : f32
    %623 = vector.broadcast %cst_250 : f32 to vector<8x128xf32>
    %624 = arith.select %621, %622, %623 : vector<8x128xi1>, vector<8x128xf32>
    %625 = vector.broadcast %619 : vector<1x128xf32> to vector<8x128xf32>
    %626 = arith.mulf %625, %624 : vector<8x128xf32>
    %627 = arith.addf %618, %626 : vector<8x128xf32>
    %628 = vector.broadcast %543 : vector<1x128xf32> to vector<8x128xf32>
    %629 = arith.mulf %628, %627 : vector<8x128xf32>
    %630 = vector.broadcast %544 : vector<1x128xf32> to vector<8x128xf32>
    %631 = arith.mulf %630, %570 : vector<8x128xf32>
    %632 = arith.addf %629, %631 : vector<8x128xf32>
    %633 = tpu.concatenate %601, %632 in 1 : vector<8x128xf32>, vector<8x128xf32> -> vector<8x256xf32>
    %634 = arith.truncf %633 : vector<8x256xf32> to vector<8x256xbf16>
    %c2_251 = arith.constant 2 : index
    %c0_252 = arith.constant 0 : index
    %c0_253 = arith.constant 0 : index
    %635 = vector.load %arg8[%c2_251, %c0_252, %c0_253] : memref<4x256x128xbf16, #tpu.memory_space<vmem>>, vector<1x256x128xbf16>
    %636 = vector.shape_cast %635 : vector<1x256x128xbf16> to vector<256x128xbf16>
    %cst_254 = arith.constant dense<0.000000e+00> : vector<8x128xf32>
    %637 = tpu.matmul %634, %636, %cst_254 {dimension_numbers = #tpu.dot_dimension_numbers<[1], [0], [0], [1], [0, 0, 1, 1], [], []>} : vector<8x256xbf16>, vector<256x128xbf16>, vector<8x128xf32> -> vector<8x128xf32>
    %638 = vector.broadcast %545 : vector<1x128xf32> to vector<8x128xf32>
    %639 = arith.addf %637, %638 : vector<8x128xf32>
    %640 = arith.mulf %568, %639 : vector<8x128xf32>
    %641 = arith.truncf %640 : vector<8x128xf32> to vector<8x128xbf16>
    %c2_255 = arith.constant 2 : index
    %c0_256 = arith.constant 0 : index
    %c0_257 = arith.constant 0 : index
    %642 = vector.load %arg9[%c2_255, %c0_256, %c0_257] : memref<4x128x128xbf16, #tpu.memory_space<vmem>>, vector<1x128x128xbf16>
    %643 = vector.shape_cast %642 : vector<1x128x128xbf16> to vector<128x128xbf16>
    %cst_258 = arith.constant dense<0.000000e+00> : vector<8x128xf32>
    %644 = tpu.matmul %641, %643, %cst_258 {dimension_numbers = #tpu.dot_dimension_numbers<[1], [0], [0], [1], [0, 0, 1, 1], [], []>} : vector<8x128xbf16>, vector<128x128xbf16>, vector<8x128xf32> -> vector<8x128xf32>
    %645 = vector.broadcast %546 : vector<1x128xf32> to vector<8x128xf32>
    %646 = arith.addf %644, %645 : vector<8x128xf32>
    %647 = arith.addf %646, %532 : vector<8x128xf32>
    %cst_259 = arith.constant dense<0.000000e+00> : vector<8xf32>
    %648 = vector.multi_reduction <add>, %647, %cst_259 [1] : vector<8x128xf32> to vector<8xf32>
    %649 = vector.shape_cast %648 : vector<8xf32> to vector<8x1xf32>
    %cst_260 = arith.constant 1.280000e+02 : f32
    %650 = vector.broadcast %cst_260 : f32 to vector<8x1xf32>
    %651 = arith.divf %649, %650 : vector<8x1xf32>
    %652 = vector.broadcast %651 : vector<8x1xf32> to vector<8x128xf32>
    %653 = arith.subf %647, %652 : vector<8x128xf32>
    %654 = arith.mulf %653, %653 : vector<8x128xf32>
    %cst_261 = arith.constant dense<0.000000e+00> : vector<8xf32>
    %655 = vector.multi_reduction <add>, %654, %cst_261 [1] : vector<8x128xf32> to vector<8xf32>
    %656 = vector.shape_cast %655 : vector<8xf32> to vector<8x1xf32>
    %cst_262 = arith.constant 1.280000e+02 : f32
    %657 = vector.broadcast %cst_262 : f32 to vector<8x1xf32>
    %658 = arith.divf %656, %657 : vector<8x1xf32>
    %cst_263 = arith.constant 9.99999974E-6 : f32
    %659 = vector.broadcast %cst_263 : f32 to vector<8x1xf32>
    %660 = arith.addf %658, %659 : vector<8x1xf32>
    %661 = math.rsqrt %660 : vector<8x1xf32>
    %662 = vector.broadcast %661 : vector<8x1xf32> to vector<8x128xf32>
    %663 = arith.mulf %653, %662 : vector<8x128xf32>
    %664 = vector.broadcast %547 : vector<1x128xf32> to vector<8x128xf32>
    %665 = arith.mulf %663, %664 : vector<8x128xf32>
    %666 = vector.broadcast %548 : vector<1x128xf32> to vector<8x128xf32>
    %667 = arith.addf %665, %666 : vector<8x128xf32>
    %c3_264 = arith.constant 3 : index
    %c0_265 = arith.constant 0 : index
    %c0_266 = arith.constant 0 : index
    %668 = vector.load %arg10[%c3_264, %c0_265, %c0_266] : memref<4x16x128xf32, #tpu.memory_space<vmem>>, vector<1x16x128xf32>
    %669 = vector.shape_cast %668 : vector<1x16x128xf32> to vector<16x128xf32>
    %670 = vector.extract_strided_slice %669 {offsets = [0, 0], sizes = [1, 128], strides = [1, 1]} : vector<16x128xf32> to vector<1x128xf32>
    %671 = vector.extract_strided_slice %669 {offsets = [1, 0], sizes = [1, 128], strides = [1, 1]} : vector<16x128xf32> to vector<1x128xf32>
    %672 = vector.extract_strided_slice %669 {offsets = [2, 0], sizes = [1, 128], strides = [1, 1]} : vector<16x128xf32> to vector<1x128xf32>
    %673 = tpu.concatenate %670, %671, %672 in 1 : vector<1x128xf32>, vector<1x128xf32>, vector<1x128xf32> -> vector<1x384xf32>
    %674 = vector.extract_strided_slice %669 {offsets = [3, 0], sizes = [1, 128], strides = [1, 1]} : vector<16x128xf32> to vector<1x128xf32>
    %675 = vector.extract_strided_slice %669 {offsets = [4, 0], sizes = [1, 128], strides = [1, 1]} : vector<16x128xf32> to vector<1x128xf32>
    %676 = vector.extract_strided_slice %669 {offsets = [5, 0], sizes = [1, 128], strides = [1, 1]} : vector<16x128xf32> to vector<1x128xf32>
    %677 = vector.extract_strided_slice %669 {offsets = [6, 0], sizes = [1, 128], strides = [1, 1]} : vector<16x128xf32> to vector<1x128xf32>
    %678 = vector.extract_strided_slice %669 {offsets = [7, 0], sizes = [1, 128], strides = [1, 1]} : vector<16x128xf32> to vector<1x128xf32>
    %679 = vector.extract_strided_slice %669 {offsets = [8, 0], sizes = [1, 128], strides = [1, 1]} : vector<16x128xf32> to vector<1x128xf32>
    %680 = vector.extract_strided_slice %669 {offsets = [9, 0], sizes = [1, 128], strides = [1, 1]} : vector<16x128xf32> to vector<1x128xf32>
    %681 = vector.extract_strided_slice %669 {offsets = [10, 0], sizes = [1, 128], strides = [1, 1]} : vector<16x128xf32> to vector<1x128xf32>
    %682 = vector.extract_strided_slice %669 {offsets = [11, 0], sizes = [1, 128], strides = [1, 1]} : vector<16x128xf32> to vector<1x128xf32>
    %683 = vector.extract_strided_slice %669 {offsets = [12, 0], sizes = [1, 128], strides = [1, 1]} : vector<16x128xf32> to vector<1x128xf32>
    %684 = arith.truncf %667 : vector<8x128xf32> to vector<8x128xbf16>
    %c3_267 = arith.constant 3 : index
    %c0_268 = arith.constant 0 : index
    %c0_269 = arith.constant 0 : index
    %685 = vector.load %arg7[%c3_267, %c0_268, %c0_269] : memref<4x128x384xbf16, #tpu.memory_space<vmem>>, vector<1x128x384xbf16>
    %686 = vector.shape_cast %685 : vector<1x128x384xbf16> to vector<128x384xbf16>
    %cst_270 = arith.constant dense<0.000000e+00> : vector<8x384xf32>
    %687 = tpu.matmul %684, %686, %cst_270 {dimension_numbers = #tpu.dot_dimension_numbers<[1], [0], [0], [1], [0, 0, 1, 1], [], []>} : vector<8x128xbf16>, vector<128x384xbf16>, vector<8x384xf32> -> vector<8x384xf32>
    %688 = vector.broadcast %673 : vector<1x384xf32> to vector<8x384xf32>
    %689 = arith.addf %687, %688 : vector<8x384xf32>
    %690 = arith.mulf %689, %689 : vector<8x384xf32>
    %691 = arith.mulf %689, %690 : vector<8x384xf32>
    %cst_271 = arith.constant 4.471500e-02 : f32
    %692 = vector.broadcast %cst_271 : f32 to vector<8x384xf32>
    %693 = arith.mulf %692, %691 : vector<8x384xf32>
    %694 = arith.addf %689, %693 : vector<8x384xf32>
    %cst_272 = arith.constant 0.797884583 : f32
    %695 = vector.broadcast %cst_272 : f32 to vector<8x384xf32>
    %696 = arith.mulf %695, %694 : vector<8x384xf32>
    %697 = math.tanh %696 : vector<8x384xf32>
    %cst_273 = arith.constant 1.000000e+00 : f32
    %698 = vector.broadcast %cst_273 : f32 to vector<8x384xf32>
    %699 = arith.addf %698, %697 : vector<8x384xf32>
    %cst_274 = arith.constant 5.000000e-01 : f32
    %700 = vector.broadcast %cst_274 : f32 to vector<8x384xf32>
    %701 = arith.mulf %700, %699 : vector<8x384xf32>
    %702 = arith.mulf %689, %701 : vector<8x384xf32>
    %703 = vector.extract_strided_slice %702 {offsets = [0, 0], sizes = [8, 128], strides = [1, 1]} : vector<8x384xf32> to vector<8x128xf32>
    %704 = vector.extract_strided_slice %702 {offsets = [0, 128], sizes = [8, 128], strides = [1, 1]} : vector<8x384xf32> to vector<8x128xf32>
    %705 = vector.extract_strided_slice %702 {offsets = [0, 256], sizes = [8, 128], strides = [1, 1]} : vector<8x384xf32> to vector<8x128xf32>
    %c1_i32_275 = arith.constant 1 : i32
    %706 = vector.broadcast %c1_i32_275 : i32 to vector<8x128xi32>
    %707 = arith.cmpi sge, %262, %706 : vector<8x128xi32>
    %c1_i32_276 = arith.constant 1 : i32
    %708 = tpu.dynamic_rotate %704 by %c1_i32_276 dim 0 : vector<8x128xf32>, i32 -> vector<8x128xf32>
    %cst_277 = arith.constant 0.000000e+00 : f32
    %709 = vector.broadcast %cst_277 : f32 to vector<8x128xf32>
    %710 = arith.select %707, %708, %709 : vector<8x128xi1>, vector<8x128xf32>
    %711 = vector.broadcast %674 : vector<1x128xf32> to vector<8x128xf32>
    %712 = arith.mulf %711, %710 : vector<8x128xf32>
    %713 = arith.addf %704, %712 : vector<8x128xf32>
    %714 = arith.mulf %674, %674 : vector<1x128xf32>
    %c2_i32_278 = arith.constant 2 : i32
    %715 = vector.broadcast %c2_i32_278 : i32 to vector<8x128xi32>
    %716 = arith.cmpi sge, %262, %715 : vector<8x128xi32>
    %c2_i32_279 = arith.constant 2 : i32
    %717 = tpu.dynamic_rotate %713 by %c2_i32_279 dim 0 : vector<8x128xf32>, i32 -> vector<8x128xf32>
    %cst_280 = arith.constant 0.000000e+00 : f32
    %718 = vector.broadcast %cst_280 : f32 to vector<8x128xf32>
    %719 = arith.select %716, %717, %718 : vector<8x128xi1>, vector<8x128xf32>
    %720 = vector.broadcast %714 : vector<1x128xf32> to vector<8x128xf32>
    %721 = arith.mulf %720, %719 : vector<8x128xf32>
    %722 = arith.addf %713, %721 : vector<8x128xf32>
    %723 = arith.mulf %714, %714 : vector<1x128xf32>
    %c4_i32_281 = arith.constant 4 : i32
    %724 = vector.broadcast %c4_i32_281 : i32 to vector<8x128xi32>
    %725 = arith.cmpi sge, %262, %724 : vector<8x128xi32>
    %c4_i32_282 = arith.constant 4 : i32
    %726 = tpu.dynamic_rotate %722 by %c4_i32_282 dim 0 : vector<8x128xf32>, i32 -> vector<8x128xf32>
    %cst_283 = arith.constant 0.000000e+00 : f32
    %727 = vector.broadcast %cst_283 : f32 to vector<8x128xf32>
    %728 = arith.select %725, %726, %727 : vector<8x128xi1>, vector<8x128xf32>
    %729 = vector.broadcast %723 : vector<1x128xf32> to vector<8x128xf32>
    %730 = arith.mulf %729, %728 : vector<8x128xf32>
    %731 = arith.addf %722, %730 : vector<8x128xf32>
    %732 = vector.broadcast %675 : vector<1x128xf32> to vector<8x128xf32>
    %733 = arith.mulf %732, %731 : vector<8x128xf32>
    %734 = vector.broadcast %676 : vector<1x128xf32> to vector<8x128xf32>
    %735 = arith.mulf %734, %704 : vector<8x128xf32>
    %736 = arith.addf %733, %735 : vector<8x128xf32>
    %c7_i32_284 = arith.constant 7 : i32
    %737 = vector.broadcast %c7_i32_284 : i32 to vector<8x128xi32>
    %738 = arith.cmpi slt, %262, %737 : vector<8x128xi32>
    %c7_i32_285 = arith.constant 7 : i32
    %739 = tpu.dynamic_rotate %705 by %c7_i32_285 dim 0 : vector<8x128xf32>, i32 -> vector<8x128xf32>
    %cst_286 = arith.constant 0.000000e+00 : f32
    %740 = vector.broadcast %cst_286 : f32 to vector<8x128xf32>
    %741 = arith.select %738, %739, %740 : vector<8x128xi1>, vector<8x128xf32>
    %742 = vector.broadcast %677 : vector<1x128xf32> to vector<8x128xf32>
    %743 = arith.mulf %742, %741 : vector<8x128xf32>
    %744 = arith.addf %705, %743 : vector<8x128xf32>
    %745 = arith.mulf %677, %677 : vector<1x128xf32>
    %c6_i32_287 = arith.constant 6 : i32
    %746 = vector.broadcast %c6_i32_287 : i32 to vector<8x128xi32>
    %747 = arith.cmpi slt, %262, %746 : vector<8x128xi32>
    %c6_i32_288 = arith.constant 6 : i32
    %748 = tpu.dynamic_rotate %744 by %c6_i32_288 dim 0 : vector<8x128xf32>, i32 -> vector<8x128xf32>
    %cst_289 = arith.constant 0.000000e+00 : f32
    %749 = vector.broadcast %cst_289 : f32 to vector<8x128xf32>
    %750 = arith.select %747, %748, %749 : vector<8x128xi1>, vector<8x128xf32>
    %751 = vector.broadcast %745 : vector<1x128xf32> to vector<8x128xf32>
    %752 = arith.mulf %751, %750 : vector<8x128xf32>
    %753 = arith.addf %744, %752 : vector<8x128xf32>
    %754 = arith.mulf %745, %745 : vector<1x128xf32>
    %c4_i32_290 = arith.constant 4 : i32
    %755 = vector.broadcast %c4_i32_290 : i32 to vector<8x128xi32>
    %756 = arith.cmpi slt, %262, %755 : vector<8x128xi32>
    %c4_i32_291 = arith.constant 4 : i32
    %757 = tpu.dynamic_rotate %753 by %c4_i32_291 dim 0 : vector<8x128xf32>, i32 -> vector<8x128xf32>
    %cst_292 = arith.constant 0.000000e+00 : f32
    %758 = vector.broadcast %cst_292 : f32 to vector<8x128xf32>
    %759 = arith.select %756, %757, %758 : vector<8x128xi1>, vector<8x128xf32>
    %760 = vector.broadcast %754 : vector<1x128xf32> to vector<8x128xf32>
    %761 = arith.mulf %760, %759 : vector<8x128xf32>
    %762 = arith.addf %753, %761 : vector<8x128xf32>
    %763 = vector.broadcast %678 : vector<1x128xf32> to vector<8x128xf32>
    %764 = arith.mulf %763, %762 : vector<8x128xf32>
    %765 = vector.broadcast %679 : vector<1x128xf32> to vector<8x128xf32>
    %766 = arith.mulf %765, %705 : vector<8x128xf32>
    %767 = arith.addf %764, %766 : vector<8x128xf32>
    %768 = tpu.concatenate %736, %767 in 1 : vector<8x128xf32>, vector<8x128xf32> -> vector<8x256xf32>
    %769 = arith.truncf %768 : vector<8x256xf32> to vector<8x256xbf16>
    %c3_293 = arith.constant 3 : index
    %c0_294 = arith.constant 0 : index
    %c0_295 = arith.constant 0 : index
    %770 = vector.load %arg8[%c3_293, %c0_294, %c0_295] : memref<4x256x128xbf16, #tpu.memory_space<vmem>>, vector<1x256x128xbf16>
    %771 = vector.shape_cast %770 : vector<1x256x128xbf16> to vector<256x128xbf16>
    %cst_296 = arith.constant dense<0.000000e+00> : vector<8x128xf32>
    %772 = tpu.matmul %769, %771, %cst_296 {dimension_numbers = #tpu.dot_dimension_numbers<[1], [0], [0], [1], [0, 0, 1, 1], [], []>} : vector<8x256xbf16>, vector<256x128xbf16>, vector<8x128xf32> -> vector<8x128xf32>
    %773 = vector.broadcast %680 : vector<1x128xf32> to vector<8x128xf32>
    %774 = arith.addf %772, %773 : vector<8x128xf32>
    %775 = arith.mulf %703, %774 : vector<8x128xf32>
    %776 = arith.truncf %775 : vector<8x128xf32> to vector<8x128xbf16>
    %c3_297 = arith.constant 3 : index
    %c0_298 = arith.constant 0 : index
    %c0_299 = arith.constant 0 : index
    %777 = vector.load %arg9[%c3_297, %c0_298, %c0_299] : memref<4x128x128xbf16, #tpu.memory_space<vmem>>, vector<1x128x128xbf16>
    %778 = vector.shape_cast %777 : vector<1x128x128xbf16> to vector<128x128xbf16>
    %cst_300 = arith.constant dense<0.000000e+00> : vector<8x128xf32>
    %779 = tpu.matmul %776, %778, %cst_300 {dimension_numbers = #tpu.dot_dimension_numbers<[1], [0], [0], [1], [0, 0, 1, 1], [], []>} : vector<8x128xbf16>, vector<128x128xbf16>, vector<8x128xf32> -> vector<8x128xf32>
    %780 = vector.broadcast %681 : vector<1x128xf32> to vector<8x128xf32>
    %781 = arith.addf %779, %780 : vector<8x128xf32>
    %782 = arith.addf %781, %667 : vector<8x128xf32>
    %cst_301 = arith.constant dense<0.000000e+00> : vector<8xf32>
    %783 = vector.multi_reduction <add>, %782, %cst_301 [1] : vector<8x128xf32> to vector<8xf32>
    %784 = vector.shape_cast %783 : vector<8xf32> to vector<8x1xf32>
    %cst_302 = arith.constant 1.280000e+02 : f32
    %785 = vector.broadcast %cst_302 : f32 to vector<8x1xf32>
    %786 = arith.divf %784, %785 : vector<8x1xf32>
    %787 = vector.broadcast %786 : vector<8x1xf32> to vector<8x128xf32>
    %788 = arith.subf %782, %787 : vector<8x128xf32>
    %789 = arith.mulf %788, %788 : vector<8x128xf32>
    %cst_303 = arith.constant dense<0.000000e+00> : vector<8xf32>
    %790 = vector.multi_reduction <add>, %789, %cst_303 [1] : vector<8x128xf32> to vector<8xf32>
    %791 = vector.shape_cast %790 : vector<8xf32> to vector<8x1xf32>
    %cst_304 = arith.constant 1.280000e+02 : f32
    %792 = vector.broadcast %cst_304 : f32 to vector<8x1xf32>
    %793 = arith.divf %791, %792 : vector<8x1xf32>
    %cst_305 = arith.constant 9.99999974E-6 : f32
    %794 = vector.broadcast %cst_305 : f32 to vector<8x1xf32>
    %795 = arith.addf %793, %794 : vector<8x1xf32>
    %796 = math.rsqrt %795 : vector<8x1xf32>
    %797 = vector.broadcast %796 : vector<8x1xf32> to vector<8x128xf32>
    %798 = arith.mulf %788, %797 : vector<8x128xf32>
    %799 = vector.broadcast %682 : vector<1x128xf32> to vector<8x128xf32>
    %800 = arith.mulf %798, %799 : vector<8x128xf32>
    %801 = vector.broadcast %683 : vector<1x128xf32> to vector<8x128xf32>
    %802 = arith.addf %800, %801 : vector<8x128xf32>
    %803 = tpu.transpose %802, [1, 0] : vector<8x128xf32> -> vector<128x8xf32>
    %c0_306 = arith.constant 0 : index
    %c0_307 = arith.constant 0 : index
    %c0_308 = arith.constant 0 : index
    %804 = vector.load %arg11[%c0_306, %c0_307, %c0_308] : memref<1x128x8xf32, #tpu.memory_space<vmem>>, vector<1x128x8xf32>
    %805 = vector.shape_cast %804 : vector<1x128x8xf32> to vector<128x8xf32>
    %806 = vector.shape_cast %803 : vector<128x8xf32> to vector<1x128x8xf32>
    tpu.vector_store %arg11[%c0_306, %c0_307, %c0_308], %806 {strides = array<i32>} : memref<1x128x8xf32, #tpu.memory_space<vmem>>, vector<1x128x8xf32>,
    return
  }
  func.func @transform_0(%arg0: i32) -> (i32, i32, i32) {
    %c0_i32 = arith.constant 0 : i32
    %c0_i32_0 = arith.constant 0 : i32
    %c0_i32_1 = arith.constant 0 : i32
    return %arg0, %c0_i32, %c0_i32_0 : i32, i32, i32
  }
  func.func @transform_1(%arg0: i32) -> (i32, i32, i32) {
    %c0_i32 = arith.constant 0 : i32
    %c0_i32_0 = arith.constant 0 : i32
    %c0_i32_1 = arith.constant 0 : i32
    %c0_i32_2 = arith.constant 0 : i32
    return %c0_i32, %c0_i32_0, %c0_i32_1 : i32, i32, i32
  }
  func.func @transform_2(%arg0: i32) -> (i32, i32) {
    %c0_i32 = arith.constant 0 : i32
    %c0_i32_0 = arith.constant 0 : i32
    %c0_i32_1 = arith.constant 0 : i32
    return %c0_i32, %c0_i32_0 : i32, i32
  }
  func.func @transform_3(%arg0: i32) -> (i32, i32, i32) {
    %c0_i32 = arith.constant 0 : i32
    %c0_i32_0 = arith.constant 0 : i32
    %c0_i32_1 = arith.constant 0 : i32
    %c0_i32_2 = arith.constant 0 : i32
    return %c0_i32, %c0_i32_0, %c0_i32_1 : i32, i32, i32
  }
  func.func @transform_4(%arg0: i32) -> (i32, i32) {
    %c0_i32 = arith.constant 0 : i32
    %c0_i32_0 = arith.constant 0 : i32
    %c0_i32_1 = arith.constant 0 : i32
    return %c0_i32, %c0_i32_0 : i32, i32
  }
  func.func @transform_5(%arg0: i32) -> (i32, i32) {
    %c0_i32 = arith.constant 0 : i32
    %c0_i32_0 = arith.constant 0 : i32
    %c0_i32_1 = arith.constant 0 : i32
    return %c0_i32, %c0_i32_0 : i32, i32
  }
  func.func @transform_6(%arg0: i32) -> (i32, i32, i32) {
    %c0_i32 = arith.constant 0 : i32
    %c0_i32_0 = arith.constant 0 : i32
    %c0_i32_1 = arith.constant 0 : i32
    %c0_i32_2 = arith.constant 0 : i32
    return %c0_i32, %c0_i32_0, %c0_i32_1 : i32, i32, i32
  }
  func.func @transform_7(%arg0: i32) -> (i32, i32, i32) {
    %c0_i32 = arith.constant 0 : i32
    %c0_i32_0 = arith.constant 0 : i32
    %c0_i32_1 = arith.constant 0 : i32
    %c0_i32_2 = arith.constant 0 : i32
    return %c0_i32, %c0_i32_0, %c0_i32_1 : i32, i32, i32
  }
  func.func @transform_8(%arg0: i32) -> (i32, i32, i32) {
    %c0_i32 = arith.constant 0 : i32
    %c0_i32_0 = arith.constant 0 : i32
    %c0_i32_1 = arith.constant 0 : i32
    %c0_i32_2 = arith.constant 0 : i32
    return %c0_i32, %c0_i32_0, %c0_i32_1 : i32, i32, i32
  }
  func.func @transform_9(%arg0: i32) -> (i32, i32, i32) {
    %c0_i32 = arith.constant 0 : i32
    %c0_i32_0 = arith.constant 0 : i32
    %c0_i32_1 = arith.constant 0 : i32
    %c0_i32_2 = arith.constant 0 : i32
    return %c0_i32, %c0_i32_0, %c0_i32_1 : i32, i32, i32
  }
  func.func @transform_10(%arg0: i32) -> (i32, i32, i32) {
    %c0_i32 = arith.constant 0 : i32
    %c0_i32_0 = arith.constant 0 : i32
    %c0_i32_1 = arith.constant 0 : i32
    return %arg0, %c0_i32, %c0_i32_0 : i32, i32, i32
  }
}

</mosaic_0001>

<llo_original>
// kernel: forward.1
$region0: #{forward.1}
  #allocation0 [shape = 'u32[]', space=smem, size = 0x4, offset = 0x4, fixed_abs, tag = 'smem constant byte address 0x4 - core index']
  #allocation1 [shape = 'u32[144,128]{1,0:T(1,128)}', space=vmem, size = 0x12000, scoped, tag = 'internal scratch']
  %s0 = inlined_call_operand.vmem [shape: f32[2,53,8], index: 0, kind: input, shape index: {}]
  %s1 = inlined_call_operand.vmem [shape: bf16[34,8,64], index: 1, kind: input, shape index: {}]
  %s2 = inlined_call_operand.vmem [shape: f32[2,64], index: 2, kind: input, shape index: {}]
  %s3 = inlined_call_operand.hbm [shape: bf16[6,64,128], index: 3, kind: input, shape index: {}]
  %s4 = inlined_call_operand.vmem [shape: f32[2,128], index: 4, kind: input, shape index: {}]
  %s5 = inlined_call_operand.vmem [shape: f32[8,15], index: 5, kind: input, shape index: {}]
  %s6 = inlined_call_operand.hbm [shape: bf16[4,128,384], index: 6, kind: input, shape index: {}]
  %s7 = inlined_call_operand.hbm [shape: bf16[4,256,128], index: 7, kind: input, shape index: {}]
  %s8 = inlined_call_operand.hbm [shape: bf16[4,128,128], index: 8, kind: input, shape index: {}]
  %s9 = inlined_call_operand.hbm [shape: f32[4,16,128], index: 9, kind: input, shape index: {}]
  %s10 = inlined_call_operand.vmem [shape: f32[2,128,8], index: 10, kind: output, shape index: {}]
  %s11 = sld [smem:[#allocation0]]
  $region93: #{forward.1} parent=0
    _
  %s13 = ssub.s32 1, %s11
  %s14 = scalar_select 0, %s13, %s11
  $region1: #{forward.1} parent=0
    #allocation2 [shape = 'u8[98304]{0}', space=vmem, size = 0x18000, scoped, tag = 'input window, operand 3, single buffered']
    #allocation3 [shape = 's32[2]{0}', space=sflag, size = 0x8, scoped, tag = 'scoped memory for forward.1']
    #allocation4 [shape = 'u8[393216]{0}', space=vmem, size = 0x60000, scoped, tag = 'input window, operand 6, single buffered']
    #allocation5 [shape = 's32[1]{0}', space=sflag, size = 0x4, scoped, tag = 'scoped memory for forward.1']
    #allocation6 [shape = 'u8[262144]{0}', space=vmem, size = 0x40000, scoped, tag = 'input window, operand 7, single buffered']
    #allocation7 [shape = 'u8[131072]{0}', space=vmem, size = 0x20000, scoped, tag = 'input window, operand 8, single buffered']
    #allocation8 [shape = 's32[1]{0}', space=sflag, size = 0x4, scoped, tag = 'scoped memory for forward.1']
    #allocation9 [shape = 'u8[32768]{0}', space=vmem, size = 0x8000, scoped, tag = 'input window, operand 9, single buffered']
    %15 = vsyncpa [#allocation3], 0
    %16 = vsyncpa [#allocation5], 0
    %17 = vsyncpa [#allocation8], 0
    loop: start=0, step=1, limit=4
    $region2: #{forward.1} parent=1 // loop_pre_header
      _
    $region3: #{forward.1} parent=1 // loop_header
      %s19 = sphi 0, %s23
      %p20 = scmp.ge.s32.totalorder %s19, 4
      %s29 = sphi 0, %s31
      %s32 = sphi 0, %s29
      %s33 = sphi 0, %s32
      %s49 = sphi 0, %s33
      %s53 = sphi 0, %s53
      %s55 = sphi 0, %s53
      %s56 = sphi 0, %s55
      %s70 = sphi 0, %s56
      %s74 = sphi 0, %s74
      %s76 = sphi 0, %s74
      %s77 = sphi 0, %s76
      %s91 = sphi 0, %s77
      %s95 = sphi 0, %s95
      %s97 = sphi 0, %s95
      %s98 = sphi 0, %s97
      %s112 = sphi 0, %s98
      %s116 = sphi 0, %s116
      %s118 = sphi 0, %s116
      %s119 = sphi 0, %s118
      %s133 = sphi 0, %s119
      %s137 = sphi 0, %s137
      %s139 = sphi 0, %s137
      %s140 = sphi 0, %s139
      %s154 = sphi 0, %s140
      %s158 = sphi 0, %s158
      %s160 = sphi 0, %s158
      %s161 = sphi 0, %s160
      %s175 = sphi 0, %s161
      %s179 = sphi 0, %s179
      %s181 = sphi 0, %s179
      %s182 = sphi 0, %s181
      %s196 = sphi 0, %s182
      %s200 = sphi 0, %s200
      %s202 = sphi 0, %s200
      %s203 = sphi 0, %s202
      %s217 = sphi 0, %s203
      %s221 = sphi 0, %s221
      %s223 = sphi 0, %s221
      %s224 = sphi 0, %s223
      %s238 = sphi 0, %s224
      %s244 = sphi 0, %s246
      %s247 = sphi 0, %s244
      %s248 = sphi 0, %s247
      %s264 = sphi 0, %s248
    $region4: #{forward.1} parent=1 // loop_header_branch
      %22 = sbr.rel (%p20) target = $region8
    $region5: #{forward.1} parent=1 // loop_body
      %s24 = ssub.s32 %s19, 1
      %s25 = ssub.s32 %s19, 2
      %s26 = sadd.s32 %s19, 1
      %s27 = ssub.s32 %s19, %s26
      %p28 = scmp.eq.s32.totalorder %s27, 0
      %s30 = sadd.s32 %s29, 1
      %s31 = scalar_select %p28, %s29, %s30
      %p34 = pneg %p28
      %p35 = scmp.eq.s32.totalorder %s19, 1
      %p36 = por %p34, %p35
      %p37 = scmp.ne.s32.totalorder %s29, %s32
      %p38 = scmp.eq.s32.totalorder %s19, 0
      %p39 = por %p37, %p38
      %p40 = scmp.ne.s32.totalorder %s29, %s32
      %p41 = scmp.eq.s32.totalorder %s24, 1
      %p42 = por %p40, %p41
      %p43 = scmp.ne.s32.totalorder %s32, %s33
      %p44 = scmp.eq.s32.totalorder %s24, 0
      %p45 = por %p43, %p44
      %p46 = scmp.ne.s32.totalorder %s32, %s33
      %p47 = scmp.eq.s32.totalorder %s25, 1
      %p48 = por %p46, %p47
      %p50 = scmp.ne.s32.totalorder %s33, %s49
      %p51 = scmp.eq.s32.totalorder %s25, 0
      %p52 = por %p50, %p51
      %s54 = sadd.s32 %s53, 1
      %p57 = scmp.eq.s32.totalorder %s19, 1
      %p58 = scmp.ne.s32.totalorder %s53, %s55
      %p59 = scmp.eq.s32.totalorder %s19, 0
      %p60 = por %p58, %p59
      %p61 = scmp.ne.s32.totalorder %s53, %s55
      %p62 = scmp.eq.s32.totalorder %s24, 1
      %p63 = por %p61, %p62
      %p64 = scmp.ne.s32.totalorder %s55, %s56
      %p65 = scmp.eq.s32.totalorder %s24, 0
      %p66 = por %p64, %p65
      %p67 = scmp.ne.s32.totalorder %s55, %s56
      %p68 = scmp.eq.s32.totalorder %s25, 1
      %p69 = por %p67, %p68
      %p71 = scmp.ne.s32.totalorder %s56, %s70
      %p72 = scmp.eq.s32.totalorder %s25, 0
      %p73 = por %p71, %p72
      %s75 = sadd.s32 %s74, 1
      %p78 = scmp.eq.s32.totalorder %s19, 1
      %p79 = scmp.ne.s32.totalorder %s74, %s76
      %p80 = scmp.eq.s32.totalorder %s19, 0
      %p81 = por %p79, %p80
      %p82 = scmp.ne.s32.totalorder %s74, %s76
      %p83 = scmp.eq.s32.totalorder %s24, 1
      %p84 = por %p82, %p83
      %p85 = scmp.ne.s32.totalorder %s76, %s77
      %p86 = scmp.eq.s32.totalorder %s24, 0
      %p87 = por %p85, %p86
      %p88 = scmp.ne.s32.totalorder %s76, %s77
      %p89 = scmp.eq.s32.totalorder %s25, 1
      %p90 = por %p88, %p89
      %p92 = scmp.ne.s32.totalorder %s77, %s91
      %p93 = scmp.eq.s32.totalorder %s25, 0
      %p94 = por %p92, %p93
      %s96 = sadd.s32 %s95, 1
      %p99 = scmp.eq.s32.totalorder %s19, 1
      %p100 = scmp.ne.s32.totalorder %s95, %s97
      %p101 = scmp.eq.s32.totalorder %s19, 0
      %p102 = por %p100, %p101
      %p103 = scmp.ne.s32.totalorder %s95, %s97
      %p104 = scmp.eq.s32.totalorder %s24, 1
      %p105 = por %p103, %p104
      %p106 = scmp.ne.s32.totalorder %s97, %s98
      %p107 = scmp.eq.s32.totalorder %s24, 0
      %p108 = por %p106, %p107
      %p109 = scmp.ne.s32.totalorder %s97, %s98
      %p110 = scmp.eq.s32.totalorder %s25, 1
      %p111 = por %p109, %p110
      %p113 = scmp.ne.s32.totalorder %s98, %s112
      %p114 = scmp.eq.s32.totalorder %s25, 0
      %p115 = por %p113, %p114
      %s117 = sadd.s32 %s116, 1
      %p120 = scmp.eq.s32.totalorder %s19, 1
      %p121 = scmp.ne.s32.totalorder %s116, %s118
      %p122 = scmp.eq.s32.totalorder %s19, 0
      %p123 = por %p121, %p122
      %p124 = scmp.ne.s32.totalorder %s116, %s118
      %p125 = scmp.eq.s32.totalorder %s24, 1
      %p126 = por %p124, %p125
      %p127 = scmp.ne.s32.totalorder %s118, %s119
      %p128 = scmp.eq.s32.totalorder %s24, 0
      %p129 = por %p127, %p128
      %p130 = scmp.ne.s32.totalorder %s118, %s119
      %p131 = scmp.eq.s32.totalorder %s25, 1
      %p132 = por %p130, %p131
      %p134 = scmp.ne.s32.totalorder %s119, %s133
      %p135 = scmp.eq.s32.totalorder %s25, 0
      %p136 = por %p134, %p135
      %s138 = sadd.s32 %s137, 1
      %p141 = scmp.eq.s32.totalorder %s19, 1
      %p142 = scmp.ne.s32.totalorder %s137, %s139
      %p143 = scmp.eq.s32.totalorder %s19, 0
      %p144 = por %p142, %p143
      %p145 = scmp.ne.s32.totalorder %s137, %s139
      %p146 = scmp.eq.s32.totalorder %s24, 1
      %p147 = por %p145, %p146
      %p148 = scmp.ne.s32.totalorder %s139, %s140
      %p149 = scmp.eq.s32.totalorder %s24, 0
      %p150 = por %p148, %p149
      %p151 = scmp.ne.s32.totalorder %s139, %s140
      %p152 = scmp.eq.s32.totalorder %s25, 1
      %p153 = por %p151, %p152
      %p155 = scmp.ne.s32.totalorder %s140, %s154
      %p156 = scmp.eq.s32.totalorder %s25, 0
      %p157 = por %p155, %p156
      %s159 = sadd.s32 %s158, 1
      %p162 = scmp.eq.s32.totalorder %s19, 1
      %p163 = scmp.ne.s32.totalorder %s158, %s160
      %p164 = scmp.eq.s32.totalorder %s19, 0
      %p165 = por %p163, %p164
      %p166 = scmp.ne.s32.totalorder %s158, %s160
      %p167 = scmp.eq.s32.totalorder %s24, 1
      %p168 = por %p166, %p167
      %p169 = scmp.ne.s32.totalorder %s160, %s161
      %p170 = scmp.eq.s32.totalorder %s24, 0
      %p171 = por %p169, %p170
      %p172 = scmp.ne.s32.totalorder %s160, %s161
      %p173 = scmp.eq.s32.totalorder %s25, 1
      %p174 = por %p172, %p173
      %p176 = scmp.ne.s32.totalorder %s161, %s175
      %p177 = scmp.eq.s32.totalorder %s25, 0
      %p178 = por %p176, %p177
      %s180 = sadd.s32 %s179, 1
      %p183 = scmp.eq.s32.totalorder %s19, 1
      %p184 = scmp.ne.s32.totalorder %s179, %s181
      %p185 = scmp.eq.s32.totalorder %s19, 0
      %p186 = por %p184, %p185
      %p187 = scmp.ne.s32.totalorder %s179, %s181
      %p188 = scmp.eq.s32.totalorder %s24, 1
      %p189 = por %p187, %p188
      %p190 = scmp.ne.s32.totalorder %s181, %s182
      %p191 = scmp.eq.s32.totalorder %s24, 0
      %p192 = por %p190, %p191
      %p193 = scmp.ne.s32.totalorder %s181, %s182
      %p194 = scmp.eq.s32.totalorder %s25, 1
      %p195 = por %p193, %p194
      %p197 = scmp.ne.s32.totalorder %s182, %s196
      %p198 = scmp.eq.s32.totalorder %s25, 0
      %p199 = por %p197, %p198
      %s201 = sadd.s32 %s200, 1
      %p204 = scmp.eq.s32.totalorder %s19, 1
      %p205 = scmp.ne.s32.totalorder %s200, %s202
      %p206 = scmp.eq.s32.totalorder %s19, 0
      %p207 = por %p205, %p206
      %p208 = scmp.ne.s32.totalorder %s200, %s202
      %p209 = scmp.eq.s32.totalorder %s24, 1
      %p210 = por %p208, %p209
      %p211 = scmp.ne.s32.totalorder %s202, %s203
      %p212 = scmp.eq.s32.totalorder %s24, 0
      %p213 = por %p211, %p212
      %p214 = scmp.ne.s32.totalorder %s202, %s203
      %p215 = scmp.eq.s32.totalorder %s25, 1
      %p216 = por %p214, %p215
      %p218 = scmp.ne.s32.totalorder %s203, %s217
      %p219 = scmp.eq.s32.totalorder %s25, 0
      %p220 = por %p218, %p219
      %s222 = sadd.s32 %s221, 1
      %p225 = scmp.eq.s32.totalorder %s19, 1
      %p226 = scmp.ne.s32.totalorder %s221, %s223
      %p227 = scmp.eq.s32.totalorder %s19, 0
      %p228 = por %p226, %p227
      %p229 = scmp.ne.s32.totalorder %s221, %s223
      %p230 = scmp.eq.s32.totalorder %s24, 1
      %p231 = por %p229, %p230
      %p232 = scmp.ne.s32.totalorder %s223, %s224
      %p233 = scmp.eq.s32.totalorder %s24, 0
      %p234 = por %p232, %p233
      %p235 = scmp.ne.s32.totalorder %s223, %s224
      %p236 = scmp.eq.s32.totalorder %s25, 1
      %p237 = por %p235, %p236
      %p239 = scmp.ne.s32.totalorder %s224, %s238
      %p240 = scmp.eq.s32.totalorder %s25, 0
      %p241 = por %p239, %p240
      %s242 = ssub.s32 %s19, %s26
      %p243 = scmp.eq.s32.totalorder %s242, 0
      %s245 = sadd.s32 %s244, 1
      %s246 = scalar_select %p243, %s244, %s245
      %p249 = pneg %p243
      %p250 = scmp.eq.s32.totalorder %s19, 1
      %p251 = por %p249, %p250
      %p252 = scmp.ne.s32.totalorder %s244, %s247
      %p253 = scmp.eq.s32.totalorder %s19, 0
      %p254 = por %p252, %p253
      %p255 = scmp.ne.s32.totalorder %s244, %s247
      %p256 = scmp.eq.s32.totalorder %s24, 1
      %p257 = por %p255, %p256
      %p258 = scmp.ne.s32.totalorder %s247, %s248
      %p259 = scmp.eq.s32.totalorder %s24, 0
      %p260 = por %p258, %p259
      %p261 = scmp.ne.s32.totalorder %s247, %s248
      %p262 = scmp.eq.s32.totalorder %s25, 1
      %p263 = por %p261, %p262
      %p265 = scmp.ne.s32.totalorder %s248, %s264
      %p266 = scmp.eq.s32.totalorder %s25, 0
      %p267 = por %p265, %p266
      %p268 = scmp.le.s32.totalorder 1, %s19
      %p269 = scmp.lt.s32.totalorder %s19, 3
      %p270 = pnand %p268, %p269
      %p271 = pneg %p270
      // Predicated region
      $region9: #{forward.1} parent=5 // pred_check
        _
      $region10: #{forward.1} parent=5 // pred_check_branch
        %273 = sbr.rel (%p270) target = $region12
      $region11: #{forward.1} parent=5 // pred_region
        %s274 = ssub.s32 %s19, 1
        // Predicated region
        $region13: #{forward.1} parent=11 // pred_check
          %p275 = pneg %p66
        $region14: #{forward.1} parent=11 // pred_check_branch
          %277 = sbr.rel (%p275) target = $region16
        $region15: #{forward.1} parent=11 // pred_region
          _
        $region16: #{forward.1} parent=11 // pred_fallthru
          _
        // Predicated region
        $region17: #{forward.1} parent=11 // pred_check
          %p278 = pneg %p87
        $region18: #{forward.1} parent=11 // pred_check_branch
          %280 = sbr.rel (%p278) target = $region20
        $region19: #{forward.1} parent=11 // pred_region
          _
        $region20: #{forward.1} parent=11 // pred_fallthru
          _
        // Predicated region
        $region21: #{forward.1} parent=11 // pred_check
          %p281 = pneg %p108
        $region22: #{forward.1} parent=11 // pred_check_branch
          %283 = sbr.rel (%p281) target = $region24
        $region23: #{forward.1} parent=11 // pred_region
          %s285 = ssub.s32 3072, 3072
          %286 = vsyncadd [#allocation3], %s285
          %s287 = sshll.u32 [#allocation2], 4
          %s288 = int_to_ptr.vmem [resolvable:$true] %s287
          %293 = dma.hbm_to_vmem [thread:$0]  %s3, 3072, %s288, [#allocation3], 64, 64, 4
        $region24: #{forward.1} parent=11 // pred_fallthru
          _
        // Predicated region
        $region25: #{forward.1} parent=11 // pred_check
          %p294 = pneg %p129
        $region26: #{forward.1} parent=11 // pred_check_branch
          %296 = sbr.rel (%p294) target = $region28
        $region27: #{forward.1} parent=11 // pred_region
          _
        $region28: #{forward.1} parent=11 // pred_fallthru
          _
        // Predicated region
        $region29: #{forward.1} parent=11 // pred_check
          %p297 = pneg %p150
        $region30: #{forward.1} parent=11 // pred_check_branch
          %299 = sbr.rel (%p297) target = $region32
        $region31: #{forward.1} parent=11 // pred_region
          _
        $region32: #{forward.1} parent=11 // pred_fallthru
          _
        // Predicated region
        $region33: #{forward.1} parent=11 // pred_check
          %p300 = pneg %p171
        $region34: #{forward.1} parent=11 // pred_check_branch
          %302 = sbr.rel (%p300) target = $region36
        $region35: #{forward.1} parent=11 // pred_region
          %s304 = ssub.s32 12288, 12288
          %305 = vsyncadd [#allocation5], %s304
          %s306 = sshll.u32 [#allocation4], 4
          %s307 = int_to_ptr.vmem [resolvable:$true] %s306
          %312 = dma.hbm_to_vmem [thread:$0]  %s6, 12288, %s307, [#allocation5], 192, 192, 12
        $region36: #{forward.1} parent=11 // pred_fallthru
          _
        // Predicated region
        $region37: #{forward.1} parent=11 // pred_check
          %p313 = pneg %p192
        $region38: #{forward.1} parent=11 // pred_check_branch
          %315 = sbr.rel (%p313) target = $region40
        $region39: #{forward.1} parent=11 // pred_region
          %s317 = ssub.s32 8192, 8192
          %318 = vsyncadd [#allocation5], %s317
          %s319 = sshll.u32 [#allocation6], 4
          %s320 = int_to_ptr.vmem [resolvable:$true] %s319
          %325 = dma.hbm_to_vmem [thread:$0]  %s7, 8192, %s320, [#allocation5], 64, 64, 4
        $region40: #{forward.1} parent=11 // pred_fallthru
          _
        // Predicated region
        $region41: #{forward.1} parent=11 // pred_check
          %p326 = pneg %p213
        $region42: #{forward.1} parent=11 // pred_check_branch
          %328 = sbr.rel (%p326) target = $region44
        $region43: #{forward.1} parent=11 // pred_region
          %s330 = ssub.s32 4096, 4096
          %331 = vsyncadd [#allocation8], %s330
          %s332 = sshll.u32 [#allocation7], 4
          %s333 = int_to_ptr.vmem [resolvable:$true] %s332
          %338 = dma.hbm_to_vmem [thread:$0]  %s8, 4096, %s333, [#allocation8], 64, 64, 4
        $region44: #{forward.1} parent=11 // pred_fallthru
          _
        // Predicated region
        $region45: #{forward.1} parent=11 // pred_check
          %p339 = pneg %p234
        $region46: #{forward.1} parent=11 // pred_check_branch
          %341 = sbr.rel (%p339) target = $region48
        $region47: #{forward.1} parent=11 // pred_region
          %s343 = ssub.s32 1024, 1024
          %344 = vsyncadd [#allocation8], %s343
          %s345 = sshll.u32 [#allocation9], 4
          %s346 = int_to_ptr.vmem [resolvable:$true] %s345
          %351 = dma.hbm_to_vmem [thread:$0]  %s9, 1024, %s346, [#allocation8], 128, 128, 8
        $region48: #{forward.1} parent=11 // pred_fallthru
          _
      $region12: #{forward.1} parent=5 // pred_fallthru
        _
      %p352 = scmp.lt.s32.totalorder %s19, 2
      // Predicated region
      $region49: #{forward.1} parent=5 // pred_check
        %p353 = pneg %p352
      $region50: #{forward.1} parent=5 // pred_check_branch
        %355 = sbr.rel (%p353) target = $region52
      $region51: #{forward.1} parent=5 // pred_region
        // Predicated region
        $region53: #{forward.1} parent=51 // pred_check
          %p356 = pneg %p39
        $region54: #{forward.1} parent=51 // pred_check_branch
          %358 = sbr.rel (%p356) target = $region56
        $region55: #{forward.1} parent=51 // pred_region
          %p359 = scmp.lt.s32.totalorder %s19, 1
          %s360 = scalar_select %p359, %s19, 1
          %s361 = smul.addr %s360, 7
          %s362 = smul.addr %s361, 8
          %s363 = scalar_lea.vmem %s0, %s362
        $region56: #{forward.1} parent=51 // pred_fallthru
          _
      $region52: #{forward.1} parent=5 // pred_fallthru
        _
      %p364 = scmp.le.s32.totalorder 1, %s19
      %p365 = scmp.lt.s32.totalorder %s19, 3
      %p366 = pnand %p364, %p365
      %p367 = pneg %p366
      // Predicated region
      $region57: #{forward.1} parent=5 // pred_check
        _
      $region58: #{forward.1} parent=5 // pred_check_branch
        %369 = sbr.rel (%p366) target = $region60
      $region59: #{forward.1} parent=5 // pred_region
        %s370 = ssub.s32 %s19, 1
        // Predicated region
        $region61: #{forward.1} parent=59 // pred_check
          %p371 = pneg %p108
        $region62: #{forward.1} parent=59 // pred_check_branch
          %373 = sbr.rel (%p371) target = $region64
        $region63: #{forward.1} parent=59 // pred_region
          %374 = dma.done [#allocation3], 3072
        $region64: #{forward.1} parent=59 // pred_fallthru
          _
        // Predicated region
        $region65: #{forward.1} parent=59 // pred_check
          %p375 = pneg %p171
        $region66: #{forward.1} parent=59 // pred_check_branch
          %377 = sbr.rel (%p375) target = $region68
        $region67: #{forward.1} parent=59 // pred_region
          %378 = dma.done [#allocation5], 12288
        $region68: #{forward.1} parent=59 // pred_fallthru
          _
        // Predicated region
        $region69: #{forward.1} parent=59 // pred_check
          %p379 = pneg %p192
        $region70: #{forward.1} parent=59 // pred_check_branch
          %381 = sbr.rel (%p379) target = $region72
        $region71: #{forward.1} parent=59 // pred_region
          %382 = dma.done [#allocation5], 8192
        $region72: #{forward.1} parent=59 // pred_fallthru
          _
        // Predicated region
        $region73: #{forward.1} parent=59 // pred_check
          %p383 = pneg %p213
        $region74: #{forward.1} parent=59 // pred_check_branch
          %385 = sbr.rel (%p383) target = $region76
        $region75: #{forward.1} parent=59 // pred_region
          %386 = dma.done [#allocation8], 4096
        $region76: #{forward.1} parent=59 // pred_fallthru
          _
        // Predicated region
        $region77: #{forward.1} parent=59 // pred_check
          %p387 = pneg %p234
        $region78: #{forward.1} parent=59 // pred_check_branch
          %389 = sbr.rel (%p387) target = $region80
        $region79: #{forward.1} parent=59 // pred_region
          %390 = dma.done [#allocation8], 1024
        $region80: #{forward.1} parent=59 // pred_fallthru
          _
        %p391 = scmp.lt.s32.totalorder %s24, 1
        %s392 = scalar_select %p391, %s24, 1
        %s393 = smul.addr %s392, 7
        %s394 = smul.addr %s393, 8
        %s395 = scalar_lea.vmem %s0, %s394
        %p396 = pneg %p45
        %p397 = pneg %p42
        %p398 = pneg %p66
        %p399 = pneg %p63
        %p400 = pneg %p87
        %p401 = pneg %p84
        %p402 = pneg %p108
        %p403 = pneg %p105
        %p404 = pneg %p129
        %p405 = pneg %p126
        %p406 = pneg %p150
        %p407 = pneg %p147
        %p408 = pneg %p171
        %p409 = pneg %p168
        %p410 = pneg %p192
        %p411 = pneg %p189
        %p412 = pneg %p213
        %p413 = pneg %p210
        %p414 = pneg %p234
        %p415 = pneg %p231
        %p416 = pneg %p260
        %p417 = pneg %p257
        %p418 = scmp.lt.s32.totalorder %s24, 1
        %s419 = scalar_select %p418, %s24, 1
        %s420 = smul.addr %s419, 16
        %s421 = smul.addr %s420, 8
        %s422 = scalar_lea.vmem %s10, %s421
        %p423 = scmp.lt.s32.totalorder %s24, 1
        %s424 = scalar_select %p423, %s24, 1
        %s425 = smul.addr %s424, 7
        %s426 = smul.addr %s425, 8
        %s427 = scalar_lea.vmem %s0, %s426
        %p428 = scmp.lt.s32.totalorder %s24, 1
        %s429 = scalar_select %p428, %s24, 1
        %s430 = smul.addr %s429, 16
        %s431 = smul.addr %s430, 8
        %s432 = scalar_lea.vmem %s10, %s431
        %v434 = vld [vmem:[%s427] sm:$0xff]
        %v435 = vld [vmem:[%s427 + $0x8] sm:$0xff]
        %v436 = vld [vmem:[%s427 + $0x10] sm:$0xff]
        %v437 = vld [vmem:[%s427 + $0x18] sm:$0xff]
        %v438 = vld [vmem:[%s427 + $0x20] sm:$0xff]
        %v439 = vld [vmem:[%s427 + $0x28] sm:$0xff]
        %v440 = vld [vmem:[%s427 + $0x30] sm:$0x1f]
        %v441 = vpack.c.bf16 %v435, %v434
        %v442 = vpack.c.bf16 %v436, %v436
        %v443 = vld [vmem:[%s1] sm:$0xf]
        %s444 = scalar_lea.vmem %s1, 4
        %v445 = vld [vmem:[%s444] sm:$0xf]
        %vm446 = vsmask.f32 7424
        %v448 = vshrl.u32 %v441, 16
        %v450 = vshll.u32 %v441, 16
        %v452 = vrot.slane %v450, 1
        %v453 = vor.u32 %v448, %v452
        %v455 = vshll.u32 %v442, 16
        %v457 = vrot.slane %v455, 1
        %v458 = vsel %vm446, %v453, %v457
        %v459 = vshrl.u32 %v442, 16
        %v461 = vor.u32 %v459, %v457
        %vm462 = vcmask 64512
        %v464 = vsel %vm462, %v458, 0
        %v467 = vsel %vm462, %v461, 0
        %vm469 = vcmask 1043456
        %v471 = vsel %vm469, %v445, 0
        %473 = vmatprep.subr.bf16.mxu0 0
        %474 = vmatpush1.bf16.msra.mxu0 %v471
        %475 = vmatprep.subr.bf16.mxu0 0
        %476 = vmatpush1.bf16.msra.mxu0 0
        %477 = vmatprep.subr.bf16.mxu0 0
        %478 = vmatpush1.bf16.msra.mxu0 0
        %479 = vmatprep.subr.bf16.mxu0 0
        %480 = vmatpush1.bf16.msra.mxu0 0
        %481 = vmatprep.subr.bf16.mxu0 0
        %482 = vmatpush1.bf16.msra.mxu0 0
        %483 = vmatprep.subr.bf16.mxu0 0
        %484 = vmatpush1.bf16.msra.mxu0 0
        %485 = vmatprep.subr.bf16.mxu0 0
        %486 = vmatpush1.bf16.msra.mxu0 0
        %487 = vmatprep.subr.bf16.mxu0 0
        %488 = vmatpush1.bf16.msra.mxu0 0
        %489 = vmatprep.subr.bf16.mxu0 0
        %490 = vmatpush1.bf16.msra.mxu0 0
        %491 = vmatprep.subr.bf16.mxu0 0
        %492 = vmatpush1.bf16.msra.mxu0 0
        %493 = vmatprep.subr.bf16.mxu0 0
        %494 = vmatpush1.bf16.msra.mxu0 0
        %495 = vmatprep.subr.bf16.mxu0 0
        %496 = vmatpush1.bf16.msra.mxu0 0
        %497 = vmatprep.subr.bf16.mxu0 0
        %498 = vmatpush1.bf16.msra.mxu0 0
        %499 = vmatprep.subr.bf16.mxu0 0
        %500 = vmatpush1.bf16.msra.mxu0 0
        %501 = vmatprep.subr.bf16.mxu0 0
        %502 = vmatpush1.bf16.msra.mxu0 0
        %503 = vmatprep.subr.bf16.mxu0 0
        %504 = vmatpush1.bf16.msra.mxu0 0
        %505 = vmatprep.mubr.bf16.mxu0 0
        %506 = vmatmul.mubr.bf16.gmra.mrb[0].mxu0 %v464
        %v507 = vpop.f32.mrb[0].mxu0
        %v508 = vadd.f32 0.0, %v507
        %v509 = vpop.f32.mrb[0].mxu0
        %v510 = vpop.f32.mrb[0].mxu0
        %v511 = vadd.f32 0.0, %v510
        %v512 = vpop.f32.mrb[0].mxu0
        %513 = vmatprep.mubr.bf16.mxu0 0
        %514 = vmatmul.mubr.bf16.gmra.mrb[0].mxu0 %v467
        %v515 = vpop.f32.mrb[0].mxu0
        %v516 = vadd.f32 0.0, %v515
        %v517 = vpop.f32.mrb[0].mxu0
        %v518 = vpop.f32.mrb[0].mxu0
        %v519 = vpop.f32.mrb[0].mxu0
        %520 = vdwg.mxu0
        %v521 = vsel %vm462, %v441, 0
        %v523 = vsel %vm462, %v442, 0
        %v526 = vsel %vm469, %v443, 0
        %528 = vmatprep.subr.bf16.mxu0 0
        %529 = vmatpush1.bf16.msra.mxu0 %v526
        %530 = vmatprep.subr.bf16.mxu0 0
        %531 = vmatpush1.bf16.msra.mxu0 0
        %532 = vmatprep.subr.bf16.mxu0 0
        %533 = vmatpush1.bf16.msra.mxu0 0
        %534 = vmatprep.subr.bf16.mxu0 0
        %535 = vmatpush1.bf16.msra.mxu0 0
        %536 = vmatprep.subr.bf16.mxu0 0
        %537 = vmatpush1.bf16.msra.mxu0 0
        %538 = vmatprep.subr.bf16.mxu0 0
        %539 = vmatpush1.bf16.msra.mxu0 0
        %540 = vmatprep.subr.bf16.mxu0 0
        %541 = vmatpush1.bf16.msra.mxu0 0
        %542 = vmatprep.subr.bf16.mxu0 0
        %543 = vmatpush1.bf16.msra.mxu0 0
        %544 = vmatprep.subr.bf16.mxu0 0
        %545 = vmatpush1.bf16.msra.mxu0 0
        %546 = vmatprep.subr.bf16.mxu0 0
        %547 = vmatpush1.bf16.msra.mxu0 0
        %548 = vmatprep.subr.bf16.mxu0 0
        %549 = vmatpush1.bf16.msra.mxu0 0
        %550 = vmatprep.subr.bf16.mxu0 0
        %551 = vmatpush1.bf16.msra.mxu0 0
        %552 = vmatprep.subr.bf16.mxu0 0
        %553 = vmatpush1.bf16.msra.mxu0 0
        %554 = vmatprep.subr.bf16.mxu0 0
        %555 = vmatpush1.bf16.msra.mxu0 0
        %556 = vmatprep.subr.bf16.mxu0 0
        %557 = vmatpush1.bf16.msra.mxu0 0
        %558 = vmatprep.subr.bf16.mxu0 0
        %559 = vmatpush1.bf16.msra.mxu0 0
        %560 = vmatprep.mubr.bf16.mxu0 0
        %561 = vmatmul.mubr.bf16.gmra.mrb[0].mxu0 %v521
        %v562 = vpop.f32.mrb[0].mxu0
        %v563 = vadd.f32 %v508, %v562
        %v564 = vpop.f32.mrb[0].mxu0
        %v565 = vpop.f32.mrb[0].mxu0
        %v566 = vadd.f32 %v511, %v565
        %v567 = vpop.f32.mrb[0].mxu0
        %568 = vmatprep.mubr.bf16.mxu0 0
        %569 = vmatmul.mubr.bf16.gmra.mrb[0].mxu0 %v523
        %v570 = vpop.f32.mrb[0].mxu0
        %v571 = vadd.f32 %v516, %v570
        %v572 = vpop.f32.mrb[0].mxu0
        %v573 = vpop.f32.mrb[0].mxu0
        %v574 = vpop.f32.mrb[0].mxu0
        %575 = vdwg.mxu0
        %s576 = scalar_lea.vmem %s1, 8
        %v577 = vld [vmem:[%s576] sm:$0xf]
        %vm580 = vcmask 1046528
        %v581 = vrot.slane %v441, 1
        %v582 = vrot.slane %v442, 1
        %v583 = vsel %vm580, %v581, %v582
        %v585 = vsel %vm462, %v583, 0
        %v588 = vsel %vm462, %v582, 0
        %v591 = vsel %vm469, %v577, 0
        %593 = vmatprep.subr.bf16.mxu0 0
        %594 = vmatpush1.bf16.msra.mxu0 %v591
        %595 = vmatprep.subr.bf16.mxu0 0
        %596 = vmatpush1.bf16.msra.mxu0 0
        %597 = vmatprep.subr.bf16.mxu0 0
        %598 = vmatpush1.bf16.msra.mxu0 0
        %599 = vmatprep.subr.bf16.mxu0 0
        %600 = vmatpush1.bf16.msra.mxu0 0
        %601 = vmatprep.subr.bf16.mxu0 0
        %602 = vmatpush1.bf16.msra.mxu0 0
        %603 = vmatprep.subr.bf16.mxu0 0
        %604 = vmatpush1.bf16.msra.mxu0 0
        %605 = vmatprep.subr.bf16.mxu0 0
        %606 = vmatpush1.bf16.msra.mxu0 0
        %607 = vmatprep.subr.bf16.mxu0 0
        %608 = vmatpush1.bf16.msra.mxu0 0
        %609 = vmatprep.subr.bf16.mxu0 0
        %610 = vmatpush1.bf16.msra.mxu0 0
        %611 = vmatprep.subr.bf16.mxu0 0
        %612 = vmatpush1.bf16.msra.mxu0 0
        %613 = vmatprep.subr.bf16.mxu0 0
        %614 = vmatpush1.bf16.msra.mxu0 0
        %615 = vmatprep.subr.bf16.mxu0 0
        %616 = vmatpush1.bf16.msra.mxu0 0
        %617 = vmatprep.subr.bf16.mxu0 0
        %618 = vmatpush1.bf16.msra.mxu0 0
        %619 = vmatprep.subr.bf16.mxu0 0
        %620 = vmatpush1.bf16.msra.mxu0 0
        %621 = vmatprep.subr.bf16.mxu0 0
        %622 = vmatpush1.bf16.msra.mxu0 0
        %623 = vmatprep.subr.bf16.mxu0 0
        %624 = vmatpush1.bf16.msra.mxu0 0
        %625 = vmatprep.mubr.bf16.mxu0 0
        %626 = vmatmul.mubr.bf16.gmra.mrb[0].mxu0 %v585
        %v627 = vpop.f32.mrb[0].mxu0
        %v628 = vadd.f32 0.0, %v627
        %v629 = vpop.f32.mrb[0].mxu0
        %v630 = vpop.f32.mrb[0].mxu0
        %v631 = vadd.f32 0.0, %v630
        %v632 = vpop.f32.mrb[0].mxu0
        %633 = vmatprep.mubr.bf16.mxu0 0
        %634 = vmatmul.mubr.bf16.gmra.mrb[0].mxu0 %v588
        %v635 = vpop.f32.mrb[0].mxu0
        %v636 = vadd.f32 0.0, %v635
        %v637 = vpop.f32.mrb[0].mxu0
        %v638 = vpop.f32.mrb[0].mxu0
        %v639 = vpop.f32.mrb[0].mxu0
        %640 = vdwg.mxu0
        %v641 = vadd.f32 %v563, %v628
        %v642 = vadd.f32 %v566, %v631
        %v643 = vadd.f32 %v571, %v636
        %s644 = scalar_lea.vmem %s1, 12
        %v645 = vld [vmem:[%s644] sm:$0xf]
        %vm646 = vsmask.f32 6400
        %v647 = vrot.slane %v448, 1
        %v648 = vrot.slane %v450, 2
        %v649 = vor.u32 %v647, %v648
        %v650 = vrot.slane %v459, 1
        %v651 = vrot.slane %v455, 2
        %v652 = vor.u32 %v650, %v651
        %v653 = vsel %vm646, %v649, %v652
        %v655 = vsel %vm462, %v653, 0
        %v658 = vsel %vm462, %v652, 0
        %v661 = vsel %vm469, %v645, 0
        %663 = vmatprep.subr.bf16.mxu0 0
        %664 = vmatpush1.bf16.msra.mxu0 %v661
        %665 = vmatprep.subr.bf16.mxu0 0
        %666 = vmatpush1.bf16.msra.mxu0 0
        %667 = vmatprep.subr.bf16.mxu0 0
        %668 = vmatpush1.bf16.msra.mxu0 0
        %669 = vmatprep.subr.bf16.mxu0 0
        %670 = vmatpush1.bf16.msra.mxu0 0
        %671 = vmatprep.subr.bf16.mxu0 0
        %672 = vmatpush1.bf16.msra.mxu0 0
        %673 = vmatprep.subr.bf16.mxu0 0
        %674 = vmatpush1.bf16.msra.mxu0 0
        %675 = vmatprep.subr.bf16.mxu0 0
        %676 = vmatpush1.bf16.msra.mxu0 0
        %677 = vmatprep.subr.bf16.mxu0 0
        %678 = vmatpush1.bf16.msra.mxu0 0
        %679 = vmatprep.subr.bf16.mxu0 0
        %680 = vmatpush1.bf16.msra.mxu0 0
        %681 = vmatprep.subr.bf16.mxu0 0
        %682 = vmatpush1.bf16.msra.mxu0 0
        %683 = vmatprep.subr.bf16.mxu0 0
        %684 = vmatpush1.bf16.msra.mxu0 0
        %685 = vmatprep.subr.bf16.mxu0 0
        %686 = vmatpush1.bf16.msra.mxu0 0
        %687 = vmatprep.subr.bf16.mxu0 0
        %688 = vmatpush1.bf16.msra.mxu0 0
        %689 = vmatprep.subr.bf16.mxu0 0
        %690 = vmatpush1.bf16.msra.mxu0 0
        %691 = vmatprep.subr.bf16.mxu0 0
        %692 = vmatpush1.bf16.msra.mxu0 0
        %693 = vmatprep.subr.bf16.mxu0 0
        %694 = vmatpush1.bf16.msra.mxu0 0
        %695 = vmatprep.mubr.bf16.mxu0 0
        %696 = vmatmul.mubr.bf16.gmra.mrb[0].mxu0 %v655
        %v697 = vpop.f32.mrb[0].mxu0
        %v698 = vadd.f32 0.0, %v697
        %v699 = vpop.f32.mrb[0].mxu0
        %v700 = vpop.f32.mrb[0].mxu0
        %v701 = vadd.f32 0.0, %v700
        %v702 = vpop.f32.mrb[0].mxu0
        %703 = vmatprep.mubr.bf16.mxu0 0
        %704 = vmatmul.mubr.bf16.gmra.mrb[0].mxu0 %v658
        %v705 = vpop.f32.mrb[0].mxu0
        %v706 = vadd.f32 0.0, %v705
        %v707 = vpop.f32.mrb[0].mxu0
        %v708 = vpop.f32.mrb[0].mxu0
        %v709 = vpop.f32.mrb[0].mxu0
        %710 = vdwg.mxu0
        %v711 = vadd.f32 %v641, %v698
        %v712 = vadd.f32 %v642, %v701
        %v713 = vadd.f32 %v643, %v706
        %s714 = scalar_lea.vmem %s1, 16
        %v715 = vld [vmem:[%s714] sm:$0xf]
        %vm716 = vcmask 1045504
        %v717 = vrot.slane %v441, 2
        %v718 = vrot.slane %v442, 2
        %v719 = vsel %vm716, %v717, %v718
        %v721 = vsel %vm462, %v719, 0
        %v724 = vsel %vm462, %v718, 0
        %v727 = vsel %vm469, %v715, 0
        %729 = vmatprep.subr.bf16.mxu0 0
        %730 = vmatpush1.bf16.msra.mxu0 %v727
        %731 = vmatprep.subr.bf16.mxu0 0
        %732 = vmatpush1.bf16.msra.mxu0 0
        %733 = vmatprep.subr.bf16.mxu0 0
        %734 = vmatpush1.bf16.msra.mxu0 0
        %735 = vmatprep.subr.bf16.mxu0 0
        %736 = vmatpush1.bf16.msra.mxu0 0
        %737 = vmatprep.subr.bf16.mxu0 0
        %738 = vmatpush1.bf16.msra.mxu0 0
        %739 = vmatprep.subr.bf16.mxu0 0
        %740 = vmatpush1.bf16.msra.mxu0 0
        %741 = vmatprep.subr.bf16.mxu0 0
        %742 = vmatpush1.bf16.msra.mxu0 0
        %743 = vmatprep.subr.bf16.mxu0 0
        %744 = vmatpush1.bf16.msra.mxu0 0
        %745 = vmatprep.subr.bf16.mxu0 0
        %746 = vmatpush1.bf16.msra.mxu0 0
        %747 = vmatprep.subr.bf16.mxu0 0
        %748 = vmatpush1.bf16.msra.mxu0 0
        %749 = vmatprep.subr.bf16.mxu0 0
        %750 = vmatpush1.bf16.msra.mxu0 0
        %751 = vmatprep.subr.bf16.mxu0 0
        %752 = vmatpush1.bf16.msra.mxu0 0
        %753 = vmatprep.subr.bf16.mxu0 0
        %754 = vmatpush1.bf16.msra.mxu0 0
        %755 = vmatprep.subr.bf16.mxu0 0
        %756 = vmatpush1.bf16.msra.mxu0 0
        %757 = vmatprep.subr.bf16.mxu0 0
        %758 = vmatpush1.bf16.msra.mxu0 0
        %759 = vmatprep.subr.bf16.mxu0 0
        %760 = vmatpush1.bf16.msra.mxu0 0
        %761 = vmatprep.mubr.bf16.mxu0 0
        %762 = vmatmul.mubr.bf16.gmra.mrb[0].mxu0 %v721
        %v763 = vpop.f32.mrb[0].mxu0
        %v764 = vadd.f32 0.0, %v763
        %v765 = vpop.f32.mrb[0].mxu0
        %v766 = vpop.f32.mrb[0].mxu0
        %v767 = vadd.f32 0.0, %v766
        %v768 = vpop.f32.mrb[0].mxu0
        %769 = vmatprep.mubr.bf16.mxu0 0
        %770 = vmatmul.mubr.bf16.gmra.mrb[0].mxu0 %v724
        %v771 = vpop.f32.mrb[0].mxu0
        %v772 = vadd.f32 0.0, %v771
        %v773 = vpop.f32.mrb[0].mxu0
        %v774 = vpop.f32.mrb[0].mxu0
        %v775 = vpop.f32.mrb[0].mxu0
        %776 = vdwg.mxu0
        %v777 = vadd.f32 %v711, %v764
        %v778 = vadd.f32 %v712, %v767
        %v779 = vadd.f32 %v713, %v772
        %v780 = vpack.c.bf16 %v437, %v436
        %s781 = scalar_lea.vmem %s1, 20
        %v782 = vld [vmem:[%s781] sm:$0xf]
        %vm783 = vsmask.f32 5376
        %v784 = vrot.slane %v448, 2
        %v785 = vrot.slane %v450, 3
        %v786 = vor.u32 %v784, %v785
        %v788 = vshrl.u32 %v780, 16
        %v790 = vrot.slane %v788, 2
        %v791 = vshll.u32 %v780, 16
        %v793 = vrot.slane %v791, 3
        %v794 = vor.u32 %v790, %v793
        %v795 = vsel %vm783, %v786, %v794
        %v797 = vsel %vm462, %v795, 0
        %v800 = vsel %vm462, %v794, 0
        %v803 = vsel %vm469, %v782, 0
        %805 = vmatprep.subr.bf16.mxu0 0
        %806 = vmatpush1.bf16.msra.mxu0 %v803
        %807 = vmatprep.subr.bf16.mxu0 0
        %808 = vmatpush1.bf16.msra.mxu0 0
        %809 = vmatprep.subr.bf16.mxu0 0
        %810 = vmatpush1.bf16.msra.mxu0 0
        %811 = vmatprep.subr.bf16.mxu0 0
        %812 = vmatpush1.bf16.msra.mxu0 0
        %813 = vmatprep.subr.bf16.mxu0 0
        %814 = vmatpush1.bf16.msra.mxu0 0
        %815 = vmatprep.subr.bf16.mxu0 0
        %816 = vmatpush1.bf16.msra.mxu0 0
        %817 = vmatprep.subr.bf16.mxu0 0
        %818 = vmatpush1.bf16.msra.mxu0 0
        %819 = vmatprep.subr.bf16.mxu0 0
        %820 = vmatpush1.bf16.msra.mxu0 0
        %821 = vmatprep.subr.bf16.mxu0 0
        %822 = vmatpush1.bf16.msra.mxu0 0
        %823 = vmatprep.subr.bf16.mxu0 0
        %824 = vmatpush1.bf16.msra.mxu0 0
        %825 = vmatprep.subr.bf16.mxu0 0
        %826 = vmatpush1.bf16.msra.mxu0 0
        %827 = vmatprep.subr.bf16.mxu0 0
        %828 = vmatpush1.bf16.msra.mxu0 0
        %829 = vmatprep.subr.bf16.mxu0 0
        %830 = vmatpush1.bf16.msra.mxu0 0
        %831 = vmatprep.subr.bf16.mxu0 0
        %832 = vmatpush1.bf16.msra.mxu0 0
        %833 = vmatprep.subr.bf16.mxu0 0
        %834 = vmatpush1.bf16.msra.mxu0 0
        %835 = vmatprep.subr.bf16.mxu0 0
        %836 = vmatpush1.bf16.msra.mxu0 0
        %837 = vmatprep.mubr.bf16.mxu0 0
        %838 = vmatmul.mubr.bf16.gmra.mrb[0].mxu0 %v797
        %v839 = vpop.f32.mrb[0].mxu0
        %v840 = vadd.f32 0.0, %v839
        %v841 = vpop.f32.mrb[0].mxu0
        %v842 = vpop.f32.mrb[0].mxu0
        %v843 = vadd.f32 0.0, %v842
        %v844 = vpop.f32.mrb[0].mxu0
        %845 = vmatprep.mubr.bf16.mxu0 0
        %846 = vmatmul.mubr.bf16.gmra.mrb[0].mxu0 %v800
        %v847 = vpop.f32.mrb[0].mxu0
        %v848 = vadd.f32 0.0, %v847
        %v849 = vpop.f32.mrb[0].mxu0
        %v850 = vpop.f32.mrb[0].mxu0
        %v851 = vpop.f32.mrb[0].mxu0
        %852 = vdwg.mxu0
        %v853 = vadd.f32 %v777, %v840
        %v854 = vadd.f32 %v778, %v843
        %v855 = vadd.f32 %v779, %v848
        %s856 = scalar_lea.vmem %s1, 24
        %v857 = vld [vmem:[%s856] sm:$0xf]
        %vm859 = vcmask 1044480
        %v860 = vrot.slane %v441, 3
        %v861 = vrot.slane %v780, 3
        %v862 = vsel %vm859, %v860, %v861
        %v864 = vsel %vm462, %v862, 0
        %v867 = vsel %vm462, %v861, 0
        %v870 = vsel %vm469, %v857, 0
        %872 = vmatprep.subr.bf16.mxu0 0
        %873 = vmatpush1.bf16.msra.mxu0 %v870
        %874 = vmatprep.subr.bf16.mxu0 0
        %875 = vmatpush1.bf16.msra.mxu0 0
        %876 = vmatprep.subr.bf16.mxu0 0
        %877 = vmatpush1.bf16.msra.mxu0 0
        %878 = vmatprep.subr.bf16.mxu0 0
        %879 = vmatpush1.bf16.msra.mxu0 0
        %880 = vmatprep.subr.bf16.mxu0 0
        %881 = vmatpush1.bf16.msra.mxu0 0
        %882 = vmatprep.subr.bf16.mxu0 0
        %883 = vmatpush1.bf16.msra.mxu0 0
        %884 = vmatprep.subr.bf16.mxu0 0
        %885 = vmatpush1.bf16.msra.mxu0 0
        %886 = vmatprep.subr.bf16.mxu0 0
        %887 = vmatpush1.bf16.msra.mxu0 0
        %888 = vmatprep.subr.bf16.mxu0 0
        %889 = vmatpush1.bf16.msra.mxu0 0
        %890 = vmatprep.subr.bf16.mxu0 0
        %891 = vmatpush1.bf16.msra.mxu0 0
        %892 = vmatprep.subr.bf16.mxu0 0
        %893 = vmatpush1.bf16.msra.mxu0 0
        %894 = vmatprep.subr.bf16.mxu0 0
        %895 = vmatpush1.bf16.msra.mxu0 0
        %896 = vmatprep.subr.bf16.mxu0 0
        %897 = vmatpush1.bf16.msra.mxu0 0
        %898 = vmatprep.subr.bf16.mxu0 0
        %899 = vmatpush1.bf16.msra.mxu0 0
        %900 = vmatprep.subr.bf16.mxu0 0
        %901 = vmatpush1.bf16.msra.mxu0 0
        %902 = vmatprep.subr.bf16.mxu0 0
        %903 = vmatpush1.bf16.msra.mxu0 0
        %904 = vmatprep.mubr.bf16.mxu0 0
        %905 = vmatmul.mubr.bf16.gmra.mrb[0].mxu0 %v864
        %v906 = vpop.f32.mrb[0].mxu0
        %v907 = vadd.f32 0.0, %v906
        %v908 = vpop.f32.mrb[0].mxu0
        %v909 = vpop.f32.mrb[0].mxu0
        %v910 = vadd.f32 0.0, %v909
        %v911 = vpop.f32.mrb[0].mxu0
        %912 = vmatprep.mubr.bf16.mxu0 0
        %913 = vmatmul.mubr.bf16.gmra.mrb[0].mxu0 %v867
        %v914 = vpop.f32.mrb[0].mxu0
        %v915 = vadd.f32 0.0, %v914
        %v916 = vpop.f32.mrb[0].mxu0
        %v917 = vpop.f32.mrb[0].mxu0
        %v918 = vpop.f32.mrb[0].mxu0
        %919 = vdwg.mxu0
        %v920 = vadd.f32 %v853, %v907
        %v921 = vadd.f32 %v854, %v910
        %v922 = vadd.f32 %v855, %v915
        %s923 = scalar_lea.vmem %s1, 28
        %v924 = vld [vmem:[%s923] sm:$0xf]
        %vm925 = vsmask.f32 4352
        %v926 = vrot.slane %v448, 3
        %v927 = vrot.slane %v450, 4
        %v928 = vor.u32 %v926, %v927
        %v929 = vrot.slane %v788, 3
        %v930 = vrot.slane %v791, 4
        %v931 = vor.u32 %v929, %v930
        %v932 = vsel %vm925, %v928, %v931
        %v934 = vsel %vm462, %v932, 0
        %v937 = vsel %vm462, %v931, 0
        %v940 = vsel %vm469, %v924, 0
        %942 = vmatprep.subr.bf16.mxu0 0
        %943 = vmatpush1.bf16.msra.mxu0 %v940
        %944 = vmatprep.subr.bf16.mxu0 0
        %945 = vmatpush1.bf16.msra.mxu0 0
        %946 = vmatprep.subr.bf16.mxu0 0
        %947 = vmatpush1.bf16.msra.mxu0 0
        %948 = vmatprep.subr.bf16.mxu0 0
        %949 = vmatpush1.bf16.msra.mxu0 0
        %950 = vmatprep.subr.bf16.mxu0 0
        %951 = vmatpush1.bf16.msra.mxu0 0
        %952 = vmatprep.subr.bf16.mxu0 0
        %953 = vmatpush1.bf16.msra.mxu0 0
        %954 = vmatprep.subr.bf16.mxu0 0
        %955 = vmatpush1.bf16.msra.mxu0 0
        %956 = vmatprep.subr.bf16.mxu0 0
        %957 = vmatpush1.bf16.msra.mxu0 0
        %958 = vmatprep.subr.bf16.mxu0 0
        %959 = vmatpush1.bf16.msra.mxu0 0
        %960 = vmatprep.subr.bf16.mxu0 0
        %961 = vmatpush1.bf16.msra.mxu0 0
        %962 = vmatprep.subr.bf16.mxu0 0
        %963 = vmatpush1.bf16.msra.mxu0 0
        %964 = vmatprep.subr.bf16.mxu0 0
        %965 = vmatpush1.bf16.msra.mxu0 0
        %966 = vmatprep.subr.bf16.mxu0 0
        %967 = vmatpush1.bf16.msra.mxu0 0
        %968 = vmatprep.subr.bf16.mxu0 0
        %969 = vmatpush1.bf16.msra.mxu0 0
        %970 = vmatprep.subr.bf16.mxu0 0
        %971 = vmatpush1.bf16.msra.mxu0 0
        %972 = vmatprep.subr.bf16.mxu0 0
        %973 = vmatpush1.bf16.msra.mxu0 0
        %974 = vmatprep.mubr.bf16.mxu0 0
        %975 = vmatmul.mubr.bf16.gmra.mrb[0].mxu0 %v934
        %v976 = vpop.f32.mrb[0].mxu0
        %v977 = vadd.f32 0.0, %v976
        %v978 = vpop.f32.mrb[0].mxu0
        %v979 = vpop.f32.mrb[0].mxu0
        %v980 = vadd.f32 0.0, %v979
        %v981 = vpop.f32.mrb[0].mxu0
        %982 = vmatprep.mubr.bf16.mxu0 0
        %983 = vmatmul.mubr.bf16.gmra.mrb[0].mxu0 %v937
        %v984 = vpop.f32.mrb[0].mxu0
        %v985 = vadd.f32 0.0, %v984
        %v986 = vpop.f32.mrb[0].mxu0
        %v987 = vpop.f32.mrb[0].mxu0
        %v988 = vpop.f32.mrb[0].mxu0
        %989 = vdwg.mxu0
        %v990 = vadd.f32 %v920, %v977
        %v991 = vadd.f32 %v921, %v980
        %v992 = vadd.f32 %v922, %v985
        %v993 = vpack.c.bf16 %v436, %v435
        %v994 = vpack.c.bf16 %v437, %v437
        %s995 = scalar_lea.vmem %s1, 32
        %v996 = vld [vmem:[%s995] sm:$0xf]
        %v998 = vsel %vm462, %v993, 0
        %v1001 = vsel %vm462, %v994, 0
        %v1004 = vsel %vm469, %v996, 0
        %1006 = vmatprep.subr.bf16.mxu0 0
        %1007 = vmatpush1.bf16.msra.mxu0 %v1004
        %1008 = vmatprep.subr.bf16.mxu0 0
        %1009 = vmatpush1.bf16.msra.mxu0 0
        %1010 = vmatprep.subr.bf16.mxu0 0
        %1011 = vmatpush1.bf16.msra.mxu0 0
        %1012 = vmatprep.subr.bf16.mxu0 0
        %1013 = vmatpush1.bf16.msra.mxu0 0
        %1014 = vmatprep.subr.bf16.mxu0 0
        %1015 = vmatpush1.bf16.msra.mxu0 0
        %1016 = vmatprep.subr.bf16.mxu0 0
        %1017 = vmatpush1.bf16.msra.mxu0 0
        %1018 = vmatprep.subr.bf16.mxu0 0
        %1019 = vmatpush1.bf16.msra.mxu0 0
        %1020 = vmatprep.subr.bf16.mxu0 0
        %1021 = vmatpush1.bf16.msra.mxu0 0
        %1022 = vmatprep.subr.bf16.mxu0 0
        %1023 = vmatpush1.bf16.msra.mxu0 0
        %1024 = vmatprep.subr.bf16.mxu0 0
        %1025 = vmatpush1.bf16.msra.mxu0 0
        %1026 = vmatprep.subr.bf16.mxu0 0
        %1027 = vmatpush1.bf16.msra.mxu0 0
        %1028 = vmatprep.subr.bf16.mxu0 0
        %1029 = vmatpush1.bf16.msra.mxu0 0
        %1030 = vmatprep.subr.bf16.mxu0 0
        %1031 = vmatpush1.bf16.msra.mxu0 0
        %1032 = vmatprep.subr.bf16.mxu0 0
        %1033 = vmatpush1.bf16.msra.mxu0 0
        %1034 = vmatprep.subr.bf16.mxu0 0
        %1035 = vmatpush1.bf16.msra.mxu0 0
        %1036 = vmatprep.subr.bf16.mxu0 0
        %1037 = vmatpush1.bf16.msra.mxu0 0
        %1038 = vmatprep.mubr.bf16.mxu0 0
        %1039 = vmatmul.mubr.bf16.gmra.mrb[0].mxu0 %v998
        %v1040 = vpop.f32.mrb[0].mxu0
        %v1041 = vadd.f32 0.0, %v1040
        %v1042 = vpop.f32.mrb[0].mxu0
        %v1043 = vpop.f32.mrb[0].mxu0
        %v1044 = vadd.f32 0.0, %v1043
        %v1045 = vpop.f32.mrb[0].mxu0
        %1046 = vmatprep.mubr.bf16.mxu0 0
        %1047 = vmatmul.mubr.bf16.gmra.mrb[0].mxu0 %v1001
        %v1048 = vpop.f32.mrb[0].mxu0
        %v1049 = vadd.f32 0.0, %v1048
        %v1050 = vpop.f32.mrb[0].mxu0
        %v1051 = vpop.f32.mrb[0].mxu0
        %v1052 = vpop.f32.mrb[0].mxu0
        %1053 = vdwg.mxu0
        %v1054 = vadd.f32 %v990, %v1041
        %v1055 = vadd.f32 %v991, %v1044
        %v1056 = vadd.f32 %v992, %v1049
        %s1057 = scalar_lea.vmem %s1, 36
        %v1058 = vld [vmem:[%s1057] sm:$0xf]
        %v1059 = vshrl.u32 %v993, 16
        %v1061 = vshll.u32 %v993, 16
        %v1063 = vrot.slane %v1061, 1
        %v1064 = vor.u32 %v1059, %v1063
        %v1065 = vshll.u32 %v994, 16
        %v1067 = vrot.slane %v1065, 1
        %v1068 = vsel %vm446, %v1064, %v1067
        %v1069 = vshrl.u32 %v994, 16
        %v1071 = vor.u32 %v1069, %v1067
        %v1073 = vsel %vm462, %v1068, 0
        %v1076 = vsel %vm462, %v1071, 0
        %v1079 = vsel %vm469, %v1058, 0
        %1081 = vmatprep.subr.bf16.mxu0 0
        %1082 = vmatpush1.bf16.msra.mxu0 %v1079
        %1083 = vmatprep.subr.bf16.mxu0 0
        %1084 = vmatpush1.bf16.msra.mxu0 0
        %1085 = vmatprep.subr.bf16.mxu0 0
        %1086 = vmatpush1.bf16.msra.mxu0 0
        %1087 = vmatprep.subr.bf16.mxu0 0
        %1088 = vmatpush1.bf16.msra.mxu0 0
        %1089 = vmatprep.subr.bf16.mxu0 0
        %1090 = vmatpush1.bf16.msra.mxu0 0
        %1091 = vmatprep.subr.bf16.mxu0 0
        %1092 = vmatpush1.bf16.msra.mxu0 0
        %1093 = vmatprep.subr.bf16.mxu0 0
        %1094 = vmatpush1.bf16.msra.mxu0 0
        %1095 = vmatprep.subr.bf16.mxu0 0
        %1096 = vmatpush1.bf16.msra.mxu0 0
        %1097 = vmatprep.subr.bf16.mxu0 0
        %1098 = vmatpush1.bf16.msra.mxu0 0
        %1099 = vmatprep.subr.bf16.mxu0 0
        %1100 = vmatpush1.bf16.msra.mxu0 0
        %1101 = vmatprep.subr.bf16.mxu0 0
        %1102 = vmatpush1.bf16.msra.mxu0 0
        %1103 = vmatprep.subr.bf16.mxu0 0
        %1104 = vmatpush1.bf16.msra.mxu0 0
        %1105 = vmatprep.subr.bf16.mxu0 0
        %1106 = vmatpush1.bf16.msra.mxu0 0
        %1107 = vmatprep.subr.bf16.mxu0 0
        %1108 = vmatpush1.bf16.msra.mxu0 0
        %1109 = vmatprep.subr.bf16.mxu0 0
        %1110 = vmatpush1.bf16.msra.mxu0 0
        %1111 = vmatprep.subr.bf16.mxu0 0
        %1112 = vmatpush1.bf16.msra.mxu0 0
        %1113 = vmatprep.mubr.bf16.mxu0 0
        %1114 = vmatmul.mubr.bf16.gmra.mrb[0].mxu0 %v1073
        %v1115 = vpop.f32.mrb[0].mxu0
        %v1116 = vadd.f32 0.0, %v1115
        %v1117 = vpop.f32.mrb[0].mxu0
        %v1118 = vpop.f32.mrb[0].mxu0
        %v1119 = vadd.f32 0.0, %v1118
        %v1120 = vpop.f32.mrb[0].mxu0
        %1121 = vmatprep.mubr.bf16.mxu0 0
        %1122 = vmatmul.mubr.bf16.gmra.mrb[0].mxu0 %v1076
        %v1123 = vpop.f32.mrb[0].mxu0
        %v1124 = vadd.f32 0.0, %v1123
        %v1125 = vpop.f32.mrb[0].mxu0
        %v1126 = vpop.f32.mrb[0].mxu0
        %v1127 = vpop.f32.mrb[0].mxu0
        %1128 = vdwg.mxu0
        %v1129 = vadd.f32 %v1054, %v1116
        %v1130 = vadd.f32 %v1055, %v1119
        %v1131 = vadd.f32 %v1056, %v1124
        %s1132 = scalar_lea.vmem %s1, 40
        %v1133 = vld [vmem:[%s1132] sm:$0xf]
        %v1136 = vrot.slane %v993, 1
        %v1137 = vrot.slane %v994, 1
        %v1138 = vsel %vm580, %v1136, %v1137
        %v1140 = vsel %vm462, %v1138, 0
        %v1143 = vsel %vm462, %v1137, 0
        %v1146 = vsel %vm469, %v1133, 0
        %1148 = vmatprep.subr.bf16.mxu0 0
        %1149 = vmatpush1.bf16.msra.mxu0 %v1146
        %1150 = vmatprep.subr.bf16.mxu0 0
        %1151 = vmatpush1.bf16.msra.mxu0 0
        %1152 = vmatprep.subr.bf16.mxu0 0
        %1153 = vmatpush1.bf16.msra.mxu0 0
        %1154 = vmatprep.subr.bf16.mxu0 0
        %1155 = vmatpush1.bf16.msra.mxu0 0
        %1156 = vmatprep.subr.bf16.mxu0 0
        %1157 = vmatpush1.bf16.msra.mxu0 0
        %1158 = vmatprep.subr.bf16.mxu0 0
        %1159 = vmatpush1.bf16.msra.mxu0 0
        %1160 = vmatprep.subr.bf16.mxu0 0
        %1161 = vmatpush1.bf16.msra.mxu0 0
        %1162 = vmatprep.subr.bf16.mxu0 0
        %1163 = vmatpush1.bf16.msra.mxu0 0
        %1164 = vmatprep.subr.bf16.mxu0 0
        %1165 = vmatpush1.bf16.msra.mxu0 0
        %1166 = vmatprep.subr.bf16.mxu0 0
        %1167 = vmatpush1.bf16.msra.mxu0 0
        %1168 = vmatprep.subr.bf16.mxu0 0
        %1169 = vmatpush1.bf16.msra.mxu0 0
        %1170 = vmatprep.subr.bf16.mxu0 0
        %1171 = vmatpush1.bf16.msra.mxu0 0
        %1172 = vmatprep.subr.bf16.mxu0 0
        %1173 = vmatpush1.bf16.msra.mxu0 0
        %1174 = vmatprep.subr.bf16.mxu0 0
        %1175 = vmatpush1.bf16.msra.mxu0 0
        %1176 = vmatprep.subr.bf16.mxu0 0
        %1177 = vmatpush1.bf16.msra.mxu0 0
        %1178 = vmatprep.subr.bf16.mxu0 0
        %1179 = vmatpush1.bf16.msra.mxu0 0
        %1180 = vmatprep.mubr.bf16.mxu0 0
        %1181 = vmatmul.mubr.bf16.gmra.mrb[0].mxu0 %v1140
        %v1182 = vpop.f32.mrb[0].mxu0
        %v1183 = vadd.f32 0.0, %v1182
        %v1184 = vpop.f32.mrb[0].mxu0
        %v1185 = vpop.f32.mrb[0].mxu0
        %v1186 = vadd.f32 0.0, %v1185
        %v1187 = vpop.f32.mrb[0].mxu0
        %1188 = vmatprep.mubr.bf16.mxu0 0
        %1189 = vmatmul.mubr.bf16.gmra.mrb[0].mxu0 %v1143
        %v1190 = vpop.f32.mrb[0].mxu0
        %v1191 = vadd.f32 0.0, %v1190
        %v1192 = vpop.f32.mrb[0].mxu0
        %v1193 = vpop.f32.mrb[0].mxu0
        %v1194 = vpop.f32.mrb[0].mxu0
        %1195 = vdwg.mxu0
        %v1196 = vadd.f32 %v1129, %v1183
        %v1197 = vadd.f32 %v1130, %v1186
        %v1198 = vadd.f32 %v1131, %v1191
        %s1199 = scalar_lea.vmem %s1, 44
        %v1200 = vld [vmem:[%s1199] sm:$0xf]
        %v1201 = vrot.slane %v1059, 1
        %v1202 = vrot.slane %v1061, 2
        %v1203 = vor.u32 %v1201, %v1202
        %v1204 = vrot.slane %v1069, 1
        %v1205 = vrot.slane %v1065, 2
        %v1206 = vor.u32 %v1204, %v1205
        %v1207 = vsel %vm646, %v1203, %v1206
        %v1209 = vsel %vm462, %v1207, 0
        %v1212 = vsel %vm462, %v1206, 0
        %v1215 = vsel %vm469, %v1200, 0
        %1217 = vmatprep.subr.bf16.mxu0 0
        %1218 = vmatpush1.bf16.msra.mxu0 %v1215
        %1219 = vmatprep.subr.bf16.mxu0 0
        %1220 = vmatpush1.bf16.msra.mxu0 0
        %1221 = vmatprep.subr.bf16.mxu0 0
        %1222 = vmatpush1.bf16.msra.mxu0 0
        %1223 = vmatprep.subr.bf16.mxu0 0
        %1224 = vmatpush1.bf16.msra.mxu0 0
        %1225 = vmatprep.subr.bf16.mxu0 0
        %1226 = vmatpush1.bf16.msra.mxu0 0
        %1227 = vmatprep.subr.bf16.mxu0 0
        %1228 = vmatpush1.bf16.msra.mxu0 0
        %1229 = vmatprep.subr.bf16.mxu0 0
        %1230 = vmatpush1.bf16.msra.mxu0 0
        %1231 = vmatprep.subr.bf16.mxu0 0
        %1232 = vmatpush1.bf16.msra.mxu0 0
        %1233 = vmatprep.subr.bf16.mxu0 0
        %1234 = vmatpush1.bf16.msra.mxu0 0
        %1235 = vmatprep.subr.bf16.mxu0 0
        %1236 = vmatpush1.bf16.msra.mxu0 0
        %1237 = vmatprep.subr.bf16.mxu0 0
        %1238 = vmatpush1.bf16.msra.mxu0 0
        %1239 = vmatprep.subr.bf16.mxu0 0
        %1240 = vmatpush1.bf16.msra.mxu0 0
        %1241 = vmatprep.subr.bf16.mxu0 0
        %1242 = vmatpush1.bf16.msra.mxu0 0
        %1243 = vmatprep.subr.bf16.mxu0 0
        %1244 = vmatpush1.bf16.msra.mxu0 0
        %1245 = vmatprep.subr.bf16.mxu0 0
        %1246 = vmatpush1.bf16.msra.mxu0 0
        %1247 = vmatprep.subr.bf16.mxu0 0
        %1248 = vmatpush1.bf16.msra.mxu0 0
        %1249 = vmatprep.mubr.bf16.mxu0 0
        %1250 = vmatmul.mubr.bf16.gmra.mrb[0].mxu0 %v1209
        %v1251 = vpop.f32.mrb[0].mxu0
        %v1252 = vadd.f32 0.0, %v1251
        %v1253 = vpop.f32.mrb[0].mxu0
        %v1254 = vpop.f32.mrb[0].mxu0
        %v1255 = vadd.f32 0.0, %v1254
        %v1256 = vpop.f32.mrb[0].mxu0
        %1257 = vmatprep.mubr.bf16.mxu0 0
        %1258 = vmatmul.mubr.bf16.gmra.mrb[0].mxu0 %v1212
        %v1259 = vpop.f32.mrb[0].mxu0
        %v1260 = vadd.f32 0.0, %v1259
        %v1261 = vpop.f32.mrb[0].mxu0
        %v1262 = vpop.f32.mrb[0].mxu0
        %v1263 = vpop.f32.mrb[0].mxu0
        %1264 = vdwg.mxu0
        %v1265 = vadd.f32 %v1196, %v1252
        %v1266 = vadd.f32 %v1197, %v1255
        %v1267 = vadd.f32 %v1198, %v1260
        %s1268 = scalar_lea.vmem %s1, 48
        %v1269 = vld [vmem:[%s1268] sm:$0xf]
        %v1270 = vrot.slane %v993, 2
        %v1271 = vrot.slane %v994, 2
        %v1272 = vsel %vm716, %v1270, %v1271
        %v1274 = vsel %vm462, %v1272, 0
        %v1277 = vsel %vm462, %v1271, 0
        %v1280 = vsel %vm469, %v1269, 0
        %1282 = vmatprep.subr.bf16.mxu0 0
        %1283 = vmatpush1.bf16.msra.mxu0 %v1280
        %1284 = vmatprep.subr.bf16.mxu0 0
        %1285 = vmatpush1.bf16.msra.mxu0 0
        %1286 = vmatprep.subr.bf16.mxu0 0
        %1287 = vmatpush1.bf16.msra.mxu0 0
        %1288 = vmatprep.subr.bf16.mxu0 0
        %1289 = vmatpush1.bf16.msra.mxu0 0
        %1290 = vmatprep.subr.bf16.mxu0 0
        %1291 = vmatpush1.bf16.msra.mxu0 0
        %1292 = vmatprep.subr.bf16.mxu0 0
        %1293 = vmatpush1.bf16.msra.mxu0 0
        %1294 = vmatprep.subr.bf16.mxu0 0
        %1295 = vmatpush1.bf16.msra.mxu0 0
        %1296 = vmatprep.subr.bf16.mxu0 0
        %1297 = vmatpush1.bf16.msra.mxu0 0
        %1298 = vmatprep.subr.bf16.mxu0 0
        %1299 = vmatpush1.bf16.msra.mxu0 0
        %1300 = vmatprep.subr.bf16.mxu0 0
        %1301 = vmatpush1.bf16.msra.mxu0 0
        %1302 = vmatprep.subr.bf16.mxu0 0
        %1303 = vmatpush1.bf16.msra.mxu0 0
        %1304 = vmatprep.subr.bf16.mxu0 0
        %1305 = vmatpush1.bf16.msra.mxu0 0
        %1306 = vmatprep.subr.bf16.mxu0 0
        %1307 = vmatpush1.bf16.msra.mxu0 0
        %1308 = vmatprep.subr.bf16.mxu0 0
        %1309 = vmatpush1.bf16.msra.mxu0 0
        %1310 = vmatprep.subr.bf16.mxu0 0
        %1311 = vmatpush1.bf16.msra.mxu0 0
        %1312 = vmatprep.subr.bf16.mxu0 0
        %1313 = vmatpush1.bf16.msra.mxu0 0
        %1314 = vmatprep.mubr.bf16.mxu0 0
        %1315 = vmatmul.mubr.bf16.gmra.mrb[0].mxu0 %v1274
        %v1316 = vpop.f32.mrb[0].mxu0
        %v1317 = vadd.f32 0.0, %v1316
        %v1318 = vpop.f32.mrb[0].mxu0
        %v1319 = vpop.f32.mrb[0].mxu0
        %v1320 = vadd.f32 0.0, %v1319
        %v1321 = vpop.f32.mrb[0].mxu0
        %1322 = vmatprep.mubr.bf16.mxu0 0
        %1323 = vmatmul.mubr.bf16.gmra.mrb[0].mxu0 %v1277
        %v1324 = vpop.f32.mrb[0].mxu0
        %v1325 = vadd.f32 0.0, %v1324
        %v1326 = vpop.f32.mrb[0].mxu0
        %v1327 = vpop.f32.mrb[0].mxu0
        %v1328 = vpop.f32.mrb[0].mxu0
        %1329 = vdwg.mxu0
        %v1330 = vadd.f32 %v1265, %v1317
        %v1331 = vadd.f32 %v1266, %v1320
        %v1332 = vadd.f32 %v1267, %v1325
        %v1333 = vpack.c.bf16 %v438, %v437
        %s1334 = scalar_lea.vmem %s1, 52
        %v1335 = vld [vmem:[%s1334] sm:$0xf]
        %v1336 = vrot.slane %v1059, 2
        %v1337 = vrot.slane %v1061, 3
        %v1338 = vor.u32 %v1336, %v1337
        %v1340 = vshrl.u32 %v1333, 16
        %v1342 = vrot.slane %v1340, 2
        %v1343 = vshll.u32 %v1333, 16
        %v1345 = vrot.slane %v1343, 3
        %v1346 = vor.u32 %v1342, %v1345
        %v1347 = vsel %vm783, %v1338, %v1346
        %v1349 = vsel %vm462, %v1347, 0
        %v1352 = vsel %vm462, %v1346, 0
        %v1355 = vsel %vm469, %v1335, 0
        %1357 = vmatprep.subr.bf16.mxu0 0
        %1358 = vmatpush1.bf16.msra.mxu0 %v1355
        %1359 = vmatprep.subr.bf16.mxu0 0
        %1360 = vmatpush1.bf16.msra.mxu0 0
        %1361 = vmatprep.subr.bf16.mxu0 0
        %1362 = vmatpush1.bf16.msra.mxu0 0
        %1363 = vmatprep.subr.bf16.mxu0 0
        %1364 = vmatpush1.bf16.msra.mxu0 0
        %1365 = vmatprep.subr.bf16.mxu0 0
        %1366 = vmatpush1.bf16.msra.mxu0 0
        %1367 = vmatprep.subr.bf16.mxu0 0
        %1368 = vmatpush1.bf16.msra.mxu0 0
        %1369 = vmatprep.subr.bf16.mxu0 0
        %1370 = vmatpush1.bf16.msra.mxu0 0
        %1371 = vmatprep.subr.bf16.mxu0 0
        %1372 = vmatpush1.bf16.msra.mxu0 0
        %1373 = vmatprep.subr.bf16.mxu0 0
        %1374 = vmatpush1.bf16.msra.mxu0 0
        %1375 = vmatprep.subr.bf16.mxu0 0
        %1376 = vmatpush1.bf16.msra.mxu0 0
        %1377 = vmatprep.subr.bf16.mxu0 0
        %1378 = vmatpush1.bf16.msra.mxu0 0
        %1379 = vmatprep.subr.bf16.mxu0 0
        %1380 = vmatpush1.bf16.msra.mxu0 0
        %1381 = vmatprep.subr.bf16.mxu0 0
        %1382 = vmatpush1.bf16.msra.mxu0 0
        %1383 = vmatprep.subr.bf16.mxu0 0
        %1384 = vmatpush1.bf16.msra.mxu0 0
        %1385 = vmatprep.subr.bf16.mxu0 0
        %1386 = vmatpush1.bf16.msra.mxu0 0
        %1387 = vmatprep.subr.bf16.mxu0 0
        %1388 = vmatpush1.bf16.msra.mxu0 0
        %1389 = vmatprep.mubr.bf16.mxu0 0
        %1390 = vmatmul.mubr.bf16.gmra.mrb[0].mxu0 %v1349
        %v1391 = vpop.f32.mrb[0].mxu0
        %v1392 = vadd.f32 0.0, %v1391
        %v1393 = vpop.f32.mrb[0].mxu0
        %v1394 = vpop.f32.mrb[0].mxu0
        %v1395 = vadd.f32 0.0, %v1394
        %v1396 = vpop.f32.mrb[0].mxu0
        %1397 = vmatprep.mubr.bf16.mxu0 0
        %1398 = vmatmul.mubr.bf16.gmra.mrb[0].mxu0 %v1352
        %v1399 = vpop.f32.mrb[0].mxu0
        %v1400 = vadd.f32 0.0, %v1399
        %v1401 = vpop.f32.mrb[0].mxu0
        %v1402 = vpop.f32.mrb[0].mxu0
        %v1403 = vpop.f32.mrb[0].mxu0
        %1404 = vdwg.mxu0
        %v1405 = vadd.f32 %v1330, %v1392
        %v1406 = vadd.f32 %v1331, %v1395
        %v1407 = vadd.f32 %v1332, %v1400
        %s1408 = scalar_lea.vmem %s1, 56
        %v1409 = vld [vmem:[%s1408] sm:$0xf]
        %v1411 = vrot.slane %v993, 3
        %v1412 = vrot.slane %v1333, 3
        %v1413 = vsel %vm859, %v1411, %v1412
        %v1415 = vsel %vm462, %v1413, 0
        %v1418 = vsel %vm462, %v1412, 0
        %v1421 = vsel %vm469, %v1409, 0
        %1423 = vmatprep.subr.bf16.mxu0 0
        %1424 = vmatpush1.bf16.msra.mxu0 %v1421
        %1425 = vmatprep.subr.bf16.mxu0 0
        %1426 = vmatpush1.bf16.msra.mxu0 0
        %1427 = vmatprep.subr.bf16.mxu0 0
        %1428 = vmatpush1.bf16.msra.mxu0 0
        %1429 = vmatprep.subr.bf16.mxu0 0
        %1430 = vmatpush1.bf16.msra.mxu0 0
        %1431 = vmatprep.subr.bf16.mxu0 0
        %1432 = vmatpush1.bf16.msra.mxu0 0
        %1433 = vmatprep.subr.bf16.mxu0 0
        %1434 = vmatpush1.bf16.msra.mxu0 0
        %1435 = vmatprep.subr.bf16.mxu0 0
        %1436 = vmatpush1.bf16.msra.mxu0 0
        %1437 = vmatprep.subr.bf16.mxu0 0
        %1438 = vmatpush1.bf16.msra.mxu0 0
        %1439 = vmatprep.subr.bf16.mxu0 0
        %1440 = vmatpush1.bf16.msra.mxu0 0
        %1441 = vmatprep.subr.bf16.mxu0 0
        %1442 = vmatpush1.bf16.msra.mxu0 0
        %1443 = vmatprep.subr.bf16.mxu0 0
        %1444 = vmatpush1.bf16.msra.mxu0 0
        %1445 = vmatprep.subr.bf16.mxu0 0
        %1446 = vmatpush1.bf16.msra.mxu0 0
        %1447 = vmatprep.subr.bf16.mxu0 0
        %1448 = vmatpush1.bf16.msra.mxu0 0
        %1449 = vmatprep.subr.bf16.mxu0 0
        %1450 = vmatpush1.bf16.msra.mxu0 0
        %1451 = vmatprep.subr.bf16.mxu0 0
        %1452 = vmatpush1.bf16.msra.mxu0 0
        %1453 = vmatprep.subr.bf16.mxu0 0
        %1454 = vmatpush1.bf16.msra.mxu0 0
        %1455 = vmatprep.mubr.bf16.mxu0 0
        %1456 = vmatmul.mubr.bf16.gmra.mrb[0].mxu0 %v1415
        %v1457 = vpop.f32.mrb[0].mxu0
        %v1458 = vadd.f32 0.0, %v1457
        %v1459 = vpop.f32.mrb[0].mxu0
        %v1460 = vpop.f32.mrb[0].mxu0
        %v1461 = vadd.f32 0.0, %v1460
        %v1462 = vpop.f32.mrb[0].mxu0
        %1463 = vmatprep.mubr.bf16.mxu0 0
        %1464 = vmatmul.mubr.bf16.gmra.mrb[0].mxu0 %v1418
        %v1465 = vpop.f32.mrb[0].mxu0
        %v1466 = vadd.f32 0.0, %v1465
        %v1467 = vpop.f32.mrb[0].mxu0
        %v1468 = vpop.f32.mrb[0].mxu0
        %v1469 = vpop.f32.mrb[0].mxu0
        %1470 = vdwg.mxu0
        %v1471 = vadd.f32 %v1405, %v1458
        %v1472 = vadd.f32 %v1406, %v1461
        %v1473 = vadd.f32 %v1407, %v1466
        %s1474 = scalar_lea.vmem %s1, 60
        %v1475 = vld [vmem:[%s1474] sm:$0xf]
        %v1476 = vrot.slane %v1059, 3
        %v1477 = vrot.slane %v1061, 4
        %v1478 = vor.u32 %v1476, %v1477
        %v1479 = vrot.slane %v1340, 3
        %v1480 = vrot.slane %v1343, 4
        %v1481 = vor.u32 %v1479, %v1480
        %v1482 = vsel %vm925, %v1478, %v1481
        %v1484 = vsel %vm462, %v1482, 0
        %v1487 = vsel %vm462, %v1481, 0
        %v1490 = vsel %vm469, %v1475, 0
        %1492 = vmatprep.subr.bf16.mxu0 0
        %1493 = vmatpush1.bf16.msra.mxu0 %v1490
        %1494 = vmatprep.subr.bf16.mxu0 0
        %1495 = vmatpush1.bf16.msra.mxu0 0
        %1496 = vmatprep.subr.bf16.mxu0 0
        %1497 = vmatpush1.bf16.msra.mxu0 0
        %1498 = vmatprep.subr.bf16.mxu0 0
        %1499 = vmatpush1.bf16.msra.mxu0 0
        %1500 = vmatprep.subr.bf16.mxu0 0
        %1501 = vmatpush1.bf16.msra.mxu0 0
        %1502 = vmatprep.subr.bf16.mxu0 0
        %1503 = vmatpush1.bf16.msra.mxu0 0
        %1504 = vmatprep.subr.bf16.mxu0 0
        %1505 = vmatpush1.bf16.msra.mxu0 0
        %1506 = vmatprep.subr.bf16.mxu0 0
        %1507 = vmatpush1.bf16.msra.mxu0 0
        %1508 = vmatprep.subr.bf16.mxu0 0
        %1509 = vmatpush1.bf16.msra.mxu0 0
        %1510 = vmatprep.subr.bf16.mxu0 0
        %1511 = vmatpush1.bf16.msra.mxu0 0
        %1512 = vmatprep.subr.bf16.mxu0 0
        %1513 = vmatpush1.bf16.msra.mxu0 0
        %1514 = vmatprep.subr.bf16.mxu0 0
        %1515 = vmatpush1.bf16.msra.mxu0 0
        %1516 = vmatprep.subr.bf16.mxu0 0
        %1517 = vmatpush1.bf16.msra.mxu0 0
        %1518 = vmatprep.subr.bf16.mxu0 0
        %1519 = vmatpush1.bf16.msra.mxu0 0
        %1520 = vmatprep.subr.bf16.mxu0 0
        %1521 = vmatpush1.bf16.msra.mxu0 0
        %1522 = vmatprep.subr.bf16.mxu0 0
        %1523 = vmatpush1.bf16.msra.mxu0 0
        %1524 = vmatprep.mubr.bf16.mxu0 0
        %1525 = vmatmul.mubr.bf16.gmra.mrb[0].mxu0 %v1484
        %v1526 = vpop.f32.mrb[0].mxu0
        %v1527 = vadd.f32 0.0, %v1526
        %v1528 = vpop.f32.mrb[0].mxu0
        %v1529 = vpop.f32.mrb[0].mxu0
        %v1530 = vadd.f32 0.0, %v1529
        %v1531 = vpop.f32.mrb[0].mxu0
        %1532 = vmatprep.mubr.bf16.mxu0 0
        %1533 = vmatmul.mubr.bf16.gmra.mrb[0].mxu0 %v1487
        %v1534 = vpop.f32.mrb[0].mxu0
        %v1535 = vadd.f32 0.0, %v1534
        %v1536 = vpop.f32.mrb[0].mxu0
        %v1537 = vpop.f32.mrb[0].mxu0
        %v1538 = vpop.f32.mrb[0].mxu0
        %1539 = vdwg.mxu0
        %v1540 = vadd.f32 %v1471, %v1527
        %v1541 = vadd.f32 %v1472, %v1530
        %v1542 = vadd.f32 %v1473, %v1535
        %v1543 = vpack.c.bf16 %v438, %v438
        %s1544 = scalar_lea.vmem %s1, 64
        %v1545 = vld [vmem:[%s1544] sm:$0xf]
        %v1546 = vsel %vm462, %v780, 0
        %v1549 = vsel %vm462, %v1543, 0
        %v1552 = vsel %vm469, %v1545, 0
        %1554 = vmatprep.subr.bf16.mxu0 0
        %1555 = vmatpush1.bf16.msra.mxu0 %v1552
        %1556 = vmatprep.subr.bf16.mxu0 0
        %1557 = vmatpush1.bf16.msra.mxu0 0
        %1558 = vmatprep.subr.bf16.mxu0 0
        %1559 = vmatpush1.bf16.msra.mxu0 0
        %1560 = vmatprep.subr.bf16.mxu0 0
        %1561 = vmatpush1.bf16.msra.mxu0 0
        %1562 = vmatprep.subr.bf16.mxu0 0
        %1563 = vmatpush1.bf16.msra.mxu0 0
        %1564 = vmatprep.subr.bf16.mxu0 0
        %1565 = vmatpush1.bf16.msra.mxu0 0
        %1566 = vmatprep.subr.bf16.mxu0 0
        %1567 = vmatpush1.bf16.msra.mxu0 0
        %1568 = vmatprep.subr.bf16.mxu0 0
        %1569 = vmatpush1.bf16.msra.mxu0 0
        %1570 = vmatprep.subr.bf16.mxu0 0
        %1571 = vmatpush1.bf16.msra.mxu0 0
        %1572 = vmatprep.subr.bf16.mxu0 0
        %1573 = vmatpush1.bf16.msra.mxu0 0
        %1574 = vmatprep.subr.bf16.mxu0 0
        %1575 = vmatpush1.bf16.msra.mxu0 0
        %1576 = vmatprep.subr.bf16.mxu0 0
        %1577 = vmatpush1.bf16.msra.mxu0 0
        %1578 = vmatprep.subr.bf16.mxu0 0
        %1579 = vmatpush1.bf16.msra.mxu0 0
        %1580 = vmatprep.subr.bf16.mxu0 0
        %1581 = vmatpush1.bf16.msra.mxu0 0
        %1582 = vmatprep.subr.bf16.mxu0 0
        %1583 = vmatpush1.bf16.msra.mxu0 0
        %1584 = vmatprep.subr.bf16.mxu0 0
        %1585 = vmatpush1.bf16.msra.mxu0 0
        %1586 = vmatprep.mubr.bf16.mxu0 0
        %1587 = vmatmul.mubr.bf16.gmra.mrb[0].mxu0 %v1546
        %v1588 = vpop.f32.mrb[0].mxu0
        %v1589 = vadd.f32 0.0, %v1588
        %v1590 = vpop.f32.mrb[0].mxu0
        %v1591 = vpop.f32.mrb[0].mxu0
        %v1592 = vadd.f32 0.0, %v1591
        %v1593 = vpop.f32.mrb[0].mxu0
        %1594 = vmatprep.mubr.bf16.mxu0 0
        %1595 = vmatmul.mubr.bf16.gmra.mrb[0].mxu0 %v1549
        %v1596 = vpop.f32.mrb[0].mxu0
        %v1597 = vadd.f32 0.0, %v1596
        %v1598 = vpop.f32.mrb[0].mxu0
        %v1599 = vpop.f32.mrb[0].mxu0
        %v1600 = vpop.f32.mrb[0].mxu0
        %1601 = vdwg.mxu0
        %v1602 = vadd.f32 %v1540, %v1589
        %v1603 = vadd.f32 %v1541, %v1592
        %v1604 = vadd.f32 %v1542, %v1597
        %s1605 = scalar_lea.vmem %s1, 68
        %v1606 = vld [vmem:[%s1605] sm:$0xf]
        %v1607 = vrot.slane %v791, 1
        %v1608 = vor.u32 %v788, %v1607
        %v1609 = vshll.u32 %v1543, 16
        %v1611 = vrot.slane %v1609, 1
        %v1612 = vsel %vm446, %v1608, %v1611
        %v1613 = vshrl.u32 %v1543, 16
        %v1615 = vor.u32 %v1613, %v1611
        %v1617 = vsel %vm462, %v1612, 0
        %v1620 = vsel %vm462, %v1615, 0
        %v1623 = vsel %vm469, %v1606, 0
        %1625 = vmatprep.subr.bf16.mxu0 0
        %1626 = vmatpush1.bf16.msra.mxu0 %v1623
        %1627 = vmatprep.subr.bf16.mxu0 0
        %1628 = vmatpush1.bf16.msra.mxu0 0
        %1629 = vmatprep.subr.bf16.mxu0 0
        %1630 = vmatpush1.bf16.msra.mxu0 0
        %1631 = vmatprep.subr.bf16.mxu0 0
        %1632 = vmatpush1.bf16.msra.mxu0 0
        %1633 = vmatprep.subr.bf16.mxu0 0
        %1634 = vmatpush1.bf16.msra.mxu0 0
        %1635 = vmatprep.subr.bf16.mxu0 0
        %1636 = vmatpush1.bf16.msra.mxu0 0
        %1637 = vmatprep.subr.bf16.mxu0 0
        %1638 = vmatpush1.bf16.msra.mxu0 0
        %1639 = vmatprep.subr.bf16.mxu0 0
        %1640 = vmatpush1.bf16.msra.mxu0 0
        %1641 = vmatprep.subr.bf16.mxu0 0
        %1642 = vmatpush1.bf16.msra.mxu0 0
        %1643 = vmatprep.subr.bf16.mxu0 0
        %1644 = vmatpush1.bf16.msra.mxu0 0
        %1645 = vmatprep.subr.bf16.mxu0 0
        %1646 = vmatpush1.bf16.msra.mxu0 0
        %1647 = vmatprep.subr.bf16.mxu0 0
        %1648 = vmatpush1.bf16.msra.mxu0 0
        %1649 = vmatprep.subr.bf16.mxu0 0
        %1650 = vmatpush1.bf16.msra.mxu0 0
        %1651 = vmatprep.subr.bf16.mxu0 0
        %1652 = vmatpush1.bf16.msra.mxu0 0
        %1653 = vmatprep.subr.bf16.mxu0 0
        %1654 = vmatpush1.bf16.msra.mxu0 0
        %1655 = vmatprep.subr.bf16.mxu0 0
        %1656 = vmatpush1.bf16.msra.mxu0 0
        %1657 = vmatprep.mubr.bf16.mxu0 0
        %1658 = vmatmul.mubr.bf16.gmra.mrb[0].mxu0 %v1617
        %v1659 = vpop.f32.mrb[0].mxu0
        %v1660 = vadd.f32 0.0, %v1659
        %v1661 = vpop.f32.mrb[0].mxu0
        %v1662 = vpop.f32.mrb[0].mxu0
        %v1663 = vadd.f32 0.0, %v1662
        %v1664 = vpop.f32.mrb[0].mxu0
        %1665 = vmatprep.mubr.bf16.mxu0 0
        %1666 = vmatmul.mubr.bf16.gmra.mrb[0].mxu0 %v1620
        %v1667 = vpop.f32.mrb[0].mxu0
        %v1668 = vadd.f32 0.0, %v1667
        %v1669 = vpop.f32.mrb[0].mxu0
        %v1670 = vpop.f32.mrb[0].mxu0
        %v1671 = vpop.f32.mrb[0].mxu0
        %1672 = vdwg.mxu0
        %v1673 = vadd.f32 %v1602, %v1660
        %v1674 = vadd.f32 %v1603, %v1663
        %v1675 = vadd.f32 %v1604, %v1668
        %s1676 = scalar_lea.vmem %s1, 72
        %v1677 = vld [vmem:[%s1676] sm:$0xf]
        %v1679 = vrot.slane %v780, 1
        %v1680 = vrot.slane %v1543, 1
        %v1681 = vsel %vm580, %v1679, %v1680
        %v1683 = vsel %vm462, %v1681, 0
        %v1686 = vsel %vm462, %v1680, 0
        %v1689 = vsel %vm469, %v1677, 0
        %1691 = vmatprep.subr.bf16.mxu0 0
        %1692 = vmatpush1.bf16.msra.mxu0 %v1689
        %1693 = vmatprep.subr.bf16.mxu0 0
        %1694 = vmatpush1.bf16.msra.mxu0 0
        %1695 = vmatprep.subr.bf16.mxu0 0
        %1696 = vmatpush1.bf16.msra.mxu0 0
        %1697 = vmatprep.subr.bf16.mxu0 0
        %1698 = vmatpush1.bf16.msra.mxu0 0
        %1699 = vmatprep.subr.bf16.mxu0 0
        %1700 = vmatpush1.bf16.msra.mxu0 0
        %1701 = vmatprep.subr.bf16.mxu0 0
        %1702 = vmatpush1.bf16.msra.mxu0 0
        %1703 = vmatprep.subr.bf16.mxu0 0
        %1704 = vmatpush1.bf16.msra.mxu0 0
        %1705 = vmatprep.subr.bf16.mxu0 0
        %1706 = vmatpush1.bf16.msra.mxu0 0
        %1707 = vmatprep.subr.bf16.mxu0 0
        %1708 = vmatpush1.bf16.msra.mxu0 0
        %1709 = vmatprep.subr.bf16.mxu0 0
        %1710 = vmatpush1.bf16.msra.mxu0 0
        %1711 = vmatprep.subr.bf16.mxu0 0
        %1712 = vmatpush1.bf16.msra.mxu0 0
        %1713 = vmatprep.subr.bf16.mxu0 0
        %1714 = vmatpush1.bf16.msra.mxu0 0
        %1715 = vmatprep.subr.bf16.mxu0 0
        %1716 = vmatpush1.bf16.msra.mxu0 0
        %1717 = vmatprep.subr.bf16.mxu0 0
        %1718 = vmatpush1.bf16.msra.mxu0 0
        %1719 = vmatprep.subr.bf16.mxu0 0
        %1720 = vmatpush1.bf16.msra.mxu0 0
        %1721 = vmatprep.subr.bf16.mxu0 0
        %1722 = vmatpush1.bf16.msra.mxu0 0
        %1723 = vmatprep.mubr.bf16.mxu0 0
        %1724 = vmatmul.mubr.bf16.gmra.mrb[0].mxu0 %v1683
        %v1725 = vpop.f32.mrb[0].mxu0
        %v1726 = vadd.f32 0.0, %v1725
        %v1727 = vpop.f32.mrb[0].mxu0
        %v1728 = vpop.f32.mrb[0].mxu0
        %v1729 = vadd.f32 0.0, %v1728
        %v1730 = vpop.f32.mrb[0].mxu0
        %1731 = vmatprep.mubr.bf16.mxu0 0
        %1732 = vmatmul.mubr.bf16.gmra.mrb[0].mxu0 %v1686
        %v1733 = vpop.f32.mrb[0].mxu0
        %v1734 = vadd.f32 0.0, %v1733
        %v1735 = vpop.f32.mrb[0].mxu0
        %v1736 = vpop.f32.mrb[0].mxu0
        %v1737 = vpop.f32.mrb[0].mxu0
        %1738 = vdwg.mxu0
        %v1739 = vadd.f32 %v1673, %v1726
        %v1740 = vadd.f32 %v1674, %v1729
        %v1741 = vadd.f32 %v1675, %v1734
        %s1742 = scalar_lea.vmem %s1, 76
        %v1743 = vld [vmem:[%s1742] sm:$0xf]
        %v1744 = vrot.slane %v788, 1
        %v1745 = vrot.slane %v791, 2
        %v1746 = vor.u32 %v1744, %v1745
        %v1747 = vrot.slane %v1613, 1
        %v1748 = vrot.slane %v1609, 2
        %v1749 = vor.u32 %v1747, %v1748
        %v1750 = vsel %vm646, %v1746, %v1749
        %v1752 = vsel %vm462, %v1750, 0
        %v1755 = vsel %vm462, %v1749, 0
        %v1758 = vsel %vm469, %v1743, 0
        %1760 = vmatprep.subr.bf16.mxu0 0
        %1761 = vmatpush1.bf16.msra.mxu0 %v1758
        %1762 = vmatprep.subr.bf16.mxu0 0
        %1763 = vmatpush1.bf16.msra.mxu0 0
        %1764 = vmatprep.subr.bf16.mxu0 0
        %1765 = vmatpush1.bf16.msra.mxu0 0
        %1766 = vmatprep.subr.bf16.mxu0 0
        %1767 = vmatpush1.bf16.msra.mxu0 0
        %1768 = vmatprep.subr.bf16.mxu0 0
        %1769 = vmatpush1.bf16.msra.mxu0 0
        %1770 = vmatprep.subr.bf16.mxu0 0
        %1771 = vmatpush1.bf16.msra.mxu0 0
        %1772 = vmatprep.subr.bf16.mxu0 0
        %1773 = vmatpush1.bf16.msra.mxu0 0
        %1774 = vmatprep.subr.bf16.mxu0 0
        %1775 = vmatpush1.bf16.msra.mxu0 0
        %1776 = vmatprep.subr.bf16.mxu0 0
        %1777 = vmatpush1.bf16.msra.mxu0 0
        %1778 = vmatprep.subr.bf16.mxu0 0
        %1779 = vmatpush1.bf16.msra.mxu0 0
        %1780 = vmatprep.subr.bf16.mxu0 0
        %1781 = vmatpush1.bf16.msra.mxu0 0
        %1782 = vmatprep.subr.bf16.mxu0 0
        %1783 = vmatpush1.bf16.msra.mxu0 0
        %1784 = vmatprep.subr.bf16.mxu0 0
        %1785 = vmatpush1.bf16.msra.mxu0 0
        %1786 = vmatprep.subr.bf16.mxu0 0
        %1787 = vmatpush1.bf16.msra.mxu0 0
        %1788 = vmatprep.subr.bf16.mxu0 0
        %1789 = vmatpush1.bf16.msra.mxu0 0
        %1790 = vmatprep.subr.bf16.mxu0 0
        %1791 = vmatpush1.bf16.msra.mxu0 0
        %1792 = vmatprep.mubr.bf16.mxu0 0
        %1793 = vmatmul.mubr.bf16.gmra.mrb[0].mxu0 %v1752
        %v1794 = vpop.f32.mrb[0].mxu0
        %v1795 = vadd.f32 0.0, %v1794
        %v1796 = vpop.f32.mrb[0].mxu0
        %v1797 = vpop.f32.mrb[0].mxu0
        %v1798 = vadd.f32 0.0, %v1797
        %v1799 = vpop.f32.mrb[0].mxu0
        %1800 = vmatprep.mubr.bf16.mxu0 0
        %1801 = vmatmul.mubr.bf16.gmra.mrb[0].mxu0 %v1755
        %v1802 = vpop.f32.mrb[0].mxu0
        %v1803 = vadd.f32 0.0, %v1802
        %v1804 = vpop.f32.mrb[0].mxu0
        %v1805 = vpop.f32.mrb[0].mxu0
        %v1806 = vpop.f32.mrb[0].mxu0
        %1807 = vdwg.mxu0
        %v1808 = vadd.f32 %v1739, %v1795
        %v1809 = vadd.f32 %v1740, %v1798
        %v1810 = vadd.f32 %v1741, %v1803
        %s1811 = scalar_lea.vmem %s1, 80
        %v1812 = vld [vmem:[%s1811] sm:$0xf]
        %v1813 = vrot.slane %v780, 2
        %v1814 = vrot.slane %v1543, 2
        %v1815 = vsel %vm716, %v1813, %v1814
        %v1817 = vsel %vm462, %v1815, 0
        %v1820 = vsel %vm462, %v1814, 0
        %v1823 = vsel %vm469, %v1812, 0
        %1825 = vmatprep.subr.bf16.mxu0 0
        %1826 = vmatpush1.bf16.msra.mxu0 %v1823
        %1827 = vmatprep.subr.bf16.mxu0 0
        %1828 = vmatpush1.bf16.msra.mxu0 0
        %1829 = vmatprep.subr.bf16.mxu0 0
        %1830 = vmatpush1.bf16.msra.mxu0 0
        %1831 = vmatprep.subr.bf16.mxu0 0
        %1832 = vmatpush1.bf16.msra.mxu0 0
        %1833 = vmatprep.subr.bf16.mxu0 0
        %1834 = vmatpush1.bf16.msra.mxu0 0
        %1835 = vmatprep.subr.bf16.mxu0 0
        %1836 = vmatpush1.bf16.msra.mxu0 0
        %1837 = vmatprep.subr.bf16.mxu0 0
        %1838 = vmatpush1.bf16.msra.mxu0 0
        %1839 = vmatprep.subr.bf16.mxu0 0
        %1840 = vmatpush1.bf16.msra.mxu0 0
        %1841 = vmatprep.subr.bf16.mxu0 0
        %1842 = vmatpush1.bf16.msra.mxu0 0
        %1843 = vmatprep.subr.bf16.mxu0 0
        %1844 = vmatpush1.bf16.msra.mxu0 0
        %1845 = vmatprep.subr.bf16.mxu0 0
        %1846 = vmatpush1.bf16.msra.mxu0 0
        %1847 = vmatprep.subr.bf16.mxu0 0
        %1848 = vmatpush1.bf16.msra.mxu0 0
        %1849 = vmatprep.subr.bf16.mxu0 0
        %1850 = vmatpush1.bf16.msra.mxu0 0
        %1851 = vmatprep.subr.bf16.mxu0 0
        %1852 = vmatpush1.bf16.msra.mxu0 0
        %1853 = vmatprep.subr.bf16.mxu0 0
        %1854 = vmatpush1.bf16.msra.mxu0 0
        %1855 = vmatprep.subr.bf16.mxu0 0
        %1856 = vmatpush1.bf16.msra.mxu0 0
        %1857 = vmatprep.mubr.bf16.mxu0 0
        %1858 = vmatmul.mubr.bf16.gmra.mrb[0].mxu0 %v1817
        %v1859 = vpop.f32.mrb[0].mxu0
        %v1860 = vadd.f32 0.0, %v1859
        %v1861 = vpop.f32.mrb[0].mxu0
        %v1862 = vpop.f32.mrb[0].mxu0
        %v1863 = vadd.f32 0.0, %v1862
        %v1864 = vpop.f32.mrb[0].mxu0
        %1865 = vmatprep.mubr.bf16.mxu0 0
        %1866 = vmatmul.mubr.bf16.gmra.mrb[0].mxu0 %v1820
        %v1867 = vpop.f32.mrb[0].mxu0
        %v1868 = vadd.f32 0.0, %v1867
        %v1869 = vpop.f32.mrb[0].mxu0
        %v1870 = vpop.f32.mrb[0].mxu0
        %v1871 = vpop.f32.mrb[0].mxu0
        %1872 = vdwg.mxu0
        %v1873 = vadd.f32 %v1808, %v1860
        %v1874 = vadd.f32 %v1809, %v1863
        %v1875 = vadd.f32 %v1810, %v1868
        %v1876 = vpack.c.bf16 %v439, %v438
        %s1877 = scalar_lea.vmem %s1, 84
        %v1878 = vld [vmem:[%s1877] sm:$0xf]
        %v1880 = vshrl.u32 %v1876, 16
        %v1882 = vrot.slane %v1880, 2
        %v1883 = vshll.u32 %v1876, 16
        %v1885 = vrot.slane %v1883, 3
        %v1886 = vor.u32 %v1882, %v1885
        %v1887 = vsel %vm783, %v794, %v1886
        %v1889 = vsel %vm462, %v1887, 0
        %v1892 = vsel %vm462, %v1886, 0
        %v1895 = vsel %vm469, %v1878, 0
        %1897 = vmatprep.subr.bf16.mxu0 0
        %1898 = vmatpush1.bf16.msra.mxu0 %v1895
        %1899 = vmatprep.subr.bf16.mxu0 0
        %1900 = vmatpush1.bf16.msra.mxu0 0
        %1901 = vmatprep.subr.bf16.mxu0 0
        %1902 = vmatpush1.bf16.msra.mxu0 0
        %1903 = vmatprep.subr.bf16.mxu0 0
        %1904 = vmatpush1.bf16.msra.mxu0 0
        %1905 = vmatprep.subr.bf16.mxu0 0
        %1906 = vmatpush1.bf16.msra.mxu0 0
        %1907 = vmatprep.subr.bf16.mxu0 0
        %1908 = vmatpush1.bf16.msra.mxu0 0
        %1909 = vmatprep.subr.bf16.mxu0 0
        %1910 = vmatpush1.bf16.msra.mxu0 0
        %1911 = vmatprep.subr.bf16.mxu0 0
        %1912 = vmatpush1.bf16.msra.mxu0 0
        %1913 = vmatprep.subr.bf16.mxu0 0
        %1914 = vmatpush1.bf16.msra.mxu0 0
        %1915 = vmatprep.subr.bf16.mxu0 0
        %1916 = vmatpush1.bf16.msra.mxu0 0
        %1917 = vmatprep.subr.bf16.mxu0 0
        %1918 = vmatpush1.bf16.msra.mxu0 0
        %1919 = vmatprep.subr.bf16.mxu0 0
        %1920 = vmatpush1.bf16.msra.mxu0 0
        %1921 = vmatprep.subr.bf16.mxu0 0
        %1922 = vmatpush1.bf16.msra.mxu0 0
        %1923 = vmatprep.subr.bf16.mxu0 0
        %1924 = vmatpush1.bf16.msra.mxu0 0
        %1925 = vmatprep.subr.bf16.mxu0 0
        %1926 = vmatpush1.bf16.msra.mxu0 0
        %1927 = vmatprep.subr.bf16.mxu0 0
        %1928 = vmatpush1.bf16.msra.mxu0 0
        %1929 = vmatprep.mubr.bf16.mxu0 0
        %1930 = vmatmul.mubr.bf16.gmra.mrb[0].mxu0 %v1889
        %v1931 = vpop.f32.mrb[0].mxu0
        %v1932 = vadd.f32 0.0, %v1931
        %v1933 = vpop.f32.mrb[0].mxu0
        %v1934 = vpop.f32.mrb[0].mxu0
        %v1935 = vadd.f32 0.0, %v1934
        %v1936 = vpop.f32.mrb[0].mxu0
        %1937 = vmatprep.mubr.bf16.mxu0 0
        %1938 = vmatmul.mubr.bf16.gmra.mrb[0].mxu0 %v1892
        %v1939 = vpop.f32.mrb[0].mxu0
        %v1940 = vadd.f32 0.0, %v1939
        %v1941 = vpop.f32.mrb[0].mxu0
        %v1942 = vpop.f32.mrb[0].mxu0
        %v1943 = vpop.f32.mrb[0].mxu0
        %1944 = vdwg.mxu0
        %v1945 = vadd.f32 %v1873, %v1932
        %v1946 = vadd.f32 %v1874, %v1935
        %v1947 = vadd.f32 %v1875, %v1940
        %s1948 = scalar_lea.vmem %s1, 88
        %v1949 = vld [vmem:[%s1948] sm:$0xf]
        %v1951 = vrot.slane %v1876, 3
        %v1952 = vsel %vm859, %v861, %v1951
        %v1954 = vsel %vm462, %v1952, 0
        %v1957 = vsel %vm462, %v1951, 0
        %v1960 = vsel %vm469, %v1949, 0
        %1962 = vmatprep.subr.bf16.mxu0 0
        %1963 = vmatpush1.bf16.msra.mxu0 %v1960
        %1964 = vmatprep.subr.bf16.mxu0 0
        %1965 = vmatpush1.bf16.msra.mxu0 0
        %1966 = vmatprep.subr.bf16.mxu0 0
        %1967 = vmatpush1.bf16.msra.mxu0 0
        %1968 = vmatprep.subr.bf16.mxu0 0
        %1969 = vmatpush1.bf16.msra.mxu0 0
        %1970 = vmatprep.subr.bf16.mxu0 0
        %1971 = vmatpush1.bf16.msra.mxu0 0
        %1972 = vmatprep.subr.bf16.mxu0 0
        %1973 = vmatpush1.bf16.msra.mxu0 0
        %1974 = vmatprep.subr.bf16.mxu0 0
        %1975 = vmatpush1.bf16.msra.mxu0 0
        %1976 = vmatprep.subr.bf16.mxu0 0
        %1977 = vmatpush1.bf16.msra.mxu0 0
        %1978 = vmatprep.subr.bf16.mxu0 0
        %1979 = vmatpush1.bf16.msra.mxu0 0
        %1980 = vmatprep.subr.bf16.mxu0 0
        %1981 = vmatpush1.bf16.msra.mxu0 0
        %1982 = vmatprep.subr.bf16.mxu0 0
        %1983 = vmatpush1.bf16.msra.mxu0 0
        %1984 = vmatprep.subr.bf16.mxu0 0
        %1985 = vmatpush1.bf16.msra.mxu0 0
        %1986 = vmatprep.subr.bf16.mxu0 0
        %1987 = vmatpush1.bf16.msra.mxu0 0
        %1988 = vmatprep.subr.bf16.mxu0 0
        %1989 = vmatpush1.bf16.msra.mxu0 0
        %1990 = vmatprep.subr.bf16.mxu0 0
        %1991 = vmatpush1.bf16.msra.mxu0 0
        %1992 = vmatprep.subr.bf16.mxu0 0
        %1993 = vmatpush1.bf16.msra.mxu0 0
        %1994 = vmatprep.mubr.bf16.mxu0 0
        %1995 = vmatmul.mubr.bf16.gmra.mrb[0].mxu0 %v1954
        %v1996 = vpop.f32.mrb[0].mxu0
        %v1997 = vadd.f32 0.0, %v1996
        %v1998 = vpop.f32.mrb[0].mxu0
        %v1999 = vpop.f32.mrb[0].mxu0
        %v2000 = vadd.f32 0.0, %v1999
        %v2001 = vpop.f32.mrb[0].mxu0
        %2002 = vmatprep.mubr.bf16.mxu0 0
        %2003 = vmatmul.mubr.bf16.gmra.mrb[0].mxu0 %v1957
        %v2004 = vpop.f32.mrb[0].mxu0
        %v2005 = vadd.f32 0.0, %v2004
        %v2006 = vpop.f32.mrb[0].mxu0
        %v2007 = vpop.f32.mrb[0].mxu0
        %v2008 = vpop.f32.mrb[0].mxu0
        %2009 = vdwg.mxu0
        %v2010 = vadd.f32 %v1945, %v1997
        %v2011 = vadd.f32 %v1946, %v2000
        %v2012 = vadd.f32 %v1947, %v2005
        %s2013 = scalar_lea.vmem %s1, 92
        %v2014 = vld [vmem:[%s2013] sm:$0xf]
        %v2015 = vrot.slane %v1880, 3
        %v2016 = vrot.slane %v1883, 4
        %v2017 = vor.u32 %v2015, %v2016
        %v2018 = vsel %vm925, %v931, %v2017
        %v2020 = vsel %vm462, %v2018, 0
        %v2023 = vsel %vm462, %v2017, 0
        %v2026 = vsel %vm469, %v2014, 0
        %2028 = vmatprep.subr.bf16.mxu0 0
        %2029 = vmatpush1.bf16.msra.mxu0 %v2026
        %2030 = vmatprep.subr.bf16.mxu0 0
        %2031 = vmatpush1.bf16.msra.mxu0 0
        %2032 = vmatprep.subr.bf16.mxu0 0
        %2033 = vmatpush1.bf16.msra.mxu0 0
        %2034 = vmatprep.subr.bf16.mxu0 0
        %2035 = vmatpush1.bf16.msra.mxu0 0
        %2036 = vmatprep.subr.bf16.mxu0 0
        %2037 = vmatpush1.bf16.msra.mxu0 0
        %2038 = vmatprep.subr.bf16.mxu0 0
        %2039 = vmatpush1.bf16.msra.mxu0 0
        %2040 = vmatprep.subr.bf16.mxu0 0
        %2041 = vmatpush1.bf16.msra.mxu0 0
        %2042 = vmatprep.subr.bf16.mxu0 0
        %2043 = vmatpush1.bf16.msra.mxu0 0
        %2044 = vmatprep.subr.bf16.mxu0 0
        %2045 = vmatpush1.bf16.msra.mxu0 0
        %2046 = vmatprep.subr.bf16.mxu0 0
        %2047 = vmatpush1.bf16.msra.mxu0 0
        %2048 = vmatprep.subr.bf16.mxu0 0
        %2049 = vmatpush1.bf16.msra.mxu0 0
        %2050 = vmatprep.subr.bf16.mxu0 0
        %2051 = vmatpush1.bf16.msra.mxu0 0
        %2052 = vmatprep.subr.bf16.mxu0 0
        %2053 = vmatpush1.bf16.msra.mxu0 0
        %2054 = vmatprep.subr.bf16.mxu0 0
        %2055 = vmatpush1.bf16.msra.mxu0 0
        %2056 = vmatprep.subr.bf16.mxu0 0
        %2057 = vmatpush1.bf16.msra.mxu0 0
        %2058 = vmatprep.subr.bf16.mxu0 0
        %2059 = vmatpush1.bf16.msra.mxu0 0
        %2060 = vmatprep.mubr.bf16.mxu0 0
        %2061 = vmatmul.mubr.bf16.gmra.mrb[0].mxu0 %v2020
        %v2062 = vpop.f32.mrb[0].mxu0
        %v2063 = vadd.f32 0.0, %v2062
        %v2064 = vpop.f32.mrb[0].mxu0
        %v2065 = vpop.f32.mrb[0].mxu0
        %v2066 = vadd.f32 0.0, %v2065
        %v2067 = vpop.f32.mrb[0].mxu0
        %2068 = vmatprep.mubr.bf16.mxu0 0
        %2069 = vmatmul.mubr.bf16.gmra.mrb[0].mxu0 %v2023
        %v2070 = vpop.f32.mrb[0].mxu0
        %v2071 = vadd.f32 0.0, %v2070
        %v2072 = vpop.f32.mrb[0].mxu0
        %v2073 = vpop.f32.mrb[0].mxu0
        %v2074 = vpop.f32.mrb[0].mxu0
        %2075 = vdwg.mxu0
        %v2076 = vadd.f32 %v2010, %v2063
        %v2077 = vadd.f32 %v2011, %v2066
        %v2078 = vadd.f32 %v2012, %v2071
        %v2079 = vpack.c.bf16 %v439, %v439
        %s2080 = scalar_lea.vmem %s1, 96
        %v2081 = vld [vmem:[%s2080] sm:$0xf]
        %v2082 = vsel %vm462, %v1333, 0
        %v2085 = vsel %vm462, %v2079, 0
        %v2088 = vsel %vm469, %v2081, 0
        %2090 = vmatprep.subr.bf16.mxu0 0
        %2091 = vmatpush1.bf16.msra.mxu0 %v2088
        %2092 = vmatprep.subr.bf16.mxu0 0
        %2093 = vmatpush1.bf16.msra.mxu0 0
        %2094 = vmatprep.subr.bf16.mxu0 0
        %2095 = vmatpush1.bf16.msra.mxu0 0
        %2096 = vmatprep.subr.bf16.mxu0 0
        %2097 = vmatpush1.bf16.msra.mxu0 0
        %2098 = vmatprep.subr.bf16.mxu0 0
        %2099 = vmatpush1.bf16.msra.mxu0 0
        %2100 = vmatprep.subr.bf16.mxu0 0
        %2101 = vmatpush1.bf16.msra.mxu0 0
        %2102 = vmatprep.subr.bf16.mxu0 0
        %2103 = vmatpush1.bf16.msra.mxu0 0
        %2104 = vmatprep.subr.bf16.mxu0 0
        %2105 = vmatpush1.bf16.msra.mxu0 0
        %2106 = vmatprep.subr.bf16.mxu0 0
        %2107 = vmatpush1.bf16.msra.mxu0 0
        %2108 = vmatprep.subr.bf16.mxu0 0
        %2109 = vmatpush1.bf16.msra.mxu0 0
        %2110 = vmatprep.subr.bf16.mxu0 0
        %2111 = vmatpush1.bf16.msra.mxu0 0
        %2112 = vmatprep.subr.bf16.mxu0 0
        %2113 = vmatpush1.bf16.msra.mxu0 0
        %2114 = vmatprep.subr.bf16.mxu0 0
        %2115 = vmatpush1.bf16.msra.mxu0 0
        %2116 = vmatprep.subr.bf16.mxu0 0
        %2117 = vmatpush1.bf16.msra.mxu0 0
        %2118 = vmatprep.subr.bf16.mxu0 0
        %2119 = vmatpush1.bf16.msra.mxu0 0
        %2120 = vmatprep.subr.bf16.mxu0 0
        %2121 = vmatpush1.bf16.msra.mxu0 0
        %2122 = vmatprep.mubr.bf16.mxu0 0
        %2123 = vmatmul.mubr.bf16.gmra.mrb[0].mxu0 %v2082
        %v2124 = vpop.f32.mrb[0].mxu0
        %v2125 = vadd.f32 0.0, %v2124
        %v2126 = vpop.f32.mrb[0].mxu0
        %v2127 = vpop.f32.mrb[0].mxu0
        %v2128 = vadd.f32 0.0, %v2127
        %v2129 = vpop.f32.mrb[0].mxu0
        %2130 = vmatprep.mubr.bf16.mxu0 0
        %2131 = vmatmul.mubr.bf16.gmra.mrb[0].mxu0 %v2085
        %v2132 = vpop.f32.mrb[0].mxu0
        %v2133 = vadd.f32 0.0, %v2132
        %v2134 = vpop.f32.mrb[0].mxu0
        %v2135 = vpop.f32.mrb[0].mxu0
        %v2136 = vpop.f32.mrb[0].mxu0
        %2137 = vdwg.mxu0
        %v2138 = vadd.f32 %v2076, %v2125
        %v2139 = vadd.f32 %v2077, %v2128
        %v2140 = vadd.f32 %v2078, %v2133
        %s2141 = scalar_lea.vmem %s1, 100
        %v2142 = vld [vmem:[%s2141] sm:$0xf]
        %v2143 = vrot.slane %v1343, 1
        %v2144 = vor.u32 %v1340, %v2143
        %v2145 = vshll.u32 %v2079, 16
        %v2147 = vrot.slane %v2145, 1
        %v2148 = vsel %vm446, %v2144, %v2147
        %v2149 = vshrl.u32 %v2079, 16
        %v2151 = vor.u32 %v2149, %v2147
        %v2153 = vsel %vm462, %v2148, 0
        %v2156 = vsel %vm462, %v2151, 0
        %v2159 = vsel %vm469, %v2142, 0
        %2161 = vmatprep.subr.bf16.mxu0 0
        %2162 = vmatpush1.bf16.msra.mxu0 %v2159
        %2163 = vmatprep.subr.bf16.mxu0 0
        %2164 = vmatpush1.bf16.msra.mxu0 0
        %2165 = vmatprep.subr.bf16.mxu0 0
        %2166 = vmatpush1.bf16.msra.mxu0 0
        %2167 = vmatprep.subr.bf16.mxu0 0
        %2168 = vmatpush1.bf16.msra.mxu0 0
        %2169 = vmatprep.subr.bf16.mxu0 0
        %2170 = vmatpush1.bf16.msra.mxu0 0
        %2171 = vmatprep.subr.bf16.mxu0 0
        %2172 = vmatpush1.bf16.msra.mxu0 0
        %2173 = vmatprep.subr.bf16.mxu0 0
        %2174 = vmatpush1.bf16.msra.mxu0 0
        %2175 = vmatprep.subr.bf16.mxu0 0
        %2176 = vmatpush1.bf16.msra.mxu0 0
        %2177 = vmatprep.subr.bf16.mxu0 0
        %2178 = vmatpush1.bf16.msra.mxu0 0
        %2179 = vmatprep.subr.bf16.mxu0 0
        %2180 = vmatpush1.bf16.msra.mxu0 0
        %2181 = vmatprep.subr.bf16.mxu0 0
        %2182 = vmatpush1.bf16.msra.mxu0 0
        %2183 = vmatprep.subr.bf16.mxu0 0
        %2184 = vmatpush1.bf16.msra.mxu0 0
        %2185 = vmatprep.subr.bf16.mxu0 0
        %2186 = vmatpush1.bf16.msra.mxu0 0
        %2187 = vmatprep.subr.bf16.mxu0 0
        %2188 = vmatpush1.bf16.msra.mxu0 0
        %2189 = vmatprep.subr.bf16.mxu0 0
        %2190 = vmatpush1.bf16.msra.mxu0 0
        %2191 = vmatprep.subr.bf16.mxu0 0
        %2192 = vmatpush1.bf16.msra.mxu0 0
        %2193 = vmatprep.mubr.bf16.mxu0 0
        %2194 = vmatmul.mubr.bf16.gmra.mrb[0].mxu0 %v2153
        %v2195 = vpop.f32.mrb[0].mxu0
        %v2196 = vadd.f32 0.0, %v2195
        %v2197 = vpop.f32.mrb[0].mxu0
        %v2198 = vpop.f32.mrb[0].mxu0
        %v2199 = vadd.f32 0.0, %v2198
        %v2200 = vpop.f32.mrb[0].mxu0
        %2201 = vmatprep.mubr.bf16.mxu0 0
        %2202 = vmatmul.mubr.bf16.gmra.mrb[0].mxu0 %v2156
        %v2203 = vpop.f32.mrb[0].mxu0
        %v2204 = vadd.f32 0.0, %v2203
        %v2205 = vpop.f32.mrb[0].mxu0
        %v2206 = vpop.f32.mrb[0].mxu0
        %v2207 = vpop.f32.mrb[0].mxu0
        %2208 = vdwg.mxu0
        %v2209 = vadd.f32 %v2138, %v2196
        %v2210 = vadd.f32 %v2139, %v2199
        %v2211 = vadd.f32 %v2140, %v2204
        %s2212 = scalar_lea.vmem %s1, 104
        %v2213 = vld [vmem:[%s2212] sm:$0xf]
        %v2215 = vrot.slane %v1333, 1
        %v2216 = vrot.slane %v2079, 1
        %v2217 = vsel %vm580, %v2215, %v2216
        %v2219 = vsel %vm462, %v2217, 0
        %v2222 = vsel %vm462, %v2216, 0
        %v2225 = vsel %vm469, %v2213, 0
        %2227 = vmatprep.subr.bf16.mxu0 0
        %2228 = vmatpush1.bf16.msra.mxu0 %v2225
        %2229 = vmatprep.subr.bf16.mxu0 0
        %2230 = vmatpush1.bf16.msra.mxu0 0
        %2231 = vmatprep.subr.bf16.mxu0 0
        %2232 = vmatpush1.bf16.msra.mxu0 0
        %2233 = vmatprep.subr.bf16.mxu0 0
        %2234 = vmatpush1.bf16.msra.mxu0 0
        %2235 = vmatprep.subr.bf16.mxu0 0
        %2236 = vmatpush1.bf16.msra.mxu0 0
        %2237 = vmatprep.subr.bf16.mxu0 0
        %2238 = vmatpush1.bf16.msra.mxu0 0
        %2239 = vmatprep.subr.bf16.mxu0 0
        %2240 = vmatpush1.bf16.msra.mxu0 0
        %2241 = vmatprep.subr.bf16.mxu0 0
        %2242 = vmatpush1.bf16.msra.mxu0 0
        %2243 = vmatprep.subr.bf16.mxu0 0
        %2244 = vmatpush1.bf16.msra.mxu0 0
        %2245 = vmatprep.subr.bf16.mxu0 0
        %2246 = vmatpush1.bf16.msra.mxu0 0
        %2247 = vmatprep.subr.bf16.mxu0 0
        %2248 = vmatpush1.bf16.msra.mxu0 0
        %2249 = vmatprep.subr.bf16.mxu0 0
        %2250 = vmatpush1.bf16.msra.mxu0 0
        %2251 = vmatprep.subr.bf16.mxu0 0
        %2252 = vmatpush1.bf16.msra.mxu0 0
        %2253 = vmatprep.subr.bf16.mxu0 0
        %2254 = vmatpush1.bf16.msra.mxu0 0
        %2255 = vmatprep.subr.bf16.mxu0 0
        %2256 = vmatpush1.bf16.msra.mxu0 0
        %2257 = vmatprep.subr.bf16.mxu0 0
        %2258 = vmatpush1.bf16.msra.mxu0 0
        %2259 = vmatprep.mubr.bf16.mxu0 0
        %2260 = vmatmul.mubr.bf16.gmra.mrb[0].mxu0 %v2219
        %v2261 = vpop.f32.mrb[0].mxu0
        %v2262 = vadd.f32 0.0, %v2261
        %v2263 = vpop.f32.mrb[0].mxu0
        %v2264 = vpop.f32.mrb[0].mxu0
        %v2265 = vadd.f32 0.0, %v2264
        %v2266 = vpop.f32.mrb[0].mxu0
        %2267 = vmatprep.mubr.bf16.mxu0 0
        %2268 = vmatmul.mubr.bf16.gmra.mrb[0].mxu0 %v2222
        %v2269 = vpop.f32.mrb[0].mxu0
        %v2270 = vadd.f32 0.0, %v2269
        %v2271 = vpop.f32.mrb[0].mxu0
        %v2272 = vpop.f32.mrb[0].mxu0
        %v2273 = vpop.f32.mrb[0].mxu0
        %2274 = vdwg.mxu0
        %v2275 = vadd.f32 %v2209, %v2262
        %v2276 = vadd.f32 %v2210, %v2265
        %v2277 = vadd.f32 %v2211, %v2270
        %s2278 = scalar_lea.vmem %s1, 108
        %v2279 = vld [vmem:[%s2278] sm:$0xf]
        %v2280 = vrot.slane %v1340, 1
        %v2281 = vrot.slane %v1343, 2
        %v2282 = vor.u32 %v2280, %v2281
        %v2283 = vrot.slane %v2149, 1
        %v2284 = vrot.slane %v2145, 2
        %v2285 = vor.u32 %v2283, %v2284
        %v2286 = vsel %vm646, %v2282, %v2285
        %v2288 = vsel %vm462, %v2286, 0
        %v2291 = vsel %vm462, %v2285, 0
        %v2294 = vsel %vm469, %v2279, 0
        %2296 = vmatprep.subr.bf16.mxu0 0
        %2297 = vmatpush1.bf16.msra.mxu0 %v2294
        %2298 = vmatprep.subr.bf16.mxu0 0
        %2299 = vmatpush1.bf16.msra.mxu0 0
        %2300 = vmatprep.subr.bf16.mxu0 0
        %2301 = vmatpush1.bf16.msra.mxu0 0
        %2302 = vmatprep.subr.bf16.mxu0 0
        %2303 = vmatpush1.bf16.msra.mxu0 0
        %2304 = vmatprep.subr.bf16.mxu0 0
        %2305 = vmatpush1.bf16.msra.mxu0 0
        %2306 = vmatprep.subr.bf16.mxu0 0
        %2307 = vmatpush1.bf16.msra.mxu0 0
        %2308 = vmatprep.subr.bf16.mxu0 0
        %2309 = vmatpush1.bf16.msra.mxu0 0
        %2310 = vmatprep.subr.bf16.mxu0 0
        %2311 = vmatpush1.bf16.msra.mxu0 0
        %2312 = vmatprep.subr.bf16.mxu0 0
        %2313 = vmatpush1.bf16.msra.mxu0 0
        %2314 = vmatprep.subr.bf16.mxu0 0
        %2315 = vmatpush1.bf16.msra.mxu0 0
        %2316 = vmatprep.subr.bf16.mxu0 0
        %2317 = vmatpush1.bf16.msra.mxu0 0
        %2318 = vmatprep.subr.bf16.mxu0 0
        %2319 = vmatpush1.bf16.msra.mxu0 0
        %2320 = vmatprep.subr.bf16.mxu0 0
        %2321 = vmatpush1.bf16.msra.mxu0 0
        %2322 = vmatprep.subr.bf16.mxu0 0
        %2323 = vmatpush1.bf16.msra.mxu0 0
        %2324 = vmatprep.subr.bf16.mxu0 0
        %2325 = vmatpush1.bf16.msra.mxu0 0
        %2326 = vmatprep.subr.bf16.mxu0 0
        %2327 = vmatpush1.bf16.msra.mxu0 0
        %2328 = vmatprep.mubr.bf16.mxu0 0
        %2329 = vmatmul.mubr.bf16.gmra.mrb[0].mxu0 %v2288
        %v2330 = vpop.f32.mrb[0].mxu0
        %v2331 = vadd.f32 0.0, %v2330
        %v2332 = vpop.f32.mrb[0].mxu0
        %v2333 = vpop.f32.mrb[0].mxu0
        %v2334 = vadd.f32 0.0, %v2333
        %v2335 = vpop.f32.mrb[0].mxu0
        %2336 = vmatprep.mubr.bf16.mxu0 0
        %2337 = vmatmul.mubr.bf16.gmra.mrb[0].mxu0 %v2291
        %v2338 = vpop.f32.mrb[0].mxu0
        %v2339 = vadd.f32 0.0, %v2338
        %v2340 = vpop.f32.mrb[0].mxu0
        %v2341 = vpop.f32.mrb[0].mxu0
        %v2342 = vpop.f32.mrb[0].mxu0
        %2343 = vdwg.mxu0
        %v2344 = vadd.f32 %v2275, %v2331
        %v2345 = vadd.f32 %v2276, %v2334
        %v2346 = vadd.f32 %v2277, %v2339
        %s2347 = scalar_lea.vmem %s1, 112
        %v2348 = vld [vmem:[%s2347] sm:$0xf]
        %v2349 = vrot.slane %v1333, 2
        %v2350 = vrot.slane %v2079, 2
        %v2351 = vsel %vm716, %v2349, %v2350
        %v2353 = vsel %vm462, %v2351, 0
        %v2356 = vsel %vm462, %v2350, 0
        %v2359 = vsel %vm469, %v2348, 0
        %2361 = vmatprep.subr.bf16.mxu0 0
        %2362 = vmatpush1.bf16.msra.mxu0 %v2359
        %2363 = vmatprep.subr.bf16.mxu0 0
        %2364 = vmatpush1.bf16.msra.mxu0 0
        %2365 = vmatprep.subr.bf16.mxu0 0
        %2366 = vmatpush1.bf16.msra.mxu0 0
        %2367 = vmatprep.subr.bf16.mxu0 0
        %2368 = vmatpush1.bf16.msra.mxu0 0
        %2369 = vmatprep.subr.bf16.mxu0 0
        %2370 = vmatpush1.bf16.msra.mxu0 0
        %2371 = vmatprep.subr.bf16.mxu0 0
        %2372 = vmatpush1.bf16.msra.mxu0 0
        %2373 = vmatprep.subr.bf16.mxu0 0
        %2374 = vmatpush1.bf16.msra.mxu0 0
        %2375 = vmatprep.subr.bf16.mxu0 0
        %2376 = vmatpush1.bf16.msra.mxu0 0
        %2377 = vmatprep.subr.bf16.mxu0 0
        %2378 = vmatpush1.bf16.msra.mxu0 0
        %2379 = vmatprep.subr.bf16.mxu0 0
        %2380 = vmatpush1.bf16.msra.mxu0 0
        %2381 = vmatprep.subr.bf16.mxu0 0
        %2382 = vmatpush1.bf16.msra.mxu0 0
        %2383 = vmatprep.subr.bf16.mxu0 0
        %2384 = vmatpush1.bf16.msra.mxu0 0
        %2385 = vmatprep.subr.bf16.mxu0 0
        %2386 = vmatpush1.bf16.msra.mxu0 0
        %2387 = vmatprep.subr.bf16.mxu0 0
        %2388 = vmatpush1.bf16.msra.mxu0 0
        %2389 = vmatprep.subr.bf16.mxu0 0
        %2390 = vmatpush1.bf16.msra.mxu0 0
        %2391 = vmatprep.subr.bf16.mxu0 0
        %2392 = vmatpush1.bf16.msra.mxu0 0
        %2393 = vmatprep.mubr.bf16.mxu0 0
        %2394 = vmatmul.mubr.bf16.gmra.mrb[0].mxu0 %v2353
        %v2395 = vpop.f32.mrb[0].mxu0
        %v2396 = vadd.f32 0.0, %v2395
        %v2397 = vpop.f32.mrb[0].mxu0
        %v2398 = vpop.f32.mrb[0].mxu0
        %v2399 = vadd.f32 0.0, %v2398
        %v2400 = vpop.f32.mrb[0].mxu0
        %2401 = vmatprep.mubr.bf16.mxu0 0
        %2402 = vmatmul.mubr.bf16.gmra.mrb[0].mxu0 %v2356
        %v2403 = vpop.f32.mrb[0].mxu0
        %v2404 = vadd.f32 0.0, %v2403
        %v2405 = vpop.f32.mrb[0].mxu0
        %v2406 = vpop.f32.mrb[0].mxu0
        %v2407 = vpop.f32.mrb[0].mxu0
        %2408 = vdwg.mxu0
        %v2409 = vadd.f32 %v2344, %v2396
        %v2410 = vadd.f32 %v2345, %v2399
        %v2411 = vadd.f32 %v2346, %v2404
        %v2412 = vpack.c.bf16 %v440, %v439
        %s2413 = scalar_lea.vmem %s1, 116
        %v2414 = vld [vmem:[%s2413] sm:$0xf]
        %v2416 = vshrl.u32 %v2412, 16
        %v2418 = vrot.slane %v2416, 2
        %v2419 = vshll.u32 %v2412, 16
        %v2421 = vrot.slane %v2419, 3
        %v2422 = vor.u32 %v2418, %v2421
        %v2423 = vsel %vm783, %v1346, %v2422
        %v2425 = vsel %vm462, %v2423, 0
        %v2428 = vsel %vm462, %v2422, 0
        %v2431 = vsel %vm469, %v2414, 0
        %2433 = vmatprep.subr.bf16.mxu0 0
        %2434 = vmatpush1.bf16.msra.mxu0 %v2431
        %2435 = vmatprep.subr.bf16.mxu0 0
        %2436 = vmatpush1.bf16.msra.mxu0 0
        %2437 = vmatprep.subr.bf16.mxu0 0
        %2438 = vmatpush1.bf16.msra.mxu0 0
        %2439 = vmatprep.subr.bf16.mxu0 0
        %2440 = vmatpush1.bf16.msra.mxu0 0
        %2441 = vmatprep.subr.bf16.mxu0 0
        %2442 = vmatpush1.bf16.msra.mxu0 0
        %2443 = vmatprep.subr.bf16.mxu0 0
        %2444 = vmatpush1.bf16.msra.mxu0 0
        %2445 = vmatprep.subr.bf16.mxu0 0
        %2446 = vmatpush1.bf16.msra.mxu0 0
        %2447 = vmatprep.subr.bf16.mxu0 0
        %2448 = vmatpush1.bf16.msra.mxu0 0
        %2449 = vmatprep.subr.bf16.mxu0 0
        %2450 = vmatpush1.bf16.msra.mxu0 0
        %2451 = vmatprep.subr.bf16.mxu0 0
        %2452 = vmatpush1.bf16.msra.mxu0 0
        %2453 = vmatprep.subr.bf16.mxu0 0
        %2454 = vmatpush1.bf16.msra.mxu0 0
        %2455 = vmatprep.subr.bf16.mxu0 0
        %2456 = vmatpush1.bf16.msra.mxu0 0
        %2457 = vmatprep.subr.bf16.mxu0 0
        %2458 = vmatpush1.bf16.msra.mxu0 0
        %2459 = vmatprep.subr.bf16.mxu0 0
        %2460 = vmatpush1.bf16.msra.mxu0 0
        %2461 = vmatprep.subr.bf16.mxu0 0
        %2462 = vmatpush1.bf16.msra.mxu0 0
        %2463 = vmatprep.subr.bf16.mxu0 0
        %2464 = vmatpush1.bf16.msra.mxu0 0
        %2465 = vmatprep.mubr.bf16.mxu0 0
        %2466 = vmatmul.mubr.bf16.gmra.mrb[0].mxu0 %v2425
        %v2467 = vpop.f32.mrb[0].mxu0
        %v2468 = vadd.f32 0.0, %v2467
        %v2469 = vpop.f32.mrb[0].mxu0
        %v2470 = vpop.f32.mrb[0].mxu0
        %v2471 = vadd.f32 0.0, %v2470
        %v2472 = vpop.f32.mrb[0].mxu0
        %2473 = vmatprep.mubr.bf16.mxu0 0
        %2474 = vmatmul.mubr.bf16.gmra.mrb[0].mxu0 %v2428
        %v2475 = vpop.f32.mrb[0].mxu0
        %v2476 = vadd.f32 0.0, %v2475
        %v2477 = vpop.f32.mrb[0].mxu0
        %v2478 = vpop.f32.mrb[0].mxu0
        %v2479 = vpop.f32.mrb[0].mxu0
        %2480 = vdwg.mxu0
        %v2481 = vadd.f32 %v2409, %v2468
        %v2482 = vadd.f32 %v2410, %v2471
        %v2483 = vadd.f32 %v2411, %v2476
        %s2484 = scalar_lea.vmem %s1, 120
        %v2485 = vld [vmem:[%s2484] sm:$0xf]
        %v2487 = vrot.slane %v2412, 3
        %v2488 = vsel %vm859, %v1412, %v2487
        %v2490 = vsel %vm462, %v2488, 0
        %v2493 = vsel %vm462, %v2487, 0
        %v2496 = vsel %vm469, %v2485, 0
        %2498 = vmatprep.subr.bf16.mxu0 0
        %2499 = vmatpush1.bf16.msra.mxu0 %v2496
        %2500 = vmatprep.subr.bf16.mxu0 0
        %2501 = vmatpush1.bf16.msra.mxu0 0
        %2502 = vmatprep.subr.bf16.mxu0 0
        %2503 = vmatpush1.bf16.msra.mxu0 0
        %2504 = vmatprep.subr.bf16.mxu0 0
        %2505 = vmatpush1.bf16.msra.mxu0 0
        %2506 = vmatprep.subr.bf16.mxu0 0
        %2507 = vmatpush1.bf16.msra.mxu0 0
        %2508 = vmatprep.subr.bf16.mxu0 0
        %2509 = vmatpush1.bf16.msra.mxu0 0
        %2510 = vmatprep.subr.bf16.mxu0 0
        %2511 = vmatpush1.bf16.msra.mxu0 0
        %2512 = vmatprep.subr.bf16.mxu0 0
        %2513 = vmatpush1.bf16.msra.mxu0 0
        %2514 = vmatprep.subr.bf16.mxu0 0
        %2515 = vmatpush1.bf16.msra.mxu0 0
        %2516 = vmatprep.subr.bf16.mxu0 0
        %2517 = vmatpush1.bf16.msra.mxu0 0
        %2518 = vmatprep.subr.bf16.mxu0 0
        %2519 = vmatpush1.bf16.msra.mxu0 0
        %2520 = vmatprep.subr.bf16.mxu0 0
        %2521 = vmatpush1.bf16.msra.mxu0 0
        %2522 = vmatprep.subr.bf16.mxu0 0
        %2523 = vmatpush1.bf16.msra.mxu0 0
        %2524 = vmatprep.subr.bf16.mxu0 0
        %2525 = vmatpush1.bf16.msra.mxu0 0
        %2526 = vmatprep.subr.bf16.mxu0 0
        %2527 = vmatpush1.bf16.msra.mxu0 0
        %2528 = vmatprep.subr.bf16.mxu0 0
        %2529 = vmatpush1.bf16.msra.mxu0 0
        %2530 = vmatprep.mubr.bf16.mxu0 0
        %2531 = vmatmul.mubr.bf16.gmra.mrb[0].mxu0 %v2490
        %v2532 = vpop.f32.mrb[0].mxu0
        %v2533 = vadd.f32 0.0, %v2532
        %v2534 = vpop.f32.mrb[0].mxu0
        %v2535 = vpop.f32.mrb[0].mxu0
        %v2536 = vadd.f32 0.0, %v2535
        %v2537 = vpop.f32.mrb[0].mxu0
        %2538 = vmatprep.mubr.bf16.mxu0 0
        %2539 = vmatmul.mubr.bf16.gmra.mrb[0].mxu0 %v2493
        %v2540 = vpop.f32.mrb[0].mxu0
        %v2541 = vadd.f32 0.0, %v2540
        %v2542 = vpop.f32.mrb[0].mxu0
        %v2543 = vpop.f32.mrb[0].mxu0
        %v2544 = vpop.f32.mrb[0].mxu0
        %2545 = vdwg.mxu0
        %v2546 = vadd.f32 %v2481, %v2533
        %v2547 = vadd.f32 %v2482, %v2536
        %v2548 = vadd.f32 %v2483, %v2541
        %s2549 = scalar_lea.vmem %s1, 124
        %v2550 = vld [vmem:[%s2549] sm:$0xf]
        %v2551 = vrot.slane %v2416, 3
        %v2552 = vrot.slane %v2419, 4
        %v2553 = vor.u32 %v2551, %v2552
        %v2554 = vsel %vm925, %v1481, %v2553
        %v2556 = vsel %vm462, %v2554, 0
        %v2559 = vsel %vm462, %v2553, 0
        %v2562 = vsel %vm469, %v2550, 0
        %2564 = vmatprep.subr.bf16.mxu0 0
        %2565 = vmatpush1.bf16.msra.mxu0 %v2562
        %2566 = vmatprep.subr.bf16.mxu0 0
        %2567 = vmatpush1.bf16.msra.mxu0 0
        %2568 = vmatprep.subr.bf16.mxu0 0
        %2569 = vmatpush1.bf16.msra.mxu0 0
        %2570 = vmatprep.subr.bf16.mxu0 0
        %2571 = vmatpush1.bf16.msra.mxu0 0
        %2572 = vmatprep.subr.bf16.mxu0 0
        %2573 = vmatpush1.bf16.msra.mxu0 0
        %2574 = vmatprep.subr.bf16.mxu0 0
        %2575 = vmatpush1.bf16.msra.mxu0 0
        %2576 = vmatprep.subr.bf16.mxu0 0
        %2577 = vmatpush1.bf16.msra.mxu0 0
        %2578 = vmatprep.subr.bf16.mxu0 0
        %2579 = vmatpush1.bf16.msra.mxu0 0
        %2580 = vmatprep.subr.bf16.mxu0 0
        %2581 = vmatpush1.bf16.msra.mxu0 0
        %2582 = vmatprep.subr.bf16.mxu0 0
        %2583 = vmatpush1.bf16.msra.mxu0 0
        %2584 = vmatprep.subr.bf16.mxu0 0
        %2585 = vmatpush1.bf16.msra.mxu0 0
        %2586 = vmatprep.subr.bf16.mxu0 0
        %2587 = vmatpush1.bf16.msra.mxu0 0
        %2588 = vmatprep.subr.bf16.mxu0 0
        %2589 = vmatpush1.bf16.msra.mxu0 0
        %2590 = vmatprep.subr.bf16.mxu0 0
        %2591 = vmatpush1.bf16.msra.mxu0 0
        %2592 = vmatprep.subr.bf16.mxu0 0
        %2593 = vmatpush1.bf16.msra.mxu0 0
        %2594 = vmatprep.subr.bf16.mxu0 0
        %2595 = vmatpush1.bf16.msra.mxu0 0
        %2596 = vmatprep.mubr.bf16.mxu0 0
        %2597 = vmatmul.mubr.bf16.gmra.mrb[0].mxu0 %v2556
        %v2598 = vpop.f32.mrb[0].mxu0
        %v2599 = vadd.f32 0.0, %v2598
        %v2600 = vpop.f32.mrb[0].mxu0
        %v2601 = vpop.f32.mrb[0].mxu0
        %v2602 = vadd.f32 0.0, %v2601
        %v2603 = vpop.f32.mrb[0].mxu0
        %2604 = vmatprep.mubr.bf16.mxu0 0
        %2605 = vmatmul.mubr.bf16.gmra.mrb[0].mxu0 %v2559
        %v2606 = vpop.f32.mrb[0].mxu0
        %v2607 = vadd.f32 0.0, %v2606
        %v2608 = vpop.f32.mrb[0].mxu0
        %v2609 = vpop.f32.mrb[0].mxu0
        %v2610 = vpop.f32.mrb[0].mxu0
        %2611 = vdwg.mxu0
        %v2612 = vadd.f32 %v2546, %v2599
        %v2613 = vadd.f32 %v2547, %v2602
        %v2614 = vadd.f32 %v2548, %v2607
        %v2615 = vpack.c.bf16 %v440, %v440
        %s2616 = scalar_lea.vmem %s1, 128
        %v2617 = vld [vmem:[%s2616] sm:$0xf]
        %v2618 = vsel %vm462, %v1876, 0
        %v2621 = vsel %vm462, %v2615, 0
        %v2624 = vsel %vm469, %v2617, 0
        %2626 = vmatprep.subr.bf16.mxu0 0
        %2627 = vmatpush1.bf16.msra.mxu0 %v2624
        %2628 = vmatprep.subr.bf16.mxu0 0
        %2629 = vmatpush1.bf16.msra.mxu0 0
        %2630 = vmatprep.subr.bf16.mxu0 0
        %2631 = vmatpush1.bf16.msra.mxu0 0
        %2632 = vmatprep.subr.bf16.mxu0 0
        %2633 = vmatpush1.bf16.msra.mxu0 0
        %2634 = vmatprep.subr.bf16.mxu0 0
        %2635 = vmatpush1.bf16.msra.mxu0 0
        %2636 = vmatprep.subr.bf16.mxu0 0
        %2637 = vmatpush1.bf16.msra.mxu0 0
        %2638 = vmatprep.subr.bf16.mxu0 0
        %2639 = vmatpush1.bf16.msra.mxu0 0
        %2640 = vmatprep.subr.bf16.mxu0 0
        %2641 = vmatpush1.bf16.msra.mxu0 0
        %2642 = vmatprep.subr.bf16.mxu0 0
        %2643 = vmatpush1.bf16.msra.mxu0 0
        %2644 = vmatprep.subr.bf16.mxu0 0
        %2645 = vmatpush1.bf16.msra.mxu0 0
        %2646 = vmatprep.subr.bf16.mxu0 0
        %2647 = vmatpush1.bf16.msra.mxu0 0
        %2648 = vmatprep.subr.bf16.mxu0 0
        %2649 = vmatpush1.bf16.msra.mxu0 0
        %2650 = vmatprep.subr.bf16.mxu0 0
        %2651 = vmatpush1.bf16.msra.mxu0 0
        %2652 = vmatprep.subr.bf16.mxu0 0
        %2653 = vmatpush1.bf16.msra.mxu0 0
        %2654 = vmatprep.subr.bf16.mxu0 0
        %2655 = vmatpush1.bf16.msra.mxu0 0
        %2656 = vmatprep.subr.bf16.mxu0 0
        %2657 = vmatpush1.bf16.msra.mxu0 0
        %2658 = vmatprep.mubr.bf16.mxu0 0
        %2659 = vmatmul.mubr.bf16.gmra.mrb[0].mxu0 %v2618
        %v2660 = vpop.f32.mrb[0].mxu0
        %v2661 = vadd.f32 0.0, %v2660
        %v2662 = vpop.f32.mrb[0].mxu0
        %v2663 = vpop.f32.mrb[0].mxu0
        %v2664 = vadd.f32 0.0, %v2663
        %v2665 = vpop.f32.mrb[0].mxu0
        %2666 = vmatprep.mubr.bf16.mxu0 0
        %2667 = vmatmul.mubr.bf16.gmra.mrb[0].mxu0 %v2621
        %v2668 = vpop.f32.mrb[0].mxu0
        %v2669 = vadd.f32 0.0, %v2668
        %v2670 = vpop.f32.mrb[0].mxu0
        %v2671 = vpop.f32.mrb[0].mxu0
        %v2672 = vpop.f32.mrb[0].mxu0
        %2673 = vdwg.mxu0
        %v2674 = vadd.f32 %v2612, %v2661
        %v2675 = vadd.f32 %v2613, %v2664
        %v2676 = vadd.f32 %v2614, %v2669
        %s2677 = scalar_lea.vmem %s1, 132
        %v2678 = vld [vmem:[%s2677] sm:$0xf]
        %v2679 = vrot.slane %v1883, 1
        %v2680 = vor.u32 %v1880, %v2679
        %v2681 = vshll.u32 %v2615, 16
        %v2683 = vrot.slane %v2681, 1
        %v2684 = vsel %vm446, %v2680, %v2683
        %v2685 = vshrl.u32 %v2615, 16
        %v2687 = vor.u32 %v2685, %v2683
        %v2689 = vsel %vm462, %v2684, 0
        %v2692 = vsel %vm462, %v2687, 0
        %v2695 = vsel %vm469, %v2678, 0
        %2697 = vmatprep.subr.bf16.mxu0 0
        %2698 = vmatpush1.bf16.msra.mxu0 %v2695
        %2699 = vmatprep.subr.bf16.mxu0 0
        %2700 = vmatpush1.bf16.msra.mxu0 0
        %2701 = vmatprep.subr.bf16.mxu0 0
        %2702 = vmatpush1.bf16.msra.mxu0 0
        %2703 = vmatprep.subr.bf16.mxu0 0
        %2704 = vmatpush1.bf16.msra.mxu0 0
        %2705 = vmatprep.subr.bf16.mxu0 0
        %2706 = vmatpush1.bf16.msra.mxu0 0
        %2707 = vmatprep.subr.bf16.mxu0 0
        %2708 = vmatpush1.bf16.msra.mxu0 0
        %2709 = vmatprep.subr.bf16.mxu0 0
        %2710 = vmatpush1.bf16.msra.mxu0 0
        %2711 = vmatprep.subr.bf16.mxu0 0
        %2712 = vmatpush1.bf16.msra.mxu0 0
        %2713 = vmatprep.subr.bf16.mxu0 0
        %2714 = vmatpush1.bf16.msra.mxu0 0
        %2715 = vmatprep.subr.bf16.mxu0 0
        %2716 = vmatpush1.bf16.msra.mxu0 0
        %2717 = vmatprep.subr.bf16.mxu0 0
        %2718 = vmatpush1.bf16.msra.mxu0 0
        %2719 = vmatprep.subr.bf16.mxu0 0
        %2720 = vmatpush1.bf16.msra.mxu0 0
        %2721 = vmatprep.subr.bf16.mxu0 0
        %2722 = vmatpush1.bf16.msra.mxu0 0
        %2723 = vmatprep.subr.bf16.mxu0 0
        %2724 = vmatpush1.bf16.msra.mxu0 0
        %2725 = vmatprep.subr.bf16.mxu0 0
        %2726 = vmatpush1.bf16.msra.mxu0 0
        %2727 = vmatprep.subr.bf16.mxu0 0
        %2728 = vmatpush1.bf16.msra.mxu0 0
        %2729 = vmatprep.mubr.bf16.mxu0 0
        %2730 = vmatmul.mubr.bf16.gmra.mrb[0].mxu0 %v2689
        %v2731 = vpop.f32.mrb[0].mxu0
        %v2732 = vadd.f32 0.0, %v2731
        %v2733 = vpop.f32.mrb[0].mxu0
        %v2734 = vpop.f32.mrb[0].mxu0
        %v2735 = vadd.f32 0.0, %v2734
        %v2736 = vpop.f32.mrb[0].mxu0
        %2737 = vmatprep.mubr.bf16.mxu0 0
        %2738 = vmatmul.mubr.bf16.gmra.mrb[0].mxu0 %v2692
        %v2739 = vpop.f32.mrb[0].mxu0
        %v2740 = vadd.f32 0.0, %v2739
        %v2741 = vpop.f32.mrb[0].mxu0
        %v2742 = vpop.f32.mrb[0].mxu0
        %v2743 = vpop.f32.mrb[0].mxu0
        %2744 = vdwg.mxu0
        %v2745 = vadd.f32 %v2674, %v2732
        %v2746 = vadd.f32 %v2675, %v2735
        %v2747 = vadd.f32 %v2676, %v2740
        %v2748 = vld [vmem:[%s2] sm:$0x1]
        %v2749 = vlaneseq
        %v2750 = vshrl.u32 %v2749, 7
        %v2751 = vsub.s32 0, %v2750
        %v2752 = vrot.slane %v2748, %v2751
        %v2753 = vmul.f32 %v2745, %v2752
        %v2754 = vmul.f32 %v2746, %v2752
        %v2755 = vmul.f32 %v2747, %v2752
        %v2756 = vld [vmem:[%s2 + $0x1] sm:$0x1]
        %v2757 = vlaneseq
        %v2758 = vshrl.u32 %v2757, 7
        %v2759 = vsub.s32 0, %v2758
        %v2760 = vrot.slane %v2756, %v2759
        %v2761 = vadd.f32 %v2753, %v2760
        %v2762 = vadd.f32 %v2754, %v2760
        %v2763 = vadd.f32 %v2755, %v2760
        %v2764 = vmax.f32 %v2761, 0.0
        %v2765 = vmax.f32 %v2762, 0.0
        %v2766 = vmax.f32 %v2763, 0.0
        %v2767 = vpack.c.bf16 %v2765, %v2764
        %v2768 = vld [vmem:[#allocation2] sm:$0xf]
        %v2769 = vld [vmem:[#allocation2 + $0x4] sm:$0xf]
        %v2770 = vld [vmem:[#allocation2 + $0x8] sm:$0xf]
        %v2771 = vld [vmem:[#allocation2 + $0xc] sm:$0xf]
        %v2772 = vld [vmem:[#allocation2 + $0x10] sm:$0xf]
        %v2773 = vld [vmem:[#allocation2 + $0x14] sm:$0xf]
        %v2774 = vld [vmem:[#allocation2 + $0x18] sm:$0xf]
        %v2775 = vld [vmem:[#allocation2 + $0x1c] sm:$0xf]
        %s2776 = scalar_lea.vmem [#allocation2], 32
        %v2777 = vld [vmem:[%s2776] sm:$0xf]
        %v2778 = vld [vmem:[%s2776 + $0x4] sm:$0xf]
        %v2779 = vld [vmem:[%s2776 + $0x8] sm:$0xf]
        %v2780 = vld [vmem:[%s2776 + $0xc] sm:$0xf]
        %v2781 = vld [vmem:[%s2776 + $0x10] sm:$0xf]
        %v2782 = vld [vmem:[%s2776 + $0x14] sm:$0xf]
        %v2783 = vld [vmem:[%s2776 + $0x18] sm:$0xf]
        %v2784 = vld [vmem:[%s2776 + $0x1c] sm:$0xf]
        %v2786 = vshrl.u32 %v2767, 16
        %v2788 = vshll.u32 %v2767, 16
        %v2790 = vrot.slane %v2788, 1
        %v2791 = vor.u32 %v2786, %v2790
        %v2800 = vunpack.c.l.b16 %v2777
        %v2801 = vunpack.c.l.b16 %v2778
        %v2802 = vunpack.c.l.b16 %v2779
        %v2803 = vunpack.c.l.b16 %v2780
        %v2804 = vunpack.c.l.b16 %v2781
        %v2805 = vunpack.c.l.b16 %v2782
        %v2806 = vunpack.c.l.b16 %v2783
        %v2807 = vunpack.c.l.b16 %v2784
        %v2808 = vpack.c.b16 %v2801, %v2800
        %v2809 = vpack.c.b16 %v2803, %v2802
        %v2810 = vpack.c.b16 %v2805, %v2804
        %v2811 = vpack.c.b16 %v2807, %v2806
        %vm2816 = vcmask 523264
        %v2818 = vsel %vm2816, %v2791, 0
        %2820 = vmatprep.subr.bf16.mxu0 0
        %2821 = vmatpush1.bf16.msra.mxu0 %v2808
        %2822 = vmatprep.subr.bf16.mxu0 0
        %2823 = vmatpush1.bf16.msra.mxu0 %v2809
        %2824 = vmatprep.subr.bf16.mxu0 0
        %2825 = vmatpush1.bf16.msra.mxu0 %v2810
        %2826 = vmatprep.subr.bf16.mxu0 0
        %2827 = vmatpush1.bf16.msra.mxu0 %v2811
        %2828 = vmatprep.subr.bf16.mxu0 0
        %2829 = vmatpush1.bf16.msra.mxu0 0
        %2830 = vmatprep.subr.bf16.mxu0 0
        %2831 = vmatpush1.bf16.msra.mxu0 0
        %2832 = vmatprep.subr.bf16.mxu0 0
        %2833 = vmatpush1.bf16.msra.mxu0 0
        %2834 = vmatprep.subr.bf16.mxu0 0
        %2835 = vmatpush1.bf16.msra.mxu0 0
        %2836 = vmatprep.subr.bf16.mxu0 0
        %2837 = vmatpush1.bf16.msra.mxu0 0
        %2838 = vmatprep.subr.bf16.mxu0 0
        %2839 = vmatpush1.bf16.msra.mxu0 0
        %2840 = vmatprep.subr.bf16.mxu0 0
        %2841 = vmatpush1.bf16.msra.mxu0 0
        %2842 = vmatprep.subr.bf16.mxu0 0
        %2843 = vmatpush1.bf16.msra.mxu0 0
        %2844 = vmatprep.subr.bf16.mxu0 0
        %2845 = vmatpush1.bf16.msra.mxu0 0
        %2846 = vmatprep.subr.bf16.mxu0 0
        %2847 = vmatpush1.bf16.msra.mxu0 0
        %2848 = vmatprep.subr.bf16.mxu0 0
        %2849 = vmatpush1.bf16.msra.mxu0 0
        %2850 = vmatprep.subr.bf16.mxu0 0
        %2851 = vmatpush1.bf16.msra.mxu0 0
        %2852 = vmatprep.mubr.bf16.mxu0 0
        %2853 = vmatmul.mubr.bf16.gmra.mrb[0].mxu0 %v2818
        %v2854 = vpop.f32.mrb[0].mxu0
        %v2855 = vadd.f32 0.0, %v2854
        %v2856 = vpop.f32.mrb[0].mxu0
        %v2857 = vpop.f32.mrb[0].mxu0
        %v2858 = vadd.f32 0.0, %v2857
        %v2859 = vpop.f32.mrb[0].mxu0
        %2860 = vdwg.mxu0
        %v2869 = vunpack.c.l.b16 %v2768
        %v2870 = vunpack.c.l.b16 %v2769
        %v2871 = vunpack.c.l.b16 %v2770
        %v2872 = vunpack.c.l.b16 %v2771
        %v2873 = vunpack.c.l.b16 %v2772
        %v2874 = vunpack.c.l.b16 %v2773
        %v2875 = vunpack.c.l.b16 %v2774
        %v2876 = vunpack.c.l.b16 %v2775
        %v2877 = vpack.c.b16 %v2870, %v2869
        %v2878 = vpack.c.b16 %v2872, %v2871
        %v2879 = vpack.c.b16 %v2874, %v2873
        %v2880 = vpack.c.b16 %v2876, %v2875
        %v2885 = vsel %vm2816, %v2767, 0
        %2887 = vmatprep.subr.bf16.mxu0 0
        %2888 = vmatpush1.bf16.msra.mxu0 %v2877
        %2889 = vmatprep.subr.bf16.mxu0 0
        %2890 = vmatpush1.bf16.msra.mxu0 %v2878
        %2891 = vmatprep.subr.bf16.mxu0 0
        %2892 = vmatpush1.bf16.msra.mxu0 %v2879
        %2893 = vmatprep.subr.bf16.mxu0 0
        %2894 = vmatpush1.bf16.msra.mxu0 %v2880
        %2895 = vmatprep.subr.bf16.mxu0 0
        %2896 = vmatpush1.bf16.msra.mxu0 0
        %2897 = vmatprep.subr.bf16.mxu0 0
        %2898 = vmatpush1.bf16.msra.mxu0 0
        %2899 = vmatprep.subr.bf16.mxu0 0
        %2900 = vmatpush1.bf16.msra.mxu0 0
        %2901 = vmatprep.subr.bf16.mxu0 0
        %2902 = vmatpush1.bf16.msra.mxu0 0
        %2903 = vmatprep.subr.bf16.mxu0 0
        %2904 = vmatpush1.bf16.msra.mxu0 0
        %2905 = vmatprep.subr.bf16.mxu0 0
        %2906 = vmatpush1.bf16.msra.mxu0 0
        %2907 = vmatprep.subr.bf16.mxu0 0
        %2908 = vmatpush1.bf16.msra.mxu0 0
        %2909 = vmatprep.subr.bf16.mxu0 0
        %2910 = vmatpush1.bf16.msra.mxu0 0
        %2911 = vmatprep.subr.bf16.mxu0 0
        %2912 = vmatpush1.bf16.msra.mxu0 0
        %2913 = vmatprep.subr.bf16.mxu0 0
        %2914 = vmatpush1.bf16.msra.mxu0 0
        %2915 = vmatprep.subr.bf16.mxu0 0
        %2916 = vmatpush1.bf16.msra.mxu0 0
        %2917 = vmatprep.subr.bf16.mxu0 0
        %2918 = vmatpush1.bf16.msra.mxu0 0
        %2919 = vmatprep.mubr.bf16.mxu0 0
        %2920 = vmatmul.mubr.bf16.gmra.mrb[0].mxu0 %v2885
        %v2921 = vpop.f32.mrb[0].mxu0
        %v2922 = vadd.f32 %v2855, %v2921
        %v2923 = vpop.f32.mrb[0].mxu0
        %v2924 = vpop.f32.mrb[0].mxu0
        %v2925 = vadd.f32 %v2858, %v2924
        %v2926 = vpop.f32.mrb[0].mxu0
        %2927 = vdwg.mxu0
        %v2928 = vpack.c.bf16 %v2766, %v2766
        %s2929 = scalar_lea.vmem [#allocation2], 64
        %v2930 = vld [vmem:[%s2929] sm:$0xf]
        %v2931 = vld [vmem:[%s2929 + $0x4] sm:$0xf]
        %v2932 = vld [vmem:[%s2929 + $0x8] sm:$0xf]
        %v2933 = vld [vmem:[%s2929 + $0xc] sm:$0xf]
        %v2934 = vld [vmem:[%s2929 + $0x10] sm:$0xf]
        %v2935 = vld [vmem:[%s2929 + $0x14] sm:$0xf]
        %v2936 = vld [vmem:[%s2929 + $0x18] sm:$0xf]
        %v2937 = vld [vmem:[%s2929 + $0x1c] sm:$0xf]
        %v2940 = vrot.slane %v2767, 1
        %v2941 = vrot.slane %v2928, 1
        %v2942 = vsel %vm580, %v2940, %v2941
        %v2951 = vunpack.c.l.b16 %v2930
        %v2952 = vunpack.c.l.b16 %v2931
        %v2953 = vunpack.c.l.b16 %v2932
        %v2954 = vunpack.c.l.b16 %v2933
        %v2955 = vunpack.c.l.b16 %v2934
        %v2956 = vunpack.c.l.b16 %v2935
        %v2957 = vunpack.c.l.b16 %v2936
        %v2958 = vunpack.c.l.b16 %v2937
        %v2959 = vpack.c.b16 %v2952, %v2951
        %v2960 = vpack.c.b16 %v2954, %v2953
        %v2961 = vpack.c.b16 %v2956, %v2955
        %v2962 = vpack.c.b16 %v2958, %v2957
        %v2968 = vsel %vm2816, %v2942, 0
        %2970 = vmatprep.subr.bf16.mxu0 0
        %2971 = vmatpush1.bf16.msra.mxu0 %v2959
        %2972 = vmatprep.subr.bf16.mxu0 0
        %2973 = vmatpush1.bf16.msra.mxu0 %v2960
        %2974 = vmatprep.subr.bf16.mxu0 0
        %2975 = vmatpush1.bf16.msra.mxu0 %v2961
        %2976 = vmatprep.subr.bf16.mxu0 0
        %2977 = vmatpush1.bf16.msra.mxu0 %v2962
        %2978 = vmatprep.subr.bf16.mxu0 0
        %2979 = vmatpush1.bf16.msra.mxu0 0
        %2980 = vmatprep.subr.bf16.mxu0 0
        %2981 = vmatpush1.bf16.msra.mxu0 0
        %2982 = vmatprep.subr.bf16.mxu0 0
        %2983 = vmatpush1.bf16.msra.mxu0 0
        %2984 = vmatprep.subr.bf16.mxu0 0
        %2985 = vmatpush1.bf16.msra.mxu0 0
        %2986 = vmatprep.subr.bf16.mxu0 0
        %2987 = vmatpush1.bf16.msra.mxu0 0
        %2988 = vmatprep.subr.bf16.mxu0 0
        %2989 = vmatpush1.bf16.msra.mxu0 0
        %2990 = vmatprep.subr.bf16.mxu0 0
        %2991 = vmatpush1.bf16.msra.mxu0 0
        %2992 = vmatprep.subr.bf16.mxu0 0
        %2993 = vmatpush1.bf16.msra.mxu0 0
        %2994 = vmatprep.subr.bf16.mxu0 0
        %2995 = vmatpush1.bf16.msra.mxu0 0
        %2996 = vmatprep.subr.bf16.mxu0 0
        %2997 = vmatpush1.bf16.msra.mxu0 0
        %2998 = vmatprep.subr.bf16.mxu0 0
        %2999 = vmatpush1.bf16.msra.mxu0 0
        %3000 = vmatprep.subr.bf16.mxu0 0
        %3001 = vmatpush1.bf16.msra.mxu0 0
        %3002 = vmatprep.mubr.bf16.mxu0 0
        %3003 = vmatmul.mubr.bf16.gmra.mrb[0].mxu0 %v2968
        %v3004 = vpop.f32.mrb[0].mxu0
        %v3005 = vadd.f32 0.0, %v3004
        %v3006 = vpop.f32.mrb[0].mxu0
        %v3007 = vpop.f32.mrb[0].mxu0
        %v3008 = vadd.f32 0.0, %v3007
        %v3009 = vpop.f32.mrb[0].mxu0
        %3010 = vdwg.mxu0
        %v3011 = vadd.f32 %v2922, %v3005
        %v3012 = vadd.f32 %v2925, %v3008
        %s3013 = scalar_lea.vmem [#allocation2], 96
        %v3014 = vld [vmem:[%s3013] sm:$0xf]
        %v3015 = vld [vmem:[%s3013 + $0x4] sm:$0xf]
        %v3016 = vld [vmem:[%s3013 + $0x8] sm:$0xf]
        %v3017 = vld [vmem:[%s3013 + $0xc] sm:$0xf]
        %v3018 = vld [vmem:[%s3013 + $0x10] sm:$0xf]
        %v3019 = vld [vmem:[%s3013 + $0x14] sm:$0xf]
        %v3020 = vld [vmem:[%s3013 + $0x18] sm:$0xf]
        %v3021 = vld [vmem:[%s3013 + $0x1c] sm:$0xf]
        %v3022 = vrot.slane %v2786, 1
        %v3023 = vrot.slane %v2788, 2
        %v3024 = vor.u32 %v3022, %v3023
        %v3026 = vshrl.u32 %v2928, 16
        %v3028 = vrot.slane %v3026, 1
        %v3029 = vshll.u32 %v2928, 16
        %v3031 = vrot.slane %v3029, 2
        %v3032 = vor.u32 %v3028, %v3031
        %v3033 = vsel %vm646, %v3024, %v3032
        %v3042 = vunpack.c.l.b16 %v3014
        %v3043 = vunpack.c.l.b16 %v3015
        %v3044 = vunpack.c.l.b16 %v3016
        %v3045 = vunpack.c.l.b16 %v3017
        %v3046 = vunpack.c.l.b16 %v3018
        %v3047 = vunpack.c.l.b16 %v3019
        %v3048 = vunpack.c.l.b16 %v3020
        %v3049 = vunpack.c.l.b16 %v3021
        %v3050 = vpack.c.b16 %v3043, %v3042
        %v3051 = vpack.c.b16 %v3045, %v3044
        %v3052 = vpack.c.b16 %v3047, %v3046
        %v3053 = vpack.c.b16 %v3049, %v3048
        %v3059 = vsel %vm2816, %v3033, 0
        %3061 = vmatprep.subr.bf16.mxu0 0
        %3062 = vmatpush1.bf16.msra.mxu0 %v3050
        %3063 = vmatprep.subr.bf16.mxu0 0
        %3064 = vmatpush1.bf16.msra.mxu0 %v3051
        %3065 = vmatprep.subr.bf16.mxu0 0
        %3066 = vmatpush1.bf16.msra.mxu0 %v3052
        %3067 = vmatprep.subr.bf16.mxu0 0
        %3068 = vmatpush1.bf16.msra.mxu0 %v3053
        %3069 = vmatprep.subr.bf16.mxu0 0
        %3070 = vmatpush1.bf16.msra.mxu0 0
        %3071 = vmatprep.subr.bf16.mxu0 0
        %3072 = vmatpush1.bf16.msra.mxu0 0
        %3073 = vmatprep.subr.bf16.mxu0 0
        %3074 = vmatpush1.bf16.msra.mxu0 0
        %3075 = vmatprep.subr.bf16.mxu0 0
        %3076 = vmatpush1.bf16.msra.mxu0 0
        %3077 = vmatprep.subr.bf16.mxu0 0
        %3078 = vmatpush1.bf16.msra.mxu0 0
        %3079 = vmatprep.subr.bf16.mxu0 0
        %3080 = vmatpush1.bf16.msra.mxu0 0
        %3081 = vmatprep.subr.bf16.mxu0 0
        %3082 = vmatpush1.bf16.msra.mxu0 0
        %3083 = vmatprep.subr.bf16.mxu0 0
        %3084 = vmatpush1.bf16.msra.mxu0 0
        %3085 = vmatprep.subr.bf16.mxu0 0
        %3086 = vmatpush1.bf16.msra.mxu0 0
        %3087 = vmatprep.subr.bf16.mxu0 0
        %3088 = vmatpush1.bf16.msra.mxu0 0
        %3089 = vmatprep.subr.bf16.mxu0 0
        %3090 = vmatpush1.bf16.msra.mxu0 0
        %3091 = vmatprep.subr.bf16.mxu0 0
        %3092 = vmatpush1.bf16.msra.mxu0 0
        %3093 = vmatprep.mubr.bf16.mxu0 0
        %3094 = vmatmul.mubr.bf16.gmra.mrb[0].mxu0 %v3059
        %v3095 = vpop.f32.mrb[0].mxu0
        %v3096 = vadd.f32 0.0, %v3095
        %v3097 = vpop.f32.mrb[0].mxu0
        %v3098 = vpop.f32.mrb[0].mxu0
        %v3099 = vadd.f32 0.0, %v3098
        %v3100 = vpop.f32.mrb[0].mxu0
        %3101 = vdwg.mxu0
        %v3102 = vadd.f32 %v3011, %v3096
        %v3103 = vadd.f32 %v3012, %v3099
        %s3104 = scalar_lea.vmem [#allocation2], 128
        %v3105 = vld [vmem:[%s3104] sm:$0xf]
        %v3106 = vld [vmem:[%s3104 + $0x4] sm:$0xf]
        %v3107 = vld [vmem:[%s3104 + $0x8] sm:$0xf]
        %v3108 = vld [vmem:[%s3104 + $0xc] sm:$0xf]
        %v3109 = vld [vmem:[%s3104 + $0x10] sm:$0xf]
        %v3110 = vld [vmem:[%s3104 + $0x14] sm:$0xf]
        %v3111 = vld [vmem:[%s3104 + $0x18] sm:$0xf]
        %v3112 = vld [vmem:[%s3104 + $0x1c] sm:$0xf]
        %v3113 = vrot.slane %v2767, 2
        %v3114 = vrot.slane %v2928, 2
        %v3115 = vsel %vm716, %v3113, %v3114
        %v3124 = vunpack.c.l.b16 %v3105
        %v3125 = vunpack.c.l.b16 %v3106
        %v3126 = vunpack.c.l.b16 %v3107
        %v3127 = vunpack.c.l.b16 %v3108
        %v3128 = vunpack.c.l.b16 %v3109
        %v3129 = vunpack.c.l.b16 %v3110
        %v3130 = vunpack.c.l.b16 %v3111
        %v3131 = vunpack.c.l.b16 %v3112
        %v3132 = vpack.c.b16 %v3125, %v3124
        %v3133 = vpack.c.b16 %v3127, %v3126
        %v3134 = vpack.c.b16 %v3129, %v3128
        %v3135 = vpack.c.b16 %v3131, %v3130
        %v3141 = vsel %vm2816, %v3115, 0
        %3143 = vmatprep.subr.bf16.mxu0 0
        %3144 = vmatpush1.bf16.msra.mxu0 %v3132
        %3145 = vmatprep.subr.bf16.mxu0 0
        %3146 = vmatpush1.bf16.msra.mxu0 %v3133
        %3147 = vmatprep.subr.bf16.mxu0 0
        %3148 = vmatpush1.bf16.msra.mxu0 %v3134
        %3149 = vmatprep.subr.bf16.mxu0 0
        %3150 = vmatpush1.bf16.msra.mxu0 %v3135
        %3151 = vmatprep.subr.bf16.mxu0 0
        %3152 = vmatpush1.bf16.msra.mxu0 0
        %3153 = vmatprep.subr.bf16.mxu0 0
        %3154 = vmatpush1.bf16.msra.mxu0 0
        %3155 = vmatprep.subr.bf16.mxu0 0
        %3156 = vmatpush1.bf16.msra.mxu0 0
        %3157 = vmatprep.subr.bf16.mxu0 0
        %3158 = vmatpush1.bf16.msra.mxu0 0
        %3159 = vmatprep.subr.bf16.mxu0 0
        %3160 = vmatpush1.bf16.msra.mxu0 0
        %3161 = vmatprep.subr.bf16.mxu0 0
        %3162 = vmatpush1.bf16.msra.mxu0 0
        %3163 = vmatprep.subr.bf16.mxu0 0
        %3164 = vmatpush1.bf16.msra.mxu0 0
        %3165 = vmatprep.subr.bf16.mxu0 0
        %3166 = vmatpush1.bf16.msra.mxu0 0
        %3167 = vmatprep.subr.bf16.mxu0 0
        %3168 = vmatpush1.bf16.msra.mxu0 0
        %3169 = vmatprep.subr.bf16.mxu0 0
        %3170 = vmatpush1.bf16.msra.mxu0 0
        %3171 = vmatprep.subr.bf16.mxu0 0
        %3172 = vmatpush1.bf16.msra.mxu0 0
        %3173 = vmatprep.subr.bf16.mxu0 0
        %3174 = vmatpush1.bf16.msra.mxu0 0
        %3175 = vmatprep.mubr.bf16.mxu0 0
        %3176 = vmatmul.mubr.bf16.gmra.mrb[0].mxu0 %v3141
        %v3177 = vpop.f32.mrb[0].mxu0
        %v3178 = vadd.f32 0.0, %v3177
        %v3179 = vpop.f32.mrb[0].mxu0
        %v3180 = vpop.f32.mrb[0].mxu0
        %v3181 = vadd.f32 0.0, %v3180
        %v3182 = vpop.f32.mrb[0].mxu0
        %3183 = vdwg.mxu0
        %v3184 = vadd.f32 %v3102, %v3178
        %v3185 = vadd.f32 %v3103, %v3181
        %s3186 = scalar_lea.vmem [#allocation2], 160
        %v3187 = vld [vmem:[%s3186] sm:$0xf]
        %v3188 = vld [vmem:[%s3186 + $0x4] sm:$0xf]
        %v3189 = vld [vmem:[%s3186 + $0x8] sm:$0xf]
        %v3190 = vld [vmem:[%s3186 + $0xc] sm:$0xf]
        %v3191 = vld [vmem:[%s3186 + $0x10] sm:$0xf]
        %v3192 = vld [vmem:[%s3186 + $0x14] sm:$0xf]
        %v3193 = vld [vmem:[%s3186 + $0x18] sm:$0xf]
        %v3194 = vld [vmem:[%s3186 + $0x1c] sm:$0xf]
        %v3195 = vrot.slane %v2786, 2
        %v3196 = vrot.slane %v2788, 3
        %v3197 = vor.u32 %v3195, %v3196
        %v3198 = vrot.slane %v3026, 2
        %v3199 = vrot.slane %v3029, 3
        %v3200 = vor.u32 %v3198, %v3199
        %v3201 = vsel %vm783, %v3197, %v3200
        %v3210 = vunpack.c.l.b16 %v3187
        %v3211 = vunpack.c.l.b16 %v3188
        %v3212 = vunpack.c.l.b16 %v3189
        %v3213 = vunpack.c.l.b16 %v3190
        %v3214 = vunpack.c.l.b16 %v3191
        %v3215 = vunpack.c.l.b16 %v3192
        %v3216 = vunpack.c.l.b16 %v3193
        %v3217 = vunpack.c.l.b16 %v3194
        %v3218 = vpack.c.b16 %v3211, %v3210
        %v3219 = vpack.c.b16 %v3213, %v3212
        %v3220 = vpack.c.b16 %v3215, %v3214
        %v3221 = vpack.c.b16 %v3217, %v3216
        %v3227 = vsel %vm2816, %v3201, 0
        %3229 = vmatprep.subr.bf16.mxu0 0
        %3230 = vmatpush1.bf16.msra.mxu0 %v3218
        %3231 = vmatprep.subr.bf16.mxu0 0
        %3232 = vmatpush1.bf16.msra.mxu0 %v3219
        %3233 = vmatprep.subr.bf16.mxu0 0
        %3234 = vmatpush1.bf16.msra.mxu0 %v3220
        %3235 = vmatprep.subr.bf16.mxu0 0
        %3236 = vmatpush1.bf16.msra.mxu0 %v3221
        %3237 = vmatprep.subr.bf16.mxu0 0
        %3238 = vmatpush1.bf16.msra.mxu0 0
        %3239 = vmatprep.subr.bf16.mxu0 0
        %3240 = vmatpush1.bf16.msra.mxu0 0
        %3241 = vmatprep.subr.bf16.mxu0 0
        %3242 = vmatpush1.bf16.msra.mxu0 0
        %3243 = vmatprep.subr.bf16.mxu0 0
        %3244 = vmatpush1.bf16.msra.mxu0 0
        %3245 = vmatprep.subr.bf16.mxu0 0
        %3246 = vmatpush1.bf16.msra.mxu0 0
        %3247 = vmatprep.subr.bf16.mxu0 0
        %3248 = vmatpush1.bf16.msra.mxu0 0
        %3249 = vmatprep.subr.bf16.mxu0 0
        %3250 = vmatpush1.bf16.msra.mxu0 0
        %3251 = vmatprep.subr.bf16.mxu0 0
        %3252 = vmatpush1.bf16.msra.mxu0 0
        %3253 = vmatprep.subr.bf16.mxu0 0
        %3254 = vmatpush1.bf16.msra.mxu0 0
        %3255 = vmatprep.subr.bf16.mxu0 0
        %3256 = vmatpush1.bf16.msra.mxu0 0
        %3257 = vmatprep.subr.bf16.mxu0 0
        %3258 = vmatpush1.bf16.msra.mxu0 0
        %3259 = vmatprep.subr.bf16.mxu0 0
        %3260 = vmatpush1.bf16.msra.mxu0 0
        %3261 = vmatprep.mubr.bf16.mxu0 0
        %3262 = vmatmul.mubr.bf16.gmra.mrb[0].mxu0 %v3227
        %v3263 = vpop.f32.mrb[0].mxu0
        %v3264 = vadd.f32 0.0, %v3263
        %v3265 = vpop.f32.mrb[0].mxu0
        %v3266 = vpop.f32.mrb[0].mxu0
        %v3267 = vadd.f32 0.0, %v3266
        %v3268 = vpop.f32.mrb[0].mxu0
        %3269 = vdwg.mxu0
        %v3270 = vadd.f32 %v3184, %v3264
        %v3271 = vadd.f32 %v3185, %v3267
        %v3272 = vld [vmem:[%s5] sm:$0xff]
        %vm3273 = vcmask 121856
        %v3275 = vsel %vm3273, %v3272, 0
        %vm3277 = vcmask 1046528
        %v3279 = vsel %vm3277, %v3271, 0
        %3281 = vmatprep.subr.mxu0 0.0
        %3282 = vmatpush1.msra.mxu0 %v3270
        %3283 = vmatprep.subr.mxu0 0.0
        %3284 = vmatpush1.msra.mxu0 %v3279
        %3285 = vmatprep.subr.mxu0 0.0
        %3286 = vmatpush1.msra.mxu0 0.0
        %3287 = vmatprep.subr.mxu0 0.0
        %3288 = vmatpush1.msra.mxu0 0.0
        %3289 = vmatprep.subr.mxu0 0.0
        %3290 = vmatpush1.msra.mxu0 0.0
        %3291 = vmatprep.subr.mxu0 0.0
        %3292 = vmatpush1.msra.mxu0 0.0
        %3293 = vmatprep.subr.mxu0 0.0
        %3294 = vmatpush1.msra.mxu0 0.0
        %3295 = vmatprep.subr.mxu0 0.0
        %3296 = vmatpush1.msra.mxu0 0.0
        %3297 = vmatprep.subr.mxu0 0.0
        %3298 = vmatpush1.msra.mxu0 0.0
        %3299 = vmatprep.subr.mxu0 0.0
        %3300 = vmatpush1.msra.mxu0 0.0
        %3301 = vmatprep.subr.mxu0 0.0
        %3302 = vmatpush1.msra.mxu0 0.0
        %3303 = vmatprep.subr.mxu0 0.0
        %3304 = vmatpush1.msra.mxu0 0.0
        %3305 = vmatprep.subr.mxu0 0.0
        %3306 = vmatpush1.msra.mxu0 0.0
        %3307 = vmatprep.subr.mxu0 0.0
        %3308 = vmatpush1.msra.mxu0 0.0
        %3309 = vmatprep.subr.mxu0 0.0
        %3310 = vmatpush1.msra.mxu0 0.0
        %3311 = vmatprep.subr.mxu0 0.0
        %3312 = vmatpush1.msra.mxu0 0.0
        %3313 = vmatprep.subr.mxu0 0.0
        %3314 = vmatpush1.msra.mxu0 0.0
        %3315 = vmatprep.subr.mxu0 0.0
        %3316 = vmatpush1.msra.mxu0 0.0
        %3317 = vmatprep.subr.mxu0 0.0
        %3318 = vmatpush1.msra.mxu0 0.0
        %3319 = vmatprep.subr.mxu0 0.0
        %3320 = vmatpush1.msra.mxu0 0.0
        %3321 = vmatprep.subr.mxu0 0.0
        %3322 = vmatpush1.msra.mxu0 0.0
        %3323 = vmatprep.subr.mxu0 0.0
        %3324 = vmatpush1.msra.mxu0 0.0
        %3325 = vmatprep.subr.mxu0 0.0
        %3326 = vmatpush1.msra.mxu0 0.0
        %3327 = vmatprep.subr.mxu0 0.0
        %3328 = vmatpush1.msra.mxu0 0.0
        %3329 = vmatprep.subr.mxu0 0.0
        %3330 = vmatpush1.msra.mxu0 0.0
        %3331 = vmatprep.subr.mxu0 0.0
        %3332 = vmatpush1.msra.mxu0 0.0
        %3333 = vmatprep.subr.mxu0 0.0
        %3334 = vmatpush1.msra.mxu0 0.0
        %3335 = vmatprep.subr.mxu0 0.0
        %3336 = vmatpush1.msra.mxu0 0.0
        %3337 = vmatprep.subr.mxu0 0.0
        %3338 = vmatpush1.msra.mxu0 0.0
        %3339 = vmatprep.subr.mxu0 0.0
        %3340 = vmatpush1.msra.mxu0 0.0
        %3341 = vmatprep.subr.mxu0 0.0
        %3342 = vmatpush1.msra.mxu0 0.0
        %3343 = vmatprep.subr.mxu0 0.0
        %3344 = vmatpush1.msra.mxu0 0.0
        %3345 = vmatprep.mubr.f32.mxu0 0.0
        %3346 = vmatmul.mubr.f32.gmra.mrb[0].mxu0 %v3275
        %v3347 = vpop.f32.mrb[0].mxu0
        %v3348 = vadd.f32 0.0, %v3347
        %v3349 = vpop.f32.mrb[0].mxu0
        %3350 = vdwg.mxu0
        %v3351 = vld [vmem:[%s4] sm:$0x1]
        %v3352 = vlaneseq
        %v3353 = vshrl.u32 %v3352, 7
        %v3354 = vsub.s32 0, %v3353
        %v3355 = vrot.slane %v3351, %v3354
        %v3356 = vmul.f32 %v3348, %v3355
        %v3357 = vld [vmem:[%s4 + $0x1] sm:$0x1]
        %v3358 = vlaneseq
        %v3359 = vshrl.u32 %v3358, 7
        %v3360 = vsub.s32 0, %v3359
        %v3361 = vrot.slane %v3357, %v3360
        %v3362 = vadd.f32 %v3356, %v3361
        %v3363 = vmax.f32 %v3362, 0.0
        %v3364 = vlaneseq
        %v3365 = vshrl.u32 %v3364, 7
        %v3366 = vld [vmem:[#allocation9] sm:$0xff]
        %v3367 = vld [vmem:[#allocation9 + $0x8] sm:$0xff]
        %v3369 = vrot.slane %v3366, 1
        %v3371 = vrot.slane %v3366, 2
        %v3373 = vpack.c.bf16 %v3363, %v3363
        %v3374 = vld [vmem:[#allocation4] sm:$0xff]
        %v3375 = vld [vmem:[#allocation4 + $0x8] sm:$0xf]
        %v3376 = vld [vmem:[#allocation4 + $0xc] sm:$0xff]
        %v3377 = vld [vmem:[#allocation4 + $0x14] sm:$0xf]
        %v3378 = vld [vmem:[#allocation4 + $0x18] sm:$0xff]
        %v3379 = vld [vmem:[#allocation4 + $0x20] sm:$0xf]
        %v3380 = vld [vmem:[#allocation4 + $0x24] sm:$0xff]
        %v3381 = vld [vmem:[#allocation4 + $0x2c] sm:$0xf]
        %v3382 = vld [vmem:[#allocation4 + $0x30] sm:$0xff]
        %v3383 = vld [vmem:[#allocation4 + $0x38] sm:$0xf]
        %v3384 = vld [vmem:[#allocation4 + $0x3c] sm:$0xff]
        %v3385 = vld [vmem:[#allocation4 + $0x44] sm:$0xf]
        %v3386 = vld [vmem:[#allocation4 + $0x48] sm:$0xff]
        %v3387 = vld [vmem:[#allocation4 + $0x50] sm:$0xf]
        %v3388 = vld [vmem:[#allocation4 + $0x54] sm:$0xff]
        %v3389 = vld [vmem:[#allocation4 + $0x5c] sm:$0xf]
        %v3390 = vld [vmem:[#allocation4 + $0x60] sm:$0xff]
        %v3391 = vld [vmem:[#allocation4 + $0x68] sm:$0xf]
        %v3392 = vld [vmem:[#allocation4 + $0x6c] sm:$0xff]
        %v3393 = vld [vmem:[#allocation4 + $0x74] sm:$0xf]
        %v3394 = vld [vmem:[#allocation4 + $0x78] sm:$0xff]
        %v3395 = vld [vmem:[#allocation4 + $0x80] sm:$0xf]
        %v3396 = vld [vmem:[#allocation4 + $0x84] sm:$0xff]
        %v3397 = vld [vmem:[#allocation4 + $0x8c] sm:$0xf]
        %v3398 = vld [vmem:[#allocation4 + $0x90] sm:$0xff]
        %v3399 = vld [vmem:[#allocation4 + $0x98] sm:$0xf]
        %v3400 = vld [vmem:[#allocation4 + $0x9c] sm:$0xff]
        %v3401 = vld [vmem:[#allocation4 + $0xa4] sm:$0xf]
        %v3402 = vld [vmem:[#allocation4 + $0xa8] sm:$0xff]
        %v3403 = vld [vmem:[#allocation4 + $0xb0] sm:$0xf]
        %v3404 = vld [vmem:[#allocation4 + $0xb4] sm:$0xff]
        %v3405 = vld [vmem:[#allocation4 + $0xbc] sm:$0xf]
        %v3406 = vlaneseq
        %v3407 = vshrl.u32 %v3406, 7
        %v3408 = vsub.s32 0, %v3407
        %v3409 = vrot.slane %v3366, %v3408
        %v3410 = vlaneseq
        %v3411 = vshrl.u32 %v3410, 7
        %v3412 = vsub.s32 0, %v3411
        %v3413 = vrot.slane %v3369, %v3412
        %v3414 = vlaneseq
        %v3415 = vshrl.u32 %v3414, 7
        %v3416 = vsub.s32 0, %v3415
        %v3417 = vrot.slane %v3371, %v3416
        %v3450 = vunpack.c.l.b16 %v3374
        %v3451 = vunpack.c.h.b16 %v3374
        %v3452 = vunpack.c.l.b16 %v3375
        %v3453 = vunpack.c.l.b16 %v3376
        %v3454 = vunpack.c.h.b16 %v3376
        %v3455 = vunpack.c.l.b16 %v3377
        %v3456 = vunpack.c.l.b16 %v3378
        %v3457 = vunpack.c.h.b16 %v3378
        %v3458 = vunpack.c.l.b16 %v3379
        %v3459 = vunpack.c.l.b16 %v3380
        %v3460 = vunpack.c.h.b16 %v3380
        %v3461 = vunpack.c.l.b16 %v3381
        %v3462 = vunpack.c.l.b16 %v3382
        %v3463 = vunpack.c.h.b16 %v3382
        %v3464 = vunpack.c.l.b16 %v3383
        %v3465 = vunpack.c.l.b16 %v3384
        %v3466 = vunpack.c.h.b16 %v3384
        %v3467 = vunpack.c.l.b16 %v3385
        %v3468 = vunpack.c.l.b16 %v3386
        %v3469 = vunpack.c.h.b16 %v3386
        %v3470 = vunpack.c.l.b16 %v3387
        %v3471 = vunpack.c.l.b16 %v3388
        %v3472 = vunpack.c.h.b16 %v3388
        %v3473 = vunpack.c.l.b16 %v3389
        %v3474 = vunpack.c.l.b16 %v3390
        %v3475 = vunpack.c.h.b16 %v3390
        %v3476 = vunpack.c.l.b16 %v3391
        %v3477 = vunpack.c.l.b16 %v3392
        %v3478 = vunpack.c.h.b16 %v3392
        %v3479 = vunpack.c.l.b16 %v3393
        %v3480 = vunpack.c.l.b16 %v3394
        %v3481 = vunpack.c.h.b16 %v3394
        %v3482 = vunpack.c.l.b16 %v3395
        %v3483 = vunpack.c.l.b16 %v3396
        %v3484 = vunpack.c.h.b16 %v3396
        %v3485 = vunpack.c.l.b16 %v3397
        %v3486 = vunpack.c.l.b16 %v3398
        %v3487 = vunpack.c.h.b16 %v3398
        %v3488 = vunpack.c.l.b16 %v3399
        %v3489 = vunpack.c.l.b16 %v3400
        %v3490 = vunpack.c.h.b16 %v3400
        %v3491 = vunpack.c.l.b16 %v3401
        %v3492 = vunpack.c.l.b16 %v3402
        %v3493 = vunpack.c.h.b16 %v3402
        %v3494 = vunpack.c.l.b16 %v3403
        %v3495 = vunpack.c.l.b16 %v3404
        %v3496 = vunpack.c.h.b16 %v3404
        %v3497 = vunpack.c.l.b16 %v3405
        %v3498 = vpack.c.b16 %v3453, %v3450
        %v3499 = vpack.c.b16 %v3454, %v3451
        %v3500 = vpack.c.b16 %v3455, %v3452
        %v3501 = vpack.c.b16 %v3459, %v3456
        %v3502 = vpack.c.b16 %v3460, %v3457
        %v3503 = vpack.c.b16 %v3461, %v3458
        %v3504 = vpack.c.b16 %v3465, %v3462
        %v3505 = vpack.c.b16 %v3466, %v3463
        %v3506 = vpack.c.b16 %v3467, %v3464
        %v3507 = vpack.c.b16 %v3471, %v3468
        %v3508 = vpack.c.b16 %v3472, %v3469
        %v3509 = vpack.c.b16 %v3473, %v3470
        %v3510 = vpack.c.b16 %v3477, %v3474
        %v3511 = vpack.c.b16 %v3478, %v3475
        %v3512 = vpack.c.b16 %v3479, %v3476
        %v3513 = vpack.c.b16 %v3483, %v3480
        %v3514 = vpack.c.b16 %v3484, %v3481
        %v3515 = vpack.c.b16 %v3485, %v3482
        %v3516 = vpack.c.b16 %v3489, %v3486
        %v3517 = vpack.c.b16 %v3490, %v3487
        %v3518 = vpack.c.b16 %v3491, %v3488
        %v3519 = vpack.c.b16 %v3495, %v3492
        %v3520 = vpack.c.b16 %v3496, %v3493
        %v3521 = vpack.c.b16 %v3497, %v3494
        %3546 = vmatprep.subr.bf16.mxu0 %v3499
        %3547 = vmatpush1.bf16.msra.mxu0 %v3498
        %3548 = vmatprep.subr.bf16.mxu0 %v3502
        %3549 = vmatpush1.bf16.msra.mxu0 %v3501
        %3550 = vmatprep.subr.bf16.mxu0 %v3505
        %3551 = vmatpush1.bf16.msra.mxu0 %v3504
        %3552 = vmatprep.subr.bf16.mxu0 %v3508
        %3553 = vmatpush1.bf16.msra.mxu0 %v3507
        %3554 = vmatprep.subr.bf16.mxu0 %v3511
        %3555 = vmatpush1.bf16.msra.mxu0 %v3510
        %3556 = vmatprep.subr.bf16.mxu0 %v3514
        %3557 = vmatpush1.bf16.msra.mxu0 %v3513
        %3558 = vmatprep.subr.bf16.mxu0 %v3517
        %3559 = vmatpush1.bf16.msra.mxu0 %v3516
        %3560 = vmatprep.subr.bf16.mxu0 %v3520
        %3561 = vmatpush1.bf16.msra.mxu0 %v3519
        %3562 = vmatprep.subr.bf16.mxu0 0
        %3563 = vmatpush1.bf16.msra.mxu0 0
        %3564 = vmatprep.subr.bf16.mxu0 0
        %3565 = vmatpush1.bf16.msra.mxu0 0
        %3566 = vmatprep.subr.bf16.mxu0 0
        %3567 = vmatpush1.bf16.msra.mxu0 0
        %3568 = vmatprep.subr.bf16.mxu0 0
        %3569 = vmatpush1.bf16.msra.mxu0 0
        %3570 = vmatprep.subr.bf16.mxu0 0
        %3571 = vmatpush1.bf16.msra.mxu0 0
        %3572 = vmatprep.subr.bf16.mxu0 0
        %3573 = vmatpush1.bf16.msra.mxu0 0
        %3574 = vmatprep.subr.bf16.mxu0 0
        %3575 = vmatpush1.bf16.msra.mxu0 0
        %3576 = vmatprep.subr.bf16.mxu0 0
        %3577 = vmatpush1.bf16.msra.mxu0 0
        %3578 = vmatprep.mubr.bf16.mxu0 0
        %3579 = vmatmul.mubr.bf16.gmra.mrb[0].mxu0 %v3373
        %v3580 = vpop.f32.mrb[0].mxu0
        %v3581 = vadd.f32 %v3409, %v3580
        %v3582 = vpop.f32.mrb[0].mxu0
        %v3583 = vadd.f32 %v3413, %v3582
        %v3584 = vpop.f32.mrb[0].mxu0
        %v3585 = vpop.f32.mrb[0].mxu0
        %3586 = vdwg.mxu0
        %3587 = vmatprep.subr.bf16.mxu0 0
        %3588 = vmatpush1.bf16.msra.mxu0 %v3500
        %3589 = vmatprep.subr.bf16.mxu0 0
        %3590 = vmatpush1.bf16.msra.mxu0 %v3503
        %3591 = vmatprep.subr.bf16.mxu0 0
        %3592 = vmatpush1.bf16.msra.mxu0 %v3506
        %3593 = vmatprep.subr.bf16.mxu0 0
        %3594 = vmatpush1.bf16.msra.mxu0 %v3509
        %3595 = vmatprep.subr.bf16.mxu0 0
        %3596 = vmatpush1.bf16.msra.mxu0 %v3512
        %3597 = vmatprep.subr.bf16.mxu0 0
        %3598 = vmatpush1.bf16.msra.mxu0 %v3515
        %3599 = vmatprep.subr.bf16.mxu0 0
        %3600 = vmatpush1.bf16.msra.mxu0 %v3518
        %3601 = vmatprep.subr.bf16.mxu0 0
        %3602 = vmatpush1.bf16.msra.mxu0 %v3521
        %3603 = vmatprep.subr.bf16.mxu0 0
        %3604 = vmatpush1.bf16.msra.mxu0 0
        %3605 = vmatprep.subr.bf16.mxu0 0
        %3606 = vmatpush1.bf16.msra.mxu0 0
        %3607 = vmatprep.subr.bf16.mxu0 0
        %3608 = vmatpush1.bf16.msra.mxu0 0
        %3609 = vmatprep.subr.bf16.mxu0 0
        %3610 = vmatpush1.bf16.msra.mxu0 0
        %3611 = vmatprep.subr.bf16.mxu0 0
        %3612 = vmatpush1.bf16.msra.mxu0 0
        %3613 = vmatprep.subr.bf16.mxu0 0
        %3614 = vmatpush1.bf16.msra.mxu0 0
        %3615 = vmatprep.subr.bf16.mxu0 0
        %3616 = vmatpush1.bf16.msra.mxu0 0
        %3617 = vmatprep.subr.bf16.mxu0 0
        %3618 = vmatpush1.bf16.msra.mxu0 0
        %3619 = vmatprep.mubr.bf16.mxu0 0
        %3620 = vmatmul.mubr.bf16.gmra.mrb[0].mxu0 %v3373
        %v3621 = vpop.f32.mrb[0].mxu0
        %v3622 = vadd.f32 %v3417, %v3621
        %v3623 = vpop.f32.mrb[0].mxu0
        %v3624 = vpop.f32.mrb[0].mxu0
        %v3625 = vpop.f32.mrb[0].mxu0
        %3626 = vdwg.mxu0
        %v3627 = vmul.f32 %v3581, %v3581
        %v3628 = vmul.f32 %v3583, %v3583
        %v3629 = vmul.f32 %v3622, %v3622
        %v3630 = vmul.f32 %v3581, %v3627
        %v3631 = vmul.f32 %v3583, %v3628
        %v3632 = vmul.f32 %v3622, %v3629
        %v3633 = vmul.f32 %v3630, 0.044715
        %v3634 = vmul.f32 %v3631, 0.044715
        %v3635 = vmul.f32 %v3632, 0.044715
        %v3636 = vadd.f32 %v3581, %v3633
        %v3637 = vadd.f32 %v3583, %v3634
        %v3638 = vadd.f32 %v3622, %v3635
        %v3639 = vmul.f32 %v3636, 0.7978846
        %v3640 = vmul.f32 %v3637, 0.7978846
        %v3641 = vmul.f32 %v3638, 0.7978846
        %v3642 = vtanh.pop %v3639
        %v3643 = vtanh.pop %v3640
        %v3644 = vtanh.pop %v3641
        %v3645 = vadd.f32 %v3642, 1.0
        %v3646 = vadd.f32 %v3643, 1.0
        %v3647 = vadd.f32 %v3644, 1.0
        %v3648 = vmul.f32 %v3645, 0.5
        %v3649 = vmul.f32 %v3646, 0.5
        %v3650 = vmul.f32 %v3647, 0.5
        %v3651 = vmul.f32 %v3581, %v3648
        %v3652 = vmul.f32 %v3583, %v3649
        %v3653 = vmul.f32 %v3622, %v3650
        %vm3654 = vcmp.ge.s32.totalorder %v3365, 1
        %v3655 = vrot.slane %v3652, 7
        %v3656 = vsel %vm3654, %v3655, 0.0
        %v3657 = vlaneseq
        %v3658 = vshrl.u32 %v3657, 7
        %v3659 = vsub.s32 3, %v3658
        %v3660 = vrot.slane %v3366, %v3659
        %v3661 = vmul.f32 %v3660, %v3656
        %v3662 = vadd.f32 %v3652, %v3661
        %v3663 = vmul.f32 %v3366, %v3366
        %vm3664 = vcmp.ge.s32.totalorder %v3365, 2
        %v3665 = vrot.slane %v3662, 6
        %v3666 = vsel %vm3664, %v3665, 0.0
        %v3667 = vlaneseq
        %v3668 = vshrl.u32 %v3667, 7
        %v3669 = vsub.s32 3, %v3668
        %v3670 = vrot.slane %v3663, %v3669
        %v3671 = vmul.f32 %v3670, %v3666
        %v3672 = vadd.f32 %v3662, %v3671
        %v3673 = vmul.f32 %v3663, %v3663
        %vm3674 = vcmp.ge.s32.totalorder %v3365, 4
        %v3675 = vrot.slane %v3672, 4
        %v3676 = vsel %vm3674, %v3675, 0.0
        %v3677 = vlaneseq
        %v3678 = vshrl.u32 %v3677, 7
        %v3679 = vsub.s32 3, %v3678
        %v3680 = vrot.slane %v3673, %v3679
        %v3681 = vmul.f32 %v3680, %v3676
        %v3682 = vadd.f32 %v3672, %v3681
        %v3683 = vlaneseq
        %v3684 = vshrl.u32 %v3683, 7
        %v3685 = vsub.s32 4, %v3684
        %v3686 = vrot.slane %v3366, %v3685
        %v3687 = vmul.f32 %v3686, %v3682
        %v3688 = vlaneseq
        %v3689 = vshrl.u32 %v3688, 7
        %v3690 = vsub.s32 5, %v3689
        %v3691 = vrot.slane %v3366, %v3690
        %v3692 = vmul.f32 %v3691, %v3652
        %v3693 = vadd.f32 %v3687, %v3692
        %vm3694 = vcmp.lt.s32.totalorder %v3365, 7
        %v3695 = vrot.slane %v3653, 1
        %v3696 = vsel %vm3694, %v3695, 0.0
        %v3697 = vlaneseq
        %v3698 = vshrl.u32 %v3697, 7
        %v3699 = vsub.s32 6, %v3698
        %v3700 = vrot.slane %v3366, %v3699
        %v3701 = vmul.f32 %v3700, %v3696
        %v3702 = vadd.f32 %v3653, %v3701
        %vm3703 = vcmp.lt.s32.totalorder %v3365, 6
        %v3704 = vrot.slane %v3702, 2
        %v3705 = vsel %vm3703, %v3704, 0.0
        %v3706 = vlaneseq
        %v3707 = vshrl.u32 %v3706, 7
        %v3708 = vsub.s32 6, %v3707
        %v3709 = vrot.slane %v3663, %v3708
        %v3710 = vmul.f32 %v3709, %v3705
        %v3711 = vadd.f32 %v3702, %v3710
        %vm3712 = vcmp.lt.s32.totalorder %v3365, 4
        %v3713 = vrot.slane %v3711, 4
        %v3714 = vsel %vm3712, %v3713, 0.0
        %v3715 = vlaneseq
        %v3716 = vshrl.u32 %v3715, 7
        %v3717 = vsub.s32 6, %v3716
        %v3718 = vrot.slane %v3673, %v3717
        %v3719 = vmul.f32 %v3718, %v3714
        %v3720 = vadd.f32 %v3711, %v3719
        %v3721 = vlaneseq
        %v3722 = vshrl.u32 %v3721, 7
        %v3723 = vsub.s32 7, %v3722
        %v3724 = vrot.slane %v3366, %v3723
        %v3725 = vmul.f32 %v3724, %v3720
        %v3726 = vlaneseq
        %v3727 = vshrl.u32 %v3726, 7
        %v3728 = vsub.s32 0, %v3727
        %v3729 = vrot.slane %v3367, %v3728
        %v3730 = vmul.f32 %v3729, %v3653
        %v3731 = vadd.f32 %v3725, %v3730
        %v3732 = vpack.c.bf16 %v3693, %v3693
        %v3733 = vpack.c.bf16 %v3731, %v3731
        %v3734 = vld [vmem:[#allocation6] sm:$0xf]
        %v3735 = vld [vmem:[#allocation6 + $0x4] sm:$0xf]
        %v3736 = vld [vmem:[#allocation6 + $0x8] sm:$0xf]
        %v3737 = vld [vmem:[#allocation6 + $0xc] sm:$0xf]
        %v3738 = vld [vmem:[#allocation6 + $0x10] sm:$0xf]
        %v3739 = vld [vmem:[#allocation6 + $0x14] sm:$0xf]
        %v3740 = vld [vmem:[#allocation6 + $0x18] sm:$0xf]
        %v3741 = vld [vmem:[#allocation6 + $0x1c] sm:$0xf]
        %v3742 = vld [vmem:[#allocation6 + $0x20] sm:$0xf]
        %v3743 = vld [vmem:[#allocation6 + $0x24] sm:$0xf]
        %v3744 = vld [vmem:[#allocation6 + $0x28] sm:$0xf]
        %v3745 = vld [vmem:[#allocation6 + $0x2c] sm:$0xf]
        %v3746 = vld [vmem:[#allocation6 + $0x30] sm:$0xf]
        %v3747 = vld [vmem:[#allocation6 + $0x34] sm:$0xf]
        %v3748 = vld [vmem:[#allocation6 + $0x38] sm:$0xf]
        %v3749 = vld [vmem:[#allocation6 + $0x3c] sm:$0xf]
        %v3750 = vld [vmem:[#allocation6 + $0x40] sm:$0xf]
        %v3751 = vld [vmem:[#allocation6 + $0x44] sm:$0xf]
        %v3752 = vld [vmem:[#allocation6 + $0x48] sm:$0xf]
        %v3753 = vld [vmem:[#allocation6 + $0x4c] sm:$0xf]
        %v3754 = vld [vmem:[#allocation6 + $0x50] sm:$0xf]
        %v3755 = vld [vmem:[#allocation6 + $0x54] sm:$0xf]
        %v3756 = vld [vmem:[#allocation6 + $0x58] sm:$0xf]
        %v3757 = vld [vmem:[#allocation6 + $0x5c] sm:$0xf]
        %v3758 = vld [vmem:[#allocation6 + $0x60] sm:$0xf]
        %v3759 = vld [vmem:[#allocation6 + $0x64] sm:$0xf]
        %v3760 = vld [vmem:[#allocation6 + $0x68] sm:$0xf]
        %v3761 = vld [vmem:[#allocation6 + $0x6c] sm:$0xf]
        %v3762 = vld [vmem:[#allocation6 + $0x70] sm:$0xf]
        %v3763 = vld [vmem:[#allocation6 + $0x74] sm:$0xf]
        %v3764 = vld [vmem:[#allocation6 + $0x78] sm:$0xf]
        %v3765 = vld [vmem:[#allocation6 + $0x7c] sm:$0xf]
        %v3766 = vlaneseq
        %v3767 = vshrl.u32 %v3766, 7
        %v3768 = vsub.s32 1, %v3767
        %v3769 = vrot.slane %v3367, %v3768
        %v3802 = vunpack.c.l.b16 %v3734
        %v3803 = vunpack.c.l.b16 %v3735
        %v3804 = vunpack.c.l.b16 %v3736
        %v3805 = vunpack.c.l.b16 %v3737
        %v3806 = vunpack.c.l.b16 %v3738
        %v3807 = vunpack.c.l.b16 %v3739
        %v3808 = vunpack.c.l.b16 %v3740
        %v3809 = vunpack.c.l.b16 %v3741
        %v3810 = vunpack.c.l.b16 %v3742
        %v3811 = vunpack.c.l.b16 %v3743
        %v3812 = vunpack.c.l.b16 %v3744
        %v3813 = vunpack.c.l.b16 %v3745
        %v3814 = vunpack.c.l.b16 %v3746
        %v3815 = vunpack.c.l.b16 %v3747
        %v3816 = vunpack.c.l.b16 %v3748
        %v3817 = vunpack.c.l.b16 %v3749
        %v3818 = vunpack.c.l.b16 %v3750
        %v3819 = vunpack.c.l.b16 %v3751
        %v3820 = vunpack.c.l.b16 %v3752
        %v3821 = vunpack.c.l.b16 %v3753
        %v3822 = vunpack.c.l.b16 %v3754
        %v3823 = vunpack.c.l.b16 %v3755
        %v3824 = vunpack.c.l.b16 %v3756
        %v3825 = vunpack.c.l.b16 %v3757
        %v3826 = vunpack.c.l.b16 %v3758
        %v3827 = vunpack.c.l.b16 %v3759
        %v3828 = vunpack.c.l.b16 %v3760
        %v3829 = vunpack.c.l.b16 %v3761
        %v3830 = vunpack.c.l.b16 %v3762
        %v3831 = vunpack.c.l.b16 %v3763
        %v3832 = vunpack.c.l.b16 %v3764
        %v3833 = vunpack.c.l.b16 %v3765
        %v3834 = vpack.c.b16 %v3803, %v3802
        %v3835 = vpack.c.b16 %v3805, %v3804
        %v3836 = vpack.c.b16 %v3807, %v3806
        %v3837 = vpack.c.b16 %v3809, %v3808
        %v3838 = vpack.c.b16 %v3811, %v3810
        %v3839 = vpack.c.b16 %v3813, %v3812
        %v3840 = vpack.c.b16 %v3815, %v3814
        %v3841 = vpack.c.b16 %v3817, %v3816
        %v3842 = vpack.c.b16 %v3819, %v3818
        %v3843 = vpack.c.b16 %v3821, %v3820
        %v3844 = vpack.c.b16 %v3823, %v3822
        %v3845 = vpack.c.b16 %v3825, %v3824
        %v3846 = vpack.c.b16 %v3827, %v3826
        %v3847 = vpack.c.b16 %v3829, %v3828
        %v3848 = vpack.c.b16 %v3831, %v3830
        %v3849 = vpack.c.b16 %v3833, %v3832
        %3866 = vmatprep.subr.bf16.mxu0 0
        %3867 = vmatpush1.bf16.msra.mxu0 %v3834
        %3868 = vmatprep.subr.bf16.mxu0 0
        %3869 = vmatpush1.bf16.msra.mxu0 %v3835
        %3870 = vmatprep.subr.bf16.mxu0 0
        %3871 = vmatpush1.bf16.msra.mxu0 %v3836
        %3872 = vmatprep.subr.bf16.mxu0 0
        %3873 = vmatpush1.bf16.msra.mxu0 %v3837
        %3874 = vmatprep.subr.bf16.mxu0 0
        %3875 = vmatpush1.bf16.msra.mxu0 %v3838
        %3876 = vmatprep.subr.bf16.mxu0 0
        %3877 = vmatpush1.bf16.msra.mxu0 %v3839
        %3878 = vmatprep.subr.bf16.mxu0 0
        %3879 = vmatpush1.bf16.msra.mxu0 %v3840
        %3880 = vmatprep.subr.bf16.mxu0 0
        %3881 = vmatpush1.bf16.msra.mxu0 %v3841
        %3882 = vmatprep.subr.bf16.mxu0 0
        %3883 = vmatpush1.bf16.msra.mxu0 %v3842
        %3884 = vmatprep.subr.bf16.mxu0 0
        %3885 = vmatpush1.bf16.msra.mxu0 %v3843
        %3886 = vmatprep.subr.bf16.mxu0 0
        %3887 = vmatpush1.bf16.msra.mxu0 %v3844
        %3888 = vmatprep.subr.bf16.mxu0 0
        %3889 = vmatpush1.bf16.msra.mxu0 %v3845
        %3890 = vmatprep.subr.bf16.mxu0 0
        %3891 = vmatpush1.bf16.msra.mxu0 %v3846
        %3892 = vmatprep.subr.bf16.mxu0 0
        %3893 = vmatpush1.bf16.msra.mxu0 %v3847
        %3894 = vmatprep.subr.bf16.mxu0 0
        %3895 = vmatpush1.bf16.msra.mxu0 %v3848
        %3896 = vmatprep.subr.bf16.mxu0 0
        %3897 = vmatpush1.bf16.msra.mxu0 %v3849
        %3898 = vmatprep.mubr.bf16.mxu0 %v3733
        %3899 = vmatmul.mubr.bf16.gmra.mrb[0].mxu0 %v3732
        %v3900 = vpop.f32.mrb[0].mxu0
        %v3901 = vadd.f32 %v3769, %v3900
        %v3902 = vpop.f32.mrb[0].mxu0
        %v3903 = vpop.f32.mrb[0].mxu0
        %v3904 = vpop.f32.mrb[0].mxu0
        %3905 = vdwg.mxu0
        %v3906 = vmul.f32 %v3651, %v3901
        %v3907 = vpack.c.bf16 %v3906, %v3906
        %v3908 = vld [vmem:[#allocation7] sm:$0xf]
        %v3909 = vld [vmem:[#allocation7 + $0x4] sm:$0xf]
        %v3910 = vld [vmem:[#allocation7 + $0x8] sm:$0xf]
        %v3911 = vld [vmem:[#allocation7 + $0xc] sm:$0xf]
        %v3912 = vld [vmem:[#allocation7 + $0x10] sm:$0xf]
        %v3913 = vld [vmem:[#allocation7 + $0x14] sm:$0xf]
        %v3914 = vld [vmem:[#allocation7 + $0x18] sm:$0xf]
        %v3915 = vld [vmem:[#allocation7 + $0x1c] sm:$0xf]
        %v3916 = vld [vmem:[#allocation7 + $0x20] sm:$0xf]
        %v3917 = vld [vmem:[#allocation7 + $0x24] sm:$0xf]
        %v3918 = vld [vmem:[#allocation7 + $0x28] sm:$0xf]
        %v3919 = vld [vmem:[#allocation7 + $0x2c] sm:$0xf]
        %v3920 = vld [vmem:[#allocation7 + $0x30] sm:$0xf]
        %v3921 = vld [vmem:[#allocation7 + $0x34] sm:$0xf]
        %v3922 = vld [vmem:[#allocation7 + $0x38] sm:$0xf]
        %v3923 = vld [vmem:[#allocation7 + $0x3c] sm:$0xf]
        %v3924 = vlaneseq
        %v3925 = vshrl.u32 %v3924, 7
        %v3926 = vsub.s32 2, %v3925
        %v3927 = vrot.slane %v3367, %v3926
        %v3944 = vunpack.c.l.b16 %v3908
        %v3945 = vunpack.c.l.b16 %v3909
        %v3946 = vunpack.c.l.b16 %v3910
        %v3947 = vunpack.c.l.b16 %v3911
        %v3948 = vunpack.c.l.b16 %v3912
        %v3949 = vunpack.c.l.b16 %v3913
        %v3950 = vunpack.c.l.b16 %v3914
        %v3951 = vunpack.c.l.b16 %v3915
        %v3952 = vunpack.c.l.b16 %v3916
        %v3953 = vunpack.c.l.b16 %v3917
        %v3954 = vunpack.c.l.b16 %v3918
        %v3955 = vunpack.c.l.b16 %v3919
        %v3956 = vunpack.c.l.b16 %v3920
        %v3957 = vunpack.c.l.b16 %v3921
        %v3958 = vunpack.c.l.b16 %v3922
        %v3959 = vunpack.c.l.b16 %v3923
        %v3960 = vpack.c.b16 %v3945, %v3944
        %v3961 = vpack.c.b16 %v3947, %v3946
        %v3962 = vpack.c.b16 %v3949, %v3948
        %v3963 = vpack.c.b16 %v3951, %v3950
        %v3964 = vpack.c.b16 %v3953, %v3952
        %v3965 = vpack.c.b16 %v3955, %v3954
        %v3966 = vpack.c.b16 %v3957, %v3956
        %v3967 = vpack.c.b16 %v3959, %v3958
        %3976 = vmatprep.subr.bf16.mxu0 0
        %3977 = vmatpush1.bf16.msra.mxu0 %v3960
        %3978 = vmatprep.subr.bf16.mxu0 0
        %3979 = vmatpush1.bf16.msra.mxu0 %v3961
        %3980 = vmatprep.subr.bf16.mxu0 0
        %3981 = vmatpush1.bf16.msra.mxu0 %v3962
        %3982 = vmatprep.subr.bf16.mxu0 0
        %3983 = vmatpush1.bf16.msra.mxu0 %v3963
        %3984 = vmatprep.subr.bf16.mxu0 0
        %3985 = vmatpush1.bf16.msra.mxu0 %v3964
        %3986 = vmatprep.subr.bf16.mxu0 0
        %3987 = vmatpush1.bf16.msra.mxu0 %v3965
        %3988 = vmatprep.subr.bf16.mxu0 0
        %3989 = vmatpush1.bf16.msra.mxu0 %v3966
        %3990 = vmatprep.subr.bf16.mxu0 0
        %3991 = vmatpush1.bf16.msra.mxu0 %v3967
        %3992 = vmatprep.subr.bf16.mxu0 0
        %3993 = vmatpush1.bf16.msra.mxu0 0
        %3994 = vmatprep.subr.bf16.mxu0 0
        %3995 = vmatpush1.bf16.msra.mxu0 0
        %3996 = vmatprep.subr.bf16.mxu0 0
        %3997 = vmatpush1.bf16.msra.mxu0 0
        %3998 = vmatprep.subr.bf16.mxu0 0
        %3999 = vmatpush1.bf16.msra.mxu0 0
        %4000 = vmatprep.subr.bf16.mxu0 0
        %4001 = vmatpush1.bf16.msra.mxu0 0
        %4002 = vmatprep.subr.bf16.mxu0 0
        %4003 = vmatpush1.bf16.msra.mxu0 0
        %4004 = vmatprep.subr.bf16.mxu0 0
        %4005 = vmatpush1.bf16.msra.mxu0 0
        %4006 = vmatprep.subr.bf16.mxu0 0
        %4007 = vmatpush1.bf16.msra.mxu0 0
        %4008 = vmatprep.mubr.bf16.mxu0 0
        %4009 = vmatmul.mubr.bf16.gmra.mrb[0].mxu0 %v3907
        %v4010 = vpop.f32.mrb[0].mxu0
        %v4011 = vadd.f32 %v3927, %v4010
        %v4012 = vpop.f32.mrb[0].mxu0
        %v4013 = vpop.f32.mrb[0].mxu0
        %v4014 = vpop.f32.mrb[0].mxu0
        %4015 = vdwg.mxu0
        %v4016 = vadd.f32 %v4011, %v3363
        %4017 = vadd.xlane.f32.xlu0 %v4016
        %v4018 = vpop.xlane.xlu0 %4017
        %v4019 = vrcp.pop 128.0
        %v4020 = vmul.f32 %v4018, %v4019
        %v4021 = vsub.f32 %v4016, %v4020
        %v4022 = vmul.f32 %v4021, %v4021
        %4023 = vadd.xlane.f32.xlu0 %v4022
        %v4024 = vpop.xlane.xlu0 %4023
        %v4025 = vmul.f32 %v4024, %v4019
        %v4026 = vadd.f32 %v4025, 1e-05
        %v4027 = vrsqrt.pop %v4026
        %v4028 = vmul.f32 %v4021, %v4027
        %v4029 = vlaneseq
        %v4030 = vshrl.u32 %v4029, 7
        %v4031 = vsub.s32 3, %v4030
        %v4032 = vrot.slane %v3367, %v4031
        %v4033 = vmul.f32 %v4028, %v4032
        %v4034 = vlaneseq
        %v4035 = vshrl.u32 %v4034, 7
        %v4036 = vsub.s32 4, %v4035
        %v4037 = vrot.slane %v3367, %v4036
        %v4038 = vadd.f32 %v4033, %v4037
        %s4039 = scalar_lea.vmem [#allocation9], 16
        %v4040 = vld [vmem:[%s4039] sm:$0xff]
        %v4041 = vld [vmem:[%s4039 + $0x8] sm:$0xff]
        %v4043 = vrot.slane %v4040, 1
        %v4045 = vrot.slane %v4040, 2
        %v4047 = vpack.c.bf16 %v4038, %v4038
        %s4048 = scalar_lea.vmem [#allocation4], 192
        %v4049 = vld [vmem:[%s4048] sm:$0xff]
        %v4050 = vld [vmem:[%s4048 + $0x8] sm:$0xf]
        %v4051 = vld [vmem:[%s4048 + $0xc] sm:$0xff]
        %v4052 = vld [vmem:[%s4048 + $0x14] sm:$0xf]
        %v4053 = vld [vmem:[%s4048 + $0x18] sm:$0xff]
        %v4054 = vld [vmem:[%s4048 + $0x20] sm:$0xf]
        %v4055 = vld [vmem:[%s4048 + $0x24] sm:$0xff]
        %v4056 = vld [vmem:[%s4048 + $0x2c] sm:$0xf]
        %v4057 = vld [vmem:[%s4048 + $0x30] sm:$0xff]
        %v4058 = vld [vmem:[%s4048 + $0x38] sm:$0xf]
        %v4059 = vld [vmem:[%s4048 + $0x3c] sm:$0xff]
        %v4060 = vld [vmem:[%s4048 + $0x44] sm:$0xf]
        %v4061 = vld [vmem:[%s4048 + $0x48] sm:$0xff]
        %v4062 = vld [vmem:[%s4048 + $0x50] sm:$0xf]
        %v4063 = vld [vmem:[%s4048 + $0x54] sm:$0xff]
        %v4064 = vld [vmem:[%s4048 + $0x5c] sm:$0xf]
        %v4065 = vld [vmem:[%s4048 + $0x60] sm:$0xff]
        %v4066 = vld [vmem:[%s4048 + $0x68] sm:$0xf]
        %v4067 = vld [vmem:[%s4048 + $0x6c] sm:$0xff]
        %v4068 = vld [vmem:[%s4048 + $0x74] sm:$0xf]
        %v4069 = vld [vmem:[%s4048 + $0x78] sm:$0xff]
        %v4070 = vld [vmem:[%s4048 + $0x80] sm:$0xf]
        %v4071 = vld [vmem:[%s4048 + $0x84] sm:$0xff]
        %v4072 = vld [vmem:[%s4048 + $0x8c] sm:$0xf]
        %v4073 = vld [vmem:[%s4048 + $0x90] sm:$0xff]
        %v4074 = vld [vmem:[%s4048 + $0x98] sm:$0xf]
        %v4075 = vld [vmem:[%s4048 + $0x9c] sm:$0xff]
        %v4076 = vld [vmem:[%s4048 + $0xa4] sm:$0xf]
        %v4077 = vld [vmem:[%s4048 + $0xa8] sm:$0xff]
        %v4078 = vld [vmem:[%s4048 + $0xb0] sm:$0xf]
        %v4079 = vld [vmem:[%s4048 + $0xb4] sm:$0xff]
        %v4080 = vld [vmem:[%s4048 + $0xbc] sm:$0xf]
        %v4081 = vlaneseq
        %v4082 = vshrl.u32 %v4081, 7
        %v4083 = vsub.s32 0, %v4082
        %v4084 = vrot.slane %v4040, %v4083
        %v4085 = vlaneseq
        %v4086 = vshrl.u32 %v4085, 7
        %v4087 = vsub.s32 0, %v4086
        %v4088 = vrot.slane %v4043, %v4087
        %v4089 = vlaneseq
        %v4090 = vshrl.u32 %v4089, 7
        %v4091 = vsub.s32 0, %v4090
        %v4092 = vrot.slane %v4045, %v4091
        %v4125 = vunpack.c.l.b16 %v4049
        %v4126 = vunpack.c.h.b16 %v4049
        %v4127 = vunpack.c.l.b16 %v4050
        %v4128 = vunpack.c.l.b16 %v4051
        %v4129 = vunpack.c.h.b16 %v4051
        %v4130 = vunpack.c.l.b16 %v4052
        %v4131 = vunpack.c.l.b16 %v4053
        %v4132 = vunpack.c.h.b16 %v4053
        %v4133 = vunpack.c.l.b16 %v4054
        %v4134 = vunpack.c.l.b16 %v4055
        %v4135 = vunpack.c.h.b16 %v4055
        %v4136 = vunpack.c.l.b16 %v4056
        %v4137 = vunpack.c.l.b16 %v4057
        %v4138 = vunpack.c.h.b16 %v4057
        %v4139 = vunpack.c.l.b16 %v4058
        %v4140 = vunpack.c.l.b16 %v4059
        %v4141 = vunpack.c.h.b16 %v4059
        %v4142 = vunpack.c.l.b16 %v4060
        %v4143 = vunpack.c.l.b16 %v4061
        %v4144 = vunpack.c.h.b16 %v4061
        %v4145 = vunpack.c.l.b16 %v4062
        %v4146 = vunpack.c.l.b16 %v4063
        %v4147 = vunpack.c.h.b16 %v4063
        %v4148 = vunpack.c.l.b16 %v4064
        %v4149 = vunpack.c.l.b16 %v4065
        %v4150 = vunpack.c.h.b16 %v4065
        %v4151 = vunpack.c.l.b16 %v4066
        %v4152 = vunpack.c.l.b16 %v4067
        %v4153 = vunpack.c.h.b16 %v4067
        %v4154 = vunpack.c.l.b16 %v4068
        %v4155 = vunpack.c.l.b16 %v4069
        %v4156 = vunpack.c.h.b16 %v4069
        %v4157 = vunpack.c.l.b16 %v4070
        %v4158 = vunpack.c.l.b16 %v4071
        %v4159 = vunpack.c.h.b16 %v4071
        %v4160 = vunpack.c.l.b16 %v4072
        %v4161 = vunpack.c.l.b16 %v4073
        %v4162 = vunpack.c.h.b16 %v4073
        %v4163 = vunpack.c.l.b16 %v4074
        %v4164 = vunpack.c.l.b16 %v4075
        %v4165 = vunpack.c.h.b16 %v4075
        %v4166 = vunpack.c.l.b16 %v4076
        %v4167 = vunpack.c.l.b16 %v4077
        %v4168 = vunpack.c.h.b16 %v4077
        %v4169 = vunpack.c.l.b16 %v4078
        %v4170 = vunpack.c.l.b16 %v4079
        %v4171 = vunpack.c.h.b16 %v4079
        %v4172 = vunpack.c.l.b16 %v4080
        %v4173 = vpack.c.b16 %v4128, %v4125
        %v4174 = vpack.c.b16 %v4129, %v4126
        %v4175 = vpack.c.b16 %v4130, %v4127
        %v4176 = vpack.c.b16 %v4134, %v4131
        %v4177 = vpack.c.b16 %v4135, %v4132
        %v4178 = vpack.c.b16 %v4136, %v4133
        %v4179 = vpack.c.b16 %v4140, %v4137
        %v4180 = vpack.c.b16 %v4141, %v4138
        %v4181 = vpack.c.b16 %v4142, %v4139
        %v4182 = vpack.c.b16 %v4146, %v4143
        %v4183 = vpack.c.b16 %v4147, %v4144
        %v4184 = vpack.c.b16 %v4148, %v4145
        %v4185 = vpack.c.b16 %v4152, %v4149
        %v4186 = vpack.c.b16 %v4153, %v4150
        %v4187 = vpack.c.b16 %v4154, %v4151
        %v4188 = vpack.c.b16 %v4158, %v4155
        %v4189 = vpack.c.b16 %v4159, %v4156
        %v4190 = vpack.c.b16 %v4160, %v4157
        %v4191 = vpack.c.b16 %v4164, %v4161
        %v4192 = vpack.c.b16 %v4165, %v4162
        %v4193 = vpack.c.b16 %v4166, %v4163
        %v4194 = vpack.c.b16 %v4170, %v4167
        %v4195 = vpack.c.b16 %v4171, %v4168
        %v4196 = vpack.c.b16 %v4172, %v4169
        %4221 = vmatprep.subr.bf16.mxu0 %v4174
        %4222 = vmatpush1.bf16.msra.mxu0 %v4173
        %4223 = vmatprep.subr.bf16.mxu0 %v4177
        %4224 = vmatpush1.bf16.msra.mxu0 %v4176
        %4225 = vmatprep.subr.bf16.mxu0 %v4180
        %4226 = vmatpush1.bf16.msra.mxu0 %v4179
        %4227 = vmatprep.subr.bf16.mxu0 %v4183
        %4228 = vmatpush1.bf16.msra.mxu0 %v4182
        %4229 = vmatprep.subr.bf16.mxu0 %v4186
        %4230 = vmatpush1.bf16.msra.mxu0 %v4185
        %4231 = vmatprep.subr.bf16.mxu0 %v4189
        %4232 = vmatpush1.bf16.msra.mxu0 %v4188
        %4233 = vmatprep.subr.bf16.mxu0 %v4192
        %4234 = vmatpush1.bf16.msra.mxu0 %v4191
        %4235 = vmatprep.subr.bf16.mxu0 %v4195
        %4236 = vmatpush1.bf16.msra.mxu0 %v4194
        %4237 = vmatprep.subr.bf16.mxu0 0
        %4238 = vmatpush1.bf16.msra.mxu0 0
        %4239 = vmatprep.subr.bf16.mxu0 0
        %4240 = vmatpush1.bf16.msra.mxu0 0
        %4241 = vmatprep.subr.bf16.mxu0 0
        %4242 = vmatpush1.bf16.msra.mxu0 0
        %4243 = vmatprep.subr.bf16.mxu0 0
        %4244 = vmatpush1.bf16.msra.mxu0 0
        %4245 = vmatprep.subr.bf16.mxu0 0
        %4246 = vmatpush1.bf16.msra.mxu0 0
        %4247 = vmatprep.subr.bf16.mxu0 0
        %4248 = vmatpush1.bf16.msra.mxu0 0
        %4249 = vmatprep.subr.bf16.mxu0 0
        %4250 = vmatpush1.bf16.msra.mxu0 0
        %4251 = vmatprep.subr.bf16.mxu0 0
        %4252 = vmatpush1.bf16.msra.mxu0 0
        %4253 = vmatprep.mubr.bf16.mxu0 0
        %4254 = vmatmul.mubr.bf16.gmra.mrb[0].mxu0 %v4047
        %v4255 = vpop.f32.mrb[0].mxu0
        %v4256 = vadd.f32 %v4084, %v4255
        %v4257 = vpop.f32.mrb[0].mxu0
        %v4258 = vadd.f32 %v4088, %v4257
        %v4259 = vpop.f32.mrb[0].mxu0
        %v4260 = vpop.f32.mrb[0].mxu0
        %4261 = vdwg.mxu0
        %4262 = vmatprep.subr.bf16.mxu0 0
        %4263 = vmatpush1.bf16.msra.mxu0 %v4175
        %4264 = vmatprep.subr.bf16.mxu0 0
        %4265 = vmatpush1.bf16.msra.mxu0 %v4178
        %4266 = vmatprep.subr.bf16.mxu0 0
        %4267 = vmatpush1.bf16.msra.mxu0 %v4181
        %4268 = vmatprep.subr.bf16.mxu0 0
        %4269 = vmatpush1.bf16.msra.mxu0 %v4184
        %4270 = vmatprep.subr.bf16.mxu0 0
        %4271 = vmatpush1.bf16.msra.mxu0 %v4187
        %4272 = vmatprep.subr.bf16.mxu0 0
        %4273 = vmatpush1.bf16.msra.mxu0 %v4190
        %4274 = vmatprep.subr.bf16.mxu0 0
        %4275 = vmatpush1.bf16.msra.mxu0 %v4193
        %4276 = vmatprep.subr.bf16.mxu0 0
        %4277 = vmatpush1.bf16.msra.mxu0 %v4196
        %4278 = vmatprep.subr.bf16.mxu0 0
        %4279 = vmatpush1.bf16.msra.mxu0 0
        %4280 = vmatprep.subr.bf16.mxu0 0
        %4281 = vmatpush1.bf16.msra.mxu0 0
        %4282 = vmatprep.subr.bf16.mxu0 0
        %4283 = vmatpush1.bf16.msra.mxu0 0
        %4284 = vmatprep.subr.bf16.mxu0 0
        %4285 = vmatpush1.bf16.msra.mxu0 0
        %4286 = vmatprep.subr.bf16.mxu0 0
        %4287 = vmatpush1.bf16.msra.mxu0 0
        %4288 = vmatprep.subr.bf16.mxu0 0
        %4289 = vmatpush1.bf16.msra.mxu0 0
        %4290 = vmatprep.subr.bf16.mxu0 0
        %4291 = vmatpush1.bf16.msra.mxu0 0
        %4292 = vmatprep.subr.bf16.mxu0 0
        %4293 = vmatpush1.bf16.msra.mxu0 0
        %4294 = vmatprep.mubr.bf16.mxu0 0
        %4295 = vmatmul.mubr.bf16.gmra.mrb[0].mxu0 %v4047
        %v4296 = vpop.f32.mrb[0].mxu0
        %v4297 = vadd.f32 %v4092, %v4296
        %v4298 = vpop.f32.mrb[0].mxu0
        %v4299 = vpop.f32.mrb[0].mxu0
        %v4300 = vpop.f32.mrb[0].mxu0
        %4301 = vdwg.mxu0
        %v4302 = vmul.f32 %v4256, %v4256
        %v4303 = vmul.f32 %v4258, %v4258
        %v4304 = vmul.f32 %v4297, %v4297
        %v4305 = vmul.f32 %v4256, %v4302
        %v4306 = vmul.f32 %v4258, %v4303
        %v4307 = vmul.f32 %v4297, %v4304
        %v4308 = vmul.f32 %v4305, 0.044715
        %v4309 = vmul.f32 %v4306, 0.044715
        %v4310 = vmul.f32 %v4307, 0.044715
        %v4311 = vadd.f32 %v4256, %v4308
        %v4312 = vadd.f32 %v4258, %v4309
        %v4313 = vadd.f32 %v4297, %v4310
        %v4314 = vmul.f32 %v4311, 0.7978846
        %v4315 = vmul.f32 %v4312, 0.7978846
        %v4316 = vmul.f32 %v4313, 0.7978846
        %v4317 = vtanh.pop %v4314
        %v4318 = vtanh.pop %v4315
        %v4319 = vtanh.pop %v4316
        %v4320 = vadd.f32 %v4317, 1.0
        %v4321 = vadd.f32 %v4318, 1.0
        %v4322 = vadd.f32 %v4319, 1.0
        %v4323 = vmul.f32 %v4320, 0.5
        %v4324 = vmul.f32 %v4321, 0.5
        %v4325 = vmul.f32 %v4322, 0.5
        %v4326 = vmul.f32 %v4256, %v4323
        %v4327 = vmul.f32 %v4258, %v4324
        %v4328 = vmul.f32 %v4297, %v4325
        %v4329 = vrot.slane %v4327, 7
        %v4330 = vsel %vm3654, %v4329, 0.0
        %v4331 = vlaneseq
        %v4332 = vshrl.u32 %v4331, 7
        %v4333 = vsub.s32 3, %v4332
        %v4334 = vrot.slane %v4040, %v4333
        %v4335 = vmul.f32 %v4334, %v4330
        %v4336 = vadd.f32 %v4327, %v4335
        %v4337 = vmul.f32 %v4040, %v4040
        %v4338 = vrot.slane %v4336, 6
        %v4339 = vsel %vm3664, %v4338, 0.0
        %v4340 = vlaneseq
        %v4341 = vshrl.u32 %v4340, 7
        %v4342 = vsub.s32 3, %v4341
        %v4343 = vrot.slane %v4337, %v4342
        %v4344 = vmul.f32 %v4343, %v4339
        %v4345 = vadd.f32 %v4336, %v4344
        %v4346 = vmul.f32 %v4337, %v4337
        %v4347 = vrot.slane %v4345, 4
        %v4348 = vsel %vm3674, %v4347, 0.0
        %v4349 = vlaneseq
        %v4350 = vshrl.u32 %v4349, 7
        %v4351 = vsub.s32 3, %v4350
        %v4352 = vrot.slane %v4346, %v4351
        %v4353 = vmul.f32 %v4352, %v4348
        %v4354 = vadd.f32 %v4345, %v4353
        %v4355 = vlaneseq
        %v4356 = vshrl.u32 %v4355, 7
        %v4357 = vsub.s32 4, %v4356
        %v4358 = vrot.slane %v4040, %v4357
        %v4359 = vmul.f32 %v4358, %v4354
        %v4360 = vlaneseq
        %v4361 = vshrl.u32 %v4360, 7
        %v4362 = vsub.s32 5, %v4361
        %v4363 = vrot.slane %v4040, %v4362
        %v4364 = vmul.f32 %v4363, %v4327
        %v4365 = vadd.f32 %v4359, %v4364
        %v4366 = vrot.slane %v4328, 1
        %v4367 = vsel %vm3694, %v4366, 0.0
        %v4368 = vlaneseq
        %v4369 = vshrl.u32 %v4368, 7
        %v4370 = vsub.s32 6, %v4369
        %v4371 = vrot.slane %v4040, %v4370
        %v4372 = vmul.f32 %v4371, %v4367
        %v4373 = vadd.f32 %v4328, %v4372
        %v4374 = vrot.slane %v4373, 2
        %v4375 = vsel %vm3703, %v4374, 0.0
        %v4376 = vlaneseq
        %v4377 = vshrl.u32 %v4376, 7
        %v4378 = vsub.s32 6, %v4377
        %v4379 = vrot.slane %v4337, %v4378
        %v4380 = vmul.f32 %v4379, %v4375
        %v4381 = vadd.f32 %v4373, %v4380
        %v4382 = vrot.slane %v4381, 4
        %v4383 = vsel %vm3712, %v4382, 0.0
        %v4384 = vlaneseq
        %v4385 = vshrl.u32 %v4384, 7
        %v4386 = vsub.s32 6, %v4385
        %v4387 = vrot.slane %v4346, %v4386
        %v4388 = vmul.f32 %v4387, %v4383
        %v4389 = vadd.f32 %v4381, %v4388
        %v4390 = vlaneseq
        %v4391 = vshrl.u32 %v4390, 7
        %v4392 = vsub.s32 7, %v4391
        %v4393 = vrot.slane %v4040, %v4392
        %v4394 = vmul.f32 %v4393, %v4389
        %v4395 = vlaneseq
        %v4396 = vshrl.u32 %v4395, 7
        %v4397 = vsub.s32 0, %v4396
        %v4398 = vrot.slane %v4041, %v4397
        %v4399 = vmul.f32 %v4398, %v4328
        %v4400 = vadd.f32 %v4394, %v4399
        %v4401 = vpack.c.bf16 %v4365, %v4365
        %v4402 = vpack.c.bf16 %v4400, %v4400
        %s4403 = scalar_lea.vmem [#allocation6], 128
        %v4404 = vld [vmem:[%s4403] sm:$0xf]
        %v4405 = vld [vmem:[%s4403 + $0x4] sm:$0xf]
        %v4406 = vld [vmem:[%s4403 + $0x8] sm:$0xf]
        %v4407 = vld [vmem:[%s4403 + $0xc] sm:$0xf]
        %v4408 = vld [vmem:[%s4403 + $0x10] sm:$0xf]
        %v4409 = vld [vmem:[%s4403 + $0x14] sm:$0xf]
        %v4410 = vld [vmem:[%s4403 + $0x18] sm:$0xf]
        %v4411 = vld [vmem:[%s4403 + $0x1c] sm:$0xf]
        %v4412 = vld [vmem:[%s4403 + $0x20] sm:$0xf]
        %v4413 = vld [vmem:[%s4403 + $0x24] sm:$0xf]
        %v4414 = vld [vmem:[%s4403 + $0x28] sm:$0xf]
        %v4415 = vld [vmem:[%s4403 + $0x2c] sm:$0xf]
        %v4416 = vld [vmem:[%s4403 + $0x30] sm:$0xf]
        %v4417 = vld [vmem:[%s4403 + $0x34] sm:$0xf]
        %v4418 = vld [vmem:[%s4403 + $0x38] sm:$0xf]
        %v4419 = vld [vmem:[%s4403 + $0x3c] sm:$0xf]
        %v4420 = vld [vmem:[%s4403 + $0x40] sm:$0xf]
        %v4421 = vld [vmem:[%s4403 + $0x44] sm:$0xf]
        %v4422 = vld [vmem:[%s4403 + $0x48] sm:$0xf]
        %v4423 = vld [vmem:[%s4403 + $0x4c] sm:$0xf]
        %v4424 = vld [vmem:[%s4403 + $0x50] sm:$0xf]
        %v4425 = vld [vmem:[%s4403 + $0x54] sm:$0xf]
        %v4426 = vld [vmem:[%s4403 + $0x58] sm:$0xf]
        %v4427 = vld [vmem:[%s4403 + $0x5c] sm:$0xf]
        %v4428 = vld [vmem:[%s4403 + $0x60] sm:$0xf]
        %v4429 = vld [vmem:[%s4403 + $0x64] sm:$0xf]
        %v4430 = vld [vmem:[%s4403 + $0x68] sm:$0xf]
        %v4431 = vld [vmem:[%s4403 + $0x6c] sm:$0xf]
        %v4432 = vld [vmem:[%s4403 + $0x70] sm:$0xf]
        %v4433 = vld [vmem:[%s4403 + $0x74] sm:$0xf]
        %v4434 = vld [vmem:[%s4403 + $0x78] sm:$0xf]
        %v4435 = vld [vmem:[%s4403 + $0x7c] sm:$0xf]
        %v4436 = vlaneseq
        %v4437 = vshrl.u32 %v4436, 7
        %v4438 = vsub.s32 1, %v4437
        %v4439 = vrot.slane %v4041, %v4438
        %v4472 = vunpack.c.l.b16 %v4404
        %v4473 = vunpack.c.l.b16 %v4405
        %v4474 = vunpack.c.l.b16 %v4406
        %v4475 = vunpack.c.l.b16 %v4407
        %v4476 = vunpack.c.l.b16 %v4408
        %v4477 = vunpack.c.l.b16 %v4409
        %v4478 = vunpack.c.l.b16 %v4410
        %v4479 = vunpack.c.l.b16 %v4411
        %v4480 = vunpack.c.l.b16 %v4412
        %v4481 = vunpack.c.l.b16 %v4413
        %v4482 = vunpack.c.l.b16 %v4414
        %v4483 = vunpack.c.l.b16 %v4415
        %v4484 = vunpack.c.l.b16 %v4416
        %v4485 = vunpack.c.l.b16 %v4417
        %v4486 = vunpack.c.l.b16 %v4418
        %v4487 = vunpack.c.l.b16 %v4419
        %v4488 = vunpack.c.l.b16 %v4420
        %v4489 = vunpack.c.l.b16 %v4421
        %v4490 = vunpack.c.l.b16 %v4422
        %v4491 = vunpack.c.l.b16 %v4423
        %v4492 = vunpack.c.l.b16 %v4424
        %v4493 = vunpack.c.l.b16 %v4425
        %v4494 = vunpack.c.l.b16 %v4426
        %v4495 = vunpack.c.l.b16 %v4427
        %v4496 = vunpack.c.l.b16 %v4428
        %v4497 = vunpack.c.l.b16 %v4429
        %v4498 = vunpack.c.l.b16 %v4430
        %v4499 = vunpack.c.l.b16 %v4431
        %v4500 = vunpack.c.l.b16 %v4432
        %v4501 = vunpack.c.l.b16 %v4433
        %v4502 = vunpack.c.l.b16 %v4434
        %v4503 = vunpack.c.l.b16 %v4435
        %v4504 = vpack.c.b16 %v4473, %v4472
        %v4505 = vpack.c.b16 %v4475, %v4474
        %v4506 = vpack.c.b16 %v4477, %v4476
        %v4507 = vpack.c.b16 %v4479, %v4478
        %v4508 = vpack.c.b16 %v4481, %v4480
        %v4509 = vpack.c.b16 %v4483, %v4482
        %v4510 = vpack.c.b16 %v4485, %v4484
        %v4511 = vpack.c.b16 %v4487, %v4486
        %v4512 = vpack.c.b16 %v4489, %v4488
        %v4513 = vpack.c.b16 %v4491, %v4490
        %v4514 = vpack.c.b16 %v4493, %v4492
        %v4515 = vpack.c.b16 %v4495, %v4494
        %v4516 = vpack.c.b16 %v4497, %v4496
        %v4517 = vpack.c.b16 %v4499, %v4498
        %v4518 = vpack.c.b16 %v4501, %v4500
        %v4519 = vpack.c.b16 %v4503, %v4502
        %4536 = vmatprep.subr.bf16.mxu0 0
        %4537 = vmatpush1.bf16.msra.mxu0 %v4504
        %4538 = vmatprep.subr.bf16.mxu0 0
        %4539 = vmatpush1.bf16.msra.mxu0 %v4505
        %4540 = vmatprep.subr.bf16.mxu0 0
        %4541 = vmatpush1.bf16.msra.mxu0 %v4506
        %4542 = vmatprep.subr.bf16.mxu0 0
        %4543 = vmatpush1.bf16.msra.mxu0 %v4507
        %4544 = vmatprep.subr.bf16.mxu0 0
        %4545 = vmatpush1.bf16.msra.mxu0 %v4508
        %4546 = vmatprep.subr.bf16.mxu0 0
        %4547 = vmatpush1.bf16.msra.mxu0 %v4509
        %4548 = vmatprep.subr.bf16.mxu0 0
        %4549 = vmatpush1.bf16.msra.mxu0 %v4510
        %4550 = vmatprep.subr.bf16.mxu0 0
        %4551 = vmatpush1.bf16.msra.mxu0 %v4511
        %4552 = vmatprep.subr.bf16.mxu0 0
        %4553 = vmatpush1.bf16.msra.mxu0 %v4512
        %4554 = vmatprep.subr.bf16.mxu0 0
        %4555 = vmatpush1.bf16.msra.mxu0 %v4513
        %4556 = vmatprep.subr.bf16.mxu0 0
        %4557 = vmatpush1.bf16.msra.mxu0 %v4514
        %4558 = vmatprep.subr.bf16.mxu0 0
        %4559 = vmatpush1.bf16.msra.mxu0 %v4515
        %4560 = vmatprep.subr.bf16.mxu0 0
        %4561 = vmatpush1.bf16.msra.mxu0 %v4516
        %4562 = vmatprep.subr.bf16.mxu0 0
        %4563 = vmatpush1.bf16.msra.mxu0 %v4517
        %4564 = vmatprep.subr.bf16.mxu0 0
        %4565 = vmatpush1.bf16.msra.mxu0 %v4518
        %4566 = vmatprep.subr.bf16.mxu0 0
        %4567 = vmatpush1.bf16.msra.mxu0 %v4519
        %4568 = vmatprep.mubr.bf16.mxu0 %v4402
        %4569 = vmatmul.mubr.bf16.gmra.mrb[0].mxu0 %v4401
        %v4570 = vpop.f32.mrb[0].mxu0
        %v4571 = vadd.f32 %v4439, %v4570
        %v4572 = vpop.f32.mrb[0].mxu0
        %v4573 = vpop.f32.mrb[0].mxu0
        %v4574 = vpop.f32.mrb[0].mxu0
        %4575 = vdwg.mxu0
        %v4576 = vmul.f32 %v4326, %v4571
        %v4577 = vpack.c.bf16 %v4576, %v4576
        %s4578 = scalar_lea.vmem [#allocation7], 64
        %v4579 = vld [vmem:[%s4578] sm:$0xf]
        %v4580 = vld [vmem:[%s4578 + $0x4] sm:$0xf]
        %v4581 = vld [vmem:[%s4578 + $0x8] sm:$0xf]
        %v4582 = vld [vmem:[%s4578 + $0xc] sm:$0xf]
        %v4583 = vld [vmem:[%s4578 + $0x10] sm:$0xf]
        %v4584 = vld [vmem:[%s4578 + $0x14] sm:$0xf]
        %v4585 = vld [vmem:[%s4578 + $0x18] sm:$0xf]
        %v4586 = vld [vmem:[%s4578 + $0x1c] sm:$0xf]
        %v4587 = vld [vmem:[%s4578 + $0x20] sm:$0xf]
        %v4588 = vld [vmem:[%s4578 + $0x24] sm:$0xf]
        %v4589 = vld [vmem:[%s4578 + $0x28] sm:$0xf]
        %v4590 = vld [vmem:[%s4578 + $0x2c] sm:$0xf]
        %v4591 = vld [vmem:[%s4578 + $0x30] sm:$0xf]
        %v4592 = vld [vmem:[%s4578 + $0x34] sm:$0xf]
        %v4593 = vld [vmem:[%s4578 + $0x38] sm:$0xf]
        %v4594 = vld [vmem:[%s4578 + $0x3c] sm:$0xf]
        %v4595 = vlaneseq
        %v4596 = vshrl.u32 %v4595, 7
        %v4597 = vsub.s32 2, %v4596
        %v4598 = vrot.slane %v4041, %v4597
        %v4615 = vunpack.c.l.b16 %v4579
        %v4616 = vunpack.c.l.b16 %v4580
        %v4617 = vunpack.c.l.b16 %v4581
        %v4618 = vunpack.c.l.b16 %v4582
        %v4619 = vunpack.c.l.b16 %v4583
        %v4620 = vunpack.c.l.b16 %v4584
        %v4621 = vunpack.c.l.b16 %v4585
        %v4622 = vunpack.c.l.b16 %v4586
        %v4623 = vunpack.c.l.b16 %v4587
        %v4624 = vunpack.c.l.b16 %v4588
        %v4625 = vunpack.c.l.b16 %v4589
        %v4626 = vunpack.c.l.b16 %v4590
        %v4627 = vunpack.c.l.b16 %v4591
        %v4628 = vunpack.c.l.b16 %v4592
        %v4629 = vunpack.c.l.b16 %v4593
        %v4630 = vunpack.c.l.b16 %v4594
        %v4631 = vpack.c.b16 %v4616, %v4615
        %v4632 = vpack.c.b16 %v4618, %v4617
        %v4633 = vpack.c.b16 %v4620, %v4619
        %v4634 = vpack.c.b16 %v4622, %v4621
        %v4635 = vpack.c.b16 %v4624, %v4623
        %v4636 = vpack.c.b16 %v4626, %v4625
        %v4637 = vpack.c.b16 %v4628, %v4627
        %v4638 = vpack.c.b16 %v4630, %v4629
        %4647 = vmatprep.subr.bf16.mxu0 0
        %4648 = vmatpush1.bf16.msra.mxu0 %v4631
        %4649 = vmatprep.subr.bf16.mxu0 0
        %4650 = vmatpush1.bf16.msra.mxu0 %v4632
        %4651 = vmatprep.subr.bf16.mxu0 0
        %4652 = vmatpush1.bf16.msra.mxu0 %v4633
        %4653 = vmatprep.subr.bf16.mxu0 0
        %4654 = vmatpush1.bf16.msra.mxu0 %v4634
        %4655 = vmatprep.subr.bf16.mxu0 0
        %4656 = vmatpush1.bf16.msra.mxu0 %v4635
        %4657 = vmatprep.subr.bf16.mxu0 0
        %4658 = vmatpush1.bf16.msra.mxu0 %v4636
        %4659 = vmatprep.subr.bf16.mxu0 0
        %4660 = vmatpush1.bf16.msra.mxu0 %v4637
        %4661 = vmatprep.subr.bf16.mxu0 0
        %4662 = vmatpush1.bf16.msra.mxu0 %v4638
        %4663 = vmatprep.subr.bf16.mxu0 0
        %4664 = vmatpush1.bf16.msra.mxu0 0
        %4665 = vmatprep.subr.bf16.mxu0 0
        %4666 = vmatpush1.bf16.msra.mxu0 0
        %4667 = vmatprep.subr.bf16.mxu0 0
        %4668 = vmatpush1.bf16.msra.mxu0 0
        %4669 = vmatprep.subr.bf16.mxu0 0
        %4670 = vmatpush1.bf16.msra.mxu0 0
        %4671 = vmatprep.subr.bf16.mxu0 0
        %4672 = vmatpush1.bf16.msra.mxu0 0
        %4673 = vmatprep.subr.bf16.mxu0 0
        %4674 = vmatpush1.bf16.msra.mxu0 0
        %4675 = vmatprep.subr.bf16.mxu0 0
        %4676 = vmatpush1.bf16.msra.mxu0 0
        %4677 = vmatprep.subr.bf16.mxu0 0
        %4678 = vmatpush1.bf16.msra.mxu0 0
        %4679 = vmatprep.mubr.bf16.mxu0 0
        %4680 = vmatmul.mubr.bf16.gmra.mrb[0].mxu0 %v4577
        %v4681 = vpop.f32.mrb[0].mxu0
        %v4682 = vadd.f32 %v4598, %v4681
        %v4683 = vpop.f32.mrb[0].mxu0
        %v4684 = vpop.f32.mrb[0].mxu0
        %v4685 = vpop.f32.mrb[0].mxu0
        %4686 = vdwg.mxu0
        %v4687 = vadd.f32 %v4682, %v4038
        %4688 = vadd.xlane.f32.xlu0 %v4687
        %v4689 = vpop.xlane.xlu0 %4688
        %v4690 = vmul.f32 %v4689, %v4019
        %v4691 = vsub.f32 %v4687, %v4690
        %v4692 = vmul.f32 %v4691, %v4691
        %4693 = vadd.xlane.f32.xlu0 %v4692
        %v4694 = vpop.xlane.xlu0 %4693
        %v4695 = vmul.f32 %v4694, %v4019
        %v4696 = vadd.f32 %v4695, 1e-05
        %v4697 = vrsqrt.pop %v4696
        %v4698 = vmul.f32 %v4691, %v4697
        %v4699 = vlaneseq
        %v4700 = vshrl.u32 %v4699, 7
        %v4701 = vsub.s32 3, %v4700
        %v4702 = vrot.slane %v4041, %v4701
        %v4703 = vmul.f32 %v4698, %v4702
        %v4704 = vlaneseq
        %v4705 = vshrl.u32 %v4704, 7
        %v4706 = vsub.s32 4, %v4705
        %v4707 = vrot.slane %v4041, %v4706
        %v4708 = vadd.f32 %v4703, %v4707
        %s4709 = scalar_lea.vmem [#allocation9], 32
        %v4710 = vld [vmem:[%s4709] sm:$0xff]
        %v4711 = vld [vmem:[%s4709 + $0x8] sm:$0xff]
        %v4713 = vrot.slane %v4710, 1
        %v4715 = vrot.slane %v4710, 2
        %v4717 = vpack.c.bf16 %v4708, %v4708
        %s4718 = scalar_lea.vmem [#allocation4], 384
        %v4719 = vld [vmem:[%s4718] sm:$0xff]
        %v4720 = vld [vmem:[%s4718 + $0x8] sm:$0xf]
        %v4721 = vld [vmem:[%s4718 + $0xc] sm:$0xff]
        %v4722 = vld [vmem:[%s4718 + $0x14] sm:$0xf]
        %v4723 = vld [vmem:[%s4718 + $0x18] sm:$0xff]
        %v4724 = vld [vmem:[%s4718 + $0x20] sm:$0xf]
        %v4725 = vld [vmem:[%s4718 + $0x24] sm:$0xff]
        %v4726 = vld [vmem:[%s4718 + $0x2c] sm:$0xf]
        %v4727 = vld [vmem:[%s4718 + $0x30] sm:$0xff]
        %v4728 = vld [vmem:[%s4718 + $0x38] sm:$0xf]
        %v4729 = vld [vmem:[%s4718 + $0x3c] sm:$0xff]
        %v4730 = vld [vmem:[%s4718 + $0x44] sm:$0xf]
        %v4731 = vld [vmem:[%s4718 + $0x48] sm:$0xff]
        %v4732 = vld [vmem:[%s4718 + $0x50] sm:$0xf]
        %v4733 = vld [vmem:[%s4718 + $0x54] sm:$0xff]
        %v4734 = vld [vmem:[%s4718 + $0x5c] sm:$0xf]
        %v4735 = vld [vmem:[%s4718 + $0x60] sm:$0xff]
        %v4736 = vld [vmem:[%s4718 + $0x68] sm:$0xf]
        %v4737 = vld [vmem:[%s4718 + $0x6c] sm:$0xff]
        %v4738 = vld [vmem:[%s4718 + $0x74] sm:$0xf]
        %v4739 = vld [vmem:[%s4718 + $0x78] sm:$0xff]
        %v4740 = vld [vmem:[%s4718 + $0x80] sm:$0xf]
        %v4741 = vld [vmem:[%s4718 + $0x84] sm:$0xff]
        %v4742 = vld [vmem:[%s4718 + $0x8c] sm:$0xf]
        %v4743 = vld [vmem:[%s4718 + $0x90] sm:$0xff]
        %v4744 = vld [vmem:[%s4718 + $0x98] sm:$0xf]
        %v4745 = vld [vmem:[%s4718 + $0x9c] sm:$0xff]
        %v4746 = vld [vmem:[%s4718 + $0xa4] sm:$0xf]
        %v4747 = vld [vmem:[%s4718 + $0xa8] sm:$0xff]
        %v4748 = vld [vmem:[%s4718 + $0xb0] sm:$0xf]
        %v4749 = vld [vmem:[%s4718 + $0xb4] sm:$0xff]
        %v4750 = vld [vmem:[%s4718 + $0xbc] sm:$0xf]
        %v4751 = vlaneseq
        %v4752 = vshrl.u32 %v4751, 7
        %v4753 = vsub.s32 0, %v4752
        %v4754 = vrot.slane %v4710, %v4753
        %v4755 = vlaneseq
        %v4756 = vshrl.u32 %v4755, 7
        %v4757 = vsub.s32 0, %v4756
        %v4758 = vrot.slane %v4713, %v4757
        %v4759 = vlaneseq
        %v4760 = vshrl.u32 %v4759, 7
        %v4761 = vsub.s32 0, %v4760
        %v4762 = vrot.slane %v4715, %v4761
        %v4795 = vunpack.c.l.b16 %v4719
        %v4796 = vunpack.c.h.b16 %v4719
        %v4797 = vunpack.c.l.b16 %v4720
        %v4798 = vunpack.c.l.b16 %v4721
        %v4799 = vunpack.c.h.b16 %v4721
        %v4800 = vunpack.c.l.b16 %v4722
        %v4801 = vunpack.c.l.b16 %v4723
        %v4802 = vunpack.c.h.b16 %v4723
        %v4803 = vunpack.c.l.b16 %v4724
        %v4804 = vunpack.c.l.b16 %v4725
        %v4805 = vunpack.c.h.b16 %v4725
        %v4806 = vunpack.c.l.b16 %v4726
        %v4807 = vunpack.c.l.b16 %v4727
        %v4808 = vunpack.c.h.b16 %v4727
        %v4809 = vunpack.c.l.b16 %v4728
        %v4810 = vunpack.c.l.b16 %v4729
        %v4811 = vunpack.c.h.b16 %v4729
        %v4812 = vunpack.c.l.b16 %v4730
        %v4813 = vunpack.c.l.b16 %v4731
        %v4814 = vunpack.c.h.b16 %v4731
        %v4815 = vunpack.c.l.b16 %v4732
        %v4816 = vunpack.c.l.b16 %v4733
        %v4817 = vunpack.c.h.b16 %v4733
        %v4818 = vunpack.c.l.b16 %v4734
        %v4819 = vunpack.c.l.b16 %v4735
        %v4820 = vunpack.c.h.b16 %v4735
        %v4821 = vunpack.c.l.b16 %v4736
        %v4822 = vunpack.c.l.b16 %v4737
        %v4823 = vunpack.c.h.b16 %v4737
        %v4824 = vunpack.c.l.b16 %v4738
        %v4825 = vunpack.c.l.b16 %v4739
        %v4826 = vunpack.c.h.b16 %v4739
        %v4827 = vunpack.c.l.b16 %v4740
        %v4828 = vunpack.c.l.b16 %v4741
        %v4829 = vunpack.c.h.b16 %v4741
        %v4830 = vunpack.c.l.b16 %v4742
        %v4831 = vunpack.c.l.b16 %v4743
        %v4832 = vunpack.c.h.b16 %v4743
        %v4833 = vunpack.c.l.b16 %v4744
        %v4834 = vunpack.c.l.b16 %v4745
        %v4835 = vunpack.c.h.b16 %v4745
        %v4836 = vunpack.c.l.b16 %v4746
        %v4837 = vunpack.c.l.b16 %v4747
        %v4838 = vunpack.c.h.b16 %v4747
        %v4839 = vunpack.c.l.b16 %v4748
        %v4840 = vunpack.c.l.b16 %v4749
        %v4841 = vunpack.c.h.b16 %v4749
        %v4842 = vunpack.c.l.b16 %v4750
        %v4843 = vpack.c.b16 %v4798, %v4795
        %v4844 = vpack.c.b16 %v4799, %v4796
        %v4845 = vpack.c.b16 %v4800, %v4797
        %v4846 = vpack.c.b16 %v4804, %v4801
        %v4847 = vpack.c.b16 %v4805, %v4802
        %v4848 = vpack.c.b16 %v4806, %v4803
        %v4849 = vpack.c.b16 %v4810, %v4807
        %v4850 = vpack.c.b16 %v4811, %v4808
        %v4851 = vpack.c.b16 %v4812, %v4809
        %v4852 = vpack.c.b16 %v4816, %v4813
        %v4853 = vpack.c.b16 %v4817, %v4814
        %v4854 = vpack.c.b16 %v4818, %v4815
        %v4855 = vpack.c.b16 %v4822, %v4819
        %v4856 = vpack.c.b16 %v4823, %v4820
        %v4857 = vpack.c.b16 %v4824, %v4821
        %v4858 = vpack.c.b16 %v4828, %v4825
        %v4859 = vpack.c.b16 %v4829, %v4826
        %v4860 = vpack.c.b16 %v4830, %v4827
        %v4861 = vpack.c.b16 %v4834, %v4831
        %v4862 = vpack.c.b16 %v4835, %v4832
        %v4863 = vpack.c.b16 %v4836, %v4833
        %v4864 = vpack.c.b16 %v4840, %v4837
        %v4865 = vpack.c.b16 %v4841, %v4838
        %v4866 = vpack.c.b16 %v4842, %v4839
        %4891 = vmatprep.subr.bf16.mxu0 %v4844
        %4892 = vmatpush1.bf16.msra.mxu0 %v4843
        %4893 = vmatprep.subr.bf16.mxu0 %v4847
        %4894 = vmatpush1.bf16.msra.mxu0 %v4846
        %4895 = vmatprep.subr.bf16.mxu0 %v4850
        %4896 = vmatpush1.bf16.msra.mxu0 %v4849
        %4897 = vmatprep.subr.bf16.mxu0 %v4853
        %4898 = vmatpush1.bf16.msra.mxu0 %v4852
        %4899 = vmatprep.subr.bf16.mxu0 %v4856
        %4900 = vmatpush1.bf16.msra.mxu0 %v4855
        %4901 = vmatprep.subr.bf16.mxu0 %v4859
        %4902 = vmatpush1.bf16.msra.mxu0 %v4858
        %4903 = vmatprep.subr.bf16.mxu0 %v4862
        %4904 = vmatpush1.bf16.msra.mxu0 %v4861
        %4905 = vmatprep.subr.bf16.mxu0 %v4865
        %4906 = vmatpush1.bf16.msra.mxu0 %v4864
        %4907 = vmatprep.subr.bf16.mxu0 0
        %4908 = vmatpush1.bf16.msra.mxu0 0
        %4909 = vmatprep.subr.bf16.mxu0 0
        %4910 = vmatpush1.bf16.msra.mxu0 0
        %4911 = vmatprep.subr.bf16.mxu0 0
        %4912 = vmatpush1.bf16.msra.mxu0 0
        %4913 = vmatprep.subr.bf16.mxu0 0
        %4914 = vmatpush1.bf16.msra.mxu0 0
        %4915 = vmatprep.subr.bf16.mxu0 0
        %4916 = vmatpush1.bf16.msra.mxu0 0
        %4917 = vmatprep.subr.bf16.mxu0 0
        %4918 = vmatpush1.bf16.msra.mxu0 0
        %4919 = vmatprep.subr.bf16.mxu0 0
        %4920 = vmatpush1.bf16.msra.mxu0 0
        %4921 = vmatprep.subr.bf16.mxu0 0
        %4922 = vmatpush1.bf16.msra.mxu0 0
        %4923 = vmatprep.mubr.bf16.mxu0 0
        %4924 = vmatmul.mubr.bf16.gmra.mrb[0].mxu0 %v4717
        %v4925 = vpop.f32.mrb[0].mxu0
        %v4926 = vadd.f32 %v4754, %v4925
        %v4927 = vpop.f32.mrb[0].mxu0
        %v4928 = vadd.f32 %v4758, %v4927
        %v4929 = vpop.f32.mrb[0].mxu0
        %v4930 = vpop.f32.mrb[0].mxu0
        %4931 = vdwg.mxu0
        %4932 = vmatprep.subr.bf16.mxu0 0
        %4933 = vmatpush1.bf16.msra.mxu0 %v4845
        %4934 = vmatprep.subr.bf16.mxu0 0
        %4935 = vmatpush1.bf16.msra.mxu0 %v4848
        %4936 = vmatprep.subr.bf16.mxu0 0
        %4937 = vmatpush1.bf16.msra.mxu0 %v4851
        %4938 = vmatprep.subr.bf16.mxu0 0
        %4939 = vmatpush1.bf16.msra.mxu0 %v4854
        %4940 = vmatprep.subr.bf16.mxu0 0
        %4941 = vmatpush1.bf16.msra.mxu0 %v4857
        %4942 = vmatprep.subr.bf16.mxu0 0
        %4943 = vmatpush1.bf16.msra.mxu0 %v4860
        %4944 = vmatprep.subr.bf16.mxu0 0
        %4945 = vmatpush1.bf16.msra.mxu0 %v4863
        %4946 = vmatprep.subr.bf16.mxu0 0
        %4947 = vmatpush1.bf16.msra.mxu0 %v4866
        %4948 = vmatprep.subr.bf16.mxu0 0
        %4949 = vmatpush1.bf16.msra.mxu0 0
        %4950 = vmatprep.subr.bf16.mxu0 0
        %4951 = vmatpush1.bf16.msra.mxu0 0
        %4952 = vmatprep.subr.bf16.mxu0 0
        %4953 = vmatpush1.bf16.msra.mxu0 0
        %4954 = vmatprep.subr.bf16.mxu0 0
        %4955 = vmatpush1.bf16.msra.mxu0 0
        %4956 = vmatprep.subr.bf16.mxu0 0
        %4957 = vmatpush1.bf16.msra.mxu0 0
        %4958 = vmatprep.subr.bf16.mxu0 0
        %4959 = vmatpush1.bf16.msra.mxu0 0
        %4960 = vmatprep.subr.bf16.mxu0 0
        %4961 = vmatpush1.bf16.msra.mxu0 0
        %4962 = vmatprep.subr.bf16.mxu0 0
        %4963 = vmatpush1.bf16.msra.mxu0 0
        %4964 = vmatprep.mubr.bf16.mxu0 0
        %4965 = vmatmul.mubr.bf16.gmra.mrb[0].mxu0 %v4717
        %v4966 = vpop.f32.mrb[0].mxu0
        %v4967 = vadd.f32 %v4762, %v4966
        %v4968 = vpop.f32.mrb[0].mxu0
        %v4969 = vpop.f32.mrb[0].mxu0
        %v4970 = vpop.f32.mrb[0].mxu0
        %4971 = vdwg.mxu0
        %v4972 = vmul.f32 %v4926, %v4926
        %v4973 = vmul.f32 %v4928, %v4928
        %v4974 = vmul.f32 %v4967, %v4967
        %v4975 = vmul.f32 %v4926, %v4972
        %v4976 = vmul.f32 %v4928, %v4973
        %v4977 = vmul.f32 %v4967, %v4974
        %v4978 = vmul.f32 %v4975, 0.044715
        %v4979 = vmul.f32 %v4976, 0.044715
        %v4980 = vmul.f32 %v4977, 0.044715
        %v4981 = vadd.f32 %v4926, %v4978
        %v4982 = vadd.f32 %v4928, %v4979
        %v4983 = vadd.f32 %v4967, %v4980
        %v4984 = vmul.f32 %v4981, 0.7978846
        %v4985 = vmul.f32 %v4982, 0.7978846
        %v4986 = vmul.f32 %v4983, 0.7978846
        %v4987 = vtanh.pop %v4984
        %v4988 = vtanh.pop %v4985
        %v4989 = vtanh.pop %v4986
        %v4990 = vadd.f32 %v4987, 1.0
        %v4991 = vadd.f32 %v4988, 1.0
        %v4992 = vadd.f32 %v4989, 1.0
        %v4993 = vmul.f32 %v4990, 0.5
        %v4994 = vmul.f32 %v4991, 0.5
        %v4995 = vmul.f32 %v4992, 0.5
        %v4996 = vmul.f32 %v4926, %v4993
        %v4997 = vmul.f32 %v4928, %v4994
        %v4998 = vmul.f32 %v4967, %v4995
        %v4999 = vrot.slane %v4997, 7
        %v5000 = vsel %vm3654, %v4999, 0.0
        %v5001 = vlaneseq
        %v5002 = vshrl.u32 %v5001, 7
        %v5003 = vsub.s32 3, %v5002
        %v5004 = vrot.slane %v4710, %v5003
        %v5005 = vmul.f32 %v5004, %v5000
        %v5006 = vadd.f32 %v4997, %v5005
        %v5007 = vmul.f32 %v4710, %v4710
        %v5008 = vrot.slane %v5006, 6
        %v5009 = vsel %vm3664, %v5008, 0.0
        %v5010 = vlaneseq
        %v5011 = vshrl.u32 %v5010, 7
        %v5012 = vsub.s32 3, %v5011
        %v5013 = vrot.slane %v5007, %v5012
        %v5014 = vmul.f32 %v5013, %v5009
        %v5015 = vadd.f32 %v5006, %v5014
        %v5016 = vmul.f32 %v5007, %v5007
        %v5017 = vrot.slane %v5015, 4
        %v5018 = vsel %vm3674, %v5017, 0.0
        %v5019 = vlaneseq
        %v5020 = vshrl.u32 %v5019, 7
        %v5021 = vsub.s32 3, %v5020
        %v5022 = vrot.slane %v5016, %v5021
        %v5023 = vmul.f32 %v5022, %v5018
        %v5024 = vadd.f32 %v5015, %v5023
        %v5025 = vlaneseq
        %v5026 = vshrl.u32 %v5025, 7
        %v5027 = vsub.s32 4, %v5026
        %v5028 = vrot.slane %v4710, %v5027
        %v5029 = vmul.f32 %v5028, %v5024
        %v5030 = vlaneseq
        %v5031 = vshrl.u32 %v5030, 7
        %v5032 = vsub.s32 5, %v5031
        %v5033 = vrot.slane %v4710, %v5032
        %v5034 = vmul.f32 %v5033, %v4997
        %v5035 = vadd.f32 %v5029, %v5034
        %v5036 = vrot.slane %v4998, 1
        %v5037 = vsel %vm3694, %v5036, 0.0
        %v5038 = vlaneseq
        %v5039 = vshrl.u32 %v5038, 7
        %v5040 = vsub.s32 6, %v5039
        %v5041 = vrot.slane %v4710, %v5040
        %v5042 = vmul.f32 %v5041, %v5037
        %v5043 = vadd.f32 %v4998, %v5042
        %v5044 = vrot.slane %v5043, 2
        %v5045 = vsel %vm3703, %v5044, 0.0
        %v5046 = vlaneseq
        %v5047 = vshrl.u32 %v5046, 7
        %v5048 = vsub.s32 6, %v5047
        %v5049 = vrot.slane %v5007, %v5048
        %v5050 = vmul.f32 %v5049, %v5045
        %v5051 = vadd.f32 %v5043, %v5050
        %v5052 = vrot.slane %v5051, 4
        %v5053 = vsel %vm3712, %v5052, 0.0
        %v5054 = vlaneseq
        %v5055 = vshrl.u32 %v5054, 7
        %v5056 = vsub.s32 6, %v5055
        %v5057 = vrot.slane %v5016, %v5056
        %v5058 = vmul.f32 %v5057, %v5053
        %v5059 = vadd.f32 %v5051, %v5058
        %v5060 = vlaneseq
        %v5061 = vshrl.u32 %v5060, 7
        %v5062 = vsub.s32 7, %v5061
        %v5063 = vrot.slane %v4710, %v5062
        %v5064 = vmul.f32 %v5063, %v5059
        %v5065 = vlaneseq
        %v5066 = vshrl.u32 %v5065, 7
        %v5067 = vsub.s32 0, %v5066
        %v5068 = vrot.slane %v4711, %v5067
        %v5069 = vmul.f32 %v5068, %v4998
        %v5070 = vadd.f32 %v5064, %v5069
        %v5071 = vpack.c.bf16 %v5035, %v5035
        %v5072 = vpack.c.bf16 %v5070, %v5070
        %s5073 = scalar_lea.vmem [#allocation6], 256
        %v5074 = vld [vmem:[%s5073] sm:$0xf]
        %v5075 = vld [vmem:[%s5073 + $0x4] sm:$0xf]
        %v5076 = vld [vmem:[%s5073 + $0x8] sm:$0xf]
        %v5077 = vld [vmem:[%s5073 + $0xc] sm:$0xf]
        %v5078 = vld [vmem:[%s5073 + $0x10] sm:$0xf]
        %v5079 = vld [vmem:[%s5073 + $0x14] sm:$0xf]
        %v5080 = vld [vmem:[%s5073 + $0x18] sm:$0xf]
        %v5081 = vld [vmem:[%s5073 + $0x1c] sm:$0xf]
        %v5082 = vld [vmem:[%s5073 + $0x20] sm:$0xf]
        %v5083 = vld [vmem:[%s5073 + $0x24] sm:$0xf]
        %v5084 = vld [vmem:[%s5073 + $0x28] sm:$0xf]
        %v5085 = vld [vmem:[%s5073 + $0x2c] sm:$0xf]
        %v5086 = vld [vmem:[%s5073 + $0x30] sm:$0xf]
        %v5087 = vld [vmem:[%s5073 + $0x34] sm:$0xf]
        %v5088 = vld [vmem:[%s5073 + $0x38] sm:$0xf]
        %v5089 = vld [vmem:[%s5073 + $0x3c] sm:$0xf]
        %v5090 = vld [vmem:[%s5073 + $0x40] sm:$0xf]
        %v5091 = vld [vmem:[%s5073 + $0x44] sm:$0xf]
        %v5092 = vld [vmem:[%s5073 + $0x48] sm:$0xf]
        %v5093 = vld [vmem:[%s5073 + $0x4c] sm:$0xf]
        %v5094 = vld [vmem:[%s5073 + $0x50] sm:$0xf]
        %v5095 = vld [vmem:[%s5073 + $0x54] sm:$0xf]
        %v5096 = vld [vmem:[%s5073 + $0x58] sm:$0xf]
        %v5097 = vld [vmem:[%s5073 + $0x5c] sm:$0xf]
        %v5098 = vld [vmem:[%s5073 + $0x60] sm:$0xf]
        %v5099 = vld [vmem:[%s5073 + $0x64] sm:$0xf]
        %v5100 = vld [vmem:[%s5073 + $0x68] sm:$0xf]
        %v5101 = vld [vmem:[%s5073 + $0x6c] sm:$0xf]
        %v5102 = vld [vmem:[%s5073 + $0x70] sm:$0xf]
        %v5103 = vld [vmem:[%s5073 + $0x74] sm:$0xf]
        %v5104 = vld [vmem:[%s5073 + $0x78] sm:$0xf]
        %v5105 = vld [vmem:[%s5073 + $0x7c] sm:$0xf]
        %v5106 = vlaneseq
        %v5107 = vshrl.u32 %v5106, 7
        %v5108 = vsub.s32 1, %v5107
        %v5109 = vrot.slane %v4711, %v5108
        %v5142 = vunpack.c.l.b16 %v5074
        %v5143 = vunpack.c.l.b16 %v5075
        %v5144 = vunpack.c.l.b16 %v5076
        %v5145 = vunpack.c.l.b16 %v5077
        %v5146 = vunpack.c.l.b16 %v5078
        %v5147 = vunpack.c.l.b16 %v5079
        %v5148 = vunpack.c.l.b16 %v5080
        %v5149 = vunpack.c.l.b16 %v5081
        %v5150 = vunpack.c.l.b16 %v5082
        %v5151 = vunpack.c.l.b16 %v5083
        %v5152 = vunpack.c.l.b16 %v5084
        %v5153 = vunpack.c.l.b16 %v5085
        %v5154 = vunpack.c.l.b16 %v5086
        %v5155 = vunpack.c.l.b16 %v5087
        %v5156 = vunpack.c.l.b16 %v5088
        %v5157 = vunpack.c.l.b16 %v5089
        %v5158 = vunpack.c.l.b16 %v5090
        %v5159 = vunpack.c.l.b16 %v5091
        %v5160 = vunpack.c.l.b16 %v5092
        %v5161 = vunpack.c.l.b16 %v5093
        %v5162 = vunpack.c.l.b16 %v5094
        %v5163 = vunpack.c.l.b16 %v5095
        %v5164 = vunpack.c.l.b16 %v5096
        %v5165 = vunpack.c.l.b16 %v5097
        %v5166 = vunpack.c.l.b16 %v5098
        %v5167 = vunpack.c.l.b16 %v5099
        %v5168 = vunpack.c.l.b16 %v5100
        %v5169 = vunpack.c.l.b16 %v5101
        %v5170 = vunpack.c.l.b16 %v5102
        %v5171 = vunpack.c.l.b16 %v5103
        %v5172 = vunpack.c.l.b16 %v5104
        %v5173 = vunpack.c.l.b16 %v5105
        %v5174 = vpack.c.b16 %v5143, %v5142
        %v5175 = vpack.c.b16 %v5145, %v5144
        %v5176 = vpack.c.b16 %v5147, %v5146
        %v5177 = vpack.c.b16 %v5149, %v5148
        %v5178 = vpack.c.b16 %v5151, %v5150
        %v5179 = vpack.c.b16 %v5153, %v5152
        %v5180 = vpack.c.b16 %v5155, %v5154
        %v5181 = vpack.c.b16 %v5157, %v5156
        %v5182 = vpack.c.b16 %v5159, %v5158
        %v5183 = vpack.c.b16 %v5161, %v5160
        %v5184 = vpack.c.b16 %v5163, %v5162
        %v5185 = vpack.c.b16 %v5165, %v5164
        %v5186 = vpack.c.b16 %v5167, %v5166
        %v5187 = vpack.c.b16 %v5169, %v5168
        %v5188 = vpack.c.b16 %v5171, %v5170
        %v5189 = vpack.c.b16 %v5173, %v5172
        %5206 = vmatprep.subr.bf16.mxu0 0
        %5207 = vmatpush1.bf16.msra.mxu0 %v5174
        %5208 = vmatprep.subr.bf16.mxu0 0
        %5209 = vmatpush1.bf16.msra.mxu0 %v5175
        %5210 = vmatprep.subr.bf16.mxu0 0
        %5211 = vmatpush1.bf16.msra.mxu0 %v5176
        %5212 = vmatprep.subr.bf16.mxu0 0
        %5213 = vmatpush1.bf16.msra.mxu0 %v5177
        %5214 = vmatprep.subr.bf16.mxu0 0
        %5215 = vmatpush1.bf16.msra.mxu0 %v5178
        %5216 = vmatprep.subr.bf16.mxu0 0
        %5217 = vmatpush1.bf16.msra.mxu0 %v5179
        %5218 = vmatprep.subr.bf16.mxu0 0
        %5219 = vmatpush1.bf16.msra.mxu0 %v5180
        %5220 = vmatprep.subr.bf16.mxu0 0
        %5221 = vmatpush1.bf16.msra.mxu0 %v5181
        %5222 = vmatprep.subr.bf16.mxu0 0
        %5223 = vmatpush1.bf16.msra.mxu0 %v5182
        %5224 = vmatprep.subr.bf16.mxu0 0
        %5225 = vmatpush1.bf16.msra.mxu0 %v5183
        %5226 = vmatprep.subr.bf16.mxu0 0
        %5227 = vmatpush1.bf16.msra.mxu0 %v5184
        %5228 = vmatprep.subr.bf16.mxu0 0
        %5229 = vmatpush1.bf16.msra.mxu0 %v5185
        %5230 = vmatprep.subr.bf16.mxu0 0
        %5231 = vmatpush1.bf16.msra.mxu0 %v5186
        %5232 = vmatprep.subr.bf16.mxu0 0
        %5233 = vmatpush1.bf16.msra.mxu0 %v5187
        %5234 = vmatprep.subr.bf16.mxu0 0
        %5235 = vmatpush1.bf16.msra.mxu0 %v5188
        %5236 = vmatprep.subr.bf16.mxu0 0
        %5237 = vmatpush1.bf16.msra.mxu0 %v5189
        %5238 = vmatprep.mubr.bf16.mxu0 %v5072
        %5239 = vmatmul.mubr.bf16.gmra.mrb[0].mxu0 %v5071
        %v5240 = vpop.f32.mrb[0].mxu0
        %v5241 = vadd.f32 %v5109, %v5240
        %v5242 = vpop.f32.mrb[0].mxu0
        %v5243 = vpop.f32.mrb[0].mxu0
        %v5244 = vpop.f32.mrb[0].mxu0
        %5245 = vdwg.mxu0
        %v5246 = vmul.f32 %v4996, %v5241
        %v5247 = vpack.c.bf16 %v5246, %v5246
        %s5248 = scalar_lea.vmem [#allocation7], 128
        %v5249 = vld [vmem:[%s5248] sm:$0xf]
        %v5250 = vld [vmem:[%s5248 + $0x4] sm:$0xf]
        %v5251 = vld [vmem:[%s5248 + $0x8] sm:$0xf]
        %v5252 = vld [vmem:[%s5248 + $0xc] sm:$0xf]
        %v5253 = vld [vmem:[%s5248 + $0x10] sm:$0xf]
        %v5254 = vld [vmem:[%s5248 + $0x14] sm:$0xf]
        %v5255 = vld [vmem:[%s5248 + $0x18] sm:$0xf]
        %v5256 = vld [vmem:[%s5248 + $0x1c] sm:$0xf]
        %v5257 = vld [vmem:[%s5248 + $0x20] sm:$0xf]
        %v5258 = vld [vmem:[%s5248 + $0x24] sm:$0xf]
        %v5259 = vld [vmem:[%s5248 + $0x28] sm:$0xf]
        %v5260 = vld [vmem:[%s5248 + $0x2c] sm:$0xf]
        %v5261 = vld [vmem:[%s5248 + $0x30] sm:$0xf]
        %v5262 = vld [vmem:[%s5248 + $0x34] sm:$0xf]
        %v5263 = vld [vmem:[%s5248 + $0x38] sm:$0xf]
        %v5264 = vld [vmem:[%s5248 + $0x3c] sm:$0xf]
        %v5265 = vlaneseq
        %v5266 = vshrl.u32 %v5265, 7
        %v5267 = vsub.s32 2, %v5266
        %v5268 = vrot.slane %v4711, %v5267
        %v5285 = vunpack.c.l.b16 %v5249
        %v5286 = vunpack.c.l.b16 %v5250
        %v5287 = vunpack.c.l.b16 %v5251
        %v5288 = vunpack.c.l.b16 %v5252
        %v5289 = vunpack.c.l.b16 %v5253
        %v5290 = vunpack.c.l.b16 %v5254
        %v5291 = vunpack.c.l.b16 %v5255
        %v5292 = vunpack.c.l.b16 %v5256
        %v5293 = vunpack.c.l.b16 %v5257
        %v5294 = vunpack.c.l.b16 %v5258
        %v5295 = vunpack.c.l.b16 %v5259
        %v5296 = vunpack.c.l.b16 %v5260
        %v5297 = vunpack.c.l.b16 %v5261
        %v5298 = vunpack.c.l.b16 %v5262
        %v5299 = vunpack.c.l.b16 %v5263
        %v5300 = vunpack.c.l.b16 %v5264
        %v5301 = vpack.c.b16 %v5286, %v5285
        %v5302 = vpack.c.b16 %v5288, %v5287
        %v5303 = vpack.c.b16 %v5290, %v5289
        %v5304 = vpack.c.b16 %v5292, %v5291
        %v5305 = vpack.c.b16 %v5294, %v5293
        %v5306 = vpack.c.b16 %v5296, %v5295
        %v5307 = vpack.c.b16 %v5298, %v5297
        %v5308 = vpack.c.b16 %v5300, %v5299
        %5317 = vmatprep.subr.bf16.mxu0 0
        %5318 = vmatpush1.bf16.msra.mxu0 %v5301
        %5319 = vmatprep.subr.bf16.mxu0 0
        %5320 = vmatpush1.bf16.msra.mxu0 %v5302
        %5321 = vmatprep.subr.bf16.mxu0 0
        %5322 = vmatpush1.bf16.msra.mxu0 %v5303
        %5323 = vmatprep.subr.bf16.mxu0 0
        %5324 = vmatpush1.bf16.msra.mxu0 %v5304
        %5325 = vmatprep.subr.bf16.mxu0 0
        %5326 = vmatpush1.bf16.msra.mxu0 %v5305
        %5327 = vmatprep.subr.bf16.mxu0 0
        %5328 = vmatpush1.bf16.msra.mxu0 %v5306
        %5329 = vmatprep.subr.bf16.mxu0 0
        %5330 = vmatpush1.bf16.msra.mxu0 %v5307
        %5331 = vmatprep.subr.bf16.mxu0 0
        %5332 = vmatpush1.bf16.msra.mxu0 %v5308
        %5333 = vmatprep.subr.bf16.mxu0 0
        %5334 = vmatpush1.bf16.msra.mxu0 0
        %5335 = vmatprep.subr.bf16.mxu0 0
        %5336 = vmatpush1.bf16.msra.mxu0 0
        %5337 = vmatprep.subr.bf16.mxu0 0
        %5338 = vmatpush1.bf16.msra.mxu0 0
        %5339 = vmatprep.subr.bf16.mxu0 0
        %5340 = vmatpush1.bf16.msra.mxu0 0
        %5341 = vmatprep.subr.bf16.mxu0 0
        %5342 = vmatpush1.bf16.msra.mxu0 0
        %5343 = vmatprep.subr.bf16.mxu0 0
        %5344 = vmatpush1.bf16.msra.mxu0 0
        %5345 = vmatprep.subr.bf16.mxu0 0
        %5346 = vmatpush1.bf16.msra.mxu0 0
        %5347 = vmatprep.subr.bf16.mxu0 0
        %5348 = vmatpush1.bf16.msra.mxu0 0
        %5349 = vmatprep.mubr.bf16.mxu0 0
        %5350 = vmatmul.mubr.bf16.gmra.mrb[0].mxu0 %v5247
        %v5351 = vpop.f32.mrb[0].mxu0
        %v5352 = vadd.f32 %v5268, %v5351
        %v5353 = vpop.f32.mrb[0].mxu0
        %v5354 = vpop.f32.mrb[0].mxu0
        %v5355 = vpop.f32.mrb[0].mxu0
        %5356 = vdwg.mxu0
        %v5357 = vadd.f32 %v5352, %v4708
        %5358 = vadd.xlane.f32.xlu0 %v5357
        %v5359 = vpop.xlane.xlu0 %5358
        %v5360 = vmul.f32 %v5359, %v4019
        %v5361 = vsub.f32 %v5357, %v5360
        %v5362 = vmul.f32 %v5361, %v5361
        %5363 = vadd.xlane.f32.xlu0 %v5362
        %v5364 = vpop.xlane.xlu0 %5363
        %v5365 = vmul.f32 %v5364, %v4019
        %v5366 = vadd.f32 %v5365, 1e-05
        %v5367 = vrsqrt.pop %v5366
        %v5368 = vmul.f32 %v5361, %v5367
        %v5369 = vlaneseq
        %v5370 = vshrl.u32 %v5369, 7
        %v5371 = vsub.s32 3, %v5370
        %v5372 = vrot.slane %v4711, %v5371
        %v5373 = vmul.f32 %v5368, %v5372
        %v5374 = vlaneseq
        %v5375 = vshrl.u32 %v5374, 7
        %v5376 = vsub.s32 4, %v5375
        %v5377 = vrot.slane %v4711, %v5376
        %v5378 = vadd.f32 %v5373, %v5377
        %s5379 = scalar_lea.vmem [#allocation9], 48
        %v5380 = vld [vmem:[%s5379] sm:$0xff]
        %v5381 = vld [vmem:[%s5379 + $0x8] sm:$0xff]
        %v5383 = vrot.slane %v5380, 1
        %v5385 = vrot.slane %v5380, 2
        %v5387 = vpack.c.bf16 %v5378, %v5378
        %s5388 = scalar_lea.vmem [#allocation4], 576
        %v5389 = vld [vmem:[%s5388] sm:$0xff]
        %v5390 = vld [vmem:[%s5388 + $0x8] sm:$0xf]
        %v5391 = vld [vmem:[%s5388 + $0xc] sm:$0xff]
        %v5392 = vld [vmem:[%s5388 + $0x14] sm:$0xf]
        %v5393 = vld [vmem:[%s5388 + $0x18] sm:$0xff]
        %v5394 = vld [vmem:[%s5388 + $0x20] sm:$0xf]
        %v5395 = vld [vmem:[%s5388 + $0x24] sm:$0xff]
        %v5396 = vld [vmem:[%s5388 + $0x2c] sm:$0xf]
        %v5397 = vld [vmem:[%s5388 + $0x30] sm:$0xff]
        %v5398 = vld [vmem:[%s5388 + $0x38] sm:$0xf]
        %v5399 = vld [vmem:[%s5388 + $0x3c] sm:$0xff]
        %v5400 = vld [vmem:[%s5388 + $0x44] sm:$0xf]
        %v5401 = vld [vmem:[%s5388 + $0x48] sm:$0xff]
        %v5402 = vld [vmem:[%s5388 + $0x50] sm:$0xf]
        %v5403 = vld [vmem:[%s5388 + $0x54] sm:$0xff]
        %v5404 = vld [vmem:[%s5388 + $0x5c] sm:$0xf]
        %v5405 = vld [vmem:[%s5388 + $0x60] sm:$0xff]
        %v5406 = vld [vmem:[%s5388 + $0x68] sm:$0xf]
        %v5407 = vld [vmem:[%s5388 + $0x6c] sm:$0xff]
        %v5408 = vld [vmem:[%s5388 + $0x74] sm:$0xf]
        %v5409 = vld [vmem:[%s5388 + $0x78] sm:$0xff]
        %v5410 = vld [vmem:[%s5388 + $0x80] sm:$0xf]
        %v5411 = vld [vmem:[%s5388 + $0x84] sm:$0xff]
        %v5412 = vld [vmem:[%s5388 + $0x8c] sm:$0xf]
        %v5413 = vld [vmem:[%s5388 + $0x90] sm:$0xff]
        %v5414 = vld [vmem:[%s5388 + $0x98] sm:$0xf]
        %v5415 = vld [vmem:[%s5388 + $0x9c] sm:$0xff]
        %v5416 = vld [vmem:[%s5388 + $0xa4] sm:$0xf]
        %v5417 = vld [vmem:[%s5388 + $0xa8] sm:$0xff]
        %v5418 = vld [vmem:[%s5388 + $0xb0] sm:$0xf]
        %v5419 = vld [vmem:[%s5388 + $0xb4] sm:$0xff]
        %v5420 = vld [vmem:[%s5388 + $0xbc] sm:$0xf]
        %v5421 = vlaneseq
        %v5422 = vshrl.u32 %v5421, 7
        %v5423 = vsub.s32 0, %v5422
        %v5424 = vrot.slane %v5380, %v5423
        %v5425 = vlaneseq
        %v5426 = vshrl.u32 %v5425, 7
        %v5427 = vsub.s32 0, %v5426
        %v5428 = vrot.slane %v5383, %v5427
        %v5429 = vlaneseq
        %v5430 = vshrl.u32 %v5429, 7
        %v5431 = vsub.s32 0, %v5430
        %v5432 = vrot.slane %v5385, %v5431
        %v5465 = vunpack.c.l.b16 %v5389
        %v5466 = vunpack.c.h.b16 %v5389
        %v5467 = vunpack.c.l.b16 %v5390
        %v5468 = vunpack.c.l.b16 %v5391
        %v5469 = vunpack.c.h.b16 %v5391
        %v5470 = vunpack.c.l.b16 %v5392
        %v5471 = vunpack.c.l.b16 %v5393
        %v5472 = vunpack.c.h.b16 %v5393
        %v5473 = vunpack.c.l.b16 %v5394
        %v5474 = vunpack.c.l.b16 %v5395
        %v5475 = vunpack.c.h.b16 %v5395
        %v5476 = vunpack.c.l.b16 %v5396
        %v5477 = vunpack.c.l.b16 %v5397
        %v5478 = vunpack.c.h.b16 %v5397
        %v5479 = vunpack.c.l.b16 %v5398
        %v5480 = vunpack.c.l.b16 %v5399
        %v5481 = vunpack.c.h.b16 %v5399
        %v5482 = vunpack.c.l.b16 %v5400
        %v5483 = vunpack.c.l.b16 %v5401
        %v5484 = vunpack.c.h.b16 %v5401
        %v5485 = vunpack.c.l.b16 %v5402
        %v5486 = vunpack.c.l.b16 %v5403
        %v5487 = vunpack.c.h.b16 %v5403
        %v5488 = vunpack.c.l.b16 %v5404
        %v5489 = vunpack.c.l.b16 %v5405
        %v5490 = vunpack.c.h.b16 %v5405
        %v5491 = vunpack.c.l.b16 %v5406
        %v5492 = vunpack.c.l.b16 %v5407
        %v5493 = vunpack.c.h.b16 %v5407
        %v5494 = vunpack.c.l.b16 %v5408
        %v5495 = vunpack.c.l.b16 %v5409
        %v5496 = vunpack.c.h.b16 %v5409
        %v5497 = vunpack.c.l.b16 %v5410
        %v5498 = vunpack.c.l.b16 %v5411
        %v5499 = vunpack.c.h.b16 %v5411
        %v5500 = vunpack.c.l.b16 %v5412
        %v5501 = vunpack.c.l.b16 %v5413
        %v5502 = vunpack.c.h.b16 %v5413
        %v5503 = vunpack.c.l.b16 %v5414
        %v5504 = vunpack.c.l.b16 %v5415
        %v5505 = vunpack.c.h.b16 %v5415
        %v5506 = vunpack.c.l.b16 %v5416
        %v5507 = vunpack.c.l.b16 %v5417
        %v5508 = vunpack.c.h.b16 %v5417
        %v5509 = vunpack.c.l.b16 %v5418
        %v5510 = vunpack.c.l.b16 %v5419
        %v5511 = vunpack.c.h.b16 %v5419
        %v5512 = vunpack.c.l.b16 %v5420
        %v5513 = vpack.c.b16 %v5468, %v5465
        %v5514 = vpack.c.b16 %v5469, %v5466
        %v5515 = vpack.c.b16 %v5470, %v5467
        %v5516 = vpack.c.b16 %v5474, %v5471
        %v5517 = vpack.c.b16 %v5475, %v5472
        %v5518 = vpack.c.b16 %v5476, %v5473
        %v5519 = vpack.c.b16 %v5480, %v5477
        %v5520 = vpack.c.b16 %v5481, %v5478
        %v5521 = vpack.c.b16 %v5482, %v5479
        %v5522 = vpack.c.b16 %v5486, %v5483
        %v5523 = vpack.c.b16 %v5487, %v5484
        %v5524 = vpack.c.b16 %v5488, %v5485
        %v5525 = vpack.c.b16 %v5492, %v5489
        %v5526 = vpack.c.b16 %v5493, %v5490
        %v5527 = vpack.c.b16 %v5494, %v5491
        %v5528 = vpack.c.b16 %v5498, %v5495
        %v5529 = vpack.c.b16 %v5499, %v5496
        %v5530 = vpack.c.b16 %v5500, %v5497
        %v5531 = vpack.c.b16 %v5504, %v5501
        %v5532 = vpack.c.b16 %v5505, %v5502
        %v5533 = vpack.c.b16 %v5506, %v5503
        %v5534 = vpack.c.b16 %v5510, %v5507
        %v5535 = vpack.c.b16 %v5511, %v5508
        %v5536 = vpack.c.b16 %v5512, %v5509
        %5561 = vmatprep.subr.bf16.mxu0 %v5514
        %5562 = vmatpush1.bf16.msra.mxu0 %v5513
        %5563 = vmatprep.subr.bf16.mxu0 %v5517
        %5564 = vmatpush1.bf16.msra.mxu0 %v5516
        %5565 = vmatprep.subr.bf16.mxu0 %v5520
        %5566 = vmatpush1.bf16.msra.mxu0 %v5519
        %5567 = vmatprep.subr.bf16.mxu0 %v5523
        %5568 = vmatpush1.bf16.msra.mxu0 %v5522
        %5569 = vmatprep.subr.bf16.mxu0 %v5526
        %5570 = vmatpush1.bf16.msra.mxu0 %v5525
        %5571 = vmatprep.subr.bf16.mxu0 %v5529
        %5572 = vmatpush1.bf16.msra.mxu0 %v5528
        %5573 = vmatprep.subr.bf16.mxu0 %v5532
        %5574 = vmatpush1.bf16.msra.mxu0 %v5531
        %5575 = vmatprep.subr.bf16.mxu0 %v5535
        %5576 = vmatpush1.bf16.msra.mxu0 %v5534
        %5577 = vmatprep.subr.bf16.mxu0 0
        %5578 = vmatpush1.bf16.msra.mxu0 0
        %5579 = vmatprep.subr.bf16.mxu0 0
        %5580 = vmatpush1.bf16.msra.mxu0 0
        %5581 = vmatprep.subr.bf16.mxu0 0
        %5582 = vmatpush1.bf16.msra.mxu0 0
        %5583 = vmatprep.subr.bf16.mxu0 0
        %5584 = vmatpush1.bf16.msra.mxu0 0
        %5585 = vmatprep.subr.bf16.mxu0 0
        %5586 = vmatpush1.bf16.msra.mxu0 0
        %5587 = vmatprep.subr.bf16.mxu0 0
        %5588 = vmatpush1.bf16.msra.mxu0 0
        %5589 = vmatprep.subr.bf16.mxu0 0
        %5590 = vmatpush1.bf16.msra.mxu0 0
        %5591 = vmatprep.subr.bf16.mxu0 0
        %5592 = vmatpush1.bf16.msra.mxu0 0
        %5593 = vmatprep.mubr.bf16.mxu0 0
        %5594 = vmatmul.mubr.bf16.gmra.mrb[0].mxu0 %v5387
        %v5595 = vpop.f32.mrb[0].mxu0
        %v5596 = vadd.f32 %v5424, %v5595
        %v5597 = vpop.f32.mrb[0].mxu0
        %v5598 = vadd.f32 %v5428, %v5597
        %v5599 = vpop.f32.mrb[0].mxu0
        %v5600 = vpop.f32.mrb[0].mxu0
        %5601 = vdwg.mxu0
        %5602 = vmatprep.subr.bf16.mxu0 0
        %5603 = vmatpush1.bf16.msra.mxu0 %v5515
        %5604 = vmatprep.subr.bf16.mxu0 0
        %5605 = vmatpush1.bf16.msra.mxu0 %v5518
        %5606 = vmatprep.subr.bf16.mxu0 0
        %5607 = vmatpush1.bf16.msra.mxu0 %v5521
        %5608 = vmatprep.subr.bf16.mxu0 0
        %5609 = vmatpush1.bf16.msra.mxu0 %v5524
        %5610 = vmatprep.subr.bf16.mxu0 0
        %5611 = vmatpush1.bf16.msra.mxu0 %v5527
        %5612 = vmatprep.subr.bf16.mxu0 0
        %5613 = vmatpush1.bf16.msra.mxu0 %v5530
        %5614 = vmatprep.subr.bf16.mxu0 0
        %5615 = vmatpush1.bf16.msra.mxu0 %v5533
        %5616 = vmatprep.subr.bf16.mxu0 0
        %5617 = vmatpush1.bf16.msra.mxu0 %v5536
        %5618 = vmatprep.subr.bf16.mxu0 0
        %5619 = vmatpush1.bf16.msra.mxu0 0
        %5620 = vmatprep.subr.bf16.mxu0 0
        %5621 = vmatpush1.bf16.msra.mxu0 0
        %5622 = vmatprep.subr.bf16.mxu0 0
        %5623 = vmatpush1.bf16.msra.mxu0 0
        %5624 = vmatprep.subr.bf16.mxu0 0
        %5625 = vmatpush1.bf16.msra.mxu0 0
        %5626 = vmatprep.subr.bf16.mxu0 0
        %5627 = vmatpush1.bf16.msra.mxu0 0
        %5628 = vmatprep.subr.bf16.mxu0 0
        %5629 = vmatpush1.bf16.msra.mxu0 0
        %5630 = vmatprep.subr.bf16.mxu0 0
        %5631 = vmatpush1.bf16.msra.mxu0 0
        %5632 = vmatprep.subr.bf16.mxu0 0
        %5633 = vmatpush1.bf16.msra.mxu0 0
        %5634 = vmatprep.mubr.bf16.mxu0 0
        %5635 = vmatmul.mubr.bf16.gmra.mrb[0].mxu0 %v5387
        %v5636 = vpop.f32.mrb[0].mxu0
        %v5637 = vadd.f32 %v5432, %v5636
        %v5638 = vpop.f32.mrb[0].mxu0
        %v5639 = vpop.f32.mrb[0].mxu0
        %v5640 = vpop.f32.mrb[0].mxu0
        %5641 = vdwg.mxu0
        %v5642 = vmul.f32 %v5596, %v5596
        %v5643 = vmul.f32 %v5598, %v5598
        %v5644 = vmul.f32 %v5637, %v5637
        %v5645 = vmul.f32 %v5596, %v5642
        %v5646 = vmul.f32 %v5598, %v5643
        %v5647 = vmul.f32 %v5637, %v5644
        %v5648 = vmul.f32 %v5645, 0.044715
        %v5649 = vmul.f32 %v5646, 0.044715
        %v5650 = vmul.f32 %v5647, 0.044715
        %v5651 = vadd.f32 %v5596, %v5648
        %v5652 = vadd.f32 %v5598, %v5649
        %v5653 = vadd.f32 %v5637, %v5650
        %v5654 = vmul.f32 %v5651, 0.7978846
        %v5655 = vmul.f32 %v5652, 0.7978846
        %v5656 = vmul.f32 %v5653, 0.7978846
        %v5657 = vtanh.pop %v5654
        %v5658 = vtanh.pop %v5655
        %v5659 = vtanh.pop %v5656
        %v5660 = vadd.f32 %v5657, 1.0
        %v5661 = vadd.f32 %v5658, 1.0
        %v5662 = vadd.f32 %v5659, 1.0
        %v5663 = vmul.f32 %v5660, 0.5
        %v5664 = vmul.f32 %v5661, 0.5
        %v5665 = vmul.f32 %v5662, 0.5
        %v5666 = vmul.f32 %v5596, %v5663
        %v5667 = vmul.f32 %v5598, %v5664
        %v5668 = vmul.f32 %v5637, %v5665
        %v5669 = vrot.slane %v5667, 7
        %v5670 = vsel %vm3654, %v5669, 0.0
        %v5671 = vlaneseq
        %v5672 = vshrl.u32 %v5671, 7
        %v5673 = vsub.s32 3, %v5672
        %v5674 = vrot.slane %v5380, %v5673
        %v5675 = vmul.f32 %v5674, %v5670
        %v5676 = vadd.f32 %v5667, %v5675
        %v5677 = vmul.f32 %v5380, %v5380
        %v5678 = vrot.slane %v5676, 6
        %v5679 = vsel %vm3664, %v5678, 0.0
        %v5680 = vlaneseq
        %v5681 = vshrl.u32 %v5680, 7
        %v5682 = vsub.s32 3, %v5681
        %v5683 = vrot.slane %v5677, %v5682
        %v5684 = vmul.f32 %v5683, %v5679
        %v5685 = vadd.f32 %v5676, %v5684
        %v5686 = vmul.f32 %v5677, %v5677
        %v5687 = vrot.slane %v5685, 4
        %v5688 = vsel %vm3674, %v5687, 0.0
        %v5689 = vlaneseq
        %v5690 = vshrl.u32 %v5689, 7
        %v5691 = vsub.s32 3, %v5690
        %v5692 = vrot.slane %v5686, %v5691
        %v5693 = vmul.f32 %v5692, %v5688
        %v5694 = vadd.f32 %v5685, %v5693
        %v5695 = vlaneseq
        %v5696 = vshrl.u32 %v5695, 7
        %v5697 = vsub.s32 4, %v5696
        %v5698 = vrot.slane %v5380, %v5697
        %v5699 = vmul.f32 %v5698, %v5694
        %v5700 = vlaneseq
        %v5701 = vshrl.u32 %v5700, 7
        %v5702 = vsub.s32 5, %v5701
        %v5703 = vrot.slane %v5380, %v5702
        %v5704 = vmul.f32 %v5703, %v5667
        %v5705 = vadd.f32 %v5699, %v5704
        %v5706 = vrot.slane %v5668, 1
        %v5707 = vsel %vm3694, %v5706, 0.0
        %v5708 = vlaneseq
        %v5709 = vshrl.u32 %v5708, 7
        %v5710 = vsub.s32 6, %v5709
        %v5711 = vrot.slane %v5380, %v5710
        %v5712 = vmul.f32 %v5711, %v5707
        %v5713 = vadd.f32 %v5668, %v5712
        %v5714 = vrot.slane %v5713, 2
        %v5715 = vsel %vm3703, %v5714, 0.0
        %v5716 = vlaneseq
        %v5717 = vshrl.u32 %v5716, 7
        %v5718 = vsub.s32 6, %v5717
        %v5719 = vrot.slane %v5677, %v5718
        %v5720 = vmul.f32 %v5719, %v5715
        %v5721 = vadd.f32 %v5713, %v5720
        %v5722 = vrot.slane %v5721, 4
        %v5723 = vsel %vm3712, %v5722, 0.0
        %v5724 = vlaneseq
        %v5725 = vshrl.u32 %v5724, 7
        %v5726 = vsub.s32 6, %v5725
        %v5727 = vrot.slane %v5686, %v5726
        %v5728 = vmul.f32 %v5727, %v5723
        %v5729 = vadd.f32 %v5721, %v5728
        %v5730 = vlaneseq
        %v5731 = vshrl.u32 %v5730, 7
        %v5732 = vsub.s32 7, %v5731
        %v5733 = vrot.slane %v5380, %v5732
        %v5734 = vmul.f32 %v5733, %v5729
        %v5735 = vlaneseq
        %v5736 = vshrl.u32 %v5735, 7
        %v5737 = vsub.s32 0, %v5736
        %v5738 = vrot.slane %v5381, %v5737
        %v5739 = vmul.f32 %v5738, %v5668
        %v5740 = vadd.f32 %v5734, %v5739
        %v5741 = vpack.c.bf16 %v5705, %v5705
        %v5742 = vpack.c.bf16 %v5740, %v5740
        %s5743 = scalar_lea.vmem [#allocation6], 384
        %v5744 = vld [vmem:[%s5743] sm:$0xf]
        %v5745 = vld [vmem:[%s5743 + $0x4] sm:$0xf]
        %v5746 = vld [vmem:[%s5743 + $0x8] sm:$0xf]
        %v5747 = vld [vmem:[%s5743 + $0xc] sm:$0xf]
        %v5748 = vld [vmem:[%s5743 + $0x10] sm:$0xf]
        %v5749 = vld [vmem:[%s5743 + $0x14] sm:$0xf]
        %v5750 = vld [vmem:[%s5743 + $0x18] sm:$0xf]
        %v5751 = vld [vmem:[%s5743 + $0x1c] sm:$0xf]
        %v5752 = vld [vmem:[%s5743 + $0x20] sm:$0xf]
        %v5753 = vld [vmem:[%s5743 + $0x24] sm:$0xf]
        %v5754 = vld [vmem:[%s5743 + $0x28] sm:$0xf]
        %v5755 = vld [vmem:[%s5743 + $0x2c] sm:$0xf]
        %v5756 = vld [vmem:[%s5743 + $0x30] sm:$0xf]
        %v5757 = vld [vmem:[%s5743 + $0x34] sm:$0xf]
        %v5758 = vld [vmem:[%s5743 + $0x38] sm:$0xf]
        %v5759 = vld [vmem:[%s5743 + $0x3c] sm:$0xf]
        %v5760 = vld [vmem:[%s5743 + $0x40] sm:$0xf]
        %v5761 = vld [vmem:[%s5743 + $0x44] sm:$0xf]
        %v5762 = vld [vmem:[%s5743 + $0x48] sm:$0xf]
        %v5763 = vld [vmem:[%s5743 + $0x4c] sm:$0xf]
        %v5764 = vld [vmem:[%s5743 + $0x50] sm:$0xf]
        %v5765 = vld [vmem:[%s5743 + $0x54] sm:$0xf]
        %v5766 = vld [vmem:[%s5743 + $0x58] sm:$0xf]
        %v5767 = vld [vmem:[%s5743 + $0x5c] sm:$0xf]
        %v5768 = vld [vmem:[%s5743 + $0x60] sm:$0xf]
        %v5769 = vld [vmem:[%s5743 + $0x64] sm:$0xf]
        %v5770 = vld [vmem:[%s5743 + $0x68] sm:$0xf]
        %v5771 = vld [vmem:[%s5743 + $0x6c] sm:$0xf]
        %v5772 = vld [vmem:[%s5743 + $0x70] sm:$0xf]
        %v5773 = vld [vmem:[%s5743 + $0x74] sm:$0xf]
        %v5774 = vld [vmem:[%s5743 + $0x78] sm:$0xf]
        %v5775 = vld [vmem:[%s5743 + $0x7c] sm:$0xf]
        %v5776 = vlaneseq
        %v5777 = vshrl.u32 %v5776, 7
        %v5778 = vsub.s32 1, %v5777
        %v5779 = vrot.slane %v5381, %v5778
        %v5812 = vunpack.c.l.b16 %v5744
        %v5813 = vunpack.c.l.b16 %v5745
        %v5814 = vunpack.c.l.b16 %v5746
        %v5815 = vunpack.c.l.b16 %v5747
        %v5816 = vunpack.c.l.b16 %v5748
        %v5817 = vunpack.c.l.b16 %v5749
        %v5818 = vunpack.c.l.b16 %v5750
        %v5819 = vunpack.c.l.b16 %v5751
        %v5820 = vunpack.c.l.b16 %v5752
        %v5821 = vunpack.c.l.b16 %v5753
        %v5822 = vunpack.c.l.b16 %v5754
        %v5823 = vunpack.c.l.b16 %v5755
        %v5824 = vunpack.c.l.b16 %v5756
        %v5825 = vunpack.c.l.b16 %v5757
        %v5826 = vunpack.c.l.b16 %v5758
        %v5827 = vunpack.c.l.b16 %v5759
        %v5828 = vunpack.c.l.b16 %v5760
        %v5829 = vunpack.c.l.b16 %v5761
        %v5830 = vunpack.c.l.b16 %v5762
        %v5831 = vunpack.c.l.b16 %v5763
        %v5832 = vunpack.c.l.b16 %v5764
        %v5833 = vunpack.c.l.b16 %v5765
        %v5834 = vunpack.c.l.b16 %v5766
        %v5835 = vunpack.c.l.b16 %v5767
        %v5836 = vunpack.c.l.b16 %v5768
        %v5837 = vunpack.c.l.b16 %v5769
        %v5838 = vunpack.c.l.b16 %v5770
        %v5839 = vunpack.c.l.b16 %v5771
        %v5840 = vunpack.c.l.b16 %v5772
        %v5841 = vunpack.c.l.b16 %v5773
        %v5842 = vunpack.c.l.b16 %v5774
        %v5843 = vunpack.c.l.b16 %v5775
        %v5844 = vpack.c.b16 %v5813, %v5812
        %v5845 = vpack.c.b16 %v5815, %v5814
        %v5846 = vpack.c.b16 %v5817, %v5816
        %v5847 = vpack.c.b16 %v5819, %v5818
        %v5848 = vpack.c.b16 %v5821, %v5820
        %v5849 = vpack.c.b16 %v5823, %v5822
        %v5850 = vpack.c.b16 %v5825, %v5824
        %v5851 = vpack.c.b16 %v5827, %v5826
        %v5852 = vpack.c.b16 %v5829, %v5828
        %v5853 = vpack.c.b16 %v5831, %v5830
        %v5854 = vpack.c.b16 %v5833, %v5832
        %v5855 = vpack.c.b16 %v5835, %v5834
        %v5856 = vpack.c.b16 %v5837, %v5836
        %v5857 = vpack.c.b16 %v5839, %v5838
        %v5858 = vpack.c.b16 %v5841, %v5840
        %v5859 = vpack.c.b16 %v5843, %v5842
        %5876 = vmatprep.subr.bf16.mxu0 0
        %5877 = vmatpush1.bf16.msra.mxu0 %v5844
        %5878 = vmatprep.subr.bf16.mxu0 0
        %5879 = vmatpush1.bf16.msra.mxu0 %v5845
        %5880 = vmatprep.subr.bf16.mxu0 0
        %5881 = vmatpush1.bf16.msra.mxu0 %v5846
        %5882 = vmatprep.subr.bf16.mxu0 0
        %5883 = vmatpush1.bf16.msra.mxu0 %v5847
        %5884 = vmatprep.subr.bf16.mxu0 0
        %5885 = vmatpush1.bf16.msra.mxu0 %v5848
        %5886 = vmatprep.subr.bf16.mxu0 0
        %5887 = vmatpush1.bf16.msra.mxu0 %v5849
        %5888 = vmatprep.subr.bf16.mxu0 0
        %5889 = vmatpush1.bf16.msra.mxu0 %v5850
        %5890 = vmatprep.subr.bf16.mxu0 0
        %5891 = vmatpush1.bf16.msra.mxu0 %v5851
        %5892 = vmatprep.subr.bf16.mxu0 0
        %5893 = vmatpush1.bf16.msra.mxu0 %v5852
        %5894 = vmatprep.subr.bf16.mxu0 0
        %5895 = vmatpush1.bf16.msra.mxu0 %v5853
        %5896 = vmatprep.subr.bf16.mxu0 0
        %5897 = vmatpush1.bf16.msra.mxu0 %v5854
        %5898 = vmatprep.subr.bf16.mxu0 0
        %5899 = vmatpush1.bf16.msra.mxu0 %v5855
        %5900 = vmatprep.subr.bf16.mxu0 0
        %5901 = vmatpush1.bf16.msra.mxu0 %v5856
        %5902 = vmatprep.subr.bf16.mxu0 0
        %5903 = vmatpush1.bf16.msra.mxu0 %v5857
        %5904 = vmatprep.subr.bf16.mxu0 0
        %5905 = vmatpush1.bf16.msra.mxu0 %v5858
        %5906 = vmatprep.subr.bf16.mxu0 0
        %5907 = vmatpush1.bf16.msra.mxu0 %v5859
        %5908 = vmatprep.mubr.bf16.mxu0 %v5742
        %5909 = vmatmul.mubr.bf16.gmra.mrb[0].mxu0 %v5741
        %v5910 = vpop.f32.mrb[0].mxu0
        %v5911 = vadd.f32 %v5779, %v5910
        %v5912 = vpop.f32.mrb[0].mxu0
        %v5913 = vpop.f32.mrb[0].mxu0
        %v5914 = vpop.f32.mrb[0].mxu0
        %5915 = vdwg.mxu0
        %v5916 = vmul.f32 %v5666, %v5911
        %v5917 = vpack.c.bf16 %v5916, %v5916
        %s5918 = scalar_lea.vmem [#allocation7], 192
        %v5919 = vld [vmem:[%s5918] sm:$0xf]
        %v5920 = vld [vmem:[%s5918 + $0x4] sm:$0xf]
        %v5921 = vld [vmem:[%s5918 + $0x8] sm:$0xf]
        %v5922 = vld [vmem:[%s5918 + $0xc] sm:$0xf]
        %v5923 = vld [vmem:[%s5918 + $0x10] sm:$0xf]
        %v5924 = vld [vmem:[%s5918 + $0x14] sm:$0xf]
        %v5925 = vld [vmem:[%s5918 + $0x18] sm:$0xf]
        %v5926 = vld [vmem:[%s5918 + $0x1c] sm:$0xf]
        %v5927 = vld [vmem:[%s5918 + $0x20] sm:$0xf]
        %v5928 = vld [vmem:[%s5918 + $0x24] sm:$0xf]
        %v5929 = vld [vmem:[%s5918 + $0x28] sm:$0xf]
        %v5930 = vld [vmem:[%s5918 + $0x2c] sm:$0xf]
        %v5931 = vld [vmem:[%s5918 + $0x30] sm:$0xf]
        %v5932 = vld [vmem:[%s5918 + $0x34] sm:$0xf]
        %v5933 = vld [vmem:[%s5918 + $0x38] sm:$0xf]
        %v5934 = vld [vmem:[%s5918 + $0x3c] sm:$0xf]
        %v5935 = vlaneseq
        %v5936 = vshrl.u32 %v5935, 7
        %v5937 = vsub.s32 2, %v5936
        %v5938 = vrot.slane %v5381, %v5937
        %v5955 = vunpack.c.l.b16 %v5919
        %v5956 = vunpack.c.l.b16 %v5920
        %v5957 = vunpack.c.l.b16 %v5921
        %v5958 = vunpack.c.l.b16 %v5922
        %v5959 = vunpack.c.l.b16 %v5923
        %v5960 = vunpack.c.l.b16 %v5924
        %v5961 = vunpack.c.l.b16 %v5925
        %v5962 = vunpack.c.l.b16 %v5926
        %v5963 = vunpack.c.l.b16 %v5927
        %v5964 = vunpack.c.l.b16 %v5928
        %v5965 = vunpack.c.l.b16 %v5929
        %v5966 = vunpack.c.l.b16 %v5930
        %v5967 = vunpack.c.l.b16 %v5931
        %v5968 = vunpack.c.l.b16 %v5932
        %v5969 = vunpack.c.l.b16 %v5933
        %v5970 = vunpack.c.l.b16 %v5934
        %v5971 = vpack.c.b16 %v5956, %v5955
        %v5972 = vpack.c.b16 %v5958, %v5957
        %v5973 = vpack.c.b16 %v5960, %v5959
        %v5974 = vpack.c.b16 %v5962, %v5961
        %v5975 = vpack.c.b16 %v5964, %v5963
        %v5976 = vpack.c.b16 %v5966, %v5965
        %v5977 = vpack.c.b16 %v5968, %v5967
        %v5978 = vpack.c.b16 %v5970, %v5969
        %5987 = vmatprep.subr.bf16.mxu0 0
        %5988 = vmatpush1.bf16.msra.mxu0 %v5971
        %5989 = vmatprep.subr.bf16.mxu0 0
        %5990 = vmatpush1.bf16.msra.mxu0 %v5972
        %5991 = vmatprep.subr.bf16.mxu0 0
        %5992 = vmatpush1.bf16.msra.mxu0 %v5973
        %5993 = vmatprep.subr.bf16.mxu0 0
        %5994 = vmatpush1.bf16.msra.mxu0 %v5974
        %5995 = vmatprep.subr.bf16.mxu0 0
        %5996 = vmatpush1.bf16.msra.mxu0 %v5975
        %5997 = vmatprep.subr.bf16.mxu0 0
        %5998 = vmatpush1.bf16.msra.mxu0 %v5976
        %5999 = vmatprep.subr.bf16.mxu0 0
        %6000 = vmatpush1.bf16.msra.mxu0 %v5977
        %6001 = vmatprep.subr.bf16.mxu0 0
        %6002 = vmatpush1.bf16.msra.mxu0 %v5978
        %6003 = vmatprep.subr.bf16.mxu0 0
        %6004 = vmatpush1.bf16.msra.mxu0 0
        %6005 = vmatprep.subr.bf16.mxu0 0
        %6006 = vmatpush1.bf16.msra.mxu0 0
        %6007 = vmatprep.subr.bf16.mxu0 0
        %6008 = vmatpush1.bf16.msra.mxu0 0
        %6009 = vmatprep.subr.bf16.mxu0 0
        %6010 = vmatpush1.bf16.msra.mxu0 0
        %6011 = vmatprep.subr.bf16.mxu0 0
        %6012 = vmatpush1.bf16.msra.mxu0 0
        %6013 = vmatprep.subr.bf16.mxu0 0
        %6014 = vmatpush1.bf16.msra.mxu0 0
        %6015 = vmatprep.subr.bf16.mxu0 0
        %6016 = vmatpush1.bf16.msra.mxu0 0
        %6017 = vmatprep.subr.bf16.mxu0 0
        %6018 = vmatpush1.bf16.msra.mxu0 0
        %6019 = vmatprep.mubr.bf16.mxu0 0
        %6020 = vmatmul.mubr.bf16.gmra.mrb[0].mxu0 %v5917
        %v6021 = vpop.f32.mrb[0].mxu0
        %v6022 = vadd.f32 %v5938, %v6021
        %v6023 = vpop.f32.mrb[0].mxu0
        %v6024 = vpop.f32.mrb[0].mxu0
        %v6025 = vpop.f32.mrb[0].mxu0
        %6026 = vdwg.mxu0
        %v6027 = vadd.f32 %v6022, %v5378
        %6028 = vadd.xlane.f32.xlu0 %v6027
        %v6029 = vpop.xlane.xlu0 %6028
        %v6030 = vmul.f32 %v6029, %v4019
        %v6031 = vsub.f32 %v6027, %v6030
        %v6032 = vmul.f32 %v6031, %v6031
        %6033 = vadd.xlane.f32.xlu0 %v6032
        %v6034 = vpop.xlane.xlu0 %6033
        %v6035 = vmul.f32 %v6034, %v4019
        %v6036 = vadd.f32 %v6035, 1e-05
        %v6037 = vrsqrt.pop %v6036
        %v6038 = vmul.f32 %v6031, %v6037
        %v6039 = vlaneseq
        %v6040 = vshrl.u32 %v6039, 7
        %v6041 = vsub.s32 3, %v6040
        %v6042 = vrot.slane %v5381, %v6041
        %v6043 = vmul.f32 %v6038, %v6042
        %v6044 = vlaneseq
        %v6045 = vshrl.u32 %v6044, 7
        %v6046 = vsub.s32 4, %v6045
        %v6047 = vrot.slane %v5381, %v6046
        %v6048 = vadd.f32 %v6043, %v6047
        %6049 = vxpose.xlu0.b32.start [1/16] %v6048, 128
        %6050 = vxpose.xlu0.b32.cont [2/16] 0.0, 128
        %6051 = vxpose.xlu0.b32.cont [3/16] 0.0, 128
        %6052 = vxpose.xlu0.b32.cont [4/16] 0.0, 128
        %6053 = vxpose.xlu0.b32.cont [5/16] 0.0, 128
        %6054 = vxpose.xlu0.b32.cont [6/16] 0.0, 128
        %6055 = vxpose.xlu0.b32.cont [7/16] 0.0, 128
        %6056 = vxpose.xlu0.b32.cont [8/16] 0.0, 128
        %6057 = vxpose.xlu0.b32.cont [9/16] 0.0, 128
        %6058 = vxpose.xlu0.b32.cont [10/16] 0.0, 128
        %6059 = vxpose.xlu0.b32.cont [11/16] 0.0, 128
        %6060 = vxpose.xlu0.b32.cont [12/16] 0.0, 128
        %6061 = vxpose.xlu0.b32.cont [13/16] 0.0, 128
        %6062 = vxpose.xlu0.b32.cont [14/16] 0.0, 128
        %6063 = vxpose.xlu0.b32.cont [15/16] 0.0, 128
        %6064 = vxpose.xlu0.b32.end [16/16] 0.0, 128
        %v6065 = vpop.trf.xlu0
        %v6066 = vpop.trf.xlu0
        %v6067 = vpop.trf.xlu0
        %v6068 = vpop.trf.xlu0
        %v6069 = vpop.trf.xlu0
        %v6070 = vpop.trf.xlu0
        %v6071 = vpop.trf.xlu0
        %v6072 = vpop.trf.xlu0
        %v6073 = vpop.trf.xlu0
        %v6074 = vpop.trf.xlu0
        %v6075 = vpop.trf.xlu0
        %v6076 = vpop.trf.xlu0
        %v6077 = vpop.trf.xlu0
        %v6078 = vpop.trf.xlu0
        %v6079 = vpop.trf.xlu0
        %v6080 = vpop.trf.xlu0
        %6081 = vst.msk [vmem:[%s432] sm:$0xff] %vm462, %v6065
        %6082 = vst.msk [vmem:[%s432 + $0x8] sm:$0xff] %vm462, %v6066
        %6083 = vst.msk [vmem:[%s432 + $0x10] sm:$0xff] %vm462, %v6067
        %6084 = vst.msk [vmem:[%s432 + $0x18] sm:$0xff] %vm462, %v6068
        %6085 = vst.msk [vmem:[%s432 + $0x20] sm:$0xff] %vm462, %v6069
        %6086 = vst.msk [vmem:[%s432 + $0x28] sm:$0xff] %vm462, %v6070
        %6087 = vst.msk [vmem:[%s432 + $0x30] sm:$0xff] %vm462, %v6071
        %6088 = vst.msk [vmem:[%s432 + $0x38] sm:$0xff] %vm462, %v6072
        %6089 = vst.msk [vmem:[%s432 + $0x40] sm:$0xff] %vm462, %v6073
        %6090 = vst.msk [vmem:[%s432 + $0x48] sm:$0xff] %vm462, %v6074
        %6091 = vst.msk [vmem:[%s432 + $0x50] sm:$0xff] %vm462, %v6075
        %6092 = vst.msk [vmem:[%s432 + $0x58] sm:$0xff] %vm462, %v6076
        %6093 = vst.msk [vmem:[%s432 + $0x60] sm:$0xff] %vm462, %v6077
        %6094 = vst.msk [vmem:[%s432 + $0x68] sm:$0xff] %vm462, %v6078
        %6095 = vst.msk [vmem:[%s432 + $0x70] sm:$0xff] %vm462, %v6079
        %6096 = vst.msk [vmem:[%s432 + $0x78] sm:$0xff] %vm462, %v6080
        %p6097 = scmp.lt.s32.totalorder %s24, 1
        %s6098 = scalar_select %p6097, %s24, 1
        %s6099 = smul.addr %s6098, 16
        %s6100 = smul.addr %s6099, 8
        %s6101 = scalar_lea.vmem %s10, %s6100
        // Predicated region
        $region81: #{forward.1} parent=59 // pred_check
          %p6102 = pneg %p257
        $region82: #{forward.1} parent=59 // pred_check_branch
          %6104 = sbr.rel (%p6102) target = $region84
        $region83: #{forward.1} parent=59 // pred_region
          _
        $region84: #{forward.1} parent=59 // pred_fallthru
          _
      $region60: #{forward.1} parent=5 // pred_fallthru
        _
      %p6105 = scmp.le.s32.totalorder 2, %s19
      // Predicated region
      $region85: #{forward.1} parent=5 // pred_check
        %p6106 = pneg %p6105
      $region86: #{forward.1} parent=5 // pred_check_branch
        %6108 = sbr.rel (%p6106) target = $region88
      $region87: #{forward.1} parent=5 // pred_region
        %s6109 = ssub.s32 %s19, 2
        // Predicated region
        $region89: #{forward.1} parent=87 // pred_check
          %p6110 = pneg %p263
        $region90: #{forward.1} parent=87 // pred_check_branch
          %6112 = sbr.rel (%p6110) target = $region92
        $region91: #{forward.1} parent=87 // pred_region
          %p6113 = scmp.lt.s32.totalorder %s25, 1
          %s6114 = scalar_select %p6113, %s25, 1
          %s6115 = smul.addr %s6114, 16
          %s6116 = smul.addr %s6115, 8
          %s6117 = scalar_lea.vmem %s10, %s6116
        $region92: #{forward.1} parent=87 // pred_fallthru
          _
      $region88: #{forward.1} parent=5 // pred_fallthru
        _
    $region6: #{forward.1} parent=1 // loop_footer
      %s23 = sadd.s32 1, %s19
    $region7: #{forward.1} parent=1 // loop_footer_branch
      %18 = sbr.rel target = $region3
    $region8: #{forward.1} parent=1 // loop_exit
      _
    %6118 = vsyncpa [#allocation3], 1
    %s6119 = scalar_lea.sflag [#allocation3], 1
    %6120 = vsyncpa %s6119, 1
    %6121 = vsyncpa [#allocation5], 1
    %6122 = vsyncpa [#allocation8], 1

</llo_original>
